<compile_context>
chip_gen: v7x
topology: tpu7x:2x2x1
jax: 0.10.0
libtpu: 0.0.40
codegen_flags: <defaults>
</compile_context>

<pallas_src>
import jax
import jax.numpy as jnp
from jax.experimental import pallas as pl
from jax.experimental.pallas import tpu as pltpu


# ---------------------------------------------------------------------------
# Fused kernel (one grid step == TB images)
# ---------------------------------------------------------------------------

def lenet_fused_kernel(x_ref,
                       w1_ref, b1_ref, rp1_ref, cp1_ref,
                       w2_ref, b2_ref, rp2_ref, cp2_ref,
                       w3_ref, b3_ref, g_ref,
                       wf1_ref, bf1_ref, wf2_ref, bf2_ref,
                       out_ref):
    tb = out_ref.shape[0]                      # images per grid step
    x = x_ref[...]                             # (tb*32, 96) bf16, flattened batch

    def banded_conv_tanh(a_bf16, w_ref, b_ref, m_rows):
        # Valid conv over H via K row-shifted banded matmuls; bias+tanh in f32.
        # a_bf16: (rows, Win*Cin) bf16, w_ref: (K, Win*Cin, OW*Cout) bf16.
        acc = jnp.zeros((m_rows, w_ref.shape[2]), jnp.float32)
        for ky in range(w_ref.shape[0]):
            acc += jnp.dot(a_bf16[ky:ky + m_rows, :], w_ref[ky],
                           preferred_element_type=jnp.float32)
        return jnp.tanh(acc + b_ref[...])

    def pool2x2(y_f32, rp_ref, cp_ref):
        # 2x2 max-pool: row-pair select (batch-aware, compacting) then
        # column-pair select, both as exact 0/1 selection matmuls.
        yb = y_f32.astype(jnp.bfloat16)
        rows = jnp.maximum(
            jnp.dot(rp_ref[0], yb, preferred_element_type=jnp.float32),
            jnp.dot(rp_ref[1], yb, preferred_element_type=jnp.float32))
        rb = rows.astype(jnp.bfloat16)
        cols = jnp.maximum(
            jnp.dot(rb, cp_ref[0], preferred_element_type=jnp.float32),
            jnp.dot(rb, cp_ref[1], preferred_element_type=jnp.float32))
        return cols.astype(jnp.bfloat16)

    # ----- encoder (per-image row stride: 32 -> 14 -> 5) -----
    y1 = banded_conv_tanh(x, w1_ref, b1_ref, 32 * tb - 4)   # (32tb-4, 336) f32
    a2 = pool2x2(y1, rp1_ref, cp1_ref)                      # (14tb,   168) bf16
    y2 = banded_conv_tanh(a2, w2_ref, b2_ref, 14 * tb - 4)  # (14tb-4, 320) f32
    a3 = pool2x2(y2, rp2_ref, cp2_ref)                      # ( 5tb,   160) bf16
    y3 = banded_conv_tanh(a3, w3_ref, b3_ref, 5 * tb - 4)   # ( 5tb-4, 240) f32

    # Gather each image's single valid feature row -> (tb, 240).
    feat = jnp.dot(g_ref[...], y3.astype(jnp.bfloat16),
                   preferred_element_type=jnp.float32)

    # ----- classifier (Dropout(0.05) is identity at inference) -----
    h = jnp.tanh(jnp.dot(feat.astype(jnp.bfloat16), wf1_ref[...],
                         preferred_element_type=jnp.float32) + bf1_ref[...])
    logits = jnp.dot(h.astype(jnp.bfloat16), wf2_ref[...],
                     preferred_element_type=jnp.float32) + bf2_ref[...]  # (tb,128)

    # softmax over 128 lanes; pad lanes carry bias -1e30 -> exp underflows to 0.
    m = jnp.max(logits, axis=-1, keepdims=True)
    e = jnp.exp(logits - m)
    denom = jnp.sum(e, axis=-1, keepdims=True)
    out_ref[...] = e * pl.reciprocal(denom, approx=False)


# ---------------------------------------------------------------------------
# pallas_call wrapper
# ---------------------------------------------------------------------------

def lenet5_like3_forward(x_nchw, kp):
    B, C, H, W = x_nchw.shape
    assert (C, H, W) == (3, 32, 32), "LeNet5Like3 head requires 3x32x32 inputs"
    tb = kp["g"].shape[0]                       # images per grid step
    n_steps = pl.cdiv(B, tb)
    b_pad = n_steps * tb

    # NCHW -> NHWC -> lane-dense (B, 32, 96); pad batch; flatten rows.
    x = jnp.transpose(x_nchw, (0, 2, 3, 1)).reshape(B, H, W * C)
    if b_pad != B:
        x = jnp.pad(x, ((0, b_pad - B), (0, 0), (0, 0)))
    x = x.reshape(b_pad * H, W * C).astype(jnp.bfloat16)

    names = ("w1", "b1", "rp1", "cp1", "w2", "b2", "rp2", "cp2",
             "w3", "b3", "g", "wf1", "bf1", "wf2", "bf2")
    in_specs = [pl.BlockSpec((tb * H, W * C), lambda i: (i, 0))]
    operands = [x]
    for name in names:
        arr = kp[name]
        # Full-array block, constant across the grid -> weights stay resident.
        in_specs.append(pl.BlockSpec(arr.shape, lambda i, _n=arr.ndim: (0,) * _n))
        operands.append(arr)

    # Advisory cost estimate (per-step MACs * 2 * n_steps).
    m1, m2, m3 = 32 * tb - 4, 14 * tb - 4, 5 * tb - 4
    macs = (5 * m1 * 96 * 336 + 2 * 14 * tb * m1 * 336 + 2 * 14 * tb * 336 * 168
            + 5 * m2 * 168 * 320 + 2 * 5 * tb * m2 * 320 + 2 * 5 * tb * 320 * 160
            + 5 * m3 * 160 * 240 + tb * m3 * 240
            + tb * 240 * 84 + tb * 84 * 128)
    trans = m1 * 336 + m2 * 320 + m3 * 240 + tb * 84 + tb * 128
    weight_bytes = sum(int(kp[n].size) * kp[n].dtype.itemsize for n in names)
    cost = pl.CostEstimate(flops=2 * macs * n_steps,
                           transcendentals=trans * n_steps,
                           bytes_accessed=int(x.size) * 2 + b_pad * 128 * 4
                                          + weight_bytes)

    out = pl.pallas_call(
        lenet_fused_kernel,
        out_shape=jax.ShapeDtypeStruct((b_pad, 128), jnp.float32),
        grid=(n_steps,),
        in_specs=in_specs,
        out_specs=pl.BlockSpec((tb, 128), lambda i: (i, 0)),
        compiler_params=pltpu.CompilerParams(
            dimension_semantics=("parallel",)),
        cost_estimate=cost,
    )(*operands)
    return out[:B, :10]


# ---------------------------------------------------------------------------
# Parameter preparation (one-time, host/XLA side)
# ---------------------------------------------------------------------------

def _band_conv_weight(w_oihw, w_in):
    """(Cout, Cin, K, K) torch weight -> (K, W_in*Cin, OW*Cout) banded, bf16."""
    cout, cin, k, _ = w_oihw.shape
    ow = w_in - k + 1
    w = jnp.transpose(w_oihw, (2, 3, 1, 0))                    # (ky, kx, cin, cout)
    col = jnp.arange(w_in)[:, None]
    ocol = jnp.arange(ow)[None, :]
    kx = col - ocol
    valid = ((kx >= 0) & (kx < k)).astype(w.dtype)
    kxc = jnp.clip(kx, 0, k - 1)
    banded = w[:, kxc, :, :] * valid[None, :, :, None, None]   # (k, w_in, ow, cin, cout)
    banded = jnp.transpose(banded, (0, 1, 3, 2, 4))            # (k, w_in, cin, ow, cout)
    return banded.reshape(k, w_in * cin, ow * cout).astype(jnp.bfloat16)


def _tiled_bias(bias, ow):
    return jnp.tile(bias, ow).reshape(1, ow * bias.shape[0]).astype(jnp.float32)


def _row_pool_selectors(tb, stride_in, out_rows, m_in):
    """Batch-aware row-pair selectors: (2, tb*out_rows, m_in) bf16.
    Output row b*out_rows+m selects input rows b*stride_in + 2m (+1)."""
    idx = jnp.arange(tb * out_rows)
    b = idx // out_rows
    m = idx % out_rows
    src = b * stride_in + 2 * m
    cols = jnp.arange(m_in)[None, :]
    pe = cols == src[:, None]
    po = cols == (src + 1)[:, None]
    return jnp.stack([pe, po]).astype(jnp.bfloat16)


def _col_pool_selectors(ow, ch):
    """(2, OW*C, (OW/2)*C): output lane owp*C+c <- input lanes (2*owp[+1])*C+c."""
    owp = ow // 2
    i = jnp.arange(ow * ch)[:, None]
    j = jnp.arange(owp * ch)[None, :]
    base = 2 * (j // ch) * ch + (j % ch)
    return jnp.stack([(i == base), (i == base + ch)]).astype(jnp.bfloat16)


def _feature_gather(tb, stride_in, m_in):
    """(tb, m_in) one-hot gather of row b*stride_in for each image."""
    src = jnp.arange(tb) * stride_in
    cols = jnp.arange(m_in)[None, :]
    return (cols == src[:, None]).astype(jnp.bfloat16)


def _pad_cols(w, n):
    return jnp.pad(w, ((0, 0), (0, n - w.shape[1])))


def _pad_bias_neg(bias, n):
    out = jnp.full((1, n), -1e30, jnp.float32)
    return out.at[0, :bias.shape[0]].set(bias.astype(jnp.float32))


def prepare_kernel_params(tp, tb):
    """Convert PyTorch-layout parameters to the fused-kernel layout."""
    return {
        "w1": _band_conv_weight(tp["conv1_w"], 32),
        "b1": _tiled_bias(tp["conv1_b"], 28),
        "rp1": _row_pool_selectors(tb, stride_in=32, out_rows=14, m_in=32 * tb - 4),
        "cp1": _col_pool_selectors(28, 12),
        "w2": _band_conv_weight(tp["conv2_w"], 14),
        "b2": _tiled_bias(tp["conv2_b"], 10),
        "rp2": _row_pool_selectors(tb, stride_in=14, out_rows=5, m_in=14 * tb - 4),
        "cp2": _col_pool_selectors(10, 32),
        "w3": _band_conv_weight(tp["conv3_w"], 5),
        "b3": _tiled_bias(tp["conv3_b"], 1),
        "g": _feature_gather(tb, stride_in=5, m_in=5 * tb - 4),
        "wf1": tp["fc1_w"].T.astype(jnp.bfloat16),
        "bf1": tp["fc1_b"].reshape(1, -1).astype(jnp.float32),
        "wf2": _pad_cols(tp["fc2_w"].T, 128).astype(jnp.bfloat16),
        "bf2": _pad_bias_neg(tp["fc2_b"], 128),
    }


def init_torch_params(key):
    """Random parameters in the PyTorch module's native shapes."""
    ks = jax.random.split(key, 10)

    def rnd(k, shape, scale=0.05):
        return (scale * jax.random.normal(k, shape)).astype(jnp.float32)

    return {
        "conv1_w": rnd(ks[0], (12, 3, 5, 5)),   "conv1_b": rnd(ks[1], (12,)),
        "conv2_w": rnd(ks[2], (32, 12, 5, 5)),  "conv2_b": rnd(ks[3], (32,)),
        "conv3_w": rnd(ks[4], (240, 32, 5, 5)), "conv3_b": rnd(ks[5], (240,)),
        "fc1_w": rnd(ks[6], (84, 240)),         "fc1_b": rnd(ks[7], (84,)),
        "fc2_w": rnd(ks[8], (10, 84)),          "fc2_b": rnd(ks[9], (10,)),
    }


# ---------------------------------------------------------------------------
# Pure-XLA f32 reference (eval-mode semantics of the PyTorch module)
# ---------------------------------------------------------------------------

def reference_forward(x_nchw, tp):
    x = jnp.transpose(x_nchw, (0, 2, 3, 1)).astype(jnp.float32)

    def conv_tanh(x, w_oihw, b):
        w = jnp.transpose(w_oihw, (2, 3, 1, 0))   # HWIO
        y = jax.lax.conv_general_dilated(
            x, w, window_strides=(1, 1), padding="VALID",
            dimension_numbers=("NHWC", "HWIO", "NHWC"))
        return jnp.tanh(y + b)

    def pool(x):
        b, h, w, c = x.shape
        return x.reshape(b, h // 2, 2, w // 2, 2, c).max(axis=(2, 4))

    y = pool(conv_tanh(x, tp["conv1_w"], tp["conv1_b"]))
    y = pool(conv_tanh(y, tp["conv2_w"], tp["conv2_b"]))
    y = conv_tanh(y, tp["conv3_w"], tp["conv3_b"])
    f = y.reshape(x.shape[0], -1)
    h = jnp.tanh(f @ tp["fc1_w"].T + tp["fc1_b"])
    logits = h @ tp["fc2_w"].T + tp["fc2_b"]
    return jax.nn.softmax(logits, axis=1)


# ---------------------------------------------------------------------------
# Main
# ---------------------------------------------------------------------------

if __name__ == "__main__":
    key = jax.random.PRNGKey(0)
    k_x, k_p = jax.random.split(key)

    # 3x32x32 inputs (required so conv3 yields 1x1x240).  Batch 16 with TB=8
    # gives a 2-step grid so both v7x TensorCores get work.
    B, TB = 16, 8
    x = jax.random.normal(k_x, (B, 3, 32, 32), dtype=jnp.float32)
    torch_params = init_torch_params(k_p)
    kernel_params = prepare_kernel_params(torch_params, TB)

    fwd = jax.jit(lenet5_like3_forward)
    out = jax.block_until_ready(fwd(x, kernel_params))

    assert out.shape == (B, 10)
    assert bool(jnp.all(jnp.isfinite(out)))
    # softmax rows sum to ~1 (exact reciprocal now -> tight tolerance)
    assert bool(jnp.all(jnp.abs(jnp.sum(out, axis=1) - 1.0) < 1e-3))
    # cross-check against pure-XLA f32 reference (bf16 MXU -> loose tolerance)
    ref = reference_forward(x, torch_params)
    max_err = float(jnp.max(jnp.abs(out - ref)))
    assert max_err < 5e-2, max_err
    print("KERNEL_OK")
</pallas_src>

<mosaic_0001>
module attributes {stable_mosaic.version = 11 : i64} {
  func.func @lenet_fused_kernel(%arg0: i32, %arg1: memref<256x96xbf16, #tpu.memory_space<vmem>>, %arg2: memref<5x96x336xbf16, #tpu.memory_space<vmem>>, %arg3: memref<1x336xf32, #tpu.memory_space<vmem>>, %arg4: memref<2x112x252xbf16, #tpu.memory_space<vmem>>, %arg5: memref<2x336x168xbf16, #tpu.memory_space<vmem>>, %arg6: memref<5x168x320xbf16, #tpu.memory_space<vmem>>, %arg7: memref<1x320xf32, #tpu.memory_space<vmem>>, %arg8: memref<2x40x108xbf16, #tpu.memory_space<vmem>>, %arg9: memref<2x320x160xbf16, #tpu.memory_space<vmem>>, %arg10: memref<5x160x240xbf16, #tpu.memory_space<vmem>>, %arg11: memref<1x240xf32, #tpu.memory_space<vmem>>, %arg12: memref<8x36xbf16, #tpu.memory_space<vmem>>, %arg13: memref<240x84xbf16, #tpu.memory_space<vmem>>, %arg14: memref<1x84xf32, #tpu.memory_space<vmem>>, %arg15: memref<84x128xbf16, #tpu.memory_space<vmem>>, %arg16: memref<1x128xf32, #tpu.memory_space<vmem>>, %arg17: memref<8x128xf32, #tpu.memory_space<vmem>>) attributes {dimension_semantics = [#tpu.dimension_semantics<parallel>], iteration_bounds = array<i64: 2>, scalar_prefetch = 0 : i64, scratch_operands = 0 : i64, tpu.core_type = #tpu.core_type<tc>, window_params = [{transform_indices = @transform_0, window_bounds = array<i64: 256, 96>}, {pipeline_mode = #tpu.pipeline_mode<synchronous>, transform_indices = @transform_1, window_bounds = array<i64: 5, 96, 336>}, {pipeline_mode = #tpu.pipeline_mode<synchronous>, transform_indices = @transform_2, window_bounds = array<i64: 1, 336>}, {pipeline_mode = #tpu.pipeline_mode<synchronous>, transform_indices = @transform_3, window_bounds = array<i64: 2, 112, 252>}, {pipeline_mode = #tpu.pipeline_mode<synchronous>, transform_indices = @transform_4, window_bounds = array<i64: 2, 336, 168>}, {pipeline_mode = #tpu.pipeline_mode<synchronous>, transform_indices = @transform_5, window_bounds = array<i64: 5, 168, 320>}, {pipeline_mode = #tpu.pipeline_mode<synchronous>, transform_indices = @transform_6, window_bounds = array<i64: 1, 320>}, {pipeline_mode = #tpu.pipeline_mode<synchronous>, transform_indices = @transform_7, window_bounds = array<i64: 2, 40, 108>}, {pipeline_mode = #tpu.pipeline_mode<synchronous>, transform_indices = @transform_8, window_bounds = array<i64: 2, 320, 160>}, {pipeline_mode = #tpu.pipeline_mode<synchronous>, transform_indices = @transform_9, window_bounds = array<i64: 5, 160, 240>}, {pipeline_mode = #tpu.pipeline_mode<synchronous>, transform_indices = @transform_10, window_bounds = array<i64: 1, 240>}, {pipeline_mode = #tpu.pipeline_mode<synchronous>, transform_indices = @transform_11, window_bounds = array<i64: 8, 36>}, {pipeline_mode = #tpu.pipeline_mode<synchronous>, transform_indices = @transform_12, window_bounds = array<i64: 240, 84>}, {pipeline_mode = #tpu.pipeline_mode<synchronous>, transform_indices = @transform_13, window_bounds = array<i64: 1, 84>}, {pipeline_mode = #tpu.pipeline_mode<synchronous>, transform_indices = @transform_14, window_bounds = array<i64: 84, 128>}, {pipeline_mode = #tpu.pipeline_mode<synchronous>, transform_indices = @transform_15, window_bounds = array<i64: 1, 128>}, {transform_indices = @transform_16, window_bounds = array<i64: 8, 128>}]} {
    %c0 = arith.constant 0 : index
    %c0_0 = arith.constant 0 : index
    %0 = vector.load %arg1[%c0, %c0_0] : memref<256x96xbf16, #tpu.memory_space<vmem>>, vector<256x96xbf16>
    %cst = arith.constant 0.000000e+00 : f32
    %1 = vector.broadcast %cst : f32 to vector<252x336xf32>
    %2 = vector.extract_strided_slice %0 {offsets = [0, 0], sizes = [252, 96], strides = [1, 1]} : vector<256x96xbf16> to vector<252x96xbf16>
    %c0_1 = arith.constant 0 : index
    %c0_2 = arith.constant 0 : index
    %c0_3 = arith.constant 0 : index
    %3 = vector.load %arg2[%c0_1, %c0_2, %c0_3] : memref<5x96x336xbf16, #tpu.memory_space<vmem>>, vector<1x96x336xbf16>
    %4 = vector.shape_cast %3 : vector<1x96x336xbf16> to vector<96x336xbf16>
    %cst_4 = arith.constant dense<0.000000e+00> : vector<252x336xf32>
    %5 = tpu.matmul %2, %4, %cst_4 {dimension_numbers = #tpu.dot_dimension_numbers<[1], [0], [0], [1], [0, 0, 1, 1], [], []>} : vector<252x96xbf16>, vector<96x336xbf16>, vector<252x336xf32> -> vector<252x336xf32>
    %6 = arith.addf %1, %5 : vector<252x336xf32>
    %7 = vector.extract_strided_slice %0 {offsets = [1, 0], sizes = [252, 96], strides = [1, 1]} : vector<256x96xbf16> to vector<252x96xbf16>
    %c1 = arith.constant 1 : index
    %c0_5 = arith.constant 0 : index
    %c0_6 = arith.constant 0 : index
    %8 = vector.load %arg2[%c1, %c0_5, %c0_6] : memref<5x96x336xbf16, #tpu.memory_space<vmem>>, vector<1x96x336xbf16>
    %9 = vector.shape_cast %8 : vector<1x96x336xbf16> to vector<96x336xbf16>
    %cst_7 = arith.constant dense<0.000000e+00> : vector<252x336xf32>
    %10 = tpu.matmul %7, %9, %cst_7 {dimension_numbers = #tpu.dot_dimension_numbers<[1], [0], [0], [1], [0, 0, 1, 1], [], []>} : vector<252x96xbf16>, vector<96x336xbf16>, vector<252x336xf32> -> vector<252x336xf32>
    %11 = arith.addf %6, %10 : vector<252x336xf32>
    %12 = vector.extract_strided_slice %0 {offsets = [2, 0], sizes = [252, 96], strides = [1, 1]} : vector<256x96xbf16> to vector<252x96xbf16>
    %c2 = arith.constant 2 : index
    %c0_8 = arith.constant 0 : index
    %c0_9 = arith.constant 0 : index
    %13 = vector.load %arg2[%c2, %c0_8, %c0_9] : memref<5x96x336xbf16, #tpu.memory_space<vmem>>, vector<1x96x336xbf16>
    %14 = vector.shape_cast %13 : vector<1x96x336xbf16> to vector<96x336xbf16>
    %cst_10 = arith.constant dense<0.000000e+00> : vector<252x336xf32>
    %15 = tpu.matmul %12, %14, %cst_10 {dimension_numbers = #tpu.dot_dimension_numbers<[1], [0], [0], [1], [0, 0, 1, 1], [], []>} : vector<252x96xbf16>, vector<96x336xbf16>, vector<252x336xf32> -> vector<252x336xf32>
    %16 = arith.addf %11, %15 : vector<252x336xf32>
    %17 = vector.extract_strided_slice %0 {offsets = [3, 0], sizes = [252, 96], strides = [1, 1]} : vector<256x96xbf16> to vector<252x96xbf16>
    %c3 = arith.constant 3 : index
    %c0_11 = arith.constant 0 : index
    %c0_12 = arith.constant 0 : index
    %18 = vector.load %arg2[%c3, %c0_11, %c0_12] : memref<5x96x336xbf16, #tpu.memory_space<vmem>>, vector<1x96x336xbf16>
    %19 = vector.shape_cast %18 : vector<1x96x336xbf16> to vector<96x336xbf16>
    %cst_13 = arith.constant dense<0.000000e+00> : vector<252x336xf32>
    %20 = tpu.matmul %17, %19, %cst_13 {dimension_numbers = #tpu.dot_dimension_numbers<[1], [0], [0], [1], [0, 0, 1, 1], [], []>} : vector<252x96xbf16>, vector<96x336xbf16>, vector<252x336xf32> -> vector<252x336xf32>
    %21 = arith.addf %16, %20 : vector<252x336xf32>
    %22 = vector.extract_strided_slice %0 {offsets = [4, 0], sizes = [252, 96], strides = [1, 1]} : vector<256x96xbf16> to vector<252x96xbf16>
    %c4 = arith.constant 4 : index
    %c0_14 = arith.constant 0 : index
    %c0_15 = arith.constant 0 : index
    %23 = vector.load %arg2[%c4, %c0_14, %c0_15] : memref<5x96x336xbf16, #tpu.memory_space<vmem>>, vector<1x96x336xbf16>
    %24 = vector.shape_cast %23 : vector<1x96x336xbf16> to vector<96x336xbf16>
    %cst_16 = arith.constant dense<0.000000e+00> : vector<252x336xf32>
    %25 = tpu.matmul %22, %24, %cst_16 {dimension_numbers = #tpu.dot_dimension_numbers<[1], [0], [0], [1], [0, 0, 1, 1], [], []>} : vector<252x96xbf16>, vector<96x336xbf16>, vector<252x336xf32> -> vector<252x336xf32>
    %26 = arith.addf %21, %25 : vector<252x336xf32>
    %c0_17 = arith.constant 0 : index
    %c0_18 = arith.constant 0 : index
    %27 = vector.load %arg3[%c0_17, %c0_18] : memref<1x336xf32, #tpu.memory_space<vmem>>, vector<1x336xf32>
    %28 = vector.broadcast %27 : vector<1x336xf32> to vector<252x336xf32>
    %29 = arith.addf %26, %28 : vector<252x336xf32>
    %30 = math.tanh %29 : vector<252x336xf32>
    %31 = arith.truncf %30 : vector<252x336xf32> to vector<252x336xbf16>
    %c0_19 = arith.constant 0 : index
    %c0_20 = arith.constant 0 : index
    %c0_21 = arith.constant 0 : index
    %32 = vector.load %arg4[%c0_19, %c0_20, %c0_21] : memref<2x112x252xbf16, #tpu.memory_space<vmem>>, vector<1x112x252xbf16>
    %33 = vector.shape_cast %32 : vector<1x112x252xbf16> to vector<112x252xbf16>
    %cst_22 = arith.constant dense<0.000000e+00> : vector<112x336xf32>
    %34 = tpu.matmul %33, %31, %cst_22 {dimension_numbers = #tpu.dot_dimension_numbers<[1], [0], [0], [1], [0, 0, 1, 1], [], []>} : vector<112x252xbf16>, vector<252x336xbf16>, vector<112x336xf32> -> vector<112x336xf32>
    %c1_23 = arith.constant 1 : index
    %c0_24 = arith.constant 0 : index
    %c0_25 = arith.constant 0 : index
    %35 = vector.load %arg4[%c1_23, %c0_24, %c0_25] : memref<2x112x252xbf16, #tpu.memory_space<vmem>>, vector<1x112x252xbf16>
    %36 = vector.shape_cast %35 : vector<1x112x252xbf16> to vector<112x252xbf16>
    %cst_26 = arith.constant dense<0.000000e+00> : vector<112x336xf32>
    %37 = tpu.matmul %36, %31, %cst_26 {dimension_numbers = #tpu.dot_dimension_numbers<[1], [0], [0], [1], [0, 0, 1, 1], [], []>} : vector<112x252xbf16>, vector<252x336xbf16>, vector<112x336xf32> -> vector<112x336xf32>
    %38 = arith.maximumf %34, %37 : vector<112x336xf32>
    %39 = arith.truncf %38 : vector<112x336xf32> to vector<112x336xbf16>
    %c0_27 = arith.constant 0 : index
    %c0_28 = arith.constant 0 : index
    %c0_29 = arith.constant 0 : index
    %40 = vector.load %arg5[%c0_27, %c0_28, %c0_29] : memref<2x336x168xbf16, #tpu.memory_space<vmem>>, vector<1x336x168xbf16>
    %41 = vector.shape_cast %40 : vector<1x336x168xbf16> to vector<336x168xbf16>
    %cst_30 = arith.constant dense<0.000000e+00> : vector<112x168xf32>
    %42 = tpu.matmul %39, %41, %cst_30 {dimension_numbers = #tpu.dot_dimension_numbers<[1], [0], [0], [1], [0, 0, 1, 1], [], []>} : vector<112x336xbf16>, vector<336x168xbf16>, vector<112x168xf32> -> vector<112x168xf32>
    %c1_31 = arith.constant 1 : index
    %c0_32 = arith.constant 0 : index
    %c0_33 = arith.constant 0 : index
    %43 = vector.load %arg5[%c1_31, %c0_32, %c0_33] : memref<2x336x168xbf16, #tpu.memory_space<vmem>>, vector<1x336x168xbf16>
    %44 = vector.shape_cast %43 : vector<1x336x168xbf16> to vector<336x168xbf16>
    %cst_34 = arith.constant dense<0.000000e+00> : vector<112x168xf32>
    %45 = tpu.matmul %39, %44, %cst_34 {dimension_numbers = #tpu.dot_dimension_numbers<[1], [0], [0], [1], [0, 0, 1, 1], [], []>} : vector<112x336xbf16>, vector<336x168xbf16>, vector<112x168xf32> -> vector<112x168xf32>
    %46 = arith.maximumf %42, %45 : vector<112x168xf32>
    %47 = arith.truncf %46 : vector<112x168xf32> to vector<112x168xbf16>
    %cst_35 = arith.constant 0.000000e+00 : f32
    %48 = vector.broadcast %cst_35 : f32 to vector<108x320xf32>
    %49 = vector.extract_strided_slice %47 {offsets = [0, 0], sizes = [108, 168], strides = [1, 1]} : vector<112x168xbf16> to vector<108x168xbf16>
    %c0_36 = arith.constant 0 : index
    %c0_37 = arith.constant 0 : index
    %c0_38 = arith.constant 0 : index
    %50 = vector.load %arg6[%c0_36, %c0_37, %c0_38] : memref<5x168x320xbf16, #tpu.memory_space<vmem>>, vector<1x168x320xbf16>
    %51 = vector.shape_cast %50 : vector<1x168x320xbf16> to vector<168x320xbf16>
    %cst_39 = arith.constant dense<0.000000e+00> : vector<108x320xf32>
    %52 = tpu.matmul %49, %51, %cst_39 {dimension_numbers = #tpu.dot_dimension_numbers<[1], [0], [0], [1], [0, 0, 1, 1], [], []>} : vector<108x168xbf16>, vector<168x320xbf16>, vector<108x320xf32> -> vector<108x320xf32>
    %53 = arith.addf %48, %52 : vector<108x320xf32>
    %54 = vector.extract_strided_slice %47 {offsets = [1, 0], sizes = [108, 168], strides = [1, 1]} : vector<112x168xbf16> to vector<108x168xbf16>
    %c1_40 = arith.constant 1 : index
    %c0_41 = arith.constant 0 : index
    %c0_42 = arith.constant 0 : index
    %55 = vector.load %arg6[%c1_40, %c0_41, %c0_42] : memref<5x168x320xbf16, #tpu.memory_space<vmem>>, vector<1x168x320xbf16>
    %56 = vector.shape_cast %55 : vector<1x168x320xbf16> to vector<168x320xbf16>
    %cst_43 = arith.constant dense<0.000000e+00> : vector<108x320xf32>
    %57 = tpu.matmul %54, %56, %cst_43 {dimension_numbers = #tpu.dot_dimension_numbers<[1], [0], [0], [1], [0, 0, 1, 1], [], []>} : vector<108x168xbf16>, vector<168x320xbf16>, vector<108x320xf32> -> vector<108x320xf32>
    %58 = arith.addf %53, %57 : vector<108x320xf32>
    %59 = vector.extract_strided_slice %47 {offsets = [2, 0], sizes = [108, 168], strides = [1, 1]} : vector<112x168xbf16> to vector<108x168xbf16>
    %c2_44 = arith.constant 2 : index
    %c0_45 = arith.constant 0 : index
    %c0_46 = arith.constant 0 : index
    %60 = vector.load %arg6[%c2_44, %c0_45, %c0_46] : memref<5x168x320xbf16, #tpu.memory_space<vmem>>, vector<1x168x320xbf16>
    %61 = vector.shape_cast %60 : vector<1x168x320xbf16> to vector<168x320xbf16>
    %cst_47 = arith.constant dense<0.000000e+00> : vector<108x320xf32>
    %62 = tpu.matmul %59, %61, %cst_47 {dimension_numbers = #tpu.dot_dimension_numbers<[1], [0], [0], [1], [0, 0, 1, 1], [], []>} : vector<108x168xbf16>, vector<168x320xbf16>, vector<108x320xf32> -> vector<108x320xf32>
    %63 = arith.addf %58, %62 : vector<108x320xf32>
    %64 = vector.extract_strided_slice %47 {offsets = [3, 0], sizes = [108, 168], strides = [1, 1]} : vector<112x168xbf16> to vector<108x168xbf16>
    %c3_48 = arith.constant 3 : index
    %c0_49 = arith.constant 0 : index
    %c0_50 = arith.constant 0 : index
    %65 = vector.load %arg6[%c3_48, %c0_49, %c0_50] : memref<5x168x320xbf16, #tpu.memory_space<vmem>>, vector<1x168x320xbf16>
    %66 = vector.shape_cast %65 : vector<1x168x320xbf16> to vector<168x320xbf16>
    %cst_51 = arith.constant dense<0.000000e+00> : vector<108x320xf32>
    %67 = tpu.matmul %64, %66, %cst_51 {dimension_numbers = #tpu.dot_dimension_numbers<[1], [0], [0], [1], [0, 0, 1, 1], [], []>} : vector<108x168xbf16>, vector<168x320xbf16>, vector<108x320xf32> -> vector<108x320xf32>
    %68 = arith.addf %63, %67 : vector<108x320xf32>
    %69 = vector.extract_strided_slice %47 {offsets = [4, 0], sizes = [108, 168], strides = [1, 1]} : vector<112x168xbf16> to vector<108x168xbf16>
    %c4_52 = arith.constant 4 : index
    %c0_53 = arith.constant 0 : index
    %c0_54 = arith.constant 0 : index
    %70 = vector.load %arg6[%c4_52, %c0_53, %c0_54] : memref<5x168x320xbf16, #tpu.memory_space<vmem>>, vector<1x168x320xbf16>
    %71 = vector.shape_cast %70 : vector<1x168x320xbf16> to vector<168x320xbf16>
    %cst_55 = arith.constant dense<0.000000e+00> : vector<108x320xf32>
    %72 = tpu.matmul %69, %71, %cst_55 {dimension_numbers = #tpu.dot_dimension_numbers<[1], [0], [0], [1], [0, 0, 1, 1], [], []>} : vector<108x168xbf16>, vector<168x320xbf16>, vector<108x320xf32> -> vector<108x320xf32>
    %73 = arith.addf %68, %72 : vector<108x320xf32>
    %c0_56 = arith.constant 0 : index
    %c0_57 = arith.constant 0 : index
    %74 = vector.load %arg7[%c0_56, %c0_57] : memref<1x320xf32, #tpu.memory_space<vmem>>, vector<1x320xf32>
    %75 = vector.broadcast %74 : vector<1x320xf32> to vector<108x320xf32>
    %76 = arith.addf %73, %75 : vector<108x320xf32>
    %77 = math.tanh %76 : vector<108x320xf32>
    %78 = arith.truncf %77 : vector<108x320xf32> to vector<108x320xbf16>
    %c0_58 = arith.constant 0 : index
    %c0_59 = arith.constant 0 : index
    %c0_60 = arith.constant 0 : index
    %79 = vector.load %arg8[%c0_58, %c0_59, %c0_60] : memref<2x40x108xbf16, #tpu.memory_space<vmem>>, vector<1x40x108xbf16>
    %80 = vector.shape_cast %79 : vector<1x40x108xbf16> to vector<40x108xbf16>
    %cst_61 = arith.constant dense<0.000000e+00> : vector<40x320xf32>
    %81 = tpu.matmul %80, %78, %cst_61 {dimension_numbers = #tpu.dot_dimension_numbers<[1], [0], [0], [1], [0, 0, 1, 1], [], []>} : vector<40x108xbf16>, vector<108x320xbf16>, vector<40x320xf32> -> vector<40x320xf32>
    %c1_62 = arith.constant 1 : index
    %c0_63 = arith.constant 0 : index
    %c0_64 = arith.constant 0 : index
    %82 = vector.load %arg8[%c1_62, %c0_63, %c0_64] : memref<2x40x108xbf16, #tpu.memory_space<vmem>>, vector<1x40x108xbf16>
    %83 = vector.shape_cast %82 : vector<1x40x108xbf16> to vector<40x108xbf16>
    %cst_65 = arith.constant dense<0.000000e+00> : vector<40x320xf32>
    %84 = tpu.matmul %83, %78, %cst_65 {dimension_numbers = #tpu.dot_dimension_numbers<[1], [0], [0], [1], [0, 0, 1, 1], [], []>} : vector<40x108xbf16>, vector<108x320xbf16>, vector<40x320xf32> -> vector<40x320xf32>
    %85 = arith.maximumf %81, %84 : vector<40x320xf32>
    %86 = arith.truncf %85 : vector<40x320xf32> to vector<40x320xbf16>
    %c0_66 = arith.constant 0 : index
    %c0_67 = arith.constant 0 : index
    %c0_68 = arith.constant 0 : index
    %87 = vector.load %arg9[%c0_66, %c0_67, %c0_68] : memref<2x320x160xbf16, #tpu.memory_space<vmem>>, vector<1x320x160xbf16>
    %88 = vector.shape_cast %87 : vector<1x320x160xbf16> to vector<320x160xbf16>
    %cst_69 = arith.constant dense<0.000000e+00> : vector<40x160xf32>
    %89 = tpu.matmul %86, %88, %cst_69 {dimension_numbers = #tpu.dot_dimension_numbers<[1], [0], [0], [1], [0, 0, 1, 1], [], []>} : vector<40x320xbf16>, vector<320x160xbf16>, vector<40x160xf32> -> vector<40x160xf32>
    %c1_70 = arith.constant 1 : index
    %c0_71 = arith.constant 0 : index
    %c0_72 = arith.constant 0 : index
    %90 = vector.load %arg9[%c1_70, %c0_71, %c0_72] : memref<2x320x160xbf16, #tpu.memory_space<vmem>>, vector<1x320x160xbf16>
    %91 = vector.shape_cast %90 : vector<1x320x160xbf16> to vector<320x160xbf16>
    %cst_73 = arith.constant dense<0.000000e+00> : vector<40x160xf32>
    %92 = tpu.matmul %86, %91, %cst_73 {dimension_numbers = #tpu.dot_dimension_numbers<[1], [0], [0], [1], [0, 0, 1, 1], [], []>} : vector<40x320xbf16>, vector<320x160xbf16>, vector<40x160xf32> -> vector<40x160xf32>
    %93 = arith.maximumf %89, %92 : vector<40x160xf32>
    %94 = arith.truncf %93 : vector<40x160xf32> to vector<40x160xbf16>
    %cst_74 = arith.constant 0.000000e+00 : f32
    %95 = vector.broadcast %cst_74 : f32 to vector<36x240xf32>
    %96 = vector.extract_strided_slice %94 {offsets = [0, 0], sizes = [36, 160], strides = [1, 1]} : vector<40x160xbf16> to vector<36x160xbf16>
    %c0_75 = arith.constant 0 : index
    %c0_76 = arith.constant 0 : index
    %c0_77 = arith.constant 0 : index
    %97 = vector.load %arg10[%c0_75, %c0_76, %c0_77] : memref<5x160x240xbf16, #tpu.memory_space<vmem>>, vector<1x160x240xbf16>
    %98 = vector.shape_cast %97 : vector<1x160x240xbf16> to vector<160x240xbf16>
    %cst_78 = arith.constant dense<0.000000e+00> : vector<36x240xf32>
    %99 = tpu.matmul %96, %98, %cst_78 {dimension_numbers = #tpu.dot_dimension_numbers<[1], [0], [0], [1], [0, 0, 1, 1], [], []>} : vector<36x160xbf16>, vector<160x240xbf16>, vector<36x240xf32> -> vector<36x240xf32>
    %100 = arith.addf %95, %99 : vector<36x240xf32>
    %101 = vector.extract_strided_slice %94 {offsets = [1, 0], sizes = [36, 160], strides = [1, 1]} : vector<40x160xbf16> to vector<36x160xbf16>
    %c1_79 = arith.constant 1 : index
    %c0_80 = arith.constant 0 : index
    %c0_81 = arith.constant 0 : index
    %102 = vector.load %arg10[%c1_79, %c0_80, %c0_81] : memref<5x160x240xbf16, #tpu.memory_space<vmem>>, vector<1x160x240xbf16>
    %103 = vector.shape_cast %102 : vector<1x160x240xbf16> to vector<160x240xbf16>
    %cst_82 = arith.constant dense<0.000000e+00> : vector<36x240xf32>
    %104 = tpu.matmul %101, %103, %cst_82 {dimension_numbers = #tpu.dot_dimension_numbers<[1], [0], [0], [1], [0, 0, 1, 1], [], []>} : vector<36x160xbf16>, vector<160x240xbf16>, vector<36x240xf32> -> vector<36x240xf32>
    %105 = arith.addf %100, %104 : vector<36x240xf32>
    %106 = vector.extract_strided_slice %94 {offsets = [2, 0], sizes = [36, 160], strides = [1, 1]} : vector<40x160xbf16> to vector<36x160xbf16>
    %c2_83 = arith.constant 2 : index
    %c0_84 = arith.constant 0 : index
    %c0_85 = arith.constant 0 : index
    %107 = vector.load %arg10[%c2_83, %c0_84, %c0_85] : memref<5x160x240xbf16, #tpu.memory_space<vmem>>, vector<1x160x240xbf16>
    %108 = vector.shape_cast %107 : vector<1x160x240xbf16> to vector<160x240xbf16>
    %cst_86 = arith.constant dense<0.000000e+00> : vector<36x240xf32>
    %109 = tpu.matmul %106, %108, %cst_86 {dimension_numbers = #tpu.dot_dimension_numbers<[1], [0], [0], [1], [0, 0, 1, 1], [], []>} : vector<36x160xbf16>, vector<160x240xbf16>, vector<36x240xf32> -> vector<36x240xf32>
    %110 = arith.addf %105, %109 : vector<36x240xf32>
    %111 = vector.extract_strided_slice %94 {offsets = [3, 0], sizes = [36, 160], strides = [1, 1]} : vector<40x160xbf16> to vector<36x160xbf16>
    %c3_87 = arith.constant 3 : index
    %c0_88 = arith.constant 0 : index
    %c0_89 = arith.constant 0 : index
    %112 = vector.load %arg10[%c3_87, %c0_88, %c0_89] : memref<5x160x240xbf16, #tpu.memory_space<vmem>>, vector<1x160x240xbf16>
    %113 = vector.shape_cast %112 : vector<1x160x240xbf16> to vector<160x240xbf16>
    %cst_90 = arith.constant dense<0.000000e+00> : vector<36x240xf32>
    %114 = tpu.matmul %111, %113, %cst_90 {dimension_numbers = #tpu.dot_dimension_numbers<[1], [0], [0], [1], [0, 0, 1, 1], [], []>} : vector<36x160xbf16>, vector<160x240xbf16>, vector<36x240xf32> -> vector<36x240xf32>
    %115 = arith.addf %110, %114 : vector<36x240xf32>
    %116 = vector.extract_strided_slice %94 {offsets = [4, 0], sizes = [36, 160], strides = [1, 1]} : vector<40x160xbf16> to vector<36x160xbf16>
    %c4_91 = arith.constant 4 : index
    %c0_92 = arith.constant 0 : index
    %c0_93 = arith.constant 0 : index
    %117 = vector.load %arg10[%c4_91, %c0_92, %c0_93] : memref<5x160x240xbf16, #tpu.memory_space<vmem>>, vector<1x160x240xbf16>
    %118 = vector.shape_cast %117 : vector<1x160x240xbf16> to vector<160x240xbf16>
    %cst_94 = arith.constant dense<0.000000e+00> : vector<36x240xf32>
    %119 = tpu.matmul %116, %118, %cst_94 {dimension_numbers = #tpu.dot_dimension_numbers<[1], [0], [0], [1], [0, 0, 1, 1], [], []>} : vector<36x160xbf16>, vector<160x240xbf16>, vector<36x240xf32> -> vector<36x240xf32>
    %120 = arith.addf %115, %119 : vector<36x240xf32>
    %c0_95 = arith.constant 0 : index
    %c0_96 = arith.constant 0 : index
    %121 = vector.load %arg11[%c0_95, %c0_96] : memref<1x240xf32, #tpu.memory_space<vmem>>, vector<1x240xf32>
    %122 = vector.broadcast %121 : vector<1x240xf32> to vector<36x240xf32>
    %123 = arith.addf %120, %122 : vector<36x240xf32>
    %124 = math.tanh %123 : vector<36x240xf32>
    %c0_97 = arith.constant 0 : index
    %c0_98 = arith.constant 0 : index
    %125 = vector.load %arg12[%c0_97, %c0_98] : memref<8x36xbf16, #tpu.memory_space<vmem>>, vector<8x36xbf16>
    %126 = arith.truncf %124 : vector<36x240xf32> to vector<36x240xbf16>
    %cst_99 = arith.constant dense<0.000000e+00> : vector<8x240xf32>
    %127 = tpu.matmul %125, %126, %cst_99 {dimension_numbers = #tpu.dot_dimension_numbers<[1], [0], [0], [1], [0, 0, 1, 1], [], []>} : vector<8x36xbf16>, vector<36x240xbf16>, vector<8x240xf32> -> vector<8x240xf32>
    %128 = arith.truncf %127 : vector<8x240xf32> to vector<8x240xbf16>
    %c0_100 = arith.constant 0 : index
    %c0_101 = arith.constant 0 : index
    %129 = vector.load %arg13[%c0_100, %c0_101] : memref<240x84xbf16, #tpu.memory_space<vmem>>, vector<240x84xbf16>
    %cst_102 = arith.constant dense<0.000000e+00> : vector<8x84xf32>
    %130 = tpu.matmul %128, %129, %cst_102 {dimension_numbers = #tpu.dot_dimension_numbers<[1], [0], [0], [1], [0, 0, 1, 1], [], []>} : vector<8x240xbf16>, vector<240x84xbf16>, vector<8x84xf32> -> vector<8x84xf32>
    %c0_103 = arith.constant 0 : index
    %c0_104 = arith.constant 0 : index
    %131 = vector.load %arg14[%c0_103, %c0_104] : memref<1x84xf32, #tpu.memory_space<vmem>>, vector<1x84xf32>
    %132 = vector.broadcast %131 : vector<1x84xf32> to vector<8x84xf32>
    %133 = arith.addf %130, %132 : vector<8x84xf32>
    %134 = math.tanh %133 : vector<8x84xf32>
    %135 = arith.truncf %134 : vector<8x84xf32> to vector<8x84xbf16>
    %c0_105 = arith.constant 0 : index
    %c0_106 = arith.constant 0 : index
    %136 = vector.load %arg15[%c0_105, %c0_106] : memref<84x128xbf16, #tpu.memory_space<vmem>>, vector<84x128xbf16>
    %cst_107 = arith.constant dense<0.000000e+00> : vector<8x128xf32>
    %137 = tpu.matmul %135, %136, %cst_107 {dimension_numbers = #tpu.dot_dimension_numbers<[1], [0], [0], [1], [0, 0, 1, 1], [], []>} : vector<8x84xbf16>, vector<84x128xbf16>, vector<8x128xf32> -> vector<8x128xf32>
    %c0_108 = arith.constant 0 : index
    %c0_109 = arith.constant 0 : index
    %138 = vector.load %arg16[%c0_108, %c0_109] : memref<1x128xf32, #tpu.memory_space<vmem>>, vector<1x128xf32>
    %139 = vector.broadcast %138 : vector<1x128xf32> to vector<8x128xf32>
    %140 = arith.addf %137, %139 : vector<8x128xf32>
    %cst_110 = arith.constant dense<0xFF800000> : vector<8xf32>
    %141 = vector.multi_reduction <maximumf>, %140, %cst_110 [1] : vector<8x128xf32> to vector<8xf32>
    %142 = vector.shape_cast %141 : vector<8xf32> to vector<8x1xf32>
    %143 = vector.broadcast %142 : vector<8x1xf32> to vector<8x128xf32>
    %144 = arith.subf %140, %143 : vector<8x128xf32>
    %145 = math.exp %144 : vector<8x128xf32>
    %cst_111 = arith.constant dense<0.000000e+00> : vector<8xf32>
    %146 = vector.multi_reduction <add>, %145, %cst_111 [1] : vector<8x128xf32> to vector<8xf32>
    %147 = vector.shape_cast %146 : vector<8xf32> to vector<8x1xf32>
    %148 = tpu.reciprocal %147 : vector<8x1xf32> -> vector<8x1xf32>
    %149 = vector.broadcast %148 : vector<8x1xf32> to vector<8x128xf32>
    %150 = arith.mulf %145, %149 : vector<8x128xf32>
    %c0_112 = arith.constant 0 : index
    %c0_113 = arith.constant 0 : index
    %151 = vector.load %arg17[%c0_112, %c0_113] : memref<8x128xf32, #tpu.memory_space<vmem>>, vector<8x128xf32>
    tpu.vector_store %arg17[%c0_112, %c0_113], %150 {strides = array<i32>} : memref<8x128xf32, #tpu.memory_space<vmem>>, vector<8x128xf32>,
    return
  }
  func.func @transform_0(%arg0: i32) -> (i32, i32) {
    %c0_i32 = arith.constant 0 : i32
    %c0_i32_0 = arith.constant 0 : i32
    return %arg0, %c0_i32 : i32, i32
  }
  func.func @transform_1(%arg0: i32) -> (i32, i32, i32) {
    %c0_i32 = arith.constant 0 : i32
    %c0_i32_0 = arith.constant 0 : i32
    %c0_i32_1 = arith.constant 0 : i32
    %c0_i32_2 = arith.constant 0 : i32
    return %c0_i32, %c0_i32_0, %c0_i32_1 : i32, i32, i32
  }
  func.func @transform_2(%arg0: i32) -> (i32, i32) {
    %c0_i32 = arith.constant 0 : i32
    %c0_i32_0 = arith.constant 0 : i32
    %c0_i32_1 = arith.constant 0 : i32
    return %c0_i32, %c0_i32_0 : i32, i32
  }
  func.func @transform_3(%arg0: i32) -> (i32, i32, i32) {
    %c0_i32 = arith.constant 0 : i32
    %c0_i32_0 = arith.constant 0 : i32
    %c0_i32_1 = arith.constant 0 : i32
    %c0_i32_2 = arith.constant 0 : i32
    return %c0_i32, %c0_i32_0, %c0_i32_1 : i32, i32, i32
  }
  func.func @transform_4(%arg0: i32) -> (i32, i32, i32) {
    %c0_i32 = arith.constant 0 : i32
    %c0_i32_0 = arith.constant 0 : i32
    %c0_i32_1 = arith.constant 0 : i32
    %c0_i32_2 = arith.constant 0 : i32
    return %c0_i32, %c0_i32_0, %c0_i32_1 : i32, i32, i32
  }
  func.func @transform_5(%arg0: i32) -> (i32, i32, i32) {
    %c0_i32 = arith.constant 0 : i32
    %c0_i32_0 = arith.constant 0 : i32
    %c0_i32_1 = arith.constant 0 : i32
    %c0_i32_2 = arith.constant 0 : i32
    return %c0_i32, %c0_i32_0, %c0_i32_1 : i32, i32, i32
  }
  func.func @transform_6(%arg0: i32) -> (i32, i32) {
    %c0_i32 = arith.constant 0 : i32
    %c0_i32_0 = arith.constant 0 : i32
    %c0_i32_1 = arith.constant 0 : i32
    return %c0_i32, %c0_i32_0 : i32, i32
  }
  func.func @transform_7(%arg0: i32) -> (i32, i32, i32) {
    %c0_i32 = arith.constant 0 : i32
    %c0_i32_0 = arith.constant 0 : i32
    %c0_i32_1 = arith.constant 0 : i32
    %c0_i32_2 = arith.constant 0 : i32
    return %c0_i32, %c0_i32_0, %c0_i32_1 : i32, i32, i32
  }
  func.func @transform_8(%arg0: i32) -> (i32, i32, i32) {
    %c0_i32 = arith.constant 0 : i32
    %c0_i32_0 = arith.constant 0 : i32
    %c0_i32_1 = arith.constant 0 : i32
    %c0_i32_2 = arith.constant 0 : i32
    return %c0_i32, %c0_i32_0, %c0_i32_1 : i32, i32, i32
  }
  func.func @transform_9(%arg0: i32) -> (i32, i32, i32) {
    %c0_i32 = arith.constant 0 : i32
    %c0_i32_0 = arith.constant 0 : i32
    %c0_i32_1 = arith.constant 0 : i32
    %c0_i32_2 = arith.constant 0 : i32
    return %c0_i32, %c0_i32_0, %c0_i32_1 : i32, i32, i32
  }
  func.func @transform_10(%arg0: i32) -> (i32, i32) {
    %c0_i32 = arith.constant 0 : i32
    %c0_i32_0 = arith.constant 0 : i32
    %c0_i32_1 = arith.constant 0 : i32
    return %c0_i32, %c0_i32_0 : i32, i32
  }
  func.func @transform_11(%arg0: i32) -> (i32, i32) {
    %c0_i32 = arith.constant 0 : i32
    %c0_i32_0 = arith.constant 0 : i32
    %c0_i32_1 = arith.constant 0 : i32
    return %c0_i32, %c0_i32_0 : i32, i32
  }
  func.func @transform_12(%arg0: i32) -> (i32, i32) {
    %c0_i32 = arith.constant 0 : i32
    %c0_i32_0 = arith.constant 0 : i32
    %c0_i32_1 = arith.constant 0 : i32
    return %c0_i32, %c0_i32_0 : i32, i32
  }
  func.func @transform_13(%arg0: i32) -> (i32, i32) {
    %c0_i32 = arith.constant 0 : i32
    %c0_i32_0 = arith.constant 0 : i32
    %c0_i32_1 = arith.constant 0 : i32
    return %c0_i32, %c0_i32_0 : i32, i32
  }
  func.func @transform_14(%arg0: i32) -> (i32, i32) {
    %c0_i32 = arith.constant 0 : i32
    %c0_i32_0 = arith.constant 0 : i32
    %c0_i32_1 = arith.constant 0 : i32
    return %c0_i32, %c0_i32_0 : i32, i32
  }
  func.func @transform_15(%arg0: i32) -> (i32, i32) {
    %c0_i32 = arith.constant 0 : i32
    %c0_i32_0 = arith.constant 0 : i32
    %c0_i32_1 = arith.constant 0 : i32
    return %c0_i32, %c0_i32_0 : i32, i32
  }
  func.func @transform_16(%arg0: i32) -> (i32, i32) {
    %c0_i32 = arith.constant 0 : i32
    %c0_i32_0 = arith.constant 0 : i32
    return %arg0, %c0_i32 : i32, i32
  }
}

</mosaic_0001>

<llo_original>
// kernel: lenet5_like3_forward.1
$region0: #{lenet5_like3_forward.1}
  #allocation0 [shape = 'u32[]', space=smem, size = 0x4, offset = 0x4, fixed_abs, tag = 'smem constant byte address 0x4 - core index']
  #allocation1 [shape = 'u32[144,128]{1,0:T(1,128)}', space=vmem, size = 0x12000, scoped, tag = 'internal scratch']
  %s0 = inlined_call_operand.vmem [shape: bf16[512,96], index: 0, kind: input, shape index: {}]
  %s1 = inlined_call_operand.vmem [shape: bf16[5,96,336], index: 1, kind: input, shape index: {}]
  %s2 = inlined_call_operand.vmem [shape: f32[1,336], index: 2, kind: input, shape index: {}]
  %s3 = inlined_call_operand.vmem [shape: bf16[2,112,252], index: 3, kind: input, shape index: {}]
  %s4 = inlined_call_operand.vmem [shape: bf16[2,336,168], index: 4, kind: input, shape index: {}]
  %s5 = inlined_call_operand.vmem [shape: bf16[5,168,320], index: 5, kind: input, shape index: {}]
  %s6 = inlined_call_operand.vmem [shape: f32[1,320], index: 6, kind: input, shape index: {}]
  %s7 = inlined_call_operand.vmem [shape: bf16[2,40,108], index: 7, kind: input, shape index: {}]
  %s8 = inlined_call_operand.vmem [shape: bf16[2,320,160], index: 8, kind: input, shape index: {}]
  %s9 = inlined_call_operand.vmem [shape: bf16[5,160,240], index: 9, kind: input, shape index: {}]
  %s10 = inlined_call_operand.vmem [shape: f32[1,240], index: 10, kind: input, shape index: {}]
  %s11 = inlined_call_operand.vmem [shape: bf16[8,36], index: 11, kind: input, shape index: {}]
  %s12 = inlined_call_operand.vmem [shape: bf16[240,84], index: 12, kind: input, shape index: {}]
  %s13 = inlined_call_operand.vmem [shape: f32[1,84], index: 13, kind: input, shape index: {}]
  %s14 = inlined_call_operand.vmem [shape: bf16[84,128], index: 14, kind: input, shape index: {}]
  %s15 = inlined_call_operand.vmem [shape: f32[1,128], index: 15, kind: input, shape index: {}]
  %s16 = inlined_call_operand.hbm [shape: f32[16,128], index: 16, kind: output, shape index: {}]
  %s17 = sld [smem:[#allocation0]]
  $region97: #{lenet5_like3_forward.1} parent=0
    _
  %s19 = ssub.s32 1, %s17
  %s20 = scalar_select 0, %s19, %s17
  $region1: #{lenet5_like3_forward.1} parent=0
    #allocation2 [shape = 'u8[8192]{0}', space=vmem, size = 0x2000, scoped, tag = 'output window, operand 0']
    #allocation3 [shape = 's32[2]{0}', space=sflag, size = 0x8, scoped, tag = 'scoped memory for lenet5_like3_forward.1']
    %21 = vsyncpa [#allocation3], 0
    %s22 = scalar_lea.sflag [#allocation3], 1
    %23 = vsyncpa %s22, 0
    loop: start=0, step=1, limit=4
    $region2: #{lenet5_like3_forward.1} parent=1 // loop_pre_header
      _
    $region3: #{lenet5_like3_forward.1} parent=1 // loop_header
      %s25 = sphi 0, %s29
      %p26 = scmp.ge.s32.totalorder %s25, 4
      %s35 = sphi 0, %s37
      %s38 = sphi 0, %s35
      %s39 = sphi 0, %s38
      %s55 = sphi 0, %s39
      %s59 = sphi 0, %s59
      %s61 = sphi 0, %s59
      %s62 = sphi 0, %s61
      %s76 = sphi 0, %s62
      %s80 = sphi 0, %s80
      %s82 = sphi 0, %s80
      %s83 = sphi 0, %s82
      %s97 = sphi 0, %s83
      %s101 = sphi 0, %s101
      %s103 = sphi 0, %s101
      %s104 = sphi 0, %s103
      %s118 = sphi 0, %s104
      %s122 = sphi 0, %s122
      %s124 = sphi 0, %s122
      %s125 = sphi 0, %s124
      %s139 = sphi 0, %s125
      %s143 = sphi 0, %s143
      %s145 = sphi 0, %s143
      %s146 = sphi 0, %s145
      %s160 = sphi 0, %s146
      %s164 = sphi 0, %s164
      %s166 = sphi 0, %s164
      %s167 = sphi 0, %s166
      %s181 = sphi 0, %s167
      %s185 = sphi 0, %s185
      %s187 = sphi 0, %s185
      %s188 = sphi 0, %s187
      %s202 = sphi 0, %s188
      %s206 = sphi 0, %s206
      %s208 = sphi 0, %s206
      %s209 = sphi 0, %s208
      %s223 = sphi 0, %s209
      %s227 = sphi 0, %s227
      %s229 = sphi 0, %s227
      %s230 = sphi 0, %s229
      %s244 = sphi 0, %s230
      %s248 = sphi 0, %s248
      %s250 = sphi 0, %s248
      %s251 = sphi 0, %s250
      %s265 = sphi 0, %s251
      %s269 = sphi 0, %s269
      %s271 = sphi 0, %s269
      %s272 = sphi 0, %s271
      %s286 = sphi 0, %s272
      %s290 = sphi 0, %s290
      %s292 = sphi 0, %s290
      %s293 = sphi 0, %s292
      %s307 = sphi 0, %s293
      %s311 = sphi 0, %s311
      %s313 = sphi 0, %s311
      %s314 = sphi 0, %s313
      %s328 = sphi 0, %s314
      %s332 = sphi 0, %s332
      %s334 = sphi 0, %s332
      %s335 = sphi 0, %s334
      %s349 = sphi 0, %s335
      %s353 = sphi 0, %s353
      %s355 = sphi 0, %s353
      %s356 = sphi 0, %s355
      %s370 = sphi 0, %s356
      %s376 = sphi 0, %s378
      %s379 = sphi 0, %s376
      %s380 = sphi 0, %s379
      %s396 = sphi 0, %s380
    $region4: #{lenet5_like3_forward.1} parent=1 // loop_header_branch
      %28 = sbr.rel (%p26) target = $region8
    $region5: #{lenet5_like3_forward.1} parent=1 // loop_body
      %s30 = ssub.s32 %s25, 1
      %s31 = ssub.s32 %s25, 2
      %s32 = sadd.s32 %s25, 1
      %s33 = ssub.s32 %s25, %s32
      %p34 = scmp.eq.s32.totalorder %s33, 0
      %s36 = sadd.s32 %s35, 1
      %s37 = scalar_select %p34, %s35, %s36
      %p40 = pneg %p34
      %p41 = scmp.eq.s32.totalorder %s25, 1
      %p42 = por %p40, %p41
      %p43 = scmp.ne.s32.totalorder %s35, %s38
      %p44 = scmp.eq.s32.totalorder %s25, 0
      %p45 = por %p43, %p44
      %p46 = scmp.ne.s32.totalorder %s35, %s38
      %p47 = scmp.eq.s32.totalorder %s30, 1
      %p48 = por %p46, %p47
      %p49 = scmp.ne.s32.totalorder %s38, %s39
      %p50 = scmp.eq.s32.totalorder %s30, 0
      %p51 = por %p49, %p50
      %p52 = scmp.ne.s32.totalorder %s38, %s39
      %p53 = scmp.eq.s32.totalorder %s31, 1
      %p54 = por %p52, %p53
      %p56 = scmp.ne.s32.totalorder %s39, %s55
      %p57 = scmp.eq.s32.totalorder %s31, 0
      %p58 = por %p56, %p57
      %s60 = sadd.s32 %s59, 1
      %p63 = scmp.eq.s32.totalorder %s25, 1
      %p64 = scmp.ne.s32.totalorder %s59, %s61
      %p65 = scmp.eq.s32.totalorder %s25, 0
      %p66 = por %p64, %p65
      %p67 = scmp.ne.s32.totalorder %s59, %s61
      %p68 = scmp.eq.s32.totalorder %s30, 1
      %p69 = por %p67, %p68
      %p70 = scmp.ne.s32.totalorder %s61, %s62
      %p71 = scmp.eq.s32.totalorder %s30, 0
      %p72 = por %p70, %p71
      %p73 = scmp.ne.s32.totalorder %s61, %s62
      %p74 = scmp.eq.s32.totalorder %s31, 1
      %p75 = por %p73, %p74
      %p77 = scmp.ne.s32.totalorder %s62, %s76
      %p78 = scmp.eq.s32.totalorder %s31, 0
      %p79 = por %p77, %p78
      %s81 = sadd.s32 %s80, 1
      %p84 = scmp.eq.s32.totalorder %s25, 1
      %p85 = scmp.ne.s32.totalorder %s80, %s82
      %p86 = scmp.eq.s32.totalorder %s25, 0
      %p87 = por %p85, %p86
      %p88 = scmp.ne.s32.totalorder %s80, %s82
      %p89 = scmp.eq.s32.totalorder %s30, 1
      %p90 = por %p88, %p89
      %p91 = scmp.ne.s32.totalorder %s82, %s83
      %p92 = scmp.eq.s32.totalorder %s30, 0
      %p93 = por %p91, %p92
      %p94 = scmp.ne.s32.totalorder %s82, %s83
      %p95 = scmp.eq.s32.totalorder %s31, 1
      %p96 = por %p94, %p95
      %p98 = scmp.ne.s32.totalorder %s83, %s97
      %p99 = scmp.eq.s32.totalorder %s31, 0
      %p100 = por %p98, %p99
      %s102 = sadd.s32 %s101, 1
      %p105 = scmp.eq.s32.totalorder %s25, 1
      %p106 = scmp.ne.s32.totalorder %s101, %s103
      %p107 = scmp.eq.s32.totalorder %s25, 0
      %p108 = por %p106, %p107
      %p109 = scmp.ne.s32.totalorder %s101, %s103
      %p110 = scmp.eq.s32.totalorder %s30, 1
      %p111 = por %p109, %p110
      %p112 = scmp.ne.s32.totalorder %s103, %s104
      %p113 = scmp.eq.s32.totalorder %s30, 0
      %p114 = por %p112, %p113
      %p115 = scmp.ne.s32.totalorder %s103, %s104
      %p116 = scmp.eq.s32.totalorder %s31, 1
      %p117 = por %p115, %p116
      %p119 = scmp.ne.s32.totalorder %s104, %s118
      %p120 = scmp.eq.s32.totalorder %s31, 0
      %p121 = por %p119, %p120
      %s123 = sadd.s32 %s122, 1
      %p126 = scmp.eq.s32.totalorder %s25, 1
      %p127 = scmp.ne.s32.totalorder %s122, %s124
      %p128 = scmp.eq.s32.totalorder %s25, 0
      %p129 = por %p127, %p128
      %p130 = scmp.ne.s32.totalorder %s122, %s124
      %p131 = scmp.eq.s32.totalorder %s30, 1
      %p132 = por %p130, %p131
      %p133 = scmp.ne.s32.totalorder %s124, %s125
      %p134 = scmp.eq.s32.totalorder %s30, 0
      %p135 = por %p133, %p134
      %p136 = scmp.ne.s32.totalorder %s124, %s125
      %p137 = scmp.eq.s32.totalorder %s31, 1
      %p138 = por %p136, %p137
      %p140 = scmp.ne.s32.totalorder %s125, %s139
      %p141 = scmp.eq.s32.totalorder %s31, 0
      %p142 = por %p140, %p141
      %s144 = sadd.s32 %s143, 1
      %p147 = scmp.eq.s32.totalorder %s25, 1
      %p148 = scmp.ne.s32.totalorder %s143, %s145
      %p149 = scmp.eq.s32.totalorder %s25, 0
      %p150 = por %p148, %p149
      %p151 = scmp.ne.s32.totalorder %s143, %s145
      %p152 = scmp.eq.s32.totalorder %s30, 1
      %p153 = por %p151, %p152
      %p154 = scmp.ne.s32.totalorder %s145, %s146
      %p155 = scmp.eq.s32.totalorder %s30, 0
      %p156 = por %p154, %p155
      %p157 = scmp.ne.s32.totalorder %s145, %s146
      %p158 = scmp.eq.s32.totalorder %s31, 1
      %p159 = por %p157, %p158
      %p161 = scmp.ne.s32.totalorder %s146, %s160
      %p162 = scmp.eq.s32.totalorder %s31, 0
      %p163 = por %p161, %p162
      %s165 = sadd.s32 %s164, 1
      %p168 = scmp.eq.s32.totalorder %s25, 1
      %p169 = scmp.ne.s32.totalorder %s164, %s166
      %p170 = scmp.eq.s32.totalorder %s25, 0
      %p171 = por %p169, %p170
      %p172 = scmp.ne.s32.totalorder %s164, %s166
      %p173 = scmp.eq.s32.totalorder %s30, 1
      %p174 = por %p172, %p173
      %p175 = scmp.ne.s32.totalorder %s166, %s167
      %p176 = scmp.eq.s32.totalorder %s30, 0
      %p177 = por %p175, %p176
      %p178 = scmp.ne.s32.totalorder %s166, %s167
      %p179 = scmp.eq.s32.totalorder %s31, 1
      %p180 = por %p178, %p179
      %p182 = scmp.ne.s32.totalorder %s167, %s181
      %p183 = scmp.eq.s32.totalorder %s31, 0
      %p184 = por %p182, %p183
      %s186 = sadd.s32 %s185, 1
      %p189 = scmp.eq.s32.totalorder %s25, 1
      %p190 = scmp.ne.s32.totalorder %s185, %s187
      %p191 = scmp.eq.s32.totalorder %s25, 0
      %p192 = por %p190, %p191
      %p193 = scmp.ne.s32.totalorder %s185, %s187
      %p194 = scmp.eq.s32.totalorder %s30, 1
      %p195 = por %p193, %p194
      %p196 = scmp.ne.s32.totalorder %s187, %s188
      %p197 = scmp.eq.s32.totalorder %s30, 0
      %p198 = por %p196, %p197
      %p199 = scmp.ne.s32.totalorder %s187, %s188
      %p200 = scmp.eq.s32.totalorder %s31, 1
      %p201 = por %p199, %p200
      %p203 = scmp.ne.s32.totalorder %s188, %s202
      %p204 = scmp.eq.s32.totalorder %s31, 0
      %p205 = por %p203, %p204
      %s207 = sadd.s32 %s206, 1
      %p210 = scmp.eq.s32.totalorder %s25, 1
      %p211 = scmp.ne.s32.totalorder %s206, %s208
      %p212 = scmp.eq.s32.totalorder %s25, 0
      %p213 = por %p211, %p212
      %p214 = scmp.ne.s32.totalorder %s206, %s208
      %p215 = scmp.eq.s32.totalorder %s30, 1
      %p216 = por %p214, %p215
      %p217 = scmp.ne.s32.totalorder %s208, %s209
      %p218 = scmp.eq.s32.totalorder %s30, 0
      %p219 = por %p217, %p218
      %p220 = scmp.ne.s32.totalorder %s208, %s209
      %p221 = scmp.eq.s32.totalorder %s31, 1
      %p222 = por %p220, %p221
      %p224 = scmp.ne.s32.totalorder %s209, %s223
      %p225 = scmp.eq.s32.totalorder %s31, 0
      %p226 = por %p224, %p225
      %s228 = sadd.s32 %s227, 1
      %p231 = scmp.eq.s32.totalorder %s25, 1
      %p232 = scmp.ne.s32.totalorder %s227, %s229
      %p233 = scmp.eq.s32.totalorder %s25, 0
      %p234 = por %p232, %p233
      %p235 = scmp.ne.s32.totalorder %s227, %s229
      %p236 = scmp.eq.s32.totalorder %s30, 1
      %p237 = por %p235, %p236
      %p238 = scmp.ne.s32.totalorder %s229, %s230
      %p239 = scmp.eq.s32.totalorder %s30, 0
      %p240 = por %p238, %p239
      %p241 = scmp.ne.s32.totalorder %s229, %s230
      %p242 = scmp.eq.s32.totalorder %s31, 1
      %p243 = por %p241, %p242
      %p245 = scmp.ne.s32.totalorder %s230, %s244
      %p246 = scmp.eq.s32.totalorder %s31, 0
      %p247 = por %p245, %p246
      %s249 = sadd.s32 %s248, 1
      %p252 = scmp.eq.s32.totalorder %s25, 1
      %p253 = scmp.ne.s32.totalorder %s248, %s250
      %p254 = scmp.eq.s32.totalorder %s25, 0
      %p255 = por %p253, %p254
      %p256 = scmp.ne.s32.totalorder %s248, %s250
      %p257 = scmp.eq.s32.totalorder %s30, 1
      %p258 = por %p256, %p257
      %p259 = scmp.ne.s32.totalorder %s250, %s251
      %p260 = scmp.eq.s32.totalorder %s30, 0
      %p261 = por %p259, %p260
      %p262 = scmp.ne.s32.totalorder %s250, %s251
      %p263 = scmp.eq.s32.totalorder %s31, 1
      %p264 = por %p262, %p263
      %p266 = scmp.ne.s32.totalorder %s251, %s265
      %p267 = scmp.eq.s32.totalorder %s31, 0
      %p268 = por %p266, %p267
      %s270 = sadd.s32 %s269, 1
      %p273 = scmp.eq.s32.totalorder %s25, 1
      %p274 = scmp.ne.s32.totalorder %s269, %s271
      %p275 = scmp.eq.s32.totalorder %s25, 0
      %p276 = por %p274, %p275
      %p277 = scmp.ne.s32.totalorder %s269, %s271
      %p278 = scmp.eq.s32.totalorder %s30, 1
      %p279 = por %p277, %p278
      %p280 = scmp.ne.s32.totalorder %s271, %s272
      %p281 = scmp.eq.s32.totalorder %s30, 0
      %p282 = por %p280, %p281
      %p283 = scmp.ne.s32.totalorder %s271, %s272
      %p284 = scmp.eq.s32.totalorder %s31, 1
      %p285 = por %p283, %p284
      %p287 = scmp.ne.s32.totalorder %s272, %s286
      %p288 = scmp.eq.s32.totalorder %s31, 0
      %p289 = por %p287, %p288
      %s291 = sadd.s32 %s290, 1
      %p294 = scmp.eq.s32.totalorder %s25, 1
      %p295 = scmp.ne.s32.totalorder %s290, %s292
      %p296 = scmp.eq.s32.totalorder %s25, 0
      %p297 = por %p295, %p296
      %p298 = scmp.ne.s32.totalorder %s290, %s292
      %p299 = scmp.eq.s32.totalorder %s30, 1
      %p300 = por %p298, %p299
      %p301 = scmp.ne.s32.totalorder %s292, %s293
      %p302 = scmp.eq.s32.totalorder %s30, 0
      %p303 = por %p301, %p302
      %p304 = scmp.ne.s32.totalorder %s292, %s293
      %p305 = scmp.eq.s32.totalorder %s31, 1
      %p306 = por %p304, %p305
      %p308 = scmp.ne.s32.totalorder %s293, %s307
      %p309 = scmp.eq.s32.totalorder %s31, 0
      %p310 = por %p308, %p309
      %s312 = sadd.s32 %s311, 1
      %p315 = scmp.eq.s32.totalorder %s25, 1
      %p316 = scmp.ne.s32.totalorder %s311, %s313
      %p317 = scmp.eq.s32.totalorder %s25, 0
      %p318 = por %p316, %p317
      %p319 = scmp.ne.s32.totalorder %s311, %s313
      %p320 = scmp.eq.s32.totalorder %s30, 1
      %p321 = por %p319, %p320
      %p322 = scmp.ne.s32.totalorder %s313, %s314
      %p323 = scmp.eq.s32.totalorder %s30, 0
      %p324 = por %p322, %p323
      %p325 = scmp.ne.s32.totalorder %s313, %s314
      %p326 = scmp.eq.s32.totalorder %s31, 1
      %p327 = por %p325, %p326
      %p329 = scmp.ne.s32.totalorder %s314, %s328
      %p330 = scmp.eq.s32.totalorder %s31, 0
      %p331 = por %p329, %p330
      %s333 = sadd.s32 %s332, 1
      %p336 = scmp.eq.s32.totalorder %s25, 1
      %p337 = scmp.ne.s32.totalorder %s332, %s334
      %p338 = scmp.eq.s32.totalorder %s25, 0
      %p339 = por %p337, %p338
      %p340 = scmp.ne.s32.totalorder %s332, %s334
      %p341 = scmp.eq.s32.totalorder %s30, 1
      %p342 = por %p340, %p341
      %p343 = scmp.ne.s32.totalorder %s334, %s335
      %p344 = scmp.eq.s32.totalorder %s30, 0
      %p345 = por %p343, %p344
      %p346 = scmp.ne.s32.totalorder %s334, %s335
      %p347 = scmp.eq.s32.totalorder %s31, 1
      %p348 = por %p346, %p347
      %p350 = scmp.ne.s32.totalorder %s335, %s349
      %p351 = scmp.eq.s32.totalorder %s31, 0
      %p352 = por %p350, %p351
      %s354 = sadd.s32 %s353, 1
      %p357 = scmp.eq.s32.totalorder %s25, 1
      %p358 = scmp.ne.s32.totalorder %s353, %s355
      %p359 = scmp.eq.s32.totalorder %s25, 0
      %p360 = por %p358, %p359
      %p361 = scmp.ne.s32.totalorder %s353, %s355
      %p362 = scmp.eq.s32.totalorder %s30, 1
      %p363 = por %p361, %p362
      %p364 = scmp.ne.s32.totalorder %s355, %s356
      %p365 = scmp.eq.s32.totalorder %s30, 0
      %p366 = por %p364, %p365
      %p367 = scmp.ne.s32.totalorder %s355, %s356
      %p368 = scmp.eq.s32.totalorder %s31, 1
      %p369 = por %p367, %p368
      %p371 = scmp.ne.s32.totalorder %s356, %s370
      %p372 = scmp.eq.s32.totalorder %s31, 0
      %p373 = por %p371, %p372
      %s374 = ssub.s32 %s25, %s32
      %p375 = scmp.eq.s32.totalorder %s374, 0
      %s377 = sadd.s32 %s376, 1
      %s378 = scalar_select %p375, %s376, %s377
      %p381 = pneg %p375
      %p382 = scmp.eq.s32.totalorder %s25, 1
      %p383 = por %p381, %p382
      %p384 = scmp.ne.s32.totalorder %s376, %s379
      %p385 = scmp.eq.s32.totalorder %s25, 0
      %p386 = por %p384, %p385
      %p387 = scmp.ne.s32.totalorder %s376, %s379
      %p388 = scmp.eq.s32.totalorder %s30, 1
      %p389 = por %p387, %p388
      %p390 = scmp.ne.s32.totalorder %s379, %s380
      %p391 = scmp.eq.s32.totalorder %s30, 0
      %p392 = por %p390, %p391
      %p393 = scmp.ne.s32.totalorder %s379, %s380
      %p394 = scmp.eq.s32.totalorder %s31, 1
      %p395 = por %p393, %p394
      %p397 = scmp.ne.s32.totalorder %s380, %s396
      %p398 = scmp.eq.s32.totalorder %s31, 0
      %p399 = por %p397, %p398
      %p400 = scmp.le.s32.totalorder 1, %s25
      %p401 = scmp.lt.s32.totalorder %s25, 3
      %p402 = pnand %p400, %p401
      %p403 = pneg %p402
      // Predicated region
      $region9: #{lenet5_like3_forward.1} parent=5 // pred_check
        _
      $region10: #{lenet5_like3_forward.1} parent=5 // pred_check_branch
        %405 = sbr.rel (%p402) target = $region12
      $region11: #{lenet5_like3_forward.1} parent=5 // pred_region
        %s406 = ssub.s32 %s25, 1
        // Predicated region
        $region13: #{lenet5_like3_forward.1} parent=11 // pred_check
          %p407 = pneg %p72
        $region14: #{lenet5_like3_forward.1} parent=11 // pred_check_branch
          %409 = sbr.rel (%p407) target = $region16
        $region15: #{lenet5_like3_forward.1} parent=11 // pred_region
          _
        $region16: #{lenet5_like3_forward.1} parent=11 // pred_fallthru
          _
        // Predicated region
        $region17: #{lenet5_like3_forward.1} parent=11 // pred_check
          %p410 = pneg %p93
        $region18: #{lenet5_like3_forward.1} parent=11 // pred_check_branch
          %412 = sbr.rel (%p410) target = $region20
        $region19: #{lenet5_like3_forward.1} parent=11 // pred_region
          _
        $region20: #{lenet5_like3_forward.1} parent=11 // pred_fallthru
          _
        // Predicated region
        $region21: #{lenet5_like3_forward.1} parent=11 // pred_check
          %p413 = pneg %p114
        $region22: #{lenet5_like3_forward.1} parent=11 // pred_check_branch
          %415 = sbr.rel (%p413) target = $region24
        $region23: #{lenet5_like3_forward.1} parent=11 // pred_region
          _
        $region24: #{lenet5_like3_forward.1} parent=11 // pred_fallthru
          _
        // Predicated region
        $region25: #{lenet5_like3_forward.1} parent=11 // pred_check
          %p416 = pneg %p135
        $region26: #{lenet5_like3_forward.1} parent=11 // pred_check_branch
          %418 = sbr.rel (%p416) target = $region28
        $region27: #{lenet5_like3_forward.1} parent=11 // pred_region
          _
        $region28: #{lenet5_like3_forward.1} parent=11 // pred_fallthru
          _
        // Predicated region
        $region29: #{lenet5_like3_forward.1} parent=11 // pred_check
          %p419 = pneg %p156
        $region30: #{lenet5_like3_forward.1} parent=11 // pred_check_branch
          %421 = sbr.rel (%p419) target = $region32
        $region31: #{lenet5_like3_forward.1} parent=11 // pred_region
          _
        $region32: #{lenet5_like3_forward.1} parent=11 // pred_fallthru
          _
        // Predicated region
        $region33: #{lenet5_like3_forward.1} parent=11 // pred_check
          %p422 = pneg %p177
        $region34: #{lenet5_like3_forward.1} parent=11 // pred_check_branch
          %424 = sbr.rel (%p422) target = $region36
        $region35: #{lenet5_like3_forward.1} parent=11 // pred_region
          _
        $region36: #{lenet5_like3_forward.1} parent=11 // pred_fallthru
          _
        // Predicated region
        $region37: #{lenet5_like3_forward.1} parent=11 // pred_check
          %p425 = pneg %p198
        $region38: #{lenet5_like3_forward.1} parent=11 // pred_check_branch
          %427 = sbr.rel (%p425) target = $region40
        $region39: #{lenet5_like3_forward.1} parent=11 // pred_region
          _
        $region40: #{lenet5_like3_forward.1} parent=11 // pred_fallthru
          _
        // Predicated region
        $region41: #{lenet5_like3_forward.1} parent=11 // pred_check
          %p428 = pneg %p219
        $region42: #{lenet5_like3_forward.1} parent=11 // pred_check_branch
          %430 = sbr.rel (%p428) target = $region44
        $region43: #{lenet5_like3_forward.1} parent=11 // pred_region
          _
        $region44: #{lenet5_like3_forward.1} parent=11 // pred_fallthru
          _
        // Predicated region
        $region45: #{lenet5_like3_forward.1} parent=11 // pred_check
          %p431 = pneg %p240
        $region46: #{lenet5_like3_forward.1} parent=11 // pred_check_branch
          %433 = sbr.rel (%p431) target = $region48
        $region47: #{lenet5_like3_forward.1} parent=11 // pred_region
          _
        $region48: #{lenet5_like3_forward.1} parent=11 // pred_fallthru
          _
        // Predicated region
        $region49: #{lenet5_like3_forward.1} parent=11 // pred_check
          %p434 = pneg %p261
        $region50: #{lenet5_like3_forward.1} parent=11 // pred_check_branch
          %436 = sbr.rel (%p434) target = $region52
        $region51: #{lenet5_like3_forward.1} parent=11 // pred_region
          _
        $region52: #{lenet5_like3_forward.1} parent=11 // pred_fallthru
          _
        // Predicated region
        $region53: #{lenet5_like3_forward.1} parent=11 // pred_check
          %p437 = pneg %p282
        $region54: #{lenet5_like3_forward.1} parent=11 // pred_check_branch
          %439 = sbr.rel (%p437) target = $region56
        $region55: #{lenet5_like3_forward.1} parent=11 // pred_region
          _
        $region56: #{lenet5_like3_forward.1} parent=11 // pred_fallthru
          _
        // Predicated region
        $region57: #{lenet5_like3_forward.1} parent=11 // pred_check
          %p440 = pneg %p303
        $region58: #{lenet5_like3_forward.1} parent=11 // pred_check_branch
          %442 = sbr.rel (%p440) target = $region60
        $region59: #{lenet5_like3_forward.1} parent=11 // pred_region
          _
        $region60: #{lenet5_like3_forward.1} parent=11 // pred_fallthru
          _
        // Predicated region
        $region61: #{lenet5_like3_forward.1} parent=11 // pred_check
          %p443 = pneg %p324
        $region62: #{lenet5_like3_forward.1} parent=11 // pred_check_branch
          %445 = sbr.rel (%p443) target = $region64
        $region63: #{lenet5_like3_forward.1} parent=11 // pred_region
          _
        $region64: #{lenet5_like3_forward.1} parent=11 // pred_fallthru
          _
        // Predicated region
        $region65: #{lenet5_like3_forward.1} parent=11 // pred_check
          %p446 = pneg %p345
        $region66: #{lenet5_like3_forward.1} parent=11 // pred_check_branch
          %448 = sbr.rel (%p446) target = $region68
        $region67: #{lenet5_like3_forward.1} parent=11 // pred_region
          _
        $region68: #{lenet5_like3_forward.1} parent=11 // pred_fallthru
          _
        // Predicated region
        $region69: #{lenet5_like3_forward.1} parent=11 // pred_check
          %p449 = pneg %p366
        $region70: #{lenet5_like3_forward.1} parent=11 // pred_check_branch
          %451 = sbr.rel (%p449) target = $region72
        $region71: #{lenet5_like3_forward.1} parent=11 // pred_region
          _
        $region72: #{lenet5_like3_forward.1} parent=11 // pred_fallthru
          _
      $region12: #{lenet5_like3_forward.1} parent=5 // pred_fallthru
        _
      %p452 = scmp.lt.s32.totalorder %s25, 2
      // Predicated region
      $region73: #{lenet5_like3_forward.1} parent=5 // pred_check
        %p453 = pneg %p452
      $region74: #{lenet5_like3_forward.1} parent=5 // pred_check_branch
        %455 = sbr.rel (%p453) target = $region76
      $region75: #{lenet5_like3_forward.1} parent=5 // pred_region
        // Predicated region
        $region77: #{lenet5_like3_forward.1} parent=75 // pred_check
          %p456 = pneg %p45
        $region78: #{lenet5_like3_forward.1} parent=75 // pred_check_branch
          %458 = sbr.rel (%p456) target = $region80
        $region79: #{lenet5_like3_forward.1} parent=75 // pred_region
          %s459 = smul.u32 32, %s25
          %p460 = scmp.lt.s32.totalorder %s459, 63
          %s461 = scalar_select %p460, %s459, 63
          %s462 = smul.addr %s461, 4
          %s463 = scalar_lea.vmem %s0, %s462
          %s464 = smul.u32 32, %s25
        $region80: #{lenet5_like3_forward.1} parent=75 // pred_fallthru
          _
      $region76: #{lenet5_like3_forward.1} parent=5 // pred_fallthru
        _
      %p465 = scmp.le.s32.totalorder 1, %s25
      %p466 = scmp.lt.s32.totalorder %s25, 3
      %p467 = pnand %p465, %p466
      %p468 = pneg %p467
      // Predicated region
      $region81: #{lenet5_like3_forward.1} parent=5 // pred_check
        _
      $region82: #{lenet5_like3_forward.1} parent=5 // pred_check_branch
        %470 = sbr.rel (%p467) target = $region84
      $region83: #{lenet5_like3_forward.1} parent=5 // pred_region
        %s471 = ssub.s32 %s25, 1
        %s472 = smul.u32 32, %s30
        %p473 = scmp.lt.s32.totalorder %s472, 63
        %s474 = scalar_select %p473, %s472, 63
        %s475 = smul.addr %s474, 4
        %s476 = scalar_lea.vmem %s0, %s475
        %p477 = pneg %p51
        %p478 = pneg %p48
        %p479 = pneg %p72
        %p480 = pneg %p69
        %p481 = pneg %p93
        %p482 = pneg %p90
        %p483 = pneg %p114
        %p484 = pneg %p111
        %p485 = pneg %p135
        %p486 = pneg %p132
        %p487 = pneg %p156
        %p488 = pneg %p153
        %p489 = pneg %p177
        %p490 = pneg %p174
        %p491 = pneg %p198
        %p492 = pneg %p195
        %p493 = pneg %p219
        %p494 = pneg %p216
        %p495 = pneg %p240
        %p496 = pneg %p237
        %p497 = pneg %p261
        %p498 = pneg %p258
        %p499 = pneg %p282
        %p500 = pneg %p279
        %p501 = pneg %p303
        %p502 = pneg %p300
        %p503 = pneg %p324
        %p504 = pneg %p321
        %p505 = pneg %p345
        %p506 = pneg %p342
        %p507 = pneg %p366
        %p508 = pneg %p363
        %p509 = pneg %p392
        %p510 = pneg %p389
        %s511 = sand.u32 %s379, 1
        %s512 = scalar_lea.sflag [#allocation3], %s511
        %s513 = sand.u32 %s379, 1
        %s514 = smul.addr %s513, 8
        %s515 = scalar_lea.vmem [#allocation2], %s514
        %s516 = smul.u32 32, %s30
        %p517 = scmp.lt.s32.totalorder %s516, 63
        %s518 = scalar_select %p517, %s516, 63
        %s519 = smul.addr %s518, 4
        %s520 = scalar_lea.vmem %s0, %s519
        %s521 = smul.u32 32, %s30
        %v523 = vld [vmem:[%s520] sm:$0xf]
        %v524 = vld [vmem:[%s520 + $0x4] sm:$0xf]
        %v525 = vld [vmem:[%s520 + $0x8] sm:$0xf]
        %v526 = vld [vmem:[%s520 + $0xc] sm:$0xf]
        %v527 = vld [vmem:[%s520 + $0x10] sm:$0xf]
        %v528 = vld [vmem:[%s520 + $0x14] sm:$0xf]
        %v529 = vld [vmem:[%s520 + $0x18] sm:$0xf]
        %v530 = vld [vmem:[%s520 + $0x1c] sm:$0xf]
        %v531 = vld [vmem:[%s520 + $0x20] sm:$0xf]
        %v532 = vld [vmem:[%s520 + $0x24] sm:$0xf]
        %v533 = vld [vmem:[%s520 + $0x28] sm:$0xf]
        %v534 = vld [vmem:[%s520 + $0x2c] sm:$0xf]
        %v535 = vld [vmem:[%s520 + $0x30] sm:$0xf]
        %v536 = vld [vmem:[%s520 + $0x34] sm:$0xf]
        %v537 = vld [vmem:[%s520 + $0x38] sm:$0xf]
        %v538 = vld [vmem:[%s520 + $0x3c] sm:$0xf]
        %v539 = vld [vmem:[%s520 + $0x40] sm:$0xf]
        %v540 = vld [vmem:[%s520 + $0x44] sm:$0xf]
        %v541 = vld [vmem:[%s520 + $0x48] sm:$0xf]
        %v542 = vld [vmem:[%s520 + $0x4c] sm:$0xf]
        %v543 = vld [vmem:[%s520 + $0x50] sm:$0xf]
        %v544 = vld [vmem:[%s520 + $0x54] sm:$0xf]
        %v545 = vld [vmem:[%s520 + $0x58] sm:$0xf]
        %v546 = vld [vmem:[%s520 + $0x5c] sm:$0xf]
        %v547 = vld [vmem:[%s520 + $0x60] sm:$0xf]
        %v548 = vld [vmem:[%s520 + $0x64] sm:$0xf]
        %v549 = vld [vmem:[%s520 + $0x68] sm:$0xf]
        %v550 = vld [vmem:[%s520 + $0x6c] sm:$0xf]
        %v551 = vld [vmem:[%s520 + $0x70] sm:$0xf]
        %v552 = vld [vmem:[%s520 + $0x74] sm:$0xf]
        %v553 = vld [vmem:[%s520 + $0x78] sm:$0xf]
        %v554 = vld [vmem:[%s520 + $0x7c] sm:$0xf]
        %v555 = vld [vmem:[%s1] sm:$0xff]
        %v556 = vld [vmem:[%s1 + $0x8] sm:$0xf]
        %v557 = vld [vmem:[%s1 + $0xc] sm:$0xff]
        %v558 = vld [vmem:[%s1 + $0x14] sm:$0xf]
        %v559 = vld [vmem:[%s1 + $0x18] sm:$0xff]
        %v560 = vld [vmem:[%s1 + $0x20] sm:$0xf]
        %v561 = vld [vmem:[%s1 + $0x24] sm:$0xff]
        %v562 = vld [vmem:[%s1 + $0x2c] sm:$0xf]
        %v563 = vld [vmem:[%s1 + $0x30] sm:$0xff]
        %v564 = vld [vmem:[%s1 + $0x38] sm:$0xf]
        %v565 = vld [vmem:[%s1 + $0x3c] sm:$0xff]
        %v566 = vld [vmem:[%s1 + $0x44] sm:$0xf]
        %v567 = vld [vmem:[%s1 + $0x48] sm:$0xff]
        %v568 = vld [vmem:[%s1 + $0x50] sm:$0xf]
        %v569 = vld [vmem:[%s1 + $0x54] sm:$0xff]
        %v570 = vld [vmem:[%s1 + $0x5c] sm:$0xf]
        %v571 = vld [vmem:[%s1 + $0x60] sm:$0xff]
        %v572 = vld [vmem:[%s1 + $0x68] sm:$0xf]
        %v573 = vld [vmem:[%s1 + $0x6c] sm:$0xff]
        %v574 = vld [vmem:[%s1 + $0x74] sm:$0xf]
        %v575 = vld [vmem:[%s1 + $0x78] sm:$0xff]
        %v576 = vld [vmem:[%s1 + $0x80] sm:$0xf]
        %v577 = vld [vmem:[%s1 + $0x84] sm:$0xff]
        %v578 = vld [vmem:[%s1 + $0x8c] sm:$0xf]
        %s579 = scalar_lea.vmem %s1, 144
        %v580 = vld [vmem:[%s579] sm:$0xff]
        %v581 = vld [vmem:[%s579 + $0x8] sm:$0xf]
        %v582 = vld [vmem:[%s579 + $0xc] sm:$0xff]
        %v583 = vld [vmem:[%s579 + $0x14] sm:$0xf]
        %v584 = vld [vmem:[%s579 + $0x18] sm:$0xff]
        %v585 = vld [vmem:[%s579 + $0x20] sm:$0xf]
        %v586 = vld [vmem:[%s579 + $0x24] sm:$0xff]
        %v587 = vld [vmem:[%s579 + $0x2c] sm:$0xf]
        %v588 = vld [vmem:[%s579 + $0x30] sm:$0xff]
        %v589 = vld [vmem:[%s579 + $0x38] sm:$0xf]
        %v590 = vld [vmem:[%s579 + $0x3c] sm:$0xff]
        %v591 = vld [vmem:[%s579 + $0x44] sm:$0xf]
        %v592 = vld [vmem:[%s579 + $0x48] sm:$0xff]
        %v593 = vld [vmem:[%s579 + $0x50] sm:$0xf]
        %v594 = vld [vmem:[%s579 + $0x54] sm:$0xff]
        %v595 = vld [vmem:[%s579 + $0x5c] sm:$0xf]
        %v596 = vld [vmem:[%s579 + $0x60] sm:$0xff]
        %v597 = vld [vmem:[%s579 + $0x68] sm:$0xf]
        %v598 = vld [vmem:[%s579 + $0x6c] sm:$0xff]
        %v599 = vld [vmem:[%s579 + $0x74] sm:$0xf]
        %v600 = vld [vmem:[%s579 + $0x78] sm:$0xff]
        %v601 = vld [vmem:[%s579 + $0x80] sm:$0xf]
        %v602 = vld [vmem:[%s579 + $0x84] sm:$0xff]
        %v603 = vld [vmem:[%s579 + $0x8c] sm:$0xf]
        %v636 = vunpack.c.l.b16 %v523
        %v637 = vunpack.c.l.b16 %v524
        %v638 = vunpack.c.l.b16 %v525
        %v639 = vunpack.c.l.b16 %v526
        %v640 = vunpack.c.l.b16 %v527
        %v641 = vunpack.c.l.b16 %v528
        %v642 = vunpack.c.l.b16 %v529
        %v643 = vunpack.c.l.b16 %v530
        %v644 = vunpack.c.l.b16 %v531
        %v645 = vunpack.c.l.b16 %v532
        %v646 = vunpack.c.l.b16 %v533
        %v647 = vunpack.c.l.b16 %v534
        %v648 = vunpack.c.l.b16 %v535
        %v649 = vunpack.c.l.b16 %v536
        %v650 = vunpack.c.l.b16 %v537
        %v651 = vunpack.c.l.b16 %v538
        %v652 = vunpack.c.l.b16 %v539
        %v653 = vunpack.c.l.b16 %v540
        %v654 = vunpack.c.l.b16 %v541
        %v655 = vunpack.c.l.b16 %v542
        %v656 = vunpack.c.l.b16 %v543
        %v657 = vunpack.c.l.b16 %v544
        %v658 = vunpack.c.l.b16 %v545
        %v659 = vunpack.c.l.b16 %v546
        %v660 = vunpack.c.l.b16 %v547
        %v661 = vunpack.c.l.b16 %v548
        %v662 = vunpack.c.l.b16 %v549
        %v663 = vunpack.c.l.b16 %v550
        %v664 = vunpack.c.l.b16 %v551
        %v665 = vunpack.c.l.b16 %v552
        %v666 = vunpack.c.l.b16 %v553
        %v667 = vunpack.c.l.b16 %v554
        %v668 = vpack.c.b16 %v637, %v636
        %v669 = vpack.c.b16 %v639, %v638
        %v670 = vpack.c.b16 %v641, %v640
        %v671 = vpack.c.b16 %v643, %v642
        %v672 = vpack.c.b16 %v645, %v644
        %v673 = vpack.c.b16 %v647, %v646
        %v674 = vpack.c.b16 %v649, %v648
        %v675 = vpack.c.b16 %v651, %v650
        %v676 = vpack.c.b16 %v653, %v652
        %v677 = vpack.c.b16 %v655, %v654
        %v678 = vpack.c.b16 %v657, %v656
        %v679 = vpack.c.b16 %v659, %v658
        %v680 = vpack.c.b16 %v661, %v660
        %v681 = vpack.c.b16 %v663, %v662
        %v682 = vpack.c.b16 %v665, %v664
        %v683 = vpack.c.b16 %v667, %v666
        %vm684 = vsmask.f32 7424
        %v686 = vshrl.u32 %v668, 16
        %v688 = vshll.u32 %v668, 16
        %v690 = vrot.slane %v688, 1
        %v691 = vor.u32 %v686, %v690
        %v693 = vshll.u32 %v669, 16
        %v695 = vrot.slane %v693, 1
        %v696 = vsel %vm684, %v691, %v695
        %v697 = vshrl.u32 %v669, 16
        %v699 = vor.u32 %v697, %v695
        %v701 = vshll.u32 %v670, 16
        %v703 = vrot.slane %v701, 1
        %v704 = vsel %vm684, %v699, %v703
        %v705 = vshrl.u32 %v670, 16
        %v707 = vor.u32 %v705, %v703
        %v709 = vshll.u32 %v671, 16
        %v711 = vrot.slane %v709, 1
        %v712 = vsel %vm684, %v707, %v711
        %v713 = vshrl.u32 %v671, 16
        %v715 = vor.u32 %v713, %v711
        %v717 = vshll.u32 %v672, 16
        %v719 = vrot.slane %v717, 1
        %v720 = vsel %vm684, %v715, %v719
        %v721 = vshrl.u32 %v672, 16
        %v723 = vor.u32 %v721, %v719
        %v725 = vshll.u32 %v673, 16
        %v727 = vrot.slane %v725, 1
        %v728 = vsel %vm684, %v723, %v727
        %v729 = vshrl.u32 %v673, 16
        %v731 = vor.u32 %v729, %v727
        %v733 = vshll.u32 %v674, 16
        %v735 = vrot.slane %v733, 1
        %v736 = vsel %vm684, %v731, %v735
        %v737 = vshrl.u32 %v674, 16
        %v739 = vor.u32 %v737, %v735
        %v741 = vshll.u32 %v675, 16
        %v743 = vrot.slane %v741, 1
        %v744 = vsel %vm684, %v739, %v743
        %v745 = vshrl.u32 %v675, 16
        %v747 = vor.u32 %v745, %v743
        %v749 = vshll.u32 %v676, 16
        %v751 = vrot.slane %v749, 1
        %v752 = vsel %vm684, %v747, %v751
        %v753 = vshrl.u32 %v676, 16
        %v755 = vor.u32 %v753, %v751
        %v757 = vshll.u32 %v677, 16
        %v759 = vrot.slane %v757, 1
        %v760 = vsel %vm684, %v755, %v759
        %v761 = vshrl.u32 %v677, 16
        %v763 = vor.u32 %v761, %v759
        %v765 = vshll.u32 %v678, 16
        %v767 = vrot.slane %v765, 1
        %v768 = vsel %vm684, %v763, %v767
        %v769 = vshrl.u32 %v678, 16
        %v771 = vor.u32 %v769, %v767
        %v773 = vshll.u32 %v679, 16
        %v775 = vrot.slane %v773, 1
        %v776 = vsel %vm684, %v771, %v775
        %v777 = vshrl.u32 %v679, 16
        %v779 = vor.u32 %v777, %v775
        %v781 = vshll.u32 %v680, 16
        %v783 = vrot.slane %v781, 1
        %v784 = vsel %vm684, %v779, %v783
        %v785 = vshrl.u32 %v680, 16
        %v787 = vor.u32 %v785, %v783
        %v789 = vshll.u32 %v681, 16
        %v791 = vrot.slane %v789, 1
        %v792 = vsel %vm684, %v787, %v791
        %v793 = vshrl.u32 %v681, 16
        %v795 = vor.u32 %v793, %v791
        %v797 = vshll.u32 %v682, 16
        %v799 = vrot.slane %v797, 1
        %v800 = vsel %vm684, %v795, %v799
        %v801 = vshrl.u32 %v682, 16
        %v803 = vor.u32 %v801, %v799
        %v805 = vshll.u32 %v683, 16
        %v807 = vrot.slane %v805, 1
        %v808 = vsel %vm684, %v803, %v807
        %v809 = vshrl.u32 %v683, 16
        %v811 = vor.u32 %v809, %v807
        %v836 = vunpack.c.l.b16 %v580
        %v837 = vunpack.c.h.b16 %v580
        %v838 = vunpack.c.l.b16 %v581
        %v839 = vunpack.c.l.b16 %v582
        %v840 = vunpack.c.h.b16 %v582
        %v841 = vunpack.c.l.b16 %v583
        %v842 = vunpack.c.l.b16 %v584
        %v843 = vunpack.c.h.b16 %v584
        %v844 = vunpack.c.l.b16 %v585
        %v845 = vunpack.c.l.b16 %v586
        %v846 = vunpack.c.h.b16 %v586
        %v847 = vunpack.c.l.b16 %v587
        %v848 = vunpack.c.l.b16 %v588
        %v849 = vunpack.c.h.b16 %v588
        %v850 = vunpack.c.l.b16 %v589
        %v851 = vunpack.c.l.b16 %v590
        %v852 = vunpack.c.h.b16 %v590
        %v853 = vunpack.c.l.b16 %v591
        %v854 = vunpack.c.l.b16 %v592
        %v855 = vunpack.c.h.b16 %v592
        %v856 = vunpack.c.l.b16 %v593
        %v857 = vunpack.c.l.b16 %v594
        %v858 = vunpack.c.h.b16 %v594
        %v859 = vunpack.c.l.b16 %v595
        %v860 = vunpack.c.l.b16 %v596
        %v861 = vunpack.c.h.b16 %v596
        %v862 = vunpack.c.l.b16 %v597
        %v863 = vunpack.c.l.b16 %v598
        %v864 = vunpack.c.h.b16 %v598
        %v865 = vunpack.c.l.b16 %v599
        %v866 = vunpack.c.l.b16 %v600
        %v867 = vunpack.c.h.b16 %v600
        %v868 = vunpack.c.l.b16 %v601
        %v869 = vunpack.c.l.b16 %v602
        %v870 = vunpack.c.h.b16 %v602
        %v871 = vunpack.c.l.b16 %v603
        %v872 = vpack.c.b16 %v839, %v836
        %v873 = vpack.c.b16 %v840, %v837
        %v874 = vpack.c.b16 %v841, %v838
        %v875 = vpack.c.b16 %v845, %v842
        %v876 = vpack.c.b16 %v846, %v843
        %v877 = vpack.c.b16 %v847, %v844
        %v878 = vpack.c.b16 %v851, %v848
        %v879 = vpack.c.b16 %v852, %v849
        %v880 = vpack.c.b16 %v853, %v850
        %v881 = vpack.c.b16 %v857, %v854
        %v882 = vpack.c.b16 %v858, %v855
        %v883 = vpack.c.b16 %v859, %v856
        %v884 = vpack.c.b16 %v863, %v860
        %v885 = vpack.c.b16 %v864, %v861
        %v886 = vpack.c.b16 %v865, %v862
        %v887 = vpack.c.b16 %v869, %v866
        %v888 = vpack.c.b16 %v870, %v867
        %v889 = vpack.c.b16 %v871, %v868
        %vm908 = vcmask 785408
        %v910 = vsel %vm908, %v696, 0
        %v913 = vsel %vm908, %v704, 0
        %v916 = vsel %vm908, %v712, 0
        %v919 = vsel %vm908, %v720, 0
        %v922 = vsel %vm908, %v728, 0
        %v925 = vsel %vm908, %v736, 0
        %v928 = vsel %vm908, %v744, 0
        %v931 = vsel %vm908, %v752, 0
        %v934 = vsel %vm908, %v760, 0
        %v937 = vsel %vm908, %v768, 0
        %v940 = vsel %vm908, %v776, 0
        %v943 = vsel %vm908, %v784, 0
        %v946 = vsel %vm908, %v792, 0
        %v949 = vsel %vm908, %v800, 0
        %v952 = vsel %vm908, %v808, 0
        %v955 = vsel %vm908, %v811, 0
        %957 = vmatprep.subr.bf16.mxu0 %v873
        %958 = vmatpush1.bf16.msra.mxu0 %v872
        %959 = vmatprep.subr.bf16.mxu0 %v876
        %960 = vmatpush1.bf16.msra.mxu0 %v875
        %961 = vmatprep.subr.bf16.mxu0 %v879
        %962 = vmatpush1.bf16.msra.mxu0 %v878
        %963 = vmatprep.subr.bf16.mxu0 %v882
        %964 = vmatpush1.bf16.msra.mxu0 %v881
        %965 = vmatprep.subr.bf16.mxu0 %v885
        %966 = vmatpush1.bf16.msra.mxu0 %v884
        %967 = vmatprep.subr.bf16.mxu0 %v888
        %968 = vmatpush1.bf16.msra.mxu0 %v887
        %969 = vmatprep.subr.bf16.mxu0 0
        %970 = vmatpush1.bf16.msra.mxu0 0
        %971 = vmatprep.subr.bf16.mxu0 0
        %972 = vmatpush1.bf16.msra.mxu0 0
        %973 = vmatprep.subr.bf16.mxu0 0
        %974 = vmatpush1.bf16.msra.mxu0 0
        %975 = vmatprep.subr.bf16.mxu0 0
        %976 = vmatpush1.bf16.msra.mxu0 0
        %977 = vmatprep.subr.bf16.mxu0 0
        %978 = vmatpush1.bf16.msra.mxu0 0
        %979 = vmatprep.subr.bf16.mxu0 0
        %980 = vmatpush1.bf16.msra.mxu0 0
        %981 = vmatprep.subr.bf16.mxu0 0
        %982 = vmatpush1.bf16.msra.mxu0 0
        %983 = vmatprep.subr.bf16.mxu0 0
        %984 = vmatpush1.bf16.msra.mxu0 0
        %985 = vmatprep.subr.bf16.mxu0 0
        %986 = vmatpush1.bf16.msra.mxu0 0
        %987 = vmatprep.subr.bf16.mxu0 0
        %988 = vmatpush1.bf16.msra.mxu0 0
        %989 = vmatprep.mubr.bf16.mxu0 0
        %990 = vmatmul.mubr.bf16.gmra.mrb[0].mxu0 %v910
        %v991 = vpop.f32.mrb[0].mxu0
        %v992 = vadd.f32 0.0, %v991
        %v993 = vpop.f32.mrb[0].mxu0
        %v994 = vadd.f32 0.0, %v993
        %v995 = vpop.f32.mrb[0].mxu0
        %v996 = vadd.f32 0.0, %v995
        %v997 = vpop.f32.mrb[0].mxu0
        %v998 = vadd.f32 0.0, %v997
        %999 = vmatprep.mubr.bf16.mxu0 0
        %1000 = vmatmul.mubr.bf16.gmra.mrb[0].mxu0 %v913
        %v1001 = vpop.f32.mrb[0].mxu0
        %v1002 = vadd.f32 0.0, %v1001
        %v1003 = vpop.f32.mrb[0].mxu0
        %v1004 = vadd.f32 0.0, %v1003
        %v1005 = vpop.f32.mrb[0].mxu0
        %v1006 = vadd.f32 0.0, %v1005
        %v1007 = vpop.f32.mrb[0].mxu0
        %v1008 = vadd.f32 0.0, %v1007
        %1009 = vmatprep.mubr.bf16.mxu0 0
        %1010 = vmatmul.mubr.bf16.gmra.mrb[0].mxu0 %v916
        %v1011 = vpop.f32.mrb[0].mxu0
        %v1012 = vadd.f32 0.0, %v1011
        %v1013 = vpop.f32.mrb[0].mxu0
        %v1014 = vadd.f32 0.0, %v1013
        %v1015 = vpop.f32.mrb[0].mxu0
        %v1016 = vadd.f32 0.0, %v1015
        %v1017 = vpop.f32.mrb[0].mxu0
        %v1018 = vadd.f32 0.0, %v1017
        %1019 = vmatprep.mubr.bf16.mxu0 0
        %1020 = vmatmul.mubr.bf16.gmra.mrb[0].mxu0 %v919
        %v1021 = vpop.f32.mrb[0].mxu0
        %v1022 = vadd.f32 0.0, %v1021
        %v1023 = vpop.f32.mrb[0].mxu0
        %v1024 = vadd.f32 0.0, %v1023
        %v1025 = vpop.f32.mrb[0].mxu0
        %v1026 = vadd.f32 0.0, %v1025
        %v1027 = vpop.f32.mrb[0].mxu0
        %v1028 = vadd.f32 0.0, %v1027
        %1029 = vmatprep.mubr.bf16.mxu0 0
        %1030 = vmatmul.mubr.bf16.gmra.mrb[0].mxu0 %v922
        %v1031 = vpop.f32.mrb[0].mxu0
        %v1032 = vadd.f32 0.0, %v1031
        %v1033 = vpop.f32.mrb[0].mxu0
        %v1034 = vadd.f32 0.0, %v1033
        %v1035 = vpop.f32.mrb[0].mxu0
        %v1036 = vadd.f32 0.0, %v1035
        %v1037 = vpop.f32.mrb[0].mxu0
        %v1038 = vadd.f32 0.0, %v1037
        %1039 = vmatprep.mubr.bf16.mxu0 0
        %1040 = vmatmul.mubr.bf16.gmra.mrb[0].mxu0 %v925
        %v1041 = vpop.f32.mrb[0].mxu0
        %v1042 = vadd.f32 0.0, %v1041
        %v1043 = vpop.f32.mrb[0].mxu0
        %v1044 = vadd.f32 0.0, %v1043
        %v1045 = vpop.f32.mrb[0].mxu0
        %v1046 = vadd.f32 0.0, %v1045
        %v1047 = vpop.f32.mrb[0].mxu0
        %v1048 = vadd.f32 0.0, %v1047
        %1049 = vmatprep.mubr.bf16.mxu0 0
        %1050 = vmatmul.mubr.bf16.gmra.mrb[0].mxu0 %v928
        %v1051 = vpop.f32.mrb[0].mxu0
        %v1052 = vadd.f32 0.0, %v1051
        %v1053 = vpop.f32.mrb[0].mxu0
        %v1054 = vadd.f32 0.0, %v1053
        %v1055 = vpop.f32.mrb[0].mxu0
        %v1056 = vadd.f32 0.0, %v1055
        %v1057 = vpop.f32.mrb[0].mxu0
        %v1058 = vadd.f32 0.0, %v1057
        %1059 = vmatprep.mubr.bf16.mxu0 0
        %1060 = vmatmul.mubr.bf16.gmra.mrb[0].mxu0 %v931
        %v1061 = vpop.f32.mrb[0].mxu0
        %v1062 = vadd.f32 0.0, %v1061
        %v1063 = vpop.f32.mrb[0].mxu0
        %v1064 = vadd.f32 0.0, %v1063
        %v1065 = vpop.f32.mrb[0].mxu0
        %v1066 = vadd.f32 0.0, %v1065
        %v1067 = vpop.f32.mrb[0].mxu0
        %v1068 = vadd.f32 0.0, %v1067
        %1069 = vmatprep.mubr.bf16.mxu0 0
        %1070 = vmatmul.mubr.bf16.gmra.mrb[0].mxu0 %v934
        %v1071 = vpop.f32.mrb[0].mxu0
        %v1072 = vadd.f32 0.0, %v1071
        %v1073 = vpop.f32.mrb[0].mxu0
        %v1074 = vadd.f32 0.0, %v1073
        %v1075 = vpop.f32.mrb[0].mxu0
        %v1076 = vadd.f32 0.0, %v1075
        %v1077 = vpop.f32.mrb[0].mxu0
        %v1078 = vadd.f32 0.0, %v1077
        %1079 = vmatprep.mubr.bf16.mxu0 0
        %1080 = vmatmul.mubr.bf16.gmra.mrb[0].mxu0 %v937
        %v1081 = vpop.f32.mrb[0].mxu0
        %v1082 = vadd.f32 0.0, %v1081
        %v1083 = vpop.f32.mrb[0].mxu0
        %v1084 = vadd.f32 0.0, %v1083
        %v1085 = vpop.f32.mrb[0].mxu0
        %v1086 = vadd.f32 0.0, %v1085
        %v1087 = vpop.f32.mrb[0].mxu0
        %v1088 = vadd.f32 0.0, %v1087
        %1089 = vmatprep.mubr.bf16.mxu0 0
        %1090 = vmatmul.mubr.bf16.gmra.mrb[0].mxu0 %v940
        %v1091 = vpop.f32.mrb[0].mxu0
        %v1092 = vadd.f32 0.0, %v1091
        %v1093 = vpop.f32.mrb[0].mxu0
        %v1094 = vadd.f32 0.0, %v1093
        %v1095 = vpop.f32.mrb[0].mxu0
        %v1096 = vadd.f32 0.0, %v1095
        %v1097 = vpop.f32.mrb[0].mxu0
        %v1098 = vadd.f32 0.0, %v1097
        %1099 = vmatprep.mubr.bf16.mxu0 0
        %1100 = vmatmul.mubr.bf16.gmra.mrb[0].mxu0 %v943
        %v1101 = vpop.f32.mrb[0].mxu0
        %v1102 = vadd.f32 0.0, %v1101
        %v1103 = vpop.f32.mrb[0].mxu0
        %v1104 = vadd.f32 0.0, %v1103
        %v1105 = vpop.f32.mrb[0].mxu0
        %v1106 = vadd.f32 0.0, %v1105
        %v1107 = vpop.f32.mrb[0].mxu0
        %v1108 = vadd.f32 0.0, %v1107
        %1109 = vmatprep.mubr.bf16.mxu0 0
        %1110 = vmatmul.mubr.bf16.gmra.mrb[0].mxu0 %v946
        %v1111 = vpop.f32.mrb[0].mxu0
        %v1112 = vadd.f32 0.0, %v1111
        %v1113 = vpop.f32.mrb[0].mxu0
        %v1114 = vadd.f32 0.0, %v1113
        %v1115 = vpop.f32.mrb[0].mxu0
        %v1116 = vadd.f32 0.0, %v1115
        %v1117 = vpop.f32.mrb[0].mxu0
        %v1118 = vadd.f32 0.0, %v1117
        %1119 = vmatprep.mubr.bf16.mxu0 0
        %1120 = vmatmul.mubr.bf16.gmra.mrb[0].mxu0 %v949
        %v1121 = vpop.f32.mrb[0].mxu0
        %v1122 = vadd.f32 0.0, %v1121
        %v1123 = vpop.f32.mrb[0].mxu0
        %v1124 = vadd.f32 0.0, %v1123
        %v1125 = vpop.f32.mrb[0].mxu0
        %v1126 = vadd.f32 0.0, %v1125
        %v1127 = vpop.f32.mrb[0].mxu0
        %v1128 = vadd.f32 0.0, %v1127
        %1129 = vmatprep.mubr.bf16.mxu0 0
        %1130 = vmatmul.mubr.bf16.gmra.mrb[0].mxu0 %v952
        %v1131 = vpop.f32.mrb[0].mxu0
        %v1132 = vadd.f32 0.0, %v1131
        %v1133 = vpop.f32.mrb[0].mxu0
        %v1134 = vadd.f32 0.0, %v1133
        %v1135 = vpop.f32.mrb[0].mxu0
        %v1136 = vadd.f32 0.0, %v1135
        %v1137 = vpop.f32.mrb[0].mxu0
        %v1138 = vadd.f32 0.0, %v1137
        %1139 = vmatprep.mubr.bf16.mxu0 0
        %1140 = vmatmul.mubr.bf16.gmra.mrb[0].mxu0 %v955
        %v1141 = vpop.f32.mrb[0].mxu0
        %v1142 = vadd.f32 0.0, %v1141
        %v1143 = vpop.f32.mrb[0].mxu0
        %v1144 = vadd.f32 0.0, %v1143
        %v1145 = vpop.f32.mrb[0].mxu0
        %v1146 = vadd.f32 0.0, %v1145
        %v1147 = vpop.f32.mrb[0].mxu0
        %v1148 = vadd.f32 0.0, %v1147
        %1149 = vdwg.mxu0
        %1150 = vmatprep.subr.bf16.mxu0 0
        %1151 = vmatpush1.bf16.msra.mxu0 %v874
        %1152 = vmatprep.subr.bf16.mxu0 0
        %1153 = vmatpush1.bf16.msra.mxu0 %v877
        %1154 = vmatprep.subr.bf16.mxu0 0
        %1155 = vmatpush1.bf16.msra.mxu0 %v880
        %1156 = vmatprep.subr.bf16.mxu0 0
        %1157 = vmatpush1.bf16.msra.mxu0 %v883
        %1158 = vmatprep.subr.bf16.mxu0 0
        %1159 = vmatpush1.bf16.msra.mxu0 %v886
        %1160 = vmatprep.subr.bf16.mxu0 0
        %1161 = vmatpush1.bf16.msra.mxu0 %v889
        %1162 = vmatprep.subr.bf16.mxu0 0
        %1163 = vmatpush1.bf16.msra.mxu0 0
        %1164 = vmatprep.subr.bf16.mxu0 0
        %1165 = vmatpush1.bf16.msra.mxu0 0
        %1166 = vmatprep.subr.bf16.mxu0 0
        %1167 = vmatpush1.bf16.msra.mxu0 0
        %1168 = vmatprep.subr.bf16.mxu0 0
        %1169 = vmatpush1.bf16.msra.mxu0 0
        %1170 = vmatprep.subr.bf16.mxu0 0
        %1171 = vmatpush1.bf16.msra.mxu0 0
        %1172 = vmatprep.subr.bf16.mxu0 0
        %1173 = vmatpush1.bf16.msra.mxu0 0
        %1174 = vmatprep.subr.bf16.mxu0 0
        %1175 = vmatpush1.bf16.msra.mxu0 0
        %1176 = vmatprep.subr.bf16.mxu0 0
        %1177 = vmatpush1.bf16.msra.mxu0 0
        %1178 = vmatprep.subr.bf16.mxu0 0
        %1179 = vmatpush1.bf16.msra.mxu0 0
        %1180 = vmatprep.subr.bf16.mxu0 0
        %1181 = vmatpush1.bf16.msra.mxu0 0
        %1182 = vmatprep.mubr.bf16.mxu0 0
        %1183 = vmatmul.mubr.bf16.gmra.mrb[0].mxu0 %v910
        %v1184 = vpop.f32.mrb[0].mxu0
        %v1185 = vadd.f32 0.0, %v1184
        %v1186 = vpop.f32.mrb[0].mxu0
        %v1187 = vpop.f32.mrb[0].mxu0
        %v1188 = vadd.f32 0.0, %v1187
        %v1189 = vpop.f32.mrb[0].mxu0
        %1190 = vmatprep.mubr.bf16.mxu0 0
        %1191 = vmatmul.mubr.bf16.gmra.mrb[0].mxu0 %v913
        %v1192 = vpop.f32.mrb[0].mxu0
        %v1193 = vadd.f32 0.0, %v1192
        %v1194 = vpop.f32.mrb[0].mxu0
        %v1195 = vpop.f32.mrb[0].mxu0
        %v1196 = vadd.f32 0.0, %v1195
        %v1197 = vpop.f32.mrb[0].mxu0
        %1198 = vmatprep.mubr.bf16.mxu0 0
        %1199 = vmatmul.mubr.bf16.gmra.mrb[0].mxu0 %v916
        %v1200 = vpop.f32.mrb[0].mxu0
        %v1201 = vadd.f32 0.0, %v1200
        %v1202 = vpop.f32.mrb[0].mxu0
        %v1203 = vpop.f32.mrb[0].mxu0
        %v1204 = vadd.f32 0.0, %v1203
        %v1205 = vpop.f32.mrb[0].mxu0
        %1206 = vmatprep.mubr.bf16.mxu0 0
        %1207 = vmatmul.mubr.bf16.gmra.mrb[0].mxu0 %v919
        %v1208 = vpop.f32.mrb[0].mxu0
        %v1209 = vadd.f32 0.0, %v1208
        %v1210 = vpop.f32.mrb[0].mxu0
        %v1211 = vpop.f32.mrb[0].mxu0
        %v1212 = vadd.f32 0.0, %v1211
        %v1213 = vpop.f32.mrb[0].mxu0
        %1214 = vmatprep.mubr.bf16.mxu0 0
        %1215 = vmatmul.mubr.bf16.gmra.mrb[0].mxu0 %v922
        %v1216 = vpop.f32.mrb[0].mxu0
        %v1217 = vadd.f32 0.0, %v1216
        %v1218 = vpop.f32.mrb[0].mxu0
        %v1219 = vpop.f32.mrb[0].mxu0
        %v1220 = vadd.f32 0.0, %v1219
        %v1221 = vpop.f32.mrb[0].mxu0
        %1222 = vmatprep.mubr.bf16.mxu0 0
        %1223 = vmatmul.mubr.bf16.gmra.mrb[0].mxu0 %v925
        %v1224 = vpop.f32.mrb[0].mxu0
        %v1225 = vadd.f32 0.0, %v1224
        %v1226 = vpop.f32.mrb[0].mxu0
        %v1227 = vpop.f32.mrb[0].mxu0
        %v1228 = vadd.f32 0.0, %v1227
        %v1229 = vpop.f32.mrb[0].mxu0
        %1230 = vmatprep.mubr.bf16.mxu0 0
        %1231 = vmatmul.mubr.bf16.gmra.mrb[0].mxu0 %v928
        %v1232 = vpop.f32.mrb[0].mxu0
        %v1233 = vadd.f32 0.0, %v1232
        %v1234 = vpop.f32.mrb[0].mxu0
        %v1235 = vpop.f32.mrb[0].mxu0
        %v1236 = vadd.f32 0.0, %v1235
        %v1237 = vpop.f32.mrb[0].mxu0
        %1238 = vmatprep.mubr.bf16.mxu0 0
        %1239 = vmatmul.mubr.bf16.gmra.mrb[0].mxu0 %v931
        %v1240 = vpop.f32.mrb[0].mxu0
        %v1241 = vadd.f32 0.0, %v1240
        %v1242 = vpop.f32.mrb[0].mxu0
        %v1243 = vpop.f32.mrb[0].mxu0
        %v1244 = vadd.f32 0.0, %v1243
        %v1245 = vpop.f32.mrb[0].mxu0
        %1246 = vmatprep.mubr.bf16.mxu0 0
        %1247 = vmatmul.mubr.bf16.gmra.mrb[0].mxu0 %v934
        %v1248 = vpop.f32.mrb[0].mxu0
        %v1249 = vadd.f32 0.0, %v1248
        %v1250 = vpop.f32.mrb[0].mxu0
        %v1251 = vpop.f32.mrb[0].mxu0
        %v1252 = vadd.f32 0.0, %v1251
        %v1253 = vpop.f32.mrb[0].mxu0
        %1254 = vmatprep.mubr.bf16.mxu0 0
        %1255 = vmatmul.mubr.bf16.gmra.mrb[0].mxu0 %v937
        %v1256 = vpop.f32.mrb[0].mxu0
        %v1257 = vadd.f32 0.0, %v1256
        %v1258 = vpop.f32.mrb[0].mxu0
        %v1259 = vpop.f32.mrb[0].mxu0
        %v1260 = vadd.f32 0.0, %v1259
        %v1261 = vpop.f32.mrb[0].mxu0
        %1262 = vmatprep.mubr.bf16.mxu0 0
        %1263 = vmatmul.mubr.bf16.gmra.mrb[0].mxu0 %v940
        %v1264 = vpop.f32.mrb[0].mxu0
        %v1265 = vadd.f32 0.0, %v1264
        %v1266 = vpop.f32.mrb[0].mxu0
        %v1267 = vpop.f32.mrb[0].mxu0
        %v1268 = vadd.f32 0.0, %v1267
        %v1269 = vpop.f32.mrb[0].mxu0
        %1270 = vmatprep.mubr.bf16.mxu0 0
        %1271 = vmatmul.mubr.bf16.gmra.mrb[0].mxu0 %v943
        %v1272 = vpop.f32.mrb[0].mxu0
        %v1273 = vadd.f32 0.0, %v1272
        %v1274 = vpop.f32.mrb[0].mxu0
        %v1275 = vpop.f32.mrb[0].mxu0
        %v1276 = vadd.f32 0.0, %v1275
        %v1277 = vpop.f32.mrb[0].mxu0
        %1278 = vmatprep.mubr.bf16.mxu0 0
        %1279 = vmatmul.mubr.bf16.gmra.mrb[0].mxu0 %v946
        %v1280 = vpop.f32.mrb[0].mxu0
        %v1281 = vadd.f32 0.0, %v1280
        %v1282 = vpop.f32.mrb[0].mxu0
        %v1283 = vpop.f32.mrb[0].mxu0
        %v1284 = vadd.f32 0.0, %v1283
        %v1285 = vpop.f32.mrb[0].mxu0
        %1286 = vmatprep.mubr.bf16.mxu0 0
        %1287 = vmatmul.mubr.bf16.gmra.mrb[0].mxu0 %v949
        %v1288 = vpop.f32.mrb[0].mxu0
        %v1289 = vadd.f32 0.0, %v1288
        %v1290 = vpop.f32.mrb[0].mxu0
        %v1291 = vpop.f32.mrb[0].mxu0
        %v1292 = vadd.f32 0.0, %v1291
        %v1293 = vpop.f32.mrb[0].mxu0
        %1294 = vmatprep.mubr.bf16.mxu0 0
        %1295 = vmatmul.mubr.bf16.gmra.mrb[0].mxu0 %v952
        %v1296 = vpop.f32.mrb[0].mxu0
        %v1297 = vadd.f32 0.0, %v1296
        %v1298 = vpop.f32.mrb[0].mxu0
        %v1299 = vpop.f32.mrb[0].mxu0
        %v1300 = vadd.f32 0.0, %v1299
        %v1301 = vpop.f32.mrb[0].mxu0
        %1302 = vmatprep.mubr.bf16.mxu0 0
        %1303 = vmatmul.mubr.bf16.gmra.mrb[0].mxu0 %v955
        %v1304 = vpop.f32.mrb[0].mxu0
        %v1305 = vadd.f32 0.0, %v1304
        %v1306 = vpop.f32.mrb[0].mxu0
        %v1307 = vpop.f32.mrb[0].mxu0
        %v1308 = vadd.f32 0.0, %v1307
        %v1309 = vpop.f32.mrb[0].mxu0
        %1310 = vdwg.mxu0
        %v1335 = vunpack.c.l.b16 %v555
        %v1336 = vunpack.c.h.b16 %v555
        %v1337 = vunpack.c.l.b16 %v556
        %v1338 = vunpack.c.l.b16 %v557
        %v1339 = vunpack.c.h.b16 %v557
        %v1340 = vunpack.c.l.b16 %v558
        %v1341 = vunpack.c.l.b16 %v559
        %v1342 = vunpack.c.h.b16 %v559
        %v1343 = vunpack.c.l.b16 %v560
        %v1344 = vunpack.c.l.b16 %v561
        %v1345 = vunpack.c.h.b16 %v561
        %v1346 = vunpack.c.l.b16 %v562
        %v1347 = vunpack.c.l.b16 %v563
        %v1348 = vunpack.c.h.b16 %v563
        %v1349 = vunpack.c.l.b16 %v564
        %v1350 = vunpack.c.l.b16 %v565
        %v1351 = vunpack.c.h.b16 %v565
        %v1352 = vunpack.c.l.b16 %v566
        %v1353 = vunpack.c.l.b16 %v567
        %v1354 = vunpack.c.h.b16 %v567
        %v1355 = vunpack.c.l.b16 %v568
        %v1356 = vunpack.c.l.b16 %v569
        %v1357 = vunpack.c.h.b16 %v569
        %v1358 = vunpack.c.l.b16 %v570
        %v1359 = vunpack.c.l.b16 %v571
        %v1360 = vunpack.c.h.b16 %v571
        %v1361 = vunpack.c.l.b16 %v572
        %v1362 = vunpack.c.l.b16 %v573
        %v1363 = vunpack.c.h.b16 %v573
        %v1364 = vunpack.c.l.b16 %v574
        %v1365 = vunpack.c.l.b16 %v575
        %v1366 = vunpack.c.h.b16 %v575
        %v1367 = vunpack.c.l.b16 %v576
        %v1368 = vunpack.c.l.b16 %v577
        %v1369 = vunpack.c.h.b16 %v577
        %v1370 = vunpack.c.l.b16 %v578
        %v1371 = vpack.c.b16 %v1338, %v1335
        %v1372 = vpack.c.b16 %v1339, %v1336
        %v1373 = vpack.c.b16 %v1340, %v1337
        %v1374 = vpack.c.b16 %v1344, %v1341
        %v1375 = vpack.c.b16 %v1345, %v1342
        %v1376 = vpack.c.b16 %v1346, %v1343
        %v1377 = vpack.c.b16 %v1350, %v1347
        %v1378 = vpack.c.b16 %v1351, %v1348
        %v1379 = vpack.c.b16 %v1352, %v1349
        %v1380 = vpack.c.b16 %v1356, %v1353
        %v1381 = vpack.c.b16 %v1357, %v1354
        %v1382 = vpack.c.b16 %v1358, %v1355
        %v1383 = vpack.c.b16 %v1362, %v1359
        %v1384 = vpack.c.b16 %v1363, %v1360
        %v1385 = vpack.c.b16 %v1364, %v1361
        %v1386 = vpack.c.b16 %v1368, %v1365
        %v1387 = vpack.c.b16 %v1369, %v1366
        %v1388 = vpack.c.b16 %v1370, %v1367
        %v1407 = vsel %vm908, %v668, 0
        %v1409 = vsel %vm908, %v669, 0
        %v1411 = vsel %vm908, %v670, 0
        %v1413 = vsel %vm908, %v671, 0
        %v1415 = vsel %vm908, %v672, 0
        %v1417 = vsel %vm908, %v673, 0
        %v1419 = vsel %vm908, %v674, 0
        %v1421 = vsel %vm908, %v675, 0
        %v1423 = vsel %vm908, %v676, 0
        %v1425 = vsel %vm908, %v677, 0
        %v1427 = vsel %vm908, %v678, 0
        %v1429 = vsel %vm908, %v679, 0
        %v1431 = vsel %vm908, %v680, 0
        %v1433 = vsel %vm908, %v681, 0
        %v1435 = vsel %vm908, %v682, 0
        %v1437 = vsel %vm908, %v683, 0
        %1439 = vmatprep.subr.bf16.mxu0 %v1372
        %1440 = vmatpush1.bf16.msra.mxu0 %v1371
        %1441 = vmatprep.subr.bf16.mxu0 %v1375
        %1442 = vmatpush1.bf16.msra.mxu0 %v1374
        %1443 = vmatprep.subr.bf16.mxu0 %v1378
        %1444 = vmatpush1.bf16.msra.mxu0 %v1377
        %1445 = vmatprep.subr.bf16.mxu0 %v1381
        %1446 = vmatpush1.bf16.msra.mxu0 %v1380
        %1447 = vmatprep.subr.bf16.mxu0 %v1384
        %1448 = vmatpush1.bf16.msra.mxu0 %v1383
        %1449 = vmatprep.subr.bf16.mxu0 %v1387
        %1450 = vmatpush1.bf16.msra.mxu0 %v1386
        %1451 = vmatprep.subr.bf16.mxu0 0
        %1452 = vmatpush1.bf16.msra.mxu0 0
        %1453 = vmatprep.subr.bf16.mxu0 0
        %1454 = vmatpush1.bf16.msra.mxu0 0
        %1455 = vmatprep.subr.bf16.mxu0 0
        %1456 = vmatpush1.bf16.msra.mxu0 0
        %1457 = vmatprep.subr.bf16.mxu0 0
        %1458 = vmatpush1.bf16.msra.mxu0 0
        %1459 = vmatprep.subr.bf16.mxu0 0
        %1460 = vmatpush1.bf16.msra.mxu0 0
        %1461 = vmatprep.subr.bf16.mxu0 0
        %1462 = vmatpush1.bf16.msra.mxu0 0
        %1463 = vmatprep.subr.bf16.mxu0 0
        %1464 = vmatpush1.bf16.msra.mxu0 0
        %1465 = vmatprep.subr.bf16.mxu0 0
        %1466 = vmatpush1.bf16.msra.mxu0 0
        %1467 = vmatprep.subr.bf16.mxu0 0
        %1468 = vmatpush1.bf16.msra.mxu0 0
        %1469 = vmatprep.subr.bf16.mxu0 0
        %1470 = vmatpush1.bf16.msra.mxu0 0
        %1471 = vmatprep.mubr.bf16.mxu0 0
        %1472 = vmatmul.mubr.bf16.gmra.mrb[0].mxu0 %v1407
        %v1473 = vpop.f32.mrb[0].mxu0
        %v1474 = vadd.f32 %v992, %v1473
        %v1475 = vpop.f32.mrb[0].mxu0
        %v1476 = vadd.f32 %v994, %v1475
        %v1477 = vpop.f32.mrb[0].mxu0
        %v1478 = vadd.f32 %v996, %v1477
        %v1479 = vpop.f32.mrb[0].mxu0
        %v1480 = vadd.f32 %v998, %v1479
        %1481 = vmatprep.mubr.bf16.mxu0 0
        %1482 = vmatmul.mubr.bf16.gmra.mrb[0].mxu0 %v1409
        %v1483 = vpop.f32.mrb[0].mxu0
        %v1484 = vadd.f32 %v1002, %v1483
        %v1485 = vpop.f32.mrb[0].mxu0
        %v1486 = vadd.f32 %v1004, %v1485
        %v1487 = vpop.f32.mrb[0].mxu0
        %v1488 = vadd.f32 %v1006, %v1487
        %v1489 = vpop.f32.mrb[0].mxu0
        %v1490 = vadd.f32 %v1008, %v1489
        %1491 = vmatprep.mubr.bf16.mxu0 0
        %1492 = vmatmul.mubr.bf16.gmra.mrb[0].mxu0 %v1411
        %v1493 = vpop.f32.mrb[0].mxu0
        %v1494 = vadd.f32 %v1012, %v1493
        %v1495 = vpop.f32.mrb[0].mxu0
        %v1496 = vadd.f32 %v1014, %v1495
        %v1497 = vpop.f32.mrb[0].mxu0
        %v1498 = vadd.f32 %v1016, %v1497
        %v1499 = vpop.f32.mrb[0].mxu0
        %v1500 = vadd.f32 %v1018, %v1499
        %1501 = vmatprep.mubr.bf16.mxu0 0
        %1502 = vmatmul.mubr.bf16.gmra.mrb[0].mxu0 %v1413
        %v1503 = vpop.f32.mrb[0].mxu0
        %v1504 = vadd.f32 %v1022, %v1503
        %v1505 = vpop.f32.mrb[0].mxu0
        %v1506 = vadd.f32 %v1024, %v1505
        %v1507 = vpop.f32.mrb[0].mxu0
        %v1508 = vadd.f32 %v1026, %v1507
        %v1509 = vpop.f32.mrb[0].mxu0
        %v1510 = vadd.f32 %v1028, %v1509
        %1511 = vmatprep.mubr.bf16.mxu0 0
        %1512 = vmatmul.mubr.bf16.gmra.mrb[0].mxu0 %v1415
        %v1513 = vpop.f32.mrb[0].mxu0
        %v1514 = vadd.f32 %v1032, %v1513
        %v1515 = vpop.f32.mrb[0].mxu0
        %v1516 = vadd.f32 %v1034, %v1515
        %v1517 = vpop.f32.mrb[0].mxu0
        %v1518 = vadd.f32 %v1036, %v1517
        %v1519 = vpop.f32.mrb[0].mxu0
        %v1520 = vadd.f32 %v1038, %v1519
        %1521 = vmatprep.mubr.bf16.mxu0 0
        %1522 = vmatmul.mubr.bf16.gmra.mrb[0].mxu0 %v1417
        %v1523 = vpop.f32.mrb[0].mxu0
        %v1524 = vadd.f32 %v1042, %v1523
        %v1525 = vpop.f32.mrb[0].mxu0
        %v1526 = vadd.f32 %v1044, %v1525
        %v1527 = vpop.f32.mrb[0].mxu0
        %v1528 = vadd.f32 %v1046, %v1527
        %v1529 = vpop.f32.mrb[0].mxu0
        %v1530 = vadd.f32 %v1048, %v1529
        %1531 = vmatprep.mubr.bf16.mxu0 0
        %1532 = vmatmul.mubr.bf16.gmra.mrb[0].mxu0 %v1419
        %v1533 = vpop.f32.mrb[0].mxu0
        %v1534 = vadd.f32 %v1052, %v1533
        %v1535 = vpop.f32.mrb[0].mxu0
        %v1536 = vadd.f32 %v1054, %v1535
        %v1537 = vpop.f32.mrb[0].mxu0
        %v1538 = vadd.f32 %v1056, %v1537
        %v1539 = vpop.f32.mrb[0].mxu0
        %v1540 = vadd.f32 %v1058, %v1539
        %1541 = vmatprep.mubr.bf16.mxu0 0
        %1542 = vmatmul.mubr.bf16.gmra.mrb[0].mxu0 %v1421
        %v1543 = vpop.f32.mrb[0].mxu0
        %v1544 = vadd.f32 %v1062, %v1543
        %v1545 = vpop.f32.mrb[0].mxu0
        %v1546 = vadd.f32 %v1064, %v1545
        %v1547 = vpop.f32.mrb[0].mxu0
        %v1548 = vadd.f32 %v1066, %v1547
        %v1549 = vpop.f32.mrb[0].mxu0
        %v1550 = vadd.f32 %v1068, %v1549
        %1551 = vmatprep.mubr.bf16.mxu0 0
        %1552 = vmatmul.mubr.bf16.gmra.mrb[0].mxu0 %v1423
        %v1553 = vpop.f32.mrb[0].mxu0
        %v1554 = vadd.f32 %v1072, %v1553
        %v1555 = vpop.f32.mrb[0].mxu0
        %v1556 = vadd.f32 %v1074, %v1555
        %v1557 = vpop.f32.mrb[0].mxu0
        %v1558 = vadd.f32 %v1076, %v1557
        %v1559 = vpop.f32.mrb[0].mxu0
        %v1560 = vadd.f32 %v1078, %v1559
        %1561 = vmatprep.mubr.bf16.mxu0 0
        %1562 = vmatmul.mubr.bf16.gmra.mrb[0].mxu0 %v1425
        %v1563 = vpop.f32.mrb[0].mxu0
        %v1564 = vadd.f32 %v1082, %v1563
        %v1565 = vpop.f32.mrb[0].mxu0
        %v1566 = vadd.f32 %v1084, %v1565
        %v1567 = vpop.f32.mrb[0].mxu0
        %v1568 = vadd.f32 %v1086, %v1567
        %v1569 = vpop.f32.mrb[0].mxu0
        %v1570 = vadd.f32 %v1088, %v1569
        %1571 = vmatprep.mubr.bf16.mxu0 0
        %1572 = vmatmul.mubr.bf16.gmra.mrb[0].mxu0 %v1427
        %v1573 = vpop.f32.mrb[0].mxu0
        %v1574 = vadd.f32 %v1092, %v1573
        %v1575 = vpop.f32.mrb[0].mxu0
        %v1576 = vadd.f32 %v1094, %v1575
        %v1577 = vpop.f32.mrb[0].mxu0
        %v1578 = vadd.f32 %v1096, %v1577
        %v1579 = vpop.f32.mrb[0].mxu0
        %v1580 = vadd.f32 %v1098, %v1579
        %1581 = vmatprep.mubr.bf16.mxu0 0
        %1582 = vmatmul.mubr.bf16.gmra.mrb[0].mxu0 %v1429
        %v1583 = vpop.f32.mrb[0].mxu0
        %v1584 = vadd.f32 %v1102, %v1583
        %v1585 = vpop.f32.mrb[0].mxu0
        %v1586 = vadd.f32 %v1104, %v1585
        %v1587 = vpop.f32.mrb[0].mxu0
        %v1588 = vadd.f32 %v1106, %v1587
        %v1589 = vpop.f32.mrb[0].mxu0
        %v1590 = vadd.f32 %v1108, %v1589
        %1591 = vmatprep.mubr.bf16.mxu0 0
        %1592 = vmatmul.mubr.bf16.gmra.mrb[0].mxu0 %v1431
        %v1593 = vpop.f32.mrb[0].mxu0
        %v1594 = vadd.f32 %v1112, %v1593
        %v1595 = vpop.f32.mrb[0].mxu0
        %v1596 = vadd.f32 %v1114, %v1595
        %v1597 = vpop.f32.mrb[0].mxu0
        %v1598 = vadd.f32 %v1116, %v1597
        %v1599 = vpop.f32.mrb[0].mxu0
        %v1600 = vadd.f32 %v1118, %v1599
        %1601 = vmatprep.mubr.bf16.mxu0 0
        %1602 = vmatmul.mubr.bf16.gmra.mrb[0].mxu0 %v1433
        %v1603 = vpop.f32.mrb[0].mxu0
        %v1604 = vadd.f32 %v1122, %v1603
        %v1605 = vpop.f32.mrb[0].mxu0
        %v1606 = vadd.f32 %v1124, %v1605
        %v1607 = vpop.f32.mrb[0].mxu0
        %v1608 = vadd.f32 %v1126, %v1607
        %v1609 = vpop.f32.mrb[0].mxu0
        %v1610 = vadd.f32 %v1128, %v1609
        %1611 = vmatprep.mubr.bf16.mxu0 0
        %1612 = vmatmul.mubr.bf16.gmra.mrb[0].mxu0 %v1435
        %v1613 = vpop.f32.mrb[0].mxu0
        %v1614 = vadd.f32 %v1132, %v1613
        %v1615 = vpop.f32.mrb[0].mxu0
        %v1616 = vadd.f32 %v1134, %v1615
        %v1617 = vpop.f32.mrb[0].mxu0
        %v1618 = vadd.f32 %v1136, %v1617
        %v1619 = vpop.f32.mrb[0].mxu0
        %v1620 = vadd.f32 %v1138, %v1619
        %1621 = vmatprep.mubr.bf16.mxu0 0
        %1622 = vmatmul.mubr.bf16.gmra.mrb[0].mxu0 %v1437
        %v1623 = vpop.f32.mrb[0].mxu0
        %v1624 = vadd.f32 %v1142, %v1623
        %v1625 = vpop.f32.mrb[0].mxu0
        %v1626 = vadd.f32 %v1144, %v1625
        %v1627 = vpop.f32.mrb[0].mxu0
        %v1628 = vadd.f32 %v1146, %v1627
        %v1629 = vpop.f32.mrb[0].mxu0
        %v1630 = vadd.f32 %v1148, %v1629
        %1631 = vdwg.mxu0
        %1632 = vmatprep.subr.bf16.mxu0 0
        %1633 = vmatpush1.bf16.msra.mxu0 %v1373
        %1634 = vmatprep.subr.bf16.mxu0 0
        %1635 = vmatpush1.bf16.msra.mxu0 %v1376
        %1636 = vmatprep.subr.bf16.mxu0 0
        %1637 = vmatpush1.bf16.msra.mxu0 %v1379
        %1638 = vmatprep.subr.bf16.mxu0 0
        %1639 = vmatpush1.bf16.msra.mxu0 %v1382
        %1640 = vmatprep.subr.bf16.mxu0 0
        %1641 = vmatpush1.bf16.msra.mxu0 %v1385
        %1642 = vmatprep.subr.bf16.mxu0 0
        %1643 = vmatpush1.bf16.msra.mxu0 %v1388
        %1644 = vmatprep.subr.bf16.mxu0 0
        %1645 = vmatpush1.bf16.msra.mxu0 0
        %1646 = vmatprep.subr.bf16.mxu0 0
        %1647 = vmatpush1.bf16.msra.mxu0 0
        %1648 = vmatprep.subr.bf16.mxu0 0
        %1649 = vmatpush1.bf16.msra.mxu0 0
        %1650 = vmatprep.subr.bf16.mxu0 0
        %1651 = vmatpush1.bf16.msra.mxu0 0
        %1652 = vmatprep.subr.bf16.mxu0 0
        %1653 = vmatpush1.bf16.msra.mxu0 0
        %1654 = vmatprep.subr.bf16.mxu0 0
        %1655 = vmatpush1.bf16.msra.mxu0 0
        %1656 = vmatprep.subr.bf16.mxu0 0
        %1657 = vmatpush1.bf16.msra.mxu0 0
        %1658 = vmatprep.subr.bf16.mxu0 0
        %1659 = vmatpush1.bf16.msra.mxu0 0
        %1660 = vmatprep.subr.bf16.mxu0 0
        %1661 = vmatpush1.bf16.msra.mxu0 0
        %1662 = vmatprep.subr.bf16.mxu0 0
        %1663 = vmatpush1.bf16.msra.mxu0 0
        %1664 = vmatprep.mubr.bf16.mxu0 0
        %1665 = vmatmul.mubr.bf16.gmra.mrb[0].mxu0 %v1407
        %v1666 = vpop.f32.mrb[0].mxu0
        %v1667 = vadd.f32 %v1185, %v1666
        %v1668 = vpop.f32.mrb[0].mxu0
        %v1669 = vpop.f32.mrb[0].mxu0
        %v1670 = vadd.f32 %v1188, %v1669
        %v1671 = vpop.f32.mrb[0].mxu0
        %1672 = vmatprep.mubr.bf16.mxu0 0
        %1673 = vmatmul.mubr.bf16.gmra.mrb[0].mxu0 %v1409
        %v1674 = vpop.f32.mrb[0].mxu0
        %v1675 = vadd.f32 %v1193, %v1674
        %v1676 = vpop.f32.mrb[0].mxu0
        %v1677 = vpop.f32.mrb[0].mxu0
        %v1678 = vadd.f32 %v1196, %v1677
        %v1679 = vpop.f32.mrb[0].mxu0
        %1680 = vmatprep.mubr.bf16.mxu0 0
        %1681 = vmatmul.mubr.bf16.gmra.mrb[0].mxu0 %v1411
        %v1682 = vpop.f32.mrb[0].mxu0
        %v1683 = vadd.f32 %v1201, %v1682
        %v1684 = vpop.f32.mrb[0].mxu0
        %v1685 = vpop.f32.mrb[0].mxu0
        %v1686 = vadd.f32 %v1204, %v1685
        %v1687 = vpop.f32.mrb[0].mxu0
        %1688 = vmatprep.mubr.bf16.mxu0 0
        %1689 = vmatmul.mubr.bf16.gmra.mrb[0].mxu0 %v1413
        %v1690 = vpop.f32.mrb[0].mxu0
        %v1691 = vadd.f32 %v1209, %v1690
        %v1692 = vpop.f32.mrb[0].mxu0
        %v1693 = vpop.f32.mrb[0].mxu0
        %v1694 = vadd.f32 %v1212, %v1693
        %v1695 = vpop.f32.mrb[0].mxu0
        %1696 = vmatprep.mubr.bf16.mxu0 0
        %1697 = vmatmul.mubr.bf16.gmra.mrb[0].mxu0 %v1415
        %v1698 = vpop.f32.mrb[0].mxu0
        %v1699 = vadd.f32 %v1217, %v1698
        %v1700 = vpop.f32.mrb[0].mxu0
        %v1701 = vpop.f32.mrb[0].mxu0
        %v1702 = vadd.f32 %v1220, %v1701
        %v1703 = vpop.f32.mrb[0].mxu0
        %1704 = vmatprep.mubr.bf16.mxu0 0
        %1705 = vmatmul.mubr.bf16.gmra.mrb[0].mxu0 %v1417
        %v1706 = vpop.f32.mrb[0].mxu0
        %v1707 = vadd.f32 %v1225, %v1706
        %v1708 = vpop.f32.mrb[0].mxu0
        %v1709 = vpop.f32.mrb[0].mxu0
        %v1710 = vadd.f32 %v1228, %v1709
        %v1711 = vpop.f32.mrb[0].mxu0
        %1712 = vmatprep.mubr.bf16.mxu0 0
        %1713 = vmatmul.mubr.bf16.gmra.mrb[0].mxu0 %v1419
        %v1714 = vpop.f32.mrb[0].mxu0
        %v1715 = vadd.f32 %v1233, %v1714
        %v1716 = vpop.f32.mrb[0].mxu0
        %v1717 = vpop.f32.mrb[0].mxu0
        %v1718 = vadd.f32 %v1236, %v1717
        %v1719 = vpop.f32.mrb[0].mxu0
        %1720 = vmatprep.mubr.bf16.mxu0 0
        %1721 = vmatmul.mubr.bf16.gmra.mrb[0].mxu0 %v1421
        %v1722 = vpop.f32.mrb[0].mxu0
        %v1723 = vadd.f32 %v1241, %v1722
        %v1724 = vpop.f32.mrb[0].mxu0
        %v1725 = vpop.f32.mrb[0].mxu0
        %v1726 = vadd.f32 %v1244, %v1725
        %v1727 = vpop.f32.mrb[0].mxu0
        %1728 = vmatprep.mubr.bf16.mxu0 0
        %1729 = vmatmul.mubr.bf16.gmra.mrb[0].mxu0 %v1423
        %v1730 = vpop.f32.mrb[0].mxu0
        %v1731 = vadd.f32 %v1249, %v1730
        %v1732 = vpop.f32.mrb[0].mxu0
        %v1733 = vpop.f32.mrb[0].mxu0
        %v1734 = vadd.f32 %v1252, %v1733
        %v1735 = vpop.f32.mrb[0].mxu0
        %1736 = vmatprep.mubr.bf16.mxu0 0
        %1737 = vmatmul.mubr.bf16.gmra.mrb[0].mxu0 %v1425
        %v1738 = vpop.f32.mrb[0].mxu0
        %v1739 = vadd.f32 %v1257, %v1738
        %v1740 = vpop.f32.mrb[0].mxu0
        %v1741 = vpop.f32.mrb[0].mxu0
        %v1742 = vadd.f32 %v1260, %v1741
        %v1743 = vpop.f32.mrb[0].mxu0
        %1744 = vmatprep.mubr.bf16.mxu0 0
        %1745 = vmatmul.mubr.bf16.gmra.mrb[0].mxu0 %v1427
        %v1746 = vpop.f32.mrb[0].mxu0
        %v1747 = vadd.f32 %v1265, %v1746
        %v1748 = vpop.f32.mrb[0].mxu0
        %v1749 = vpop.f32.mrb[0].mxu0
        %v1750 = vadd.f32 %v1268, %v1749
        %v1751 = vpop.f32.mrb[0].mxu0
        %1752 = vmatprep.mubr.bf16.mxu0 0
        %1753 = vmatmul.mubr.bf16.gmra.mrb[0].mxu0 %v1429
        %v1754 = vpop.f32.mrb[0].mxu0
        %v1755 = vadd.f32 %v1273, %v1754
        %v1756 = vpop.f32.mrb[0].mxu0
        %v1757 = vpop.f32.mrb[0].mxu0
        %v1758 = vadd.f32 %v1276, %v1757
        %v1759 = vpop.f32.mrb[0].mxu0
        %1760 = vmatprep.mubr.bf16.mxu0 0
        %1761 = vmatmul.mubr.bf16.gmra.mrb[0].mxu0 %v1431
        %v1762 = vpop.f32.mrb[0].mxu0
        %v1763 = vadd.f32 %v1281, %v1762
        %v1764 = vpop.f32.mrb[0].mxu0
        %v1765 = vpop.f32.mrb[0].mxu0
        %v1766 = vadd.f32 %v1284, %v1765
        %v1767 = vpop.f32.mrb[0].mxu0
        %1768 = vmatprep.mubr.bf16.mxu0 0
        %1769 = vmatmul.mubr.bf16.gmra.mrb[0].mxu0 %v1433
        %v1770 = vpop.f32.mrb[0].mxu0
        %v1771 = vadd.f32 %v1289, %v1770
        %v1772 = vpop.f32.mrb[0].mxu0
        %v1773 = vpop.f32.mrb[0].mxu0
        %v1774 = vadd.f32 %v1292, %v1773
        %v1775 = vpop.f32.mrb[0].mxu0
        %1776 = vmatprep.mubr.bf16.mxu0 0
        %1777 = vmatmul.mubr.bf16.gmra.mrb[0].mxu0 %v1435
        %v1778 = vpop.f32.mrb[0].mxu0
        %v1779 = vadd.f32 %v1297, %v1778
        %v1780 = vpop.f32.mrb[0].mxu0
        %v1781 = vpop.f32.mrb[0].mxu0
        %v1782 = vadd.f32 %v1300, %v1781
        %v1783 = vpop.f32.mrb[0].mxu0
        %1784 = vmatprep.mubr.bf16.mxu0 0
        %1785 = vmatmul.mubr.bf16.gmra.mrb[0].mxu0 %v1437
        %v1786 = vpop.f32.mrb[0].mxu0
        %v1787 = vadd.f32 %v1305, %v1786
        %v1788 = vpop.f32.mrb[0].mxu0
        %v1789 = vpop.f32.mrb[0].mxu0
        %v1790 = vadd.f32 %v1308, %v1789
        %v1791 = vpop.f32.mrb[0].mxu0
        %1792 = vdwg.mxu0
        %s1793 = scalar_lea.vmem %s1, 288
        %v1794 = vld [vmem:[%s1793] sm:$0xff]
        %v1795 = vld [vmem:[%s1793 + $0x8] sm:$0xf]
        %v1796 = vld [vmem:[%s1793 + $0xc] sm:$0xff]
        %v1797 = vld [vmem:[%s1793 + $0x14] sm:$0xf]
        %v1798 = vld [vmem:[%s1793 + $0x18] sm:$0xff]
        %v1799 = vld [vmem:[%s1793 + $0x20] sm:$0xf]
        %v1800 = vld [vmem:[%s1793 + $0x24] sm:$0xff]
        %v1801 = vld [vmem:[%s1793 + $0x2c] sm:$0xf]
        %v1802 = vld [vmem:[%s1793 + $0x30] sm:$0xff]
        %v1803 = vld [vmem:[%s1793 + $0x38] sm:$0xf]
        %v1804 = vld [vmem:[%s1793 + $0x3c] sm:$0xff]
        %v1805 = vld [vmem:[%s1793 + $0x44] sm:$0xf]
        %v1806 = vld [vmem:[%s1793 + $0x48] sm:$0xff]
        %v1807 = vld [vmem:[%s1793 + $0x50] sm:$0xf]
        %v1808 = vld [vmem:[%s1793 + $0x54] sm:$0xff]
        %v1809 = vld [vmem:[%s1793 + $0x5c] sm:$0xf]
        %v1810 = vld [vmem:[%s1793 + $0x60] sm:$0xff]
        %v1811 = vld [vmem:[%s1793 + $0x68] sm:$0xf]
        %v1812 = vld [vmem:[%s1793 + $0x6c] sm:$0xff]
        %v1813 = vld [vmem:[%s1793 + $0x74] sm:$0xf]
        %v1814 = vld [vmem:[%s1793 + $0x78] sm:$0xff]
        %v1815 = vld [vmem:[%s1793 + $0x80] sm:$0xf]
        %v1816 = vld [vmem:[%s1793 + $0x84] sm:$0xff]
        %v1817 = vld [vmem:[%s1793 + $0x8c] sm:$0xf]
        %vm1818 = vcmask 1046528
        %v1819 = vrot.slane %v668, 1
        %v1820 = vrot.slane %v669, 1
        %v1821 = vsel %vm1818, %v1819, %v1820
        %v1822 = vrot.slane %v670, 1
        %v1823 = vsel %vm1818, %v1820, %v1822
        %v1824 = vrot.slane %v671, 1
        %v1825 = vsel %vm1818, %v1822, %v1824
        %v1826 = vrot.slane %v672, 1
        %v1827 = vsel %vm1818, %v1824, %v1826
        %v1828 = vrot.slane %v673, 1
        %v1829 = vsel %vm1818, %v1826, %v1828
        %v1830 = vrot.slane %v674, 1
        %v1831 = vsel %vm1818, %v1828, %v1830
        %v1832 = vrot.slane %v675, 1
        %v1833 = vsel %vm1818, %v1830, %v1832
        %v1834 = vrot.slane %v676, 1
        %v1835 = vsel %vm1818, %v1832, %v1834
        %v1836 = vrot.slane %v677, 1
        %v1837 = vsel %vm1818, %v1834, %v1836
        %v1838 = vrot.slane %v678, 1
        %v1839 = vsel %vm1818, %v1836, %v1838
        %v1840 = vrot.slane %v679, 1
        %v1841 = vsel %vm1818, %v1838, %v1840
        %v1842 = vrot.slane %v680, 1
        %v1843 = vsel %vm1818, %v1840, %v1842
        %v1844 = vrot.slane %v681, 1
        %v1845 = vsel %vm1818, %v1842, %v1844
        %v1846 = vrot.slane %v682, 1
        %v1847 = vsel %vm1818, %v1844, %v1846
        %v1848 = vrot.slane %v683, 1
        %v1849 = vsel %vm1818, %v1846, %v1848
        %v1874 = vunpack.c.l.b16 %v1794
        %v1875 = vunpack.c.h.b16 %v1794
        %v1876 = vunpack.c.l.b16 %v1795
        %v1877 = vunpack.c.l.b16 %v1796
        %v1878 = vunpack.c.h.b16 %v1796
        %v1879 = vunpack.c.l.b16 %v1797
        %v1880 = vunpack.c.l.b16 %v1798
        %v1881 = vunpack.c.h.b16 %v1798
        %v1882 = vunpack.c.l.b16 %v1799
        %v1883 = vunpack.c.l.b16 %v1800
        %v1884 = vunpack.c.h.b16 %v1800
        %v1885 = vunpack.c.l.b16 %v1801
        %v1886 = vunpack.c.l.b16 %v1802
        %v1887 = vunpack.c.h.b16 %v1802
        %v1888 = vunpack.c.l.b16 %v1803
        %v1889 = vunpack.c.l.b16 %v1804
        %v1890 = vunpack.c.h.b16 %v1804
        %v1891 = vunpack.c.l.b16 %v1805
        %v1892 = vunpack.c.l.b16 %v1806
        %v1893 = vunpack.c.h.b16 %v1806
        %v1894 = vunpack.c.l.b16 %v1807
        %v1895 = vunpack.c.l.b16 %v1808
        %v1896 = vunpack.c.h.b16 %v1808
        %v1897 = vunpack.c.l.b16 %v1809
        %v1898 = vunpack.c.l.b16 %v1810
        %v1899 = vunpack.c.h.b16 %v1810
        %v1900 = vunpack.c.l.b16 %v1811
        %v1901 = vunpack.c.l.b16 %v1812
        %v1902 = vunpack.c.h.b16 %v1812
        %v1903 = vunpack.c.l.b16 %v1813
        %v1904 = vunpack.c.l.b16 %v1814
        %v1905 = vunpack.c.h.b16 %v1814
        %v1906 = vunpack.c.l.b16 %v1815
        %v1907 = vunpack.c.l.b16 %v1816
        %v1908 = vunpack.c.h.b16 %v1816
        %v1909 = vunpack.c.l.b16 %v1817
        %v1910 = vpack.c.b16 %v1877, %v1874
        %v1911 = vpack.c.b16 %v1878, %v1875
        %v1912 = vpack.c.b16 %v1879, %v1876
        %v1913 = vpack.c.b16 %v1883, %v1880
        %v1914 = vpack.c.b16 %v1884, %v1881
        %v1915 = vpack.c.b16 %v1885, %v1882
        %v1916 = vpack.c.b16 %v1889, %v1886
        %v1917 = vpack.c.b16 %v1890, %v1887
        %v1918 = vpack.c.b16 %v1891, %v1888
        %v1919 = vpack.c.b16 %v1895, %v1892
        %v1920 = vpack.c.b16 %v1896, %v1893
        %v1921 = vpack.c.b16 %v1897, %v1894
        %v1922 = vpack.c.b16 %v1901, %v1898
        %v1923 = vpack.c.b16 %v1902, %v1899
        %v1924 = vpack.c.b16 %v1903, %v1900
        %v1925 = vpack.c.b16 %v1907, %v1904
        %v1926 = vpack.c.b16 %v1908, %v1905
        %v1927 = vpack.c.b16 %v1909, %v1906
        %v1947 = vsel %vm908, %v1821, 0
        %v1950 = vsel %vm908, %v1823, 0
        %v1953 = vsel %vm908, %v1825, 0
        %v1956 = vsel %vm908, %v1827, 0
        %v1959 = vsel %vm908, %v1829, 0
        %v1962 = vsel %vm908, %v1831, 0
        %v1965 = vsel %vm908, %v1833, 0
        %v1968 = vsel %vm908, %v1835, 0
        %v1971 = vsel %vm908, %v1837, 0
        %v1974 = vsel %vm908, %v1839, 0
        %v1977 = vsel %vm908, %v1841, 0
        %v1980 = vsel %vm908, %v1843, 0
        %v1983 = vsel %vm908, %v1845, 0
        %v1986 = vsel %vm908, %v1847, 0
        %v1989 = vsel %vm908, %v1849, 0
        %v1992 = vsel %vm908, %v1848, 0
        %1994 = vmatprep.subr.bf16.mxu0 %v1911
        %1995 = vmatpush1.bf16.msra.mxu0 %v1910
        %1996 = vmatprep.subr.bf16.mxu0 %v1914
        %1997 = vmatpush1.bf16.msra.mxu0 %v1913
        %1998 = vmatprep.subr.bf16.mxu0 %v1917
        %1999 = vmatpush1.bf16.msra.mxu0 %v1916
        %2000 = vmatprep.subr.bf16.mxu0 %v1920
        %2001 = vmatpush1.bf16.msra.mxu0 %v1919
        %2002 = vmatprep.subr.bf16.mxu0 %v1923
        %2003 = vmatpush1.bf16.msra.mxu0 %v1922
        %2004 = vmatprep.subr.bf16.mxu0 %v1926
        %2005 = vmatpush1.bf16.msra.mxu0 %v1925
        %2006 = vmatprep.subr.bf16.mxu0 0
        %2007 = vmatpush1.bf16.msra.mxu0 0
        %2008 = vmatprep.subr.bf16.mxu0 0
        %2009 = vmatpush1.bf16.msra.mxu0 0
        %2010 = vmatprep.subr.bf16.mxu0 0
        %2011 = vmatpush1.bf16.msra.mxu0 0
        %2012 = vmatprep.subr.bf16.mxu0 0
        %2013 = vmatpush1.bf16.msra.mxu0 0
        %2014 = vmatprep.subr.bf16.mxu0 0
        %2015 = vmatpush1.bf16.msra.mxu0 0
        %2016 = vmatprep.subr.bf16.mxu0 0
        %2017 = vmatpush1.bf16.msra.mxu0 0
        %2018 = vmatprep.subr.bf16.mxu0 0
        %2019 = vmatpush1.bf16.msra.mxu0 0
        %2020 = vmatprep.subr.bf16.mxu0 0
        %2021 = vmatpush1.bf16.msra.mxu0 0
        %2022 = vmatprep.subr.bf16.mxu0 0
        %2023 = vmatpush1.bf16.msra.mxu0 0
        %2024 = vmatprep.subr.bf16.mxu0 0
        %2025 = vmatpush1.bf16.msra.mxu0 0
        %2026 = vmatprep.mubr.bf16.mxu0 0
        %2027 = vmatmul.mubr.bf16.gmra.mrb[0].mxu0 %v1947
        %v2028 = vpop.f32.mrb[0].mxu0
        %v2029 = vadd.f32 0.0, %v2028
        %v2030 = vpop.f32.mrb[0].mxu0
        %v2031 = vadd.f32 0.0, %v2030
        %v2032 = vpop.f32.mrb[0].mxu0
        %v2033 = vadd.f32 0.0, %v2032
        %v2034 = vpop.f32.mrb[0].mxu0
        %v2035 = vadd.f32 0.0, %v2034
        %2036 = vmatprep.mubr.bf16.mxu0 0
        %2037 = vmatmul.mubr.bf16.gmra.mrb[0].mxu0 %v1950
        %v2038 = vpop.f32.mrb[0].mxu0
        %v2039 = vadd.f32 0.0, %v2038
        %v2040 = vpop.f32.mrb[0].mxu0
        %v2041 = vadd.f32 0.0, %v2040
        %v2042 = vpop.f32.mrb[0].mxu0
        %v2043 = vadd.f32 0.0, %v2042
        %v2044 = vpop.f32.mrb[0].mxu0
        %v2045 = vadd.f32 0.0, %v2044
        %2046 = vmatprep.mubr.bf16.mxu0 0
        %2047 = vmatmul.mubr.bf16.gmra.mrb[0].mxu0 %v1953
        %v2048 = vpop.f32.mrb[0].mxu0
        %v2049 = vadd.f32 0.0, %v2048
        %v2050 = vpop.f32.mrb[0].mxu0
        %v2051 = vadd.f32 0.0, %v2050
        %v2052 = vpop.f32.mrb[0].mxu0
        %v2053 = vadd.f32 0.0, %v2052
        %v2054 = vpop.f32.mrb[0].mxu0
        %v2055 = vadd.f32 0.0, %v2054
        %2056 = vmatprep.mubr.bf16.mxu0 0
        %2057 = vmatmul.mubr.bf16.gmra.mrb[0].mxu0 %v1956
        %v2058 = vpop.f32.mrb[0].mxu0
        %v2059 = vadd.f32 0.0, %v2058
        %v2060 = vpop.f32.mrb[0].mxu0
        %v2061 = vadd.f32 0.0, %v2060
        %v2062 = vpop.f32.mrb[0].mxu0
        %v2063 = vadd.f32 0.0, %v2062
        %v2064 = vpop.f32.mrb[0].mxu0
        %v2065 = vadd.f32 0.0, %v2064
        %2066 = vmatprep.mubr.bf16.mxu0 0
        %2067 = vmatmul.mubr.bf16.gmra.mrb[0].mxu0 %v1959
        %v2068 = vpop.f32.mrb[0].mxu0
        %v2069 = vadd.f32 0.0, %v2068
        %v2070 = vpop.f32.mrb[0].mxu0
        %v2071 = vadd.f32 0.0, %v2070
        %v2072 = vpop.f32.mrb[0].mxu0
        %v2073 = vadd.f32 0.0, %v2072
        %v2074 = vpop.f32.mrb[0].mxu0
        %v2075 = vadd.f32 0.0, %v2074
        %2076 = vmatprep.mubr.bf16.mxu0 0
        %2077 = vmatmul.mubr.bf16.gmra.mrb[0].mxu0 %v1962
        %v2078 = vpop.f32.mrb[0].mxu0
        %v2079 = vadd.f32 0.0, %v2078
        %v2080 = vpop.f32.mrb[0].mxu0
        %v2081 = vadd.f32 0.0, %v2080
        %v2082 = vpop.f32.mrb[0].mxu0
        %v2083 = vadd.f32 0.0, %v2082
        %v2084 = vpop.f32.mrb[0].mxu0
        %v2085 = vadd.f32 0.0, %v2084
        %2086 = vmatprep.mubr.bf16.mxu0 0
        %2087 = vmatmul.mubr.bf16.gmra.mrb[0].mxu0 %v1965
        %v2088 = vpop.f32.mrb[0].mxu0
        %v2089 = vadd.f32 0.0, %v2088
        %v2090 = vpop.f32.mrb[0].mxu0
        %v2091 = vadd.f32 0.0, %v2090
        %v2092 = vpop.f32.mrb[0].mxu0
        %v2093 = vadd.f32 0.0, %v2092
        %v2094 = vpop.f32.mrb[0].mxu0
        %v2095 = vadd.f32 0.0, %v2094
        %2096 = vmatprep.mubr.bf16.mxu0 0
        %2097 = vmatmul.mubr.bf16.gmra.mrb[0].mxu0 %v1968
        %v2098 = vpop.f32.mrb[0].mxu0
        %v2099 = vadd.f32 0.0, %v2098
        %v2100 = vpop.f32.mrb[0].mxu0
        %v2101 = vadd.f32 0.0, %v2100
        %v2102 = vpop.f32.mrb[0].mxu0
        %v2103 = vadd.f32 0.0, %v2102
        %v2104 = vpop.f32.mrb[0].mxu0
        %v2105 = vadd.f32 0.0, %v2104
        %2106 = vmatprep.mubr.bf16.mxu0 0
        %2107 = vmatmul.mubr.bf16.gmra.mrb[0].mxu0 %v1971
        %v2108 = vpop.f32.mrb[0].mxu0
        %v2109 = vadd.f32 0.0, %v2108
        %v2110 = vpop.f32.mrb[0].mxu0
        %v2111 = vadd.f32 0.0, %v2110
        %v2112 = vpop.f32.mrb[0].mxu0
        %v2113 = vadd.f32 0.0, %v2112
        %v2114 = vpop.f32.mrb[0].mxu0
        %v2115 = vadd.f32 0.0, %v2114
        %2116 = vmatprep.mubr.bf16.mxu0 0
        %2117 = vmatmul.mubr.bf16.gmra.mrb[0].mxu0 %v1974
        %v2118 = vpop.f32.mrb[0].mxu0
        %v2119 = vadd.f32 0.0, %v2118
        %v2120 = vpop.f32.mrb[0].mxu0
        %v2121 = vadd.f32 0.0, %v2120
        %v2122 = vpop.f32.mrb[0].mxu0
        %v2123 = vadd.f32 0.0, %v2122
        %v2124 = vpop.f32.mrb[0].mxu0
        %v2125 = vadd.f32 0.0, %v2124
        %2126 = vmatprep.mubr.bf16.mxu0 0
        %2127 = vmatmul.mubr.bf16.gmra.mrb[0].mxu0 %v1977
        %v2128 = vpop.f32.mrb[0].mxu0
        %v2129 = vadd.f32 0.0, %v2128
        %v2130 = vpop.f32.mrb[0].mxu0
        %v2131 = vadd.f32 0.0, %v2130
        %v2132 = vpop.f32.mrb[0].mxu0
        %v2133 = vadd.f32 0.0, %v2132
        %v2134 = vpop.f32.mrb[0].mxu0
        %v2135 = vadd.f32 0.0, %v2134
        %2136 = vmatprep.mubr.bf16.mxu0 0
        %2137 = vmatmul.mubr.bf16.gmra.mrb[0].mxu0 %v1980
        %v2138 = vpop.f32.mrb[0].mxu0
        %v2139 = vadd.f32 0.0, %v2138
        %v2140 = vpop.f32.mrb[0].mxu0
        %v2141 = vadd.f32 0.0, %v2140
        %v2142 = vpop.f32.mrb[0].mxu0
        %v2143 = vadd.f32 0.0, %v2142
        %v2144 = vpop.f32.mrb[0].mxu0
        %v2145 = vadd.f32 0.0, %v2144
        %2146 = vmatprep.mubr.bf16.mxu0 0
        %2147 = vmatmul.mubr.bf16.gmra.mrb[0].mxu0 %v1983
        %v2148 = vpop.f32.mrb[0].mxu0
        %v2149 = vadd.f32 0.0, %v2148
        %v2150 = vpop.f32.mrb[0].mxu0
        %v2151 = vadd.f32 0.0, %v2150
        %v2152 = vpop.f32.mrb[0].mxu0
        %v2153 = vadd.f32 0.0, %v2152
        %v2154 = vpop.f32.mrb[0].mxu0
        %v2155 = vadd.f32 0.0, %v2154
        %2156 = vmatprep.mubr.bf16.mxu0 0
        %2157 = vmatmul.mubr.bf16.gmra.mrb[0].mxu0 %v1986
        %v2158 = vpop.f32.mrb[0].mxu0
        %v2159 = vadd.f32 0.0, %v2158
        %v2160 = vpop.f32.mrb[0].mxu0
        %v2161 = vadd.f32 0.0, %v2160
        %v2162 = vpop.f32.mrb[0].mxu0
        %v2163 = vadd.f32 0.0, %v2162
        %v2164 = vpop.f32.mrb[0].mxu0
        %v2165 = vadd.f32 0.0, %v2164
        %2166 = vmatprep.mubr.bf16.mxu0 0
        %2167 = vmatmul.mubr.bf16.gmra.mrb[0].mxu0 %v1989
        %v2168 = vpop.f32.mrb[0].mxu0
        %v2169 = vadd.f32 0.0, %v2168
        %v2170 = vpop.f32.mrb[0].mxu0
        %v2171 = vadd.f32 0.0, %v2170
        %v2172 = vpop.f32.mrb[0].mxu0
        %v2173 = vadd.f32 0.0, %v2172
        %v2174 = vpop.f32.mrb[0].mxu0
        %v2175 = vadd.f32 0.0, %v2174
        %2176 = vmatprep.mubr.bf16.mxu0 0
        %2177 = vmatmul.mubr.bf16.gmra.mrb[0].mxu0 %v1992
        %v2178 = vpop.f32.mrb[0].mxu0
        %v2179 = vadd.f32 0.0, %v2178
        %v2180 = vpop.f32.mrb[0].mxu0
        %v2181 = vadd.f32 0.0, %v2180
        %v2182 = vpop.f32.mrb[0].mxu0
        %v2183 = vadd.f32 0.0, %v2182
        %v2184 = vpop.f32.mrb[0].mxu0
        %v2185 = vadd.f32 0.0, %v2184
        %2186 = vdwg.mxu0
        %2187 = vmatprep.subr.bf16.mxu0 0
        %2188 = vmatpush1.bf16.msra.mxu0 %v1912
        %2189 = vmatprep.subr.bf16.mxu0 0
        %2190 = vmatpush1.bf16.msra.mxu0 %v1915
        %2191 = vmatprep.subr.bf16.mxu0 0
        %2192 = vmatpush1.bf16.msra.mxu0 %v1918
        %2193 = vmatprep.subr.bf16.mxu0 0
        %2194 = vmatpush1.bf16.msra.mxu0 %v1921
        %2195 = vmatprep.subr.bf16.mxu0 0
        %2196 = vmatpush1.bf16.msra.mxu0 %v1924
        %2197 = vmatprep.subr.bf16.mxu0 0
        %2198 = vmatpush1.bf16.msra.mxu0 %v1927
        %2199 = vmatprep.subr.bf16.mxu0 0
        %2200 = vmatpush1.bf16.msra.mxu0 0
        %2201 = vmatprep.subr.bf16.mxu0 0
        %2202 = vmatpush1.bf16.msra.mxu0 0
        %2203 = vmatprep.subr.bf16.mxu0 0
        %2204 = vmatpush1.bf16.msra.mxu0 0
        %2205 = vmatprep.subr.bf16.mxu0 0
        %2206 = vmatpush1.bf16.msra.mxu0 0
        %2207 = vmatprep.subr.bf16.mxu0 0
        %2208 = vmatpush1.bf16.msra.mxu0 0
        %2209 = vmatprep.subr.bf16.mxu0 0
        %2210 = vmatpush1.bf16.msra.mxu0 0
        %2211 = vmatprep.subr.bf16.mxu0 0
        %2212 = vmatpush1.bf16.msra.mxu0 0
        %2213 = vmatprep.subr.bf16.mxu0 0
        %2214 = vmatpush1.bf16.msra.mxu0 0
        %2215 = vmatprep.subr.bf16.mxu0 0
        %2216 = vmatpush1.bf16.msra.mxu0 0
        %2217 = vmatprep.subr.bf16.mxu0 0
        %2218 = vmatpush1.bf16.msra.mxu0 0
        %2219 = vmatprep.mubr.bf16.mxu0 0
        %2220 = vmatmul.mubr.bf16.gmra.mrb[0].mxu0 %v1947
        %v2221 = vpop.f32.mrb[0].mxu0
        %v2222 = vadd.f32 0.0, %v2221
        %v2223 = vpop.f32.mrb[0].mxu0
        %v2224 = vpop.f32.mrb[0].mxu0
        %v2225 = vadd.f32 0.0, %v2224
        %v2226 = vpop.f32.mrb[0].mxu0
        %2227 = vmatprep.mubr.bf16.mxu0 0
        %2228 = vmatmul.mubr.bf16.gmra.mrb[0].mxu0 %v1950
        %v2229 = vpop.f32.mrb[0].mxu0
        %v2230 = vadd.f32 0.0, %v2229
        %v2231 = vpop.f32.mrb[0].mxu0
        %v2232 = vpop.f32.mrb[0].mxu0
        %v2233 = vadd.f32 0.0, %v2232
        %v2234 = vpop.f32.mrb[0].mxu0
        %2235 = vmatprep.mubr.bf16.mxu0 0
        %2236 = vmatmul.mubr.bf16.gmra.mrb[0].mxu0 %v1953
        %v2237 = vpop.f32.mrb[0].mxu0
        %v2238 = vadd.f32 0.0, %v2237
        %v2239 = vpop.f32.mrb[0].mxu0
        %v2240 = vpop.f32.mrb[0].mxu0
        %v2241 = vadd.f32 0.0, %v2240
        %v2242 = vpop.f32.mrb[0].mxu0
        %2243 = vmatprep.mubr.bf16.mxu0 0
        %2244 = vmatmul.mubr.bf16.gmra.mrb[0].mxu0 %v1956
        %v2245 = vpop.f32.mrb[0].mxu0
        %v2246 = vadd.f32 0.0, %v2245
        %v2247 = vpop.f32.mrb[0].mxu0
        %v2248 = vpop.f32.mrb[0].mxu0
        %v2249 = vadd.f32 0.0, %v2248
        %v2250 = vpop.f32.mrb[0].mxu0
        %2251 = vmatprep.mubr.bf16.mxu0 0
        %2252 = vmatmul.mubr.bf16.gmra.mrb[0].mxu0 %v1959
        %v2253 = vpop.f32.mrb[0].mxu0
        %v2254 = vadd.f32 0.0, %v2253
        %v2255 = vpop.f32.mrb[0].mxu0
        %v2256 = vpop.f32.mrb[0].mxu0
        %v2257 = vadd.f32 0.0, %v2256
        %v2258 = vpop.f32.mrb[0].mxu0
        %2259 = vmatprep.mubr.bf16.mxu0 0
        %2260 = vmatmul.mubr.bf16.gmra.mrb[0].mxu0 %v1962
        %v2261 = vpop.f32.mrb[0].mxu0
        %v2262 = vadd.f32 0.0, %v2261
        %v2263 = vpop.f32.mrb[0].mxu0
        %v2264 = vpop.f32.mrb[0].mxu0
        %v2265 = vadd.f32 0.0, %v2264
        %v2266 = vpop.f32.mrb[0].mxu0
        %2267 = vmatprep.mubr.bf16.mxu0 0
        %2268 = vmatmul.mubr.bf16.gmra.mrb[0].mxu0 %v1965
        %v2269 = vpop.f32.mrb[0].mxu0
        %v2270 = vadd.f32 0.0, %v2269
        %v2271 = vpop.f32.mrb[0].mxu0
        %v2272 = vpop.f32.mrb[0].mxu0
        %v2273 = vadd.f32 0.0, %v2272
        %v2274 = vpop.f32.mrb[0].mxu0
        %2275 = vmatprep.mubr.bf16.mxu0 0
        %2276 = vmatmul.mubr.bf16.gmra.mrb[0].mxu0 %v1968
        %v2277 = vpop.f32.mrb[0].mxu0
        %v2278 = vadd.f32 0.0, %v2277
        %v2279 = vpop.f32.mrb[0].mxu0
        %v2280 = vpop.f32.mrb[0].mxu0
        %v2281 = vadd.f32 0.0, %v2280
        %v2282 = vpop.f32.mrb[0].mxu0
        %2283 = vmatprep.mubr.bf16.mxu0 0
        %2284 = vmatmul.mubr.bf16.gmra.mrb[0].mxu0 %v1971
        %v2285 = vpop.f32.mrb[0].mxu0
        %v2286 = vadd.f32 0.0, %v2285
        %v2287 = vpop.f32.mrb[0].mxu0
        %v2288 = vpop.f32.mrb[0].mxu0
        %v2289 = vadd.f32 0.0, %v2288
        %v2290 = vpop.f32.mrb[0].mxu0
        %2291 = vmatprep.mubr.bf16.mxu0 0
        %2292 = vmatmul.mubr.bf16.gmra.mrb[0].mxu0 %v1974
        %v2293 = vpop.f32.mrb[0].mxu0
        %v2294 = vadd.f32 0.0, %v2293
        %v2295 = vpop.f32.mrb[0].mxu0
        %v2296 = vpop.f32.mrb[0].mxu0
        %v2297 = vadd.f32 0.0, %v2296
        %v2298 = vpop.f32.mrb[0].mxu0
        %2299 = vmatprep.mubr.bf16.mxu0 0
        %2300 = vmatmul.mubr.bf16.gmra.mrb[0].mxu0 %v1977
        %v2301 = vpop.f32.mrb[0].mxu0
        %v2302 = vadd.f32 0.0, %v2301
        %v2303 = vpop.f32.mrb[0].mxu0
        %v2304 = vpop.f32.mrb[0].mxu0
        %v2305 = vadd.f32 0.0, %v2304
        %v2306 = vpop.f32.mrb[0].mxu0
        %2307 = vmatprep.mubr.bf16.mxu0 0
        %2308 = vmatmul.mubr.bf16.gmra.mrb[0].mxu0 %v1980
        %v2309 = vpop.f32.mrb[0].mxu0
        %v2310 = vadd.f32 0.0, %v2309
        %v2311 = vpop.f32.mrb[0].mxu0
        %v2312 = vpop.f32.mrb[0].mxu0
        %v2313 = vadd.f32 0.0, %v2312
        %v2314 = vpop.f32.mrb[0].mxu0
        %2315 = vmatprep.mubr.bf16.mxu0 0
        %2316 = vmatmul.mubr.bf16.gmra.mrb[0].mxu0 %v1983
        %v2317 = vpop.f32.mrb[0].mxu0
        %v2318 = vadd.f32 0.0, %v2317
        %v2319 = vpop.f32.mrb[0].mxu0
        %v2320 = vpop.f32.mrb[0].mxu0
        %v2321 = vadd.f32 0.0, %v2320
        %v2322 = vpop.f32.mrb[0].mxu0
        %2323 = vmatprep.mubr.bf16.mxu0 0
        %2324 = vmatmul.mubr.bf16.gmra.mrb[0].mxu0 %v1986
        %v2325 = vpop.f32.mrb[0].mxu0
        %v2326 = vadd.f32 0.0, %v2325
        %v2327 = vpop.f32.mrb[0].mxu0
        %v2328 = vpop.f32.mrb[0].mxu0
        %v2329 = vadd.f32 0.0, %v2328
        %v2330 = vpop.f32.mrb[0].mxu0
        %2331 = vmatprep.mubr.bf16.mxu0 0
        %2332 = vmatmul.mubr.bf16.gmra.mrb[0].mxu0 %v1989
        %v2333 = vpop.f32.mrb[0].mxu0
        %v2334 = vadd.f32 0.0, %v2333
        %v2335 = vpop.f32.mrb[0].mxu0
        %v2336 = vpop.f32.mrb[0].mxu0
        %v2337 = vadd.f32 0.0, %v2336
        %v2338 = vpop.f32.mrb[0].mxu0
        %2339 = vmatprep.mubr.bf16.mxu0 0
        %2340 = vmatmul.mubr.bf16.gmra.mrb[0].mxu0 %v1992
        %v2341 = vpop.f32.mrb[0].mxu0
        %v2342 = vadd.f32 0.0, %v2341
        %v2343 = vpop.f32.mrb[0].mxu0
        %v2344 = vpop.f32.mrb[0].mxu0
        %v2345 = vadd.f32 0.0, %v2344
        %v2346 = vpop.f32.mrb[0].mxu0
        %2347 = vdwg.mxu0
        %v2348 = vadd.f32 %v1474, %v2029
        %v2349 = vadd.f32 %v1476, %v2031
        %v2350 = vadd.f32 %v1667, %v2222
        %v2351 = vadd.f32 %v1478, %v2033
        %v2352 = vadd.f32 %v1480, %v2035
        %v2353 = vadd.f32 %v1670, %v2225
        %v2354 = vadd.f32 %v1484, %v2039
        %v2355 = vadd.f32 %v1486, %v2041
        %v2356 = vadd.f32 %v1675, %v2230
        %v2357 = vadd.f32 %v1488, %v2043
        %v2358 = vadd.f32 %v1490, %v2045
        %v2359 = vadd.f32 %v1678, %v2233
        %v2360 = vadd.f32 %v1494, %v2049
        %v2361 = vadd.f32 %v1496, %v2051
        %v2362 = vadd.f32 %v1683, %v2238
        %v2363 = vadd.f32 %v1498, %v2053
        %v2364 = vadd.f32 %v1500, %v2055
        %v2365 = vadd.f32 %v1686, %v2241
        %v2366 = vadd.f32 %v1504, %v2059
        %v2367 = vadd.f32 %v1506, %v2061
        %v2368 = vadd.f32 %v1691, %v2246
        %v2369 = vadd.f32 %v1508, %v2063
        %v2370 = vadd.f32 %v1510, %v2065
        %v2371 = vadd.f32 %v1694, %v2249
        %v2372 = vadd.f32 %v1514, %v2069
        %v2373 = vadd.f32 %v1516, %v2071
        %v2374 = vadd.f32 %v1699, %v2254
        %v2375 = vadd.f32 %v1518, %v2073
        %v2376 = vadd.f32 %v1520, %v2075
        %v2377 = vadd.f32 %v1702, %v2257
        %v2378 = vadd.f32 %v1524, %v2079
        %v2379 = vadd.f32 %v1526, %v2081
        %v2380 = vadd.f32 %v1707, %v2262
        %v2381 = vadd.f32 %v1528, %v2083
        %v2382 = vadd.f32 %v1530, %v2085
        %v2383 = vadd.f32 %v1710, %v2265
        %v2384 = vadd.f32 %v1534, %v2089
        %v2385 = vadd.f32 %v1536, %v2091
        %v2386 = vadd.f32 %v1715, %v2270
        %v2387 = vadd.f32 %v1538, %v2093
        %v2388 = vadd.f32 %v1540, %v2095
        %v2389 = vadd.f32 %v1718, %v2273
        %v2390 = vadd.f32 %v1544, %v2099
        %v2391 = vadd.f32 %v1546, %v2101
        %v2392 = vadd.f32 %v1723, %v2278
        %v2393 = vadd.f32 %v1548, %v2103
        %v2394 = vadd.f32 %v1550, %v2105
        %v2395 = vadd.f32 %v1726, %v2281
        %v2396 = vadd.f32 %v1554, %v2109
        %v2397 = vadd.f32 %v1556, %v2111
        %v2398 = vadd.f32 %v1731, %v2286
        %v2399 = vadd.f32 %v1558, %v2113
        %v2400 = vadd.f32 %v1560, %v2115
        %v2401 = vadd.f32 %v1734, %v2289
        %v2402 = vadd.f32 %v1564, %v2119
        %v2403 = vadd.f32 %v1566, %v2121
        %v2404 = vadd.f32 %v1739, %v2294
        %v2405 = vadd.f32 %v1568, %v2123
        %v2406 = vadd.f32 %v1570, %v2125
        %v2407 = vadd.f32 %v1742, %v2297
        %v2408 = vadd.f32 %v1574, %v2129
        %v2409 = vadd.f32 %v1576, %v2131
        %v2410 = vadd.f32 %v1747, %v2302
        %v2411 = vadd.f32 %v1578, %v2133
        %v2412 = vadd.f32 %v1580, %v2135
        %v2413 = vadd.f32 %v1750, %v2305
        %v2414 = vadd.f32 %v1584, %v2139
        %v2415 = vadd.f32 %v1586, %v2141
        %v2416 = vadd.f32 %v1755, %v2310
        %v2417 = vadd.f32 %v1588, %v2143
        %v2418 = vadd.f32 %v1590, %v2145
        %v2419 = vadd.f32 %v1758, %v2313
        %v2420 = vadd.f32 %v1594, %v2149
        %v2421 = vadd.f32 %v1596, %v2151
        %v2422 = vadd.f32 %v1763, %v2318
        %v2423 = vadd.f32 %v1598, %v2153
        %v2424 = vadd.f32 %v1600, %v2155
        %v2425 = vadd.f32 %v1766, %v2321
        %v2426 = vadd.f32 %v1604, %v2159
        %v2427 = vadd.f32 %v1606, %v2161
        %v2428 = vadd.f32 %v1771, %v2326
        %v2429 = vadd.f32 %v1608, %v2163
        %v2430 = vadd.f32 %v1610, %v2165
        %v2431 = vadd.f32 %v1774, %v2329
        %v2432 = vadd.f32 %v1614, %v2169
        %v2433 = vadd.f32 %v1616, %v2171
        %v2434 = vadd.f32 %v1779, %v2334
        %v2435 = vadd.f32 %v1618, %v2173
        %v2436 = vadd.f32 %v1620, %v2175
        %v2437 = vadd.f32 %v1782, %v2337
        %v2438 = vadd.f32 %v1624, %v2179
        %v2439 = vadd.f32 %v1626, %v2181
        %v2440 = vadd.f32 %v1787, %v2342
        %v2441 = vadd.f32 %v1628, %v2183
        %v2442 = vadd.f32 %v1630, %v2185
        %v2443 = vadd.f32 %v1790, %v2345
        %s2444 = scalar_lea.vmem %s1, 432
        %v2445 = vld [vmem:[%s2444] sm:$0xff]
        %v2446 = vld [vmem:[%s2444 + $0x8] sm:$0xf]
        %v2447 = vld [vmem:[%s2444 + $0xc] sm:$0xff]
        %v2448 = vld [vmem:[%s2444 + $0x14] sm:$0xf]
        %v2449 = vld [vmem:[%s2444 + $0x18] sm:$0xff]
        %v2450 = vld [vmem:[%s2444 + $0x20] sm:$0xf]
        %v2451 = vld [vmem:[%s2444 + $0x24] sm:$0xff]
        %v2452 = vld [vmem:[%s2444 + $0x2c] sm:$0xf]
        %v2453 = vld [vmem:[%s2444 + $0x30] sm:$0xff]
        %v2454 = vld [vmem:[%s2444 + $0x38] sm:$0xf]
        %v2455 = vld [vmem:[%s2444 + $0x3c] sm:$0xff]
        %v2456 = vld [vmem:[%s2444 + $0x44] sm:$0xf]
        %v2457 = vld [vmem:[%s2444 + $0x48] sm:$0xff]
        %v2458 = vld [vmem:[%s2444 + $0x50] sm:$0xf]
        %v2459 = vld [vmem:[%s2444 + $0x54] sm:$0xff]
        %v2460 = vld [vmem:[%s2444 + $0x5c] sm:$0xf]
        %v2461 = vld [vmem:[%s2444 + $0x60] sm:$0xff]
        %v2462 = vld [vmem:[%s2444 + $0x68] sm:$0xf]
        %v2463 = vld [vmem:[%s2444 + $0x6c] sm:$0xff]
        %v2464 = vld [vmem:[%s2444 + $0x74] sm:$0xf]
        %v2465 = vld [vmem:[%s2444 + $0x78] sm:$0xff]
        %v2466 = vld [vmem:[%s2444 + $0x80] sm:$0xf]
        %v2467 = vld [vmem:[%s2444 + $0x84] sm:$0xff]
        %v2468 = vld [vmem:[%s2444 + $0x8c] sm:$0xf]
        %vm2469 = vsmask.f32 6400
        %v2470 = vrot.slane %v686, 1
        %v2471 = vrot.slane %v688, 2
        %v2472 = vor.u32 %v2470, %v2471
        %v2473 = vrot.slane %v697, 1
        %v2474 = vrot.slane %v693, 2
        %v2475 = vor.u32 %v2473, %v2474
        %v2476 = vsel %vm2469, %v2472, %v2475
        %v2477 = vrot.slane %v705, 1
        %v2478 = vrot.slane %v701, 2
        %v2479 = vor.u32 %v2477, %v2478
        %v2480 = vsel %vm2469, %v2475, %v2479
        %v2481 = vrot.slane %v713, 1
        %v2482 = vrot.slane %v709, 2
        %v2483 = vor.u32 %v2481, %v2482
        %v2484 = vsel %vm2469, %v2479, %v2483
        %v2485 = vrot.slane %v721, 1
        %v2486 = vrot.slane %v717, 2
        %v2487 = vor.u32 %v2485, %v2486
        %v2488 = vsel %vm2469, %v2483, %v2487
        %v2489 = vrot.slane %v729, 1
        %v2490 = vrot.slane %v725, 2
        %v2491 = vor.u32 %v2489, %v2490
        %v2492 = vsel %vm2469, %v2487, %v2491
        %v2493 = vrot.slane %v737, 1
        %v2494 = vrot.slane %v733, 2
        %v2495 = vor.u32 %v2493, %v2494
        %v2496 = vsel %vm2469, %v2491, %v2495
        %v2497 = vrot.slane %v745, 1
        %v2498 = vrot.slane %v741, 2
        %v2499 = vor.u32 %v2497, %v2498
        %v2500 = vsel %vm2469, %v2495, %v2499
        %v2501 = vrot.slane %v753, 1
        %v2502 = vrot.slane %v749, 2
        %v2503 = vor.u32 %v2501, %v2502
        %v2504 = vsel %vm2469, %v2499, %v2503
        %v2505 = vrot.slane %v761, 1
        %v2506 = vrot.slane %v757, 2
        %v2507 = vor.u32 %v2505, %v2506
        %v2508 = vsel %vm2469, %v2503, %v2507
        %v2509 = vrot.slane %v769, 1
        %v2510 = vrot.slane %v765, 2
        %v2511 = vor.u32 %v2509, %v2510
        %v2512 = vsel %vm2469, %v2507, %v2511
        %v2513 = vrot.slane %v777, 1
        %v2514 = vrot.slane %v773, 2
        %v2515 = vor.u32 %v2513, %v2514
        %v2516 = vsel %vm2469, %v2511, %v2515
        %v2517 = vrot.slane %v785, 1
        %v2518 = vrot.slane %v781, 2
        %v2519 = vor.u32 %v2517, %v2518
        %v2520 = vsel %vm2469, %v2515, %v2519
        %v2521 = vrot.slane %v793, 1
        %v2522 = vrot.slane %v789, 2
        %v2523 = vor.u32 %v2521, %v2522
        %v2524 = vsel %vm2469, %v2519, %v2523
        %v2525 = vrot.slane %v801, 1
        %v2526 = vrot.slane %v797, 2
        %v2527 = vor.u32 %v2525, %v2526
        %v2528 = vsel %vm2469, %v2523, %v2527
        %v2529 = vrot.slane %v809, 1
        %v2530 = vrot.slane %v805, 2
        %v2531 = vor.u32 %v2529, %v2530
        %v2532 = vsel %vm2469, %v2527, %v2531
        %v2557 = vunpack.c.l.b16 %v2445
        %v2558 = vunpack.c.h.b16 %v2445
        %v2559 = vunpack.c.l.b16 %v2446
        %v2560 = vunpack.c.l.b16 %v2447
        %v2561 = vunpack.c.h.b16 %v2447
        %v2562 = vunpack.c.l.b16 %v2448
        %v2563 = vunpack.c.l.b16 %v2449
        %v2564 = vunpack.c.h.b16 %v2449
        %v2565 = vunpack.c.l.b16 %v2450
        %v2566 = vunpack.c.l.b16 %v2451
        %v2567 = vunpack.c.h.b16 %v2451
        %v2568 = vunpack.c.l.b16 %v2452
        %v2569 = vunpack.c.l.b16 %v2453
        %v2570 = vunpack.c.h.b16 %v2453
        %v2571 = vunpack.c.l.b16 %v2454
        %v2572 = vunpack.c.l.b16 %v2455
        %v2573 = vunpack.c.h.b16 %v2455
        %v2574 = vunpack.c.l.b16 %v2456
        %v2575 = vunpack.c.l.b16 %v2457
        %v2576 = vunpack.c.h.b16 %v2457
        %v2577 = vunpack.c.l.b16 %v2458
        %v2578 = vunpack.c.l.b16 %v2459
        %v2579 = vunpack.c.h.b16 %v2459
        %v2580 = vunpack.c.l.b16 %v2460
        %v2581 = vunpack.c.l.b16 %v2461
        %v2582 = vunpack.c.h.b16 %v2461
        %v2583 = vunpack.c.l.b16 %v2462
        %v2584 = vunpack.c.l.b16 %v2463
        %v2585 = vunpack.c.h.b16 %v2463
        %v2586 = vunpack.c.l.b16 %v2464
        %v2587 = vunpack.c.l.b16 %v2465
        %v2588 = vunpack.c.h.b16 %v2465
        %v2589 = vunpack.c.l.b16 %v2466
        %v2590 = vunpack.c.l.b16 %v2467
        %v2591 = vunpack.c.h.b16 %v2467
        %v2592 = vunpack.c.l.b16 %v2468
        %v2593 = vpack.c.b16 %v2560, %v2557
        %v2594 = vpack.c.b16 %v2561, %v2558
        %v2595 = vpack.c.b16 %v2562, %v2559
        %v2596 = vpack.c.b16 %v2566, %v2563
        %v2597 = vpack.c.b16 %v2567, %v2564
        %v2598 = vpack.c.b16 %v2568, %v2565
        %v2599 = vpack.c.b16 %v2572, %v2569
        %v2600 = vpack.c.b16 %v2573, %v2570
        %v2601 = vpack.c.b16 %v2574, %v2571
        %v2602 = vpack.c.b16 %v2578, %v2575
        %v2603 = vpack.c.b16 %v2579, %v2576
        %v2604 = vpack.c.b16 %v2580, %v2577
        %v2605 = vpack.c.b16 %v2584, %v2581
        %v2606 = vpack.c.b16 %v2585, %v2582
        %v2607 = vpack.c.b16 %v2586, %v2583
        %v2608 = vpack.c.b16 %v2590, %v2587
        %v2609 = vpack.c.b16 %v2591, %v2588
        %v2610 = vpack.c.b16 %v2592, %v2589
        %v2630 = vsel %vm908, %v2476, 0
        %v2633 = vsel %vm908, %v2480, 0
        %v2636 = vsel %vm908, %v2484, 0
        %v2639 = vsel %vm908, %v2488, 0
        %v2642 = vsel %vm908, %v2492, 0
        %v2645 = vsel %vm908, %v2496, 0
        %v2648 = vsel %vm908, %v2500, 0
        %v2651 = vsel %vm908, %v2504, 0
        %v2654 = vsel %vm908, %v2508, 0
        %v2657 = vsel %vm908, %v2512, 0
        %v2660 = vsel %vm908, %v2516, 0
        %v2663 = vsel %vm908, %v2520, 0
        %v2666 = vsel %vm908, %v2524, 0
        %v2669 = vsel %vm908, %v2528, 0
        %v2672 = vsel %vm908, %v2532, 0
        %v2675 = vsel %vm908, %v2531, 0
        %2677 = vmatprep.subr.bf16.mxu0 %v2594
        %2678 = vmatpush1.bf16.msra.mxu0 %v2593
        %2679 = vmatprep.subr.bf16.mxu0 %v2597
        %2680 = vmatpush1.bf16.msra.mxu0 %v2596
        %2681 = vmatprep.subr.bf16.mxu0 %v2600
        %2682 = vmatpush1.bf16.msra.mxu0 %v2599
        %2683 = vmatprep.subr.bf16.mxu0 %v2603
        %2684 = vmatpush1.bf16.msra.mxu0 %v2602
        %2685 = vmatprep.subr.bf16.mxu0 %v2606
        %2686 = vmatpush1.bf16.msra.mxu0 %v2605
        %2687 = vmatprep.subr.bf16.mxu0 %v2609
        %2688 = vmatpush1.bf16.msra.mxu0 %v2608
        %2689 = vmatprep.subr.bf16.mxu0 0
        %2690 = vmatpush1.bf16.msra.mxu0 0
        %2691 = vmatprep.subr.bf16.mxu0 0
        %2692 = vmatpush1.bf16.msra.mxu0 0
        %2693 = vmatprep.subr.bf16.mxu0 0
        %2694 = vmatpush1.bf16.msra.mxu0 0
        %2695 = vmatprep.subr.bf16.mxu0 0
        %2696 = vmatpush1.bf16.msra.mxu0 0
        %2697 = vmatprep.subr.bf16.mxu0 0
        %2698 = vmatpush1.bf16.msra.mxu0 0
        %2699 = vmatprep.subr.bf16.mxu0 0
        %2700 = vmatpush1.bf16.msra.mxu0 0
        %2701 = vmatprep.subr.bf16.mxu0 0
        %2702 = vmatpush1.bf16.msra.mxu0 0
        %2703 = vmatprep.subr.bf16.mxu0 0
        %2704 = vmatpush1.bf16.msra.mxu0 0
        %2705 = vmatprep.subr.bf16.mxu0 0
        %2706 = vmatpush1.bf16.msra.mxu0 0
        %2707 = vmatprep.subr.bf16.mxu0 0
        %2708 = vmatpush1.bf16.msra.mxu0 0
        %2709 = vmatprep.mubr.bf16.mxu0 0
        %2710 = vmatmul.mubr.bf16.gmra.mrb[0].mxu0 %v2630
        %v2711 = vpop.f32.mrb[0].mxu0
        %v2712 = vadd.f32 0.0, %v2711
        %v2713 = vpop.f32.mrb[0].mxu0
        %v2714 = vadd.f32 0.0, %v2713
        %v2715 = vpop.f32.mrb[0].mxu0
        %v2716 = vadd.f32 0.0, %v2715
        %v2717 = vpop.f32.mrb[0].mxu0
        %v2718 = vadd.f32 0.0, %v2717
        %2719 = vmatprep.mubr.bf16.mxu0 0
        %2720 = vmatmul.mubr.bf16.gmra.mrb[0].mxu0 %v2633
        %v2721 = vpop.f32.mrb[0].mxu0
        %v2722 = vadd.f32 0.0, %v2721
        %v2723 = vpop.f32.mrb[0].mxu0
        %v2724 = vadd.f32 0.0, %v2723
        %v2725 = vpop.f32.mrb[0].mxu0
        %v2726 = vadd.f32 0.0, %v2725
        %v2727 = vpop.f32.mrb[0].mxu0
        %v2728 = vadd.f32 0.0, %v2727
        %2729 = vmatprep.mubr.bf16.mxu0 0
        %2730 = vmatmul.mubr.bf16.gmra.mrb[0].mxu0 %v2636
        %v2731 = vpop.f32.mrb[0].mxu0
        %v2732 = vadd.f32 0.0, %v2731
        %v2733 = vpop.f32.mrb[0].mxu0
        %v2734 = vadd.f32 0.0, %v2733
        %v2735 = vpop.f32.mrb[0].mxu0
        %v2736 = vadd.f32 0.0, %v2735
        %v2737 = vpop.f32.mrb[0].mxu0
        %v2738 = vadd.f32 0.0, %v2737
        %2739 = vmatprep.mubr.bf16.mxu0 0
        %2740 = vmatmul.mubr.bf16.gmra.mrb[0].mxu0 %v2639
        %v2741 = vpop.f32.mrb[0].mxu0
        %v2742 = vadd.f32 0.0, %v2741
        %v2743 = vpop.f32.mrb[0].mxu0
        %v2744 = vadd.f32 0.0, %v2743
        %v2745 = vpop.f32.mrb[0].mxu0
        %v2746 = vadd.f32 0.0, %v2745
        %v2747 = vpop.f32.mrb[0].mxu0
        %v2748 = vadd.f32 0.0, %v2747
        %2749 = vmatprep.mubr.bf16.mxu0 0
        %2750 = vmatmul.mubr.bf16.gmra.mrb[0].mxu0 %v2642
        %v2751 = vpop.f32.mrb[0].mxu0
        %v2752 = vadd.f32 0.0, %v2751
        %v2753 = vpop.f32.mrb[0].mxu0
        %v2754 = vadd.f32 0.0, %v2753
        %v2755 = vpop.f32.mrb[0].mxu0
        %v2756 = vadd.f32 0.0, %v2755
        %v2757 = vpop.f32.mrb[0].mxu0
        %v2758 = vadd.f32 0.0, %v2757
        %2759 = vmatprep.mubr.bf16.mxu0 0
        %2760 = vmatmul.mubr.bf16.gmra.mrb[0].mxu0 %v2645
        %v2761 = vpop.f32.mrb[0].mxu0
        %v2762 = vadd.f32 0.0, %v2761
        %v2763 = vpop.f32.mrb[0].mxu0
        %v2764 = vadd.f32 0.0, %v2763
        %v2765 = vpop.f32.mrb[0].mxu0
        %v2766 = vadd.f32 0.0, %v2765
        %v2767 = vpop.f32.mrb[0].mxu0
        %v2768 = vadd.f32 0.0, %v2767
        %2769 = vmatprep.mubr.bf16.mxu0 0
        %2770 = vmatmul.mubr.bf16.gmra.mrb[0].mxu0 %v2648
        %v2771 = vpop.f32.mrb[0].mxu0
        %v2772 = vadd.f32 0.0, %v2771
        %v2773 = vpop.f32.mrb[0].mxu0
        %v2774 = vadd.f32 0.0, %v2773
        %v2775 = vpop.f32.mrb[0].mxu0
        %v2776 = vadd.f32 0.0, %v2775
        %v2777 = vpop.f32.mrb[0].mxu0
        %v2778 = vadd.f32 0.0, %v2777
        %2779 = vmatprep.mubr.bf16.mxu0 0
        %2780 = vmatmul.mubr.bf16.gmra.mrb[0].mxu0 %v2651
        %v2781 = vpop.f32.mrb[0].mxu0
        %v2782 = vadd.f32 0.0, %v2781
        %v2783 = vpop.f32.mrb[0].mxu0
        %v2784 = vadd.f32 0.0, %v2783
        %v2785 = vpop.f32.mrb[0].mxu0
        %v2786 = vadd.f32 0.0, %v2785
        %v2787 = vpop.f32.mrb[0].mxu0
        %v2788 = vadd.f32 0.0, %v2787
        %2789 = vmatprep.mubr.bf16.mxu0 0
        %2790 = vmatmul.mubr.bf16.gmra.mrb[0].mxu0 %v2654
        %v2791 = vpop.f32.mrb[0].mxu0
        %v2792 = vadd.f32 0.0, %v2791
        %v2793 = vpop.f32.mrb[0].mxu0
        %v2794 = vadd.f32 0.0, %v2793
        %v2795 = vpop.f32.mrb[0].mxu0
        %v2796 = vadd.f32 0.0, %v2795
        %v2797 = vpop.f32.mrb[0].mxu0
        %v2798 = vadd.f32 0.0, %v2797
        %2799 = vmatprep.mubr.bf16.mxu0 0
        %2800 = vmatmul.mubr.bf16.gmra.mrb[0].mxu0 %v2657
        %v2801 = vpop.f32.mrb[0].mxu0
        %v2802 = vadd.f32 0.0, %v2801
        %v2803 = vpop.f32.mrb[0].mxu0
        %v2804 = vadd.f32 0.0, %v2803
        %v2805 = vpop.f32.mrb[0].mxu0
        %v2806 = vadd.f32 0.0, %v2805
        %v2807 = vpop.f32.mrb[0].mxu0
        %v2808 = vadd.f32 0.0, %v2807
        %2809 = vmatprep.mubr.bf16.mxu0 0
        %2810 = vmatmul.mubr.bf16.gmra.mrb[0].mxu0 %v2660
        %v2811 = vpop.f32.mrb[0].mxu0
        %v2812 = vadd.f32 0.0, %v2811
        %v2813 = vpop.f32.mrb[0].mxu0
        %v2814 = vadd.f32 0.0, %v2813
        %v2815 = vpop.f32.mrb[0].mxu0
        %v2816 = vadd.f32 0.0, %v2815
        %v2817 = vpop.f32.mrb[0].mxu0
        %v2818 = vadd.f32 0.0, %v2817
        %2819 = vmatprep.mubr.bf16.mxu0 0
        %2820 = vmatmul.mubr.bf16.gmra.mrb[0].mxu0 %v2663
        %v2821 = vpop.f32.mrb[0].mxu0
        %v2822 = vadd.f32 0.0, %v2821
        %v2823 = vpop.f32.mrb[0].mxu0
        %v2824 = vadd.f32 0.0, %v2823
        %v2825 = vpop.f32.mrb[0].mxu0
        %v2826 = vadd.f32 0.0, %v2825
        %v2827 = vpop.f32.mrb[0].mxu0
        %v2828 = vadd.f32 0.0, %v2827
        %2829 = vmatprep.mubr.bf16.mxu0 0
        %2830 = vmatmul.mubr.bf16.gmra.mrb[0].mxu0 %v2666
        %v2831 = vpop.f32.mrb[0].mxu0
        %v2832 = vadd.f32 0.0, %v2831
        %v2833 = vpop.f32.mrb[0].mxu0
        %v2834 = vadd.f32 0.0, %v2833
        %v2835 = vpop.f32.mrb[0].mxu0
        %v2836 = vadd.f32 0.0, %v2835
        %v2837 = vpop.f32.mrb[0].mxu0
        %v2838 = vadd.f32 0.0, %v2837
        %2839 = vmatprep.mubr.bf16.mxu0 0
        %2840 = vmatmul.mubr.bf16.gmra.mrb[0].mxu0 %v2669
        %v2841 = vpop.f32.mrb[0].mxu0
        %v2842 = vadd.f32 0.0, %v2841
        %v2843 = vpop.f32.mrb[0].mxu0
        %v2844 = vadd.f32 0.0, %v2843
        %v2845 = vpop.f32.mrb[0].mxu0
        %v2846 = vadd.f32 0.0, %v2845
        %v2847 = vpop.f32.mrb[0].mxu0
        %v2848 = vadd.f32 0.0, %v2847
        %2849 = vmatprep.mubr.bf16.mxu0 0
        %2850 = vmatmul.mubr.bf16.gmra.mrb[0].mxu0 %v2672
        %v2851 = vpop.f32.mrb[0].mxu0
        %v2852 = vadd.f32 0.0, %v2851
        %v2853 = vpop.f32.mrb[0].mxu0
        %v2854 = vadd.f32 0.0, %v2853
        %v2855 = vpop.f32.mrb[0].mxu0
        %v2856 = vadd.f32 0.0, %v2855
        %v2857 = vpop.f32.mrb[0].mxu0
        %v2858 = vadd.f32 0.0, %v2857
        %2859 = vmatprep.mubr.bf16.mxu0 0
        %2860 = vmatmul.mubr.bf16.gmra.mrb[0].mxu0 %v2675
        %v2861 = vpop.f32.mrb[0].mxu0
        %v2862 = vadd.f32 0.0, %v2861
        %v2863 = vpop.f32.mrb[0].mxu0
        %v2864 = vadd.f32 0.0, %v2863
        %v2865 = vpop.f32.mrb[0].mxu0
        %v2866 = vadd.f32 0.0, %v2865
        %v2867 = vpop.f32.mrb[0].mxu0
        %v2868 = vadd.f32 0.0, %v2867
        %2869 = vdwg.mxu0
        %2870 = vmatprep.subr.bf16.mxu0 0
        %2871 = vmatpush1.bf16.msra.mxu0 %v2595
        %2872 = vmatprep.subr.bf16.mxu0 0
        %2873 = vmatpush1.bf16.msra.mxu0 %v2598
        %2874 = vmatprep.subr.bf16.mxu0 0
        %2875 = vmatpush1.bf16.msra.mxu0 %v2601
        %2876 = vmatprep.subr.bf16.mxu0 0
        %2877 = vmatpush1.bf16.msra.mxu0 %v2604
        %2878 = vmatprep.subr.bf16.mxu0 0
        %2879 = vmatpush1.bf16.msra.mxu0 %v2607
        %2880 = vmatprep.subr.bf16.mxu0 0
        %2881 = vmatpush1.bf16.msra.mxu0 %v2610
        %2882 = vmatprep.subr.bf16.mxu0 0
        %2883 = vmatpush1.bf16.msra.mxu0 0
        %2884 = vmatprep.subr.bf16.mxu0 0
        %2885 = vmatpush1.bf16.msra.mxu0 0
        %2886 = vmatprep.subr.bf16.mxu0 0
        %2887 = vmatpush1.bf16.msra.mxu0 0
        %2888 = vmatprep.subr.bf16.mxu0 0
        %2889 = vmatpush1.bf16.msra.mxu0 0
        %2890 = vmatprep.subr.bf16.mxu0 0
        %2891 = vmatpush1.bf16.msra.mxu0 0
        %2892 = vmatprep.subr.bf16.mxu0 0
        %2893 = vmatpush1.bf16.msra.mxu0 0
        %2894 = vmatprep.subr.bf16.mxu0 0
        %2895 = vmatpush1.bf16.msra.mxu0 0
        %2896 = vmatprep.subr.bf16.mxu0 0
        %2897 = vmatpush1.bf16.msra.mxu0 0
        %2898 = vmatprep.subr.bf16.mxu0 0
        %2899 = vmatpush1.bf16.msra.mxu0 0
        %2900 = vmatprep.subr.bf16.mxu0 0
        %2901 = vmatpush1.bf16.msra.mxu0 0
        %2902 = vmatprep.mubr.bf16.mxu0 0
        %2903 = vmatmul.mubr.bf16.gmra.mrb[0].mxu0 %v2630
        %v2904 = vpop.f32.mrb[0].mxu0
        %v2905 = vadd.f32 0.0, %v2904
        %v2906 = vpop.f32.mrb[0].mxu0
        %v2907 = vpop.f32.mrb[0].mxu0
        %v2908 = vadd.f32 0.0, %v2907
        %v2909 = vpop.f32.mrb[0].mxu0
        %2910 = vmatprep.mubr.bf16.mxu0 0
        %2911 = vmatmul.mubr.bf16.gmra.mrb[0].mxu0 %v2633
        %v2912 = vpop.f32.mrb[0].mxu0
        %v2913 = vadd.f32 0.0, %v2912
        %v2914 = vpop.f32.mrb[0].mxu0
        %v2915 = vpop.f32.mrb[0].mxu0
        %v2916 = vadd.f32 0.0, %v2915
        %v2917 = vpop.f32.mrb[0].mxu0
        %2918 = vmatprep.mubr.bf16.mxu0 0
        %2919 = vmatmul.mubr.bf16.gmra.mrb[0].mxu0 %v2636
        %v2920 = vpop.f32.mrb[0].mxu0
        %v2921 = vadd.f32 0.0, %v2920
        %v2922 = vpop.f32.mrb[0].mxu0
        %v2923 = vpop.f32.mrb[0].mxu0
        %v2924 = vadd.f32 0.0, %v2923
        %v2925 = vpop.f32.mrb[0].mxu0
        %2926 = vmatprep.mubr.bf16.mxu0 0
        %2927 = vmatmul.mubr.bf16.gmra.mrb[0].mxu0 %v2639
        %v2928 = vpop.f32.mrb[0].mxu0
        %v2929 = vadd.f32 0.0, %v2928
        %v2930 = vpop.f32.mrb[0].mxu0
        %v2931 = vpop.f32.mrb[0].mxu0
        %v2932 = vadd.f32 0.0, %v2931
        %v2933 = vpop.f32.mrb[0].mxu0
        %2934 = vmatprep.mubr.bf16.mxu0 0
        %2935 = vmatmul.mubr.bf16.gmra.mrb[0].mxu0 %v2642
        %v2936 = vpop.f32.mrb[0].mxu0
        %v2937 = vadd.f32 0.0, %v2936
        %v2938 = vpop.f32.mrb[0].mxu0
        %v2939 = vpop.f32.mrb[0].mxu0
        %v2940 = vadd.f32 0.0, %v2939
        %v2941 = vpop.f32.mrb[0].mxu0
        %2942 = vmatprep.mubr.bf16.mxu0 0
        %2943 = vmatmul.mubr.bf16.gmra.mrb[0].mxu0 %v2645
        %v2944 = vpop.f32.mrb[0].mxu0
        %v2945 = vadd.f32 0.0, %v2944
        %v2946 = vpop.f32.mrb[0].mxu0
        %v2947 = vpop.f32.mrb[0].mxu0
        %v2948 = vadd.f32 0.0, %v2947
        %v2949 = vpop.f32.mrb[0].mxu0
        %2950 = vmatprep.mubr.bf16.mxu0 0
        %2951 = vmatmul.mubr.bf16.gmra.mrb[0].mxu0 %v2648
        %v2952 = vpop.f32.mrb[0].mxu0
        %v2953 = vadd.f32 0.0, %v2952
        %v2954 = vpop.f32.mrb[0].mxu0
        %v2955 = vpop.f32.mrb[0].mxu0
        %v2956 = vadd.f32 0.0, %v2955
        %v2957 = vpop.f32.mrb[0].mxu0
        %2958 = vmatprep.mubr.bf16.mxu0 0
        %2959 = vmatmul.mubr.bf16.gmra.mrb[0].mxu0 %v2651
        %v2960 = vpop.f32.mrb[0].mxu0
        %v2961 = vadd.f32 0.0, %v2960
        %v2962 = vpop.f32.mrb[0].mxu0
        %v2963 = vpop.f32.mrb[0].mxu0
        %v2964 = vadd.f32 0.0, %v2963
        %v2965 = vpop.f32.mrb[0].mxu0
        %2966 = vmatprep.mubr.bf16.mxu0 0
        %2967 = vmatmul.mubr.bf16.gmra.mrb[0].mxu0 %v2654
        %v2968 = vpop.f32.mrb[0].mxu0
        %v2969 = vadd.f32 0.0, %v2968
        %v2970 = vpop.f32.mrb[0].mxu0
        %v2971 = vpop.f32.mrb[0].mxu0
        %v2972 = vadd.f32 0.0, %v2971
        %v2973 = vpop.f32.mrb[0].mxu0
        %2974 = vmatprep.mubr.bf16.mxu0 0
        %2975 = vmatmul.mubr.bf16.gmra.mrb[0].mxu0 %v2657
        %v2976 = vpop.f32.mrb[0].mxu0
        %v2977 = vadd.f32 0.0, %v2976
        %v2978 = vpop.f32.mrb[0].mxu0
        %v2979 = vpop.f32.mrb[0].mxu0
        %v2980 = vadd.f32 0.0, %v2979
        %v2981 = vpop.f32.mrb[0].mxu0
        %2982 = vmatprep.mubr.bf16.mxu0 0
        %2983 = vmatmul.mubr.bf16.gmra.mrb[0].mxu0 %v2660
        %v2984 = vpop.f32.mrb[0].mxu0
        %v2985 = vadd.f32 0.0, %v2984
        %v2986 = vpop.f32.mrb[0].mxu0
        %v2987 = vpop.f32.mrb[0].mxu0
        %v2988 = vadd.f32 0.0, %v2987
        %v2989 = vpop.f32.mrb[0].mxu0
        %2990 = vmatprep.mubr.bf16.mxu0 0
        %2991 = vmatmul.mubr.bf16.gmra.mrb[0].mxu0 %v2663
        %v2992 = vpop.f32.mrb[0].mxu0
        %v2993 = vadd.f32 0.0, %v2992
        %v2994 = vpop.f32.mrb[0].mxu0
        %v2995 = vpop.f32.mrb[0].mxu0
        %v2996 = vadd.f32 0.0, %v2995
        %v2997 = vpop.f32.mrb[0].mxu0
        %2998 = vmatprep.mubr.bf16.mxu0 0
        %2999 = vmatmul.mubr.bf16.gmra.mrb[0].mxu0 %v2666
        %v3000 = vpop.f32.mrb[0].mxu0
        %v3001 = vadd.f32 0.0, %v3000
        %v3002 = vpop.f32.mrb[0].mxu0
        %v3003 = vpop.f32.mrb[0].mxu0
        %v3004 = vadd.f32 0.0, %v3003
        %v3005 = vpop.f32.mrb[0].mxu0
        %3006 = vmatprep.mubr.bf16.mxu0 0
        %3007 = vmatmul.mubr.bf16.gmra.mrb[0].mxu0 %v2669
        %v3008 = vpop.f32.mrb[0].mxu0
        %v3009 = vadd.f32 0.0, %v3008
        %v3010 = vpop.f32.mrb[0].mxu0
        %v3011 = vpop.f32.mrb[0].mxu0
        %v3012 = vadd.f32 0.0, %v3011
        %v3013 = vpop.f32.mrb[0].mxu0
        %3014 = vmatprep.mubr.bf16.mxu0 0
        %3015 = vmatmul.mubr.bf16.gmra.mrb[0].mxu0 %v2672
        %v3016 = vpop.f32.mrb[0].mxu0
        %v3017 = vadd.f32 0.0, %v3016
        %v3018 = vpop.f32.mrb[0].mxu0
        %v3019 = vpop.f32.mrb[0].mxu0
        %v3020 = vadd.f32 0.0, %v3019
        %v3021 = vpop.f32.mrb[0].mxu0
        %3022 = vmatprep.mubr.bf16.mxu0 0
        %3023 = vmatmul.mubr.bf16.gmra.mrb[0].mxu0 %v2675
        %v3024 = vpop.f32.mrb[0].mxu0
        %v3025 = vadd.f32 0.0, %v3024
        %v3026 = vpop.f32.mrb[0].mxu0
        %v3027 = vpop.f32.mrb[0].mxu0
        %v3028 = vadd.f32 0.0, %v3027
        %v3029 = vpop.f32.mrb[0].mxu0
        %3030 = vdwg.mxu0
        %v3031 = vadd.f32 %v2348, %v2712
        %v3032 = vadd.f32 %v2349, %v2714
        %v3033 = vadd.f32 %v2350, %v2905
        %v3034 = vadd.f32 %v2351, %v2716
        %v3035 = vadd.f32 %v2352, %v2718
        %v3036 = vadd.f32 %v2353, %v2908
        %v3037 = vadd.f32 %v2354, %v2722
        %v3038 = vadd.f32 %v2355, %v2724
        %v3039 = vadd.f32 %v2356, %v2913
        %v3040 = vadd.f32 %v2357, %v2726
        %v3041 = vadd.f32 %v2358, %v2728
        %v3042 = vadd.f32 %v2359, %v2916
        %v3043 = vadd.f32 %v2360, %v2732
        %v3044 = vadd.f32 %v2361, %v2734
        %v3045 = vadd.f32 %v2362, %v2921
        %v3046 = vadd.f32 %v2363, %v2736
        %v3047 = vadd.f32 %v2364, %v2738
        %v3048 = vadd.f32 %v2365, %v2924
        %v3049 = vadd.f32 %v2366, %v2742
        %v3050 = vadd.f32 %v2367, %v2744
        %v3051 = vadd.f32 %v2368, %v2929
        %v3052 = vadd.f32 %v2369, %v2746
        %v3053 = vadd.f32 %v2370, %v2748
        %v3054 = vadd.f32 %v2371, %v2932
        %v3055 = vadd.f32 %v2372, %v2752
        %v3056 = vadd.f32 %v2373, %v2754
        %v3057 = vadd.f32 %v2374, %v2937
        %v3058 = vadd.f32 %v2375, %v2756
        %v3059 = vadd.f32 %v2376, %v2758
        %v3060 = vadd.f32 %v2377, %v2940
        %v3061 = vadd.f32 %v2378, %v2762
        %v3062 = vadd.f32 %v2379, %v2764
        %v3063 = vadd.f32 %v2380, %v2945
        %v3064 = vadd.f32 %v2381, %v2766
        %v3065 = vadd.f32 %v2382, %v2768
        %v3066 = vadd.f32 %v2383, %v2948
        %v3067 = vadd.f32 %v2384, %v2772
        %v3068 = vadd.f32 %v2385, %v2774
        %v3069 = vadd.f32 %v2386, %v2953
        %v3070 = vadd.f32 %v2387, %v2776
        %v3071 = vadd.f32 %v2388, %v2778
        %v3072 = vadd.f32 %v2389, %v2956
        %v3073 = vadd.f32 %v2390, %v2782
        %v3074 = vadd.f32 %v2391, %v2784
        %v3075 = vadd.f32 %v2392, %v2961
        %v3076 = vadd.f32 %v2393, %v2786
        %v3077 = vadd.f32 %v2394, %v2788
        %v3078 = vadd.f32 %v2395, %v2964
        %v3079 = vadd.f32 %v2396, %v2792
        %v3080 = vadd.f32 %v2397, %v2794
        %v3081 = vadd.f32 %v2398, %v2969
        %v3082 = vadd.f32 %v2399, %v2796
        %v3083 = vadd.f32 %v2400, %v2798
        %v3084 = vadd.f32 %v2401, %v2972
        %v3085 = vadd.f32 %v2402, %v2802
        %v3086 = vadd.f32 %v2403, %v2804
        %v3087 = vadd.f32 %v2404, %v2977
        %v3088 = vadd.f32 %v2405, %v2806
        %v3089 = vadd.f32 %v2406, %v2808
        %v3090 = vadd.f32 %v2407, %v2980
        %v3091 = vadd.f32 %v2408, %v2812
        %v3092 = vadd.f32 %v2409, %v2814
        %v3093 = vadd.f32 %v2410, %v2985
        %v3094 = vadd.f32 %v2411, %v2816
        %v3095 = vadd.f32 %v2412, %v2818
        %v3096 = vadd.f32 %v2413, %v2988
        %v3097 = vadd.f32 %v2414, %v2822
        %v3098 = vadd.f32 %v2415, %v2824
        %v3099 = vadd.f32 %v2416, %v2993
        %v3100 = vadd.f32 %v2417, %v2826
        %v3101 = vadd.f32 %v2418, %v2828
        %v3102 = vadd.f32 %v2419, %v2996
        %v3103 = vadd.f32 %v2420, %v2832
        %v3104 = vadd.f32 %v2421, %v2834
        %v3105 = vadd.f32 %v2422, %v3001
        %v3106 = vadd.f32 %v2423, %v2836
        %v3107 = vadd.f32 %v2424, %v2838
        %v3108 = vadd.f32 %v2425, %v3004
        %v3109 = vadd.f32 %v2426, %v2842
        %v3110 = vadd.f32 %v2427, %v2844
        %v3111 = vadd.f32 %v2428, %v3009
        %v3112 = vadd.f32 %v2429, %v2846
        %v3113 = vadd.f32 %v2430, %v2848
        %v3114 = vadd.f32 %v2431, %v3012
        %v3115 = vadd.f32 %v2432, %v2852
        %v3116 = vadd.f32 %v2433, %v2854
        %v3117 = vadd.f32 %v2434, %v3017
        %v3118 = vadd.f32 %v2435, %v2856
        %v3119 = vadd.f32 %v2436, %v2858
        %v3120 = vadd.f32 %v2437, %v3020
        %v3121 = vadd.f32 %v2438, %v2862
        %v3122 = vadd.f32 %v2439, %v2864
        %v3123 = vadd.f32 %v2440, %v3025
        %v3124 = vadd.f32 %v2441, %v2866
        %v3125 = vadd.f32 %v2442, %v2868
        %v3126 = vadd.f32 %v2443, %v3028
        %s3127 = scalar_lea.vmem %s1, 576
        %v3128 = vld [vmem:[%s3127] sm:$0xff]
        %v3129 = vld [vmem:[%s3127 + $0x8] sm:$0xf]
        %v3130 = vld [vmem:[%s3127 + $0xc] sm:$0xff]
        %v3131 = vld [vmem:[%s3127 + $0x14] sm:$0xf]
        %v3132 = vld [vmem:[%s3127 + $0x18] sm:$0xff]
        %v3133 = vld [vmem:[%s3127 + $0x20] sm:$0xf]
        %v3134 = vld [vmem:[%s3127 + $0x24] sm:$0xff]
        %v3135 = vld [vmem:[%s3127 + $0x2c] sm:$0xf]
        %v3136 = vld [vmem:[%s3127 + $0x30] sm:$0xff]
        %v3137 = vld [vmem:[%s3127 + $0x38] sm:$0xf]
        %v3138 = vld [vmem:[%s3127 + $0x3c] sm:$0xff]
        %v3139 = vld [vmem:[%s3127 + $0x44] sm:$0xf]
        %v3140 = vld [vmem:[%s3127 + $0x48] sm:$0xff]
        %v3141 = vld [vmem:[%s3127 + $0x50] sm:$0xf]
        %v3142 = vld [vmem:[%s3127 + $0x54] sm:$0xff]
        %v3143 = vld [vmem:[%s3127 + $0x5c] sm:$0xf]
        %v3144 = vld [vmem:[%s3127 + $0x60] sm:$0xff]
        %v3145 = vld [vmem:[%s3127 + $0x68] sm:$0xf]
        %v3146 = vld [vmem:[%s3127 + $0x6c] sm:$0xff]
        %v3147 = vld [vmem:[%s3127 + $0x74] sm:$0xf]
        %v3148 = vld [vmem:[%s3127 + $0x78] sm:$0xff]
        %v3149 = vld [vmem:[%s3127 + $0x80] sm:$0xf]
        %v3150 = vld [vmem:[%s3127 + $0x84] sm:$0xff]
        %v3151 = vld [vmem:[%s3127 + $0x8c] sm:$0xf]
        %vm3152 = vcmask 1045504
        %v3153 = vrot.slane %v668, 2
        %v3154 = vrot.slane %v669, 2
        %v3155 = vsel %vm3152, %v3153, %v3154
        %v3156 = vrot.slane %v670, 2
        %v3157 = vsel %vm3152, %v3154, %v3156
        %v3158 = vrot.slane %v671, 2
        %v3159 = vsel %vm3152, %v3156, %v3158
        %v3160 = vrot.slane %v672, 2
        %v3161 = vsel %vm3152, %v3158, %v3160
        %v3162 = vrot.slane %v673, 2
        %v3163 = vsel %vm3152, %v3160, %v3162
        %v3164 = vrot.slane %v674, 2
        %v3165 = vsel %vm3152, %v3162, %v3164
        %v3166 = vrot.slane %v675, 2
        %v3167 = vsel %vm3152, %v3164, %v3166
        %v3168 = vrot.slane %v676, 2
        %v3169 = vsel %vm3152, %v3166, %v3168
        %v3170 = vrot.slane %v677, 2
        %v3171 = vsel %vm3152, %v3168, %v3170
        %v3172 = vrot.slane %v678, 2
        %v3173 = vsel %vm3152, %v3170, %v3172
        %v3174 = vrot.slane %v679, 2
        %v3175 = vsel %vm3152, %v3172, %v3174
        %v3176 = vrot.slane %v680, 2
        %v3177 = vsel %vm3152, %v3174, %v3176
        %v3178 = vrot.slane %v681, 2
        %v3179 = vsel %vm3152, %v3176, %v3178
        %v3180 = vrot.slane %v682, 2
        %v3181 = vsel %vm3152, %v3178, %v3180
        %v3182 = vrot.slane %v683, 2
        %v3183 = vsel %vm3152, %v3180, %v3182
        %v3208 = vunpack.c.l.b16 %v3128
        %v3209 = vunpack.c.h.b16 %v3128
        %v3210 = vunpack.c.l.b16 %v3129
        %v3211 = vunpack.c.l.b16 %v3130
        %v3212 = vunpack.c.h.b16 %v3130
        %v3213 = vunpack.c.l.b16 %v3131
        %v3214 = vunpack.c.l.b16 %v3132
        %v3215 = vunpack.c.h.b16 %v3132
        %v3216 = vunpack.c.l.b16 %v3133
        %v3217 = vunpack.c.l.b16 %v3134
        %v3218 = vunpack.c.h.b16 %v3134
        %v3219 = vunpack.c.l.b16 %v3135
        %v3220 = vunpack.c.l.b16 %v3136
        %v3221 = vunpack.c.h.b16 %v3136
        %v3222 = vunpack.c.l.b16 %v3137
        %v3223 = vunpack.c.l.b16 %v3138
        %v3224 = vunpack.c.h.b16 %v3138
        %v3225 = vunpack.c.l.b16 %v3139
        %v3226 = vunpack.c.l.b16 %v3140
        %v3227 = vunpack.c.h.b16 %v3140
        %v3228 = vunpack.c.l.b16 %v3141
        %v3229 = vunpack.c.l.b16 %v3142
        %v3230 = vunpack.c.h.b16 %v3142
        %v3231 = vunpack.c.l.b16 %v3143
        %v3232 = vunpack.c.l.b16 %v3144
        %v3233 = vunpack.c.h.b16 %v3144
        %v3234 = vunpack.c.l.b16 %v3145
        %v3235 = vunpack.c.l.b16 %v3146
        %v3236 = vunpack.c.h.b16 %v3146
        %v3237 = vunpack.c.l.b16 %v3147
        %v3238 = vunpack.c.l.b16 %v3148
        %v3239 = vunpack.c.h.b16 %v3148
        %v3240 = vunpack.c.l.b16 %v3149
        %v3241 = vunpack.c.l.b16 %v3150
        %v3242 = vunpack.c.h.b16 %v3150
        %v3243 = vunpack.c.l.b16 %v3151
        %v3244 = vpack.c.b16 %v3211, %v3208
        %v3245 = vpack.c.b16 %v3212, %v3209
        %v3246 = vpack.c.b16 %v3213, %v3210
        %v3247 = vpack.c.b16 %v3217, %v3214
        %v3248 = vpack.c.b16 %v3218, %v3215
        %v3249 = vpack.c.b16 %v3219, %v3216
        %v3250 = vpack.c.b16 %v3223, %v3220
        %v3251 = vpack.c.b16 %v3224, %v3221
        %v3252 = vpack.c.b16 %v3225, %v3222
        %v3253 = vpack.c.b16 %v3229, %v3226
        %v3254 = vpack.c.b16 %v3230, %v3227
        %v3255 = vpack.c.b16 %v3231, %v3228
        %v3256 = vpack.c.b16 %v3235, %v3232
        %v3257 = vpack.c.b16 %v3236, %v3233
        %v3258 = vpack.c.b16 %v3237, %v3234
        %v3259 = vpack.c.b16 %v3241, %v3238
        %v3260 = vpack.c.b16 %v3242, %v3239
        %v3261 = vpack.c.b16 %v3243, %v3240
        %v3281 = vsel %vm908, %v3155, 0
        %v3284 = vsel %vm908, %v3157, 0
        %v3287 = vsel %vm908, %v3159, 0
        %v3290 = vsel %vm908, %v3161, 0
        %v3293 = vsel %vm908, %v3163, 0
        %v3296 = vsel %vm908, %v3165, 0
        %v3299 = vsel %vm908, %v3167, 0
        %v3302 = vsel %vm908, %v3169, 0
        %v3305 = vsel %vm908, %v3171, 0
        %v3308 = vsel %vm908, %v3173, 0
        %v3311 = vsel %vm908, %v3175, 0
        %v3314 = vsel %vm908, %v3177, 0
        %v3317 = vsel %vm908, %v3179, 0
        %v3320 = vsel %vm908, %v3181, 0
        %v3323 = vsel %vm908, %v3183, 0
        %v3326 = vsel %vm908, %v3182, 0
        %3328 = vmatprep.subr.bf16.mxu0 %v3245
        %3329 = vmatpush1.bf16.msra.mxu0 %v3244
        %3330 = vmatprep.subr.bf16.mxu0 %v3248
        %3331 = vmatpush1.bf16.msra.mxu0 %v3247
        %3332 = vmatprep.subr.bf16.mxu0 %v3251
        %3333 = vmatpush1.bf16.msra.mxu0 %v3250
        %3334 = vmatprep.subr.bf16.mxu0 %v3254
        %3335 = vmatpush1.bf16.msra.mxu0 %v3253
        %3336 = vmatprep.subr.bf16.mxu0 %v3257
        %3337 = vmatpush1.bf16.msra.mxu0 %v3256
        %3338 = vmatprep.subr.bf16.mxu0 %v3260
        %3339 = vmatpush1.bf16.msra.mxu0 %v3259
        %3340 = vmatprep.subr.bf16.mxu0 0
        %3341 = vmatpush1.bf16.msra.mxu0 0
        %3342 = vmatprep.subr.bf16.mxu0 0
        %3343 = vmatpush1.bf16.msra.mxu0 0
        %3344 = vmatprep.subr.bf16.mxu0 0
        %3345 = vmatpush1.bf16.msra.mxu0 0
        %3346 = vmatprep.subr.bf16.mxu0 0
        %3347 = vmatpush1.bf16.msra.mxu0 0
        %3348 = vmatprep.subr.bf16.mxu0 0
        %3349 = vmatpush1.bf16.msra.mxu0 0
        %3350 = vmatprep.subr.bf16.mxu0 0
        %3351 = vmatpush1.bf16.msra.mxu0 0
        %3352 = vmatprep.subr.bf16.mxu0 0
        %3353 = vmatpush1.bf16.msra.mxu0 0
        %3354 = vmatprep.subr.bf16.mxu0 0
        %3355 = vmatpush1.bf16.msra.mxu0 0
        %3356 = vmatprep.subr.bf16.mxu0 0
        %3357 = vmatpush1.bf16.msra.mxu0 0
        %3358 = vmatprep.subr.bf16.mxu0 0
        %3359 = vmatpush1.bf16.msra.mxu0 0
        %3360 = vmatprep.mubr.bf16.mxu0 0
        %3361 = vmatmul.mubr.bf16.gmra.mrb[0].mxu0 %v3281
        %v3362 = vpop.f32.mrb[0].mxu0
        %v3363 = vadd.f32 0.0, %v3362
        %v3364 = vpop.f32.mrb[0].mxu0
        %v3365 = vadd.f32 0.0, %v3364
        %v3366 = vpop.f32.mrb[0].mxu0
        %v3367 = vadd.f32 0.0, %v3366
        %v3368 = vpop.f32.mrb[0].mxu0
        %v3369 = vadd.f32 0.0, %v3368
        %3370 = vmatprep.mubr.bf16.mxu0 0
        %3371 = vmatmul.mubr.bf16.gmra.mrb[0].mxu0 %v3284
        %v3372 = vpop.f32.mrb[0].mxu0
        %v3373 = vadd.f32 0.0, %v3372
        %v3374 = vpop.f32.mrb[0].mxu0
        %v3375 = vadd.f32 0.0, %v3374
        %v3376 = vpop.f32.mrb[0].mxu0
        %v3377 = vadd.f32 0.0, %v3376
        %v3378 = vpop.f32.mrb[0].mxu0
        %v3379 = vadd.f32 0.0, %v3378
        %3380 = vmatprep.mubr.bf16.mxu0 0
        %3381 = vmatmul.mubr.bf16.gmra.mrb[0].mxu0 %v3287
        %v3382 = vpop.f32.mrb[0].mxu0
        %v3383 = vadd.f32 0.0, %v3382
        %v3384 = vpop.f32.mrb[0].mxu0
        %v3385 = vadd.f32 0.0, %v3384
        %v3386 = vpop.f32.mrb[0].mxu0
        %v3387 = vadd.f32 0.0, %v3386
        %v3388 = vpop.f32.mrb[0].mxu0
        %v3389 = vadd.f32 0.0, %v3388
        %3390 = vmatprep.mubr.bf16.mxu0 0
        %3391 = vmatmul.mubr.bf16.gmra.mrb[0].mxu0 %v3290
        %v3392 = vpop.f32.mrb[0].mxu0
        %v3393 = vadd.f32 0.0, %v3392
        %v3394 = vpop.f32.mrb[0].mxu0
        %v3395 = vadd.f32 0.0, %v3394
        %v3396 = vpop.f32.mrb[0].mxu0
        %v3397 = vadd.f32 0.0, %v3396
        %v3398 = vpop.f32.mrb[0].mxu0
        %v3399 = vadd.f32 0.0, %v3398
        %3400 = vmatprep.mubr.bf16.mxu0 0
        %3401 = vmatmul.mubr.bf16.gmra.mrb[0].mxu0 %v3293
        %v3402 = vpop.f32.mrb[0].mxu0
        %v3403 = vadd.f32 0.0, %v3402
        %v3404 = vpop.f32.mrb[0].mxu0
        %v3405 = vadd.f32 0.0, %v3404
        %v3406 = vpop.f32.mrb[0].mxu0
        %v3407 = vadd.f32 0.0, %v3406
        %v3408 = vpop.f32.mrb[0].mxu0
        %v3409 = vadd.f32 0.0, %v3408
        %3410 = vmatprep.mubr.bf16.mxu0 0
        %3411 = vmatmul.mubr.bf16.gmra.mrb[0].mxu0 %v3296
        %v3412 = vpop.f32.mrb[0].mxu0
        %v3413 = vadd.f32 0.0, %v3412
        %v3414 = vpop.f32.mrb[0].mxu0
        %v3415 = vadd.f32 0.0, %v3414
        %v3416 = vpop.f32.mrb[0].mxu0
        %v3417 = vadd.f32 0.0, %v3416
        %v3418 = vpop.f32.mrb[0].mxu0
        %v3419 = vadd.f32 0.0, %v3418
        %3420 = vmatprep.mubr.bf16.mxu0 0
        %3421 = vmatmul.mubr.bf16.gmra.mrb[0].mxu0 %v3299
        %v3422 = vpop.f32.mrb[0].mxu0
        %v3423 = vadd.f32 0.0, %v3422
        %v3424 = vpop.f32.mrb[0].mxu0
        %v3425 = vadd.f32 0.0, %v3424
        %v3426 = vpop.f32.mrb[0].mxu0
        %v3427 = vadd.f32 0.0, %v3426
        %v3428 = vpop.f32.mrb[0].mxu0
        %v3429 = vadd.f32 0.0, %v3428
        %3430 = vmatprep.mubr.bf16.mxu0 0
        %3431 = vmatmul.mubr.bf16.gmra.mrb[0].mxu0 %v3302
        %v3432 = vpop.f32.mrb[0].mxu0
        %v3433 = vadd.f32 0.0, %v3432
        %v3434 = vpop.f32.mrb[0].mxu0
        %v3435 = vadd.f32 0.0, %v3434
        %v3436 = vpop.f32.mrb[0].mxu0
        %v3437 = vadd.f32 0.0, %v3436
        %v3438 = vpop.f32.mrb[0].mxu0
        %v3439 = vadd.f32 0.0, %v3438
        %3440 = vmatprep.mubr.bf16.mxu0 0
        %3441 = vmatmul.mubr.bf16.gmra.mrb[0].mxu0 %v3305
        %v3442 = vpop.f32.mrb[0].mxu0
        %v3443 = vadd.f32 0.0, %v3442
        %v3444 = vpop.f32.mrb[0].mxu0
        %v3445 = vadd.f32 0.0, %v3444
        %v3446 = vpop.f32.mrb[0].mxu0
        %v3447 = vadd.f32 0.0, %v3446
        %v3448 = vpop.f32.mrb[0].mxu0
        %v3449 = vadd.f32 0.0, %v3448
        %3450 = vmatprep.mubr.bf16.mxu0 0
        %3451 = vmatmul.mubr.bf16.gmra.mrb[0].mxu0 %v3308
        %v3452 = vpop.f32.mrb[0].mxu0
        %v3453 = vadd.f32 0.0, %v3452
        %v3454 = vpop.f32.mrb[0].mxu0
        %v3455 = vadd.f32 0.0, %v3454
        %v3456 = vpop.f32.mrb[0].mxu0
        %v3457 = vadd.f32 0.0, %v3456
        %v3458 = vpop.f32.mrb[0].mxu0
        %v3459 = vadd.f32 0.0, %v3458
        %3460 = vmatprep.mubr.bf16.mxu0 0
        %3461 = vmatmul.mubr.bf16.gmra.mrb[0].mxu0 %v3311
        %v3462 = vpop.f32.mrb[0].mxu0
        %v3463 = vadd.f32 0.0, %v3462
        %v3464 = vpop.f32.mrb[0].mxu0
        %v3465 = vadd.f32 0.0, %v3464
        %v3466 = vpop.f32.mrb[0].mxu0
        %v3467 = vadd.f32 0.0, %v3466
        %v3468 = vpop.f32.mrb[0].mxu0
        %v3469 = vadd.f32 0.0, %v3468
        %3470 = vmatprep.mubr.bf16.mxu0 0
        %3471 = vmatmul.mubr.bf16.gmra.mrb[0].mxu0 %v3314
        %v3472 = vpop.f32.mrb[0].mxu0
        %v3473 = vadd.f32 0.0, %v3472
        %v3474 = vpop.f32.mrb[0].mxu0
        %v3475 = vadd.f32 0.0, %v3474
        %v3476 = vpop.f32.mrb[0].mxu0
        %v3477 = vadd.f32 0.0, %v3476
        %v3478 = vpop.f32.mrb[0].mxu0
        %v3479 = vadd.f32 0.0, %v3478
        %3480 = vmatprep.mubr.bf16.mxu0 0
        %3481 = vmatmul.mubr.bf16.gmra.mrb[0].mxu0 %v3317
        %v3482 = vpop.f32.mrb[0].mxu0
        %v3483 = vadd.f32 0.0, %v3482
        %v3484 = vpop.f32.mrb[0].mxu0
        %v3485 = vadd.f32 0.0, %v3484
        %v3486 = vpop.f32.mrb[0].mxu0
        %v3487 = vadd.f32 0.0, %v3486
        %v3488 = vpop.f32.mrb[0].mxu0
        %v3489 = vadd.f32 0.0, %v3488
        %3490 = vmatprep.mubr.bf16.mxu0 0
        %3491 = vmatmul.mubr.bf16.gmra.mrb[0].mxu0 %v3320
        %v3492 = vpop.f32.mrb[0].mxu0
        %v3493 = vadd.f32 0.0, %v3492
        %v3494 = vpop.f32.mrb[0].mxu0
        %v3495 = vadd.f32 0.0, %v3494
        %v3496 = vpop.f32.mrb[0].mxu0
        %v3497 = vadd.f32 0.0, %v3496
        %v3498 = vpop.f32.mrb[0].mxu0
        %v3499 = vadd.f32 0.0, %v3498
        %3500 = vmatprep.mubr.bf16.mxu0 0
        %3501 = vmatmul.mubr.bf16.gmra.mrb[0].mxu0 %v3323
        %v3502 = vpop.f32.mrb[0].mxu0
        %v3503 = vadd.f32 0.0, %v3502
        %v3504 = vpop.f32.mrb[0].mxu0
        %v3505 = vadd.f32 0.0, %v3504
        %v3506 = vpop.f32.mrb[0].mxu0
        %v3507 = vadd.f32 0.0, %v3506
        %v3508 = vpop.f32.mrb[0].mxu0
        %v3509 = vadd.f32 0.0, %v3508
        %3510 = vmatprep.mubr.bf16.mxu0 0
        %3511 = vmatmul.mubr.bf16.gmra.mrb[0].mxu0 %v3326
        %v3512 = vpop.f32.mrb[0].mxu0
        %v3513 = vadd.f32 0.0, %v3512
        %v3514 = vpop.f32.mrb[0].mxu0
        %v3515 = vadd.f32 0.0, %v3514
        %v3516 = vpop.f32.mrb[0].mxu0
        %v3517 = vadd.f32 0.0, %v3516
        %v3518 = vpop.f32.mrb[0].mxu0
        %v3519 = vadd.f32 0.0, %v3518
        %3520 = vdwg.mxu0
        %3521 = vmatprep.subr.bf16.mxu0 0
        %3522 = vmatpush1.bf16.msra.mxu0 %v3246
        %3523 = vmatprep.subr.bf16.mxu0 0
        %3524 = vmatpush1.bf16.msra.mxu0 %v3249
        %3525 = vmatprep.subr.bf16.mxu0 0
        %3526 = vmatpush1.bf16.msra.mxu0 %v3252
        %3527 = vmatprep.subr.bf16.mxu0 0
        %3528 = vmatpush1.bf16.msra.mxu0 %v3255
        %3529 = vmatprep.subr.bf16.mxu0 0
        %3530 = vmatpush1.bf16.msra.mxu0 %v3258
        %3531 = vmatprep.subr.bf16.mxu0 0
        %3532 = vmatpush1.bf16.msra.mxu0 %v3261
        %3533 = vmatprep.subr.bf16.mxu0 0
        %3534 = vmatpush1.bf16.msra.mxu0 0
        %3535 = vmatprep.subr.bf16.mxu0 0
        %3536 = vmatpush1.bf16.msra.mxu0 0
        %3537 = vmatprep.subr.bf16.mxu0 0
        %3538 = vmatpush1.bf16.msra.mxu0 0
        %3539 = vmatprep.subr.bf16.mxu0 0
        %3540 = vmatpush1.bf16.msra.mxu0 0
        %3541 = vmatprep.subr.bf16.mxu0 0
        %3542 = vmatpush1.bf16.msra.mxu0 0
        %3543 = vmatprep.subr.bf16.mxu0 0
        %3544 = vmatpush1.bf16.msra.mxu0 0
        %3545 = vmatprep.subr.bf16.mxu0 0
        %3546 = vmatpush1.bf16.msra.mxu0 0
        %3547 = vmatprep.subr.bf16.mxu0 0
        %3548 = vmatpush1.bf16.msra.mxu0 0
        %3549 = vmatprep.subr.bf16.mxu0 0
        %3550 = vmatpush1.bf16.msra.mxu0 0
        %3551 = vmatprep.subr.bf16.mxu0 0
        %3552 = vmatpush1.bf16.msra.mxu0 0
        %3553 = vmatprep.mubr.bf16.mxu0 0
        %3554 = vmatmul.mubr.bf16.gmra.mrb[0].mxu0 %v3281
        %v3555 = vpop.f32.mrb[0].mxu0
        %v3556 = vadd.f32 0.0, %v3555
        %v3557 = vpop.f32.mrb[0].mxu0
        %v3558 = vpop.f32.mrb[0].mxu0
        %v3559 = vadd.f32 0.0, %v3558
        %v3560 = vpop.f32.mrb[0].mxu0
        %3561 = vmatprep.mubr.bf16.mxu0 0
        %3562 = vmatmul.mubr.bf16.gmra.mrb[0].mxu0 %v3284
        %v3563 = vpop.f32.mrb[0].mxu0
        %v3564 = vadd.f32 0.0, %v3563
        %v3565 = vpop.f32.mrb[0].mxu0
        %v3566 = vpop.f32.mrb[0].mxu0
        %v3567 = vadd.f32 0.0, %v3566
        %v3568 = vpop.f32.mrb[0].mxu0
        %3569 = vmatprep.mubr.bf16.mxu0 0
        %3570 = vmatmul.mubr.bf16.gmra.mrb[0].mxu0 %v3287
        %v3571 = vpop.f32.mrb[0].mxu0
        %v3572 = vadd.f32 0.0, %v3571
        %v3573 = vpop.f32.mrb[0].mxu0
        %v3574 = vpop.f32.mrb[0].mxu0
        %v3575 = vadd.f32 0.0, %v3574
        %v3576 = vpop.f32.mrb[0].mxu0
        %3577 = vmatprep.mubr.bf16.mxu0 0
        %3578 = vmatmul.mubr.bf16.gmra.mrb[0].mxu0 %v3290
        %v3579 = vpop.f32.mrb[0].mxu0
        %v3580 = vadd.f32 0.0, %v3579
        %v3581 = vpop.f32.mrb[0].mxu0
        %v3582 = vpop.f32.mrb[0].mxu0
        %v3583 = vadd.f32 0.0, %v3582
        %v3584 = vpop.f32.mrb[0].mxu0
        %3585 = vmatprep.mubr.bf16.mxu0 0
        %3586 = vmatmul.mubr.bf16.gmra.mrb[0].mxu0 %v3293
        %v3587 = vpop.f32.mrb[0].mxu0
        %v3588 = vadd.f32 0.0, %v3587
        %v3589 = vpop.f32.mrb[0].mxu0
        %v3590 = vpop.f32.mrb[0].mxu0
        %v3591 = vadd.f32 0.0, %v3590
        %v3592 = vpop.f32.mrb[0].mxu0
        %3593 = vmatprep.mubr.bf16.mxu0 0
        %3594 = vmatmul.mubr.bf16.gmra.mrb[0].mxu0 %v3296
        %v3595 = vpop.f32.mrb[0].mxu0
        %v3596 = vadd.f32 0.0, %v3595
        %v3597 = vpop.f32.mrb[0].mxu0
        %v3598 = vpop.f32.mrb[0].mxu0
        %v3599 = vadd.f32 0.0, %v3598
        %v3600 = vpop.f32.mrb[0].mxu0
        %3601 = vmatprep.mubr.bf16.mxu0 0
        %3602 = vmatmul.mubr.bf16.gmra.mrb[0].mxu0 %v3299
        %v3603 = vpop.f32.mrb[0].mxu0
        %v3604 = vadd.f32 0.0, %v3603
        %v3605 = vpop.f32.mrb[0].mxu0
        %v3606 = vpop.f32.mrb[0].mxu0
        %v3607 = vadd.f32 0.0, %v3606
        %v3608 = vpop.f32.mrb[0].mxu0
        %3609 = vmatprep.mubr.bf16.mxu0 0
        %3610 = vmatmul.mubr.bf16.gmra.mrb[0].mxu0 %v3302
        %v3611 = vpop.f32.mrb[0].mxu0
        %v3612 = vadd.f32 0.0, %v3611
        %v3613 = vpop.f32.mrb[0].mxu0
        %v3614 = vpop.f32.mrb[0].mxu0
        %v3615 = vadd.f32 0.0, %v3614
        %v3616 = vpop.f32.mrb[0].mxu0
        %3617 = vmatprep.mubr.bf16.mxu0 0
        %3618 = vmatmul.mubr.bf16.gmra.mrb[0].mxu0 %v3305
        %v3619 = vpop.f32.mrb[0].mxu0
        %v3620 = vadd.f32 0.0, %v3619
        %v3621 = vpop.f32.mrb[0].mxu0
        %v3622 = vpop.f32.mrb[0].mxu0
        %v3623 = vadd.f32 0.0, %v3622
        %v3624 = vpop.f32.mrb[0].mxu0
        %3625 = vmatprep.mubr.bf16.mxu0 0
        %3626 = vmatmul.mubr.bf16.gmra.mrb[0].mxu0 %v3308
        %v3627 = vpop.f32.mrb[0].mxu0
        %v3628 = vadd.f32 0.0, %v3627
        %v3629 = vpop.f32.mrb[0].mxu0
        %v3630 = vpop.f32.mrb[0].mxu0
        %v3631 = vadd.f32 0.0, %v3630
        %v3632 = vpop.f32.mrb[0].mxu0
        %3633 = vmatprep.mubr.bf16.mxu0 0
        %3634 = vmatmul.mubr.bf16.gmra.mrb[0].mxu0 %v3311
        %v3635 = vpop.f32.mrb[0].mxu0
        %v3636 = vadd.f32 0.0, %v3635
        %v3637 = vpop.f32.mrb[0].mxu0
        %v3638 = vpop.f32.mrb[0].mxu0
        %v3639 = vadd.f32 0.0, %v3638
        %v3640 = vpop.f32.mrb[0].mxu0
        %3641 = vmatprep.mubr.bf16.mxu0 0
        %3642 = vmatmul.mubr.bf16.gmra.mrb[0].mxu0 %v3314
        %v3643 = vpop.f32.mrb[0].mxu0
        %v3644 = vadd.f32 0.0, %v3643
        %v3645 = vpop.f32.mrb[0].mxu0
        %v3646 = vpop.f32.mrb[0].mxu0
        %v3647 = vadd.f32 0.0, %v3646
        %v3648 = vpop.f32.mrb[0].mxu0
        %3649 = vmatprep.mubr.bf16.mxu0 0
        %3650 = vmatmul.mubr.bf16.gmra.mrb[0].mxu0 %v3317
        %v3651 = vpop.f32.mrb[0].mxu0
        %v3652 = vadd.f32 0.0, %v3651
        %v3653 = vpop.f32.mrb[0].mxu0
        %v3654 = vpop.f32.mrb[0].mxu0
        %v3655 = vadd.f32 0.0, %v3654
        %v3656 = vpop.f32.mrb[0].mxu0
        %3657 = vmatprep.mubr.bf16.mxu0 0
        %3658 = vmatmul.mubr.bf16.gmra.mrb[0].mxu0 %v3320
        %v3659 = vpop.f32.mrb[0].mxu0
        %v3660 = vadd.f32 0.0, %v3659
        %v3661 = vpop.f32.mrb[0].mxu0
        %v3662 = vpop.f32.mrb[0].mxu0
        %v3663 = vadd.f32 0.0, %v3662
        %v3664 = vpop.f32.mrb[0].mxu0
        %3665 = vmatprep.mubr.bf16.mxu0 0
        %3666 = vmatmul.mubr.bf16.gmra.mrb[0].mxu0 %v3323
        %v3667 = vpop.f32.mrb[0].mxu0
        %v3668 = vadd.f32 0.0, %v3667
        %v3669 = vpop.f32.mrb[0].mxu0
        %v3670 = vpop.f32.mrb[0].mxu0
        %v3671 = vadd.f32 0.0, %v3670
        %v3672 = vpop.f32.mrb[0].mxu0
        %3673 = vmatprep.mubr.bf16.mxu0 0
        %3674 = vmatmul.mubr.bf16.gmra.mrb[0].mxu0 %v3326
        %v3675 = vpop.f32.mrb[0].mxu0
        %v3676 = vadd.f32 0.0, %v3675
        %v3677 = vpop.f32.mrb[0].mxu0
        %v3678 = vpop.f32.mrb[0].mxu0
        %v3679 = vadd.f32 0.0, %v3678
        %v3680 = vpop.f32.mrb[0].mxu0
        %3681 = vdwg.mxu0
        %v3682 = vadd.f32 %v3031, %v3363
        %v3683 = vadd.f32 %v3032, %v3365
        %v3684 = vadd.f32 %v3033, %v3556
        %v3685 = vadd.f32 %v3034, %v3367
        %v3686 = vadd.f32 %v3035, %v3369
        %v3687 = vadd.f32 %v3036, %v3559
        %v3688 = vadd.f32 %v3037, %v3373
        %v3689 = vadd.f32 %v3038, %v3375
        %v3690 = vadd.f32 %v3039, %v3564
        %v3691 = vadd.f32 %v3040, %v3377
        %v3692 = vadd.f32 %v3041, %v3379
        %v3693 = vadd.f32 %v3042, %v3567
        %v3694 = vadd.f32 %v3043, %v3383
        %v3695 = vadd.f32 %v3044, %v3385
        %v3696 = vadd.f32 %v3045, %v3572
        %v3697 = vadd.f32 %v3046, %v3387
        %v3698 = vadd.f32 %v3047, %v3389
        %v3699 = vadd.f32 %v3048, %v3575
        %v3700 = vadd.f32 %v3049, %v3393
        %v3701 = vadd.f32 %v3050, %v3395
        %v3702 = vadd.f32 %v3051, %v3580
        %v3703 = vadd.f32 %v3052, %v3397
        %v3704 = vadd.f32 %v3053, %v3399
        %v3705 = vadd.f32 %v3054, %v3583
        %v3706 = vadd.f32 %v3055, %v3403
        %v3707 = vadd.f32 %v3056, %v3405
        %v3708 = vadd.f32 %v3057, %v3588
        %v3709 = vadd.f32 %v3058, %v3407
        %v3710 = vadd.f32 %v3059, %v3409
        %v3711 = vadd.f32 %v3060, %v3591
        %v3712 = vadd.f32 %v3061, %v3413
        %v3713 = vadd.f32 %v3062, %v3415
        %v3714 = vadd.f32 %v3063, %v3596
        %v3715 = vadd.f32 %v3064, %v3417
        %v3716 = vadd.f32 %v3065, %v3419
        %v3717 = vadd.f32 %v3066, %v3599
        %v3718 = vadd.f32 %v3067, %v3423
        %v3719 = vadd.f32 %v3068, %v3425
        %v3720 = vadd.f32 %v3069, %v3604
        %v3721 = vadd.f32 %v3070, %v3427
        %v3722 = vadd.f32 %v3071, %v3429
        %v3723 = vadd.f32 %v3072, %v3607
        %v3724 = vadd.f32 %v3073, %v3433
        %v3725 = vadd.f32 %v3074, %v3435
        %v3726 = vadd.f32 %v3075, %v3612
        %v3727 = vadd.f32 %v3076, %v3437
        %v3728 = vadd.f32 %v3077, %v3439
        %v3729 = vadd.f32 %v3078, %v3615
        %v3730 = vadd.f32 %v3079, %v3443
        %v3731 = vadd.f32 %v3080, %v3445
        %v3732 = vadd.f32 %v3081, %v3620
        %v3733 = vadd.f32 %v3082, %v3447
        %v3734 = vadd.f32 %v3083, %v3449
        %v3735 = vadd.f32 %v3084, %v3623
        %v3736 = vadd.f32 %v3085, %v3453
        %v3737 = vadd.f32 %v3086, %v3455
        %v3738 = vadd.f32 %v3087, %v3628
        %v3739 = vadd.f32 %v3088, %v3457
        %v3740 = vadd.f32 %v3089, %v3459
        %v3741 = vadd.f32 %v3090, %v3631
        %v3742 = vadd.f32 %v3091, %v3463
        %v3743 = vadd.f32 %v3092, %v3465
        %v3744 = vadd.f32 %v3093, %v3636
        %v3745 = vadd.f32 %v3094, %v3467
        %v3746 = vadd.f32 %v3095, %v3469
        %v3747 = vadd.f32 %v3096, %v3639
        %v3748 = vadd.f32 %v3097, %v3473
        %v3749 = vadd.f32 %v3098, %v3475
        %v3750 = vadd.f32 %v3099, %v3644
        %v3751 = vadd.f32 %v3100, %v3477
        %v3752 = vadd.f32 %v3101, %v3479
        %v3753 = vadd.f32 %v3102, %v3647
        %v3754 = vadd.f32 %v3103, %v3483
        %v3755 = vadd.f32 %v3104, %v3485
        %v3756 = vadd.f32 %v3105, %v3652
        %v3757 = vadd.f32 %v3106, %v3487
        %v3758 = vadd.f32 %v3107, %v3489
        %v3759 = vadd.f32 %v3108, %v3655
        %v3760 = vadd.f32 %v3109, %v3493
        %v3761 = vadd.f32 %v3110, %v3495
        %v3762 = vadd.f32 %v3111, %v3660
        %v3763 = vadd.f32 %v3112, %v3497
        %v3764 = vadd.f32 %v3113, %v3499
        %v3765 = vadd.f32 %v3114, %v3663
        %v3766 = vadd.f32 %v3115, %v3503
        %v3767 = vadd.f32 %v3116, %v3505
        %v3768 = vadd.f32 %v3117, %v3668
        %v3769 = vadd.f32 %v3118, %v3507
        %v3770 = vadd.f32 %v3119, %v3509
        %v3771 = vadd.f32 %v3120, %v3671
        %v3772 = vadd.f32 %v3121, %v3513
        %v3773 = vadd.f32 %v3122, %v3515
        %v3774 = vadd.f32 %v3123, %v3676
        %v3775 = vadd.f32 %v3124, %v3517
        %v3776 = vadd.f32 %v3125, %v3519
        %v3777 = vadd.f32 %v3126, %v3679
        %v3778 = vld [vmem:[%s2] sm:$0x7]
        %v3780 = vlaneseq
        %v3781 = vshrl.u32 %v3780, 7
        %v3782 = vsub.s32 0, %v3781
        %v3783 = vrot.slane %v3778, %v3782
        %v3784 = vlaneseq
        %v3785 = vshrl.u32 %v3784, 7
        %v3786 = vsub.s32 1, %v3785
        %v3787 = vrot.slane %v3778, %v3786
        %v3788 = vlaneseq
        %v3789 = vshrl.u32 %v3788, 7
        %v3790 = vsub.s32 2, %v3789
        %v3791 = vrot.slane %v3778, %v3790
        %v3795 = vadd.f32 %v3682, %v3783
        %v3796 = vadd.f32 %v3683, %v3787
        %v3797 = vadd.f32 %v3684, %v3791
        %v3798 = vadd.f32 %v3685, %v3783
        %v3799 = vadd.f32 %v3686, %v3787
        %v3800 = vadd.f32 %v3687, %v3791
        %v3801 = vadd.f32 %v3688, %v3783
        %v3802 = vadd.f32 %v3689, %v3787
        %v3803 = vadd.f32 %v3690, %v3791
        %v3804 = vadd.f32 %v3691, %v3783
        %v3805 = vadd.f32 %v3692, %v3787
        %v3806 = vadd.f32 %v3693, %v3791
        %v3807 = vadd.f32 %v3694, %v3783
        %v3808 = vadd.f32 %v3695, %v3787
        %v3809 = vadd.f32 %v3696, %v3791
        %v3810 = vadd.f32 %v3697, %v3783
        %v3811 = vadd.f32 %v3698, %v3787
        %v3812 = vadd.f32 %v3699, %v3791
        %v3813 = vadd.f32 %v3700, %v3783
        %v3814 = vadd.f32 %v3701, %v3787
        %v3815 = vadd.f32 %v3702, %v3791
        %v3816 = vadd.f32 %v3703, %v3783
        %v3817 = vadd.f32 %v3704, %v3787
        %v3818 = vadd.f32 %v3705, %v3791
        %v3819 = vadd.f32 %v3706, %v3783
        %v3820 = vadd.f32 %v3707, %v3787
        %v3821 = vadd.f32 %v3708, %v3791
        %v3822 = vadd.f32 %v3709, %v3783
        %v3823 = vadd.f32 %v3710, %v3787
        %v3824 = vadd.f32 %v3711, %v3791
        %v3825 = vadd.f32 %v3712, %v3783
        %v3826 = vadd.f32 %v3713, %v3787
        %v3827 = vadd.f32 %v3714, %v3791
        %v3828 = vadd.f32 %v3715, %v3783
        %v3829 = vadd.f32 %v3716, %v3787
        %v3830 = vadd.f32 %v3717, %v3791
        %v3831 = vadd.f32 %v3718, %v3783
        %v3832 = vadd.f32 %v3719, %v3787
        %v3833 = vadd.f32 %v3720, %v3791
        %v3834 = vadd.f32 %v3721, %v3783
        %v3835 = vadd.f32 %v3722, %v3787
        %v3836 = vadd.f32 %v3723, %v3791
        %v3837 = vadd.f32 %v3724, %v3783
        %v3838 = vadd.f32 %v3725, %v3787
        %v3839 = vadd.f32 %v3726, %v3791
        %v3840 = vadd.f32 %v3727, %v3783
        %v3841 = vadd.f32 %v3728, %v3787
        %v3842 = vadd.f32 %v3729, %v3791
        %v3843 = vadd.f32 %v3730, %v3783
        %v3844 = vadd.f32 %v3731, %v3787
        %v3845 = vadd.f32 %v3732, %v3791
        %v3846 = vadd.f32 %v3733, %v3783
        %v3847 = vadd.f32 %v3734, %v3787
        %v3848 = vadd.f32 %v3735, %v3791
        %v3849 = vadd.f32 %v3736, %v3783
        %v3850 = vadd.f32 %v3737, %v3787
        %v3851 = vadd.f32 %v3738, %v3791
        %v3852 = vadd.f32 %v3739, %v3783
        %v3853 = vadd.f32 %v3740, %v3787
        %v3854 = vadd.f32 %v3741, %v3791
        %v3855 = vadd.f32 %v3742, %v3783
        %v3856 = vadd.f32 %v3743, %v3787
        %v3857 = vadd.f32 %v3744, %v3791
        %v3858 = vadd.f32 %v3745, %v3783
        %v3859 = vadd.f32 %v3746, %v3787
        %v3860 = vadd.f32 %v3747, %v3791
        %v3861 = vadd.f32 %v3748, %v3783
        %v3862 = vadd.f32 %v3749, %v3787
        %v3863 = vadd.f32 %v3750, %v3791
        %v3864 = vadd.f32 %v3751, %v3783
        %v3865 = vadd.f32 %v3752, %v3787
        %v3866 = vadd.f32 %v3753, %v3791
        %v3867 = vadd.f32 %v3754, %v3783
        %v3868 = vadd.f32 %v3755, %v3787
        %v3869 = vadd.f32 %v3756, %v3791
        %v3870 = vadd.f32 %v3757, %v3783
        %v3871 = vadd.f32 %v3758, %v3787
        %v3872 = vadd.f32 %v3759, %v3791
        %v3873 = vadd.f32 %v3760, %v3783
        %v3874 = vadd.f32 %v3761, %v3787
        %v3875 = vadd.f32 %v3762, %v3791
        %v3876 = vadd.f32 %v3763, %v3783
        %v3877 = vadd.f32 %v3764, %v3787
        %v3878 = vadd.f32 %v3765, %v3791
        %v3879 = vadd.f32 %v3766, %v3783
        %v3880 = vadd.f32 %v3767, %v3787
        %v3881 = vadd.f32 %v3768, %v3791
        %v3882 = vadd.f32 %v3769, %v3783
        %v3883 = vadd.f32 %v3770, %v3787
        %v3884 = vadd.f32 %v3771, %v3791
        %v3885 = vadd.f32 %v3772, %v3783
        %v3886 = vadd.f32 %v3773, %v3787
        %v3887 = vadd.f32 %v3774, %v3791
        %v3888 = vadd.f32 %v3775, %v3783
        %v3889 = vadd.f32 %v3776, %v3787
        %v3890 = vadd.f32 %v3777, %v3791
        %v3891 = vtanh.pop %v3795
        %v3892 = vtanh.pop %v3796
        %v3893 = vtanh.pop %v3797
        %v3894 = vtanh.pop %v3798
        %v3895 = vtanh.pop %v3799
        %v3896 = vtanh.pop %v3800
        %v3897 = vtanh.pop %v3801
        %v3898 = vtanh.pop %v3802
        %v3899 = vtanh.pop %v3803
        %v3900 = vtanh.pop %v3804
        %v3901 = vtanh.pop %v3805
        %v3902 = vtanh.pop %v3806
        %v3903 = vtanh.pop %v3807
        %v3904 = vtanh.pop %v3808
        %v3905 = vtanh.pop %v3809
        %v3906 = vtanh.pop %v3810
        %v3907 = vtanh.pop %v3811
        %v3908 = vtanh.pop %v3812
        %v3909 = vtanh.pop %v3813
        %v3910 = vtanh.pop %v3814
        %v3911 = vtanh.pop %v3815
        %v3912 = vtanh.pop %v3816
        %v3913 = vtanh.pop %v3817
        %v3914 = vtanh.pop %v3818
        %v3915 = vtanh.pop %v3819
        %v3916 = vtanh.pop %v3820
        %v3917 = vtanh.pop %v3821
        %v3918 = vtanh.pop %v3822
        %v3919 = vtanh.pop %v3823
        %v3920 = vtanh.pop %v3824
        %v3921 = vtanh.pop %v3825
        %v3922 = vtanh.pop %v3826
        %v3923 = vtanh.pop %v3827
        %v3924 = vtanh.pop %v3828
        %v3925 = vtanh.pop %v3829
        %v3926 = vtanh.pop %v3830
        %v3927 = vtanh.pop %v3831
        %v3928 = vtanh.pop %v3832
        %v3929 = vtanh.pop %v3833
        %v3930 = vtanh.pop %v3834
        %v3931 = vtanh.pop %v3835
        %v3932 = vtanh.pop %v3836
        %v3933 = vtanh.pop %v3837
        %v3934 = vtanh.pop %v3838
        %v3935 = vtanh.pop %v3839
        %v3936 = vtanh.pop %v3840
        %v3937 = vtanh.pop %v3841
        %v3938 = vtanh.pop %v3842
        %v3939 = vtanh.pop %v3843
        %v3940 = vtanh.pop %v3844
        %v3941 = vtanh.pop %v3845
        %v3942 = vtanh.pop %v3846
        %v3943 = vtanh.pop %v3847
        %v3944 = vtanh.pop %v3848
        %v3945 = vtanh.pop %v3849
        %v3946 = vtanh.pop %v3850
        %v3947 = vtanh.pop %v3851
        %v3948 = vtanh.pop %v3852
        %v3949 = vtanh.pop %v3853
        %v3950 = vtanh.pop %v3854
        %v3951 = vtanh.pop %v3855
        %v3952 = vtanh.pop %v3856
        %v3953 = vtanh.pop %v3857
        %v3954 = vtanh.pop %v3858
        %v3955 = vtanh.pop %v3859
        %v3956 = vtanh.pop %v3860
        %v3957 = vtanh.pop %v3861
        %v3958 = vtanh.pop %v3862
        %v3959 = vtanh.pop %v3863
        %v3960 = vtanh.pop %v3864
        %v3961 = vtanh.pop %v3865
        %v3962 = vtanh.pop %v3866
        %v3963 = vtanh.pop %v3867
        %v3964 = vtanh.pop %v3868
        %v3965 = vtanh.pop %v3869
        %v3966 = vtanh.pop %v3870
        %v3967 = vtanh.pop %v3871
        %v3968 = vtanh.pop %v3872
        %v3969 = vtanh.pop %v3873
        %v3970 = vtanh.pop %v3874
        %v3971 = vtanh.pop %v3875
        %v3972 = vtanh.pop %v3876
        %v3973 = vtanh.pop %v3877
        %v3974 = vtanh.pop %v3878
        %v3975 = vtanh.pop %v3879
        %v3976 = vtanh.pop %v3880
        %v3977 = vtanh.pop %v3881
        %v3978 = vtanh.pop %v3882
        %v3979 = vtanh.pop %v3883
        %v3980 = vtanh.pop %v3884
        %v3981 = vtanh.pop %v3885
        %v3982 = vtanh.pop %v3886
        %v3983 = vtanh.pop %v3887
        %v3984 = vtanh.pop %v3888
        %v3985 = vtanh.pop %v3889
        %v3986 = vtanh.pop %v3890
        %v3987 = vpack.c.bf16 %v3894, %v3891
        %v3988 = vpack.c.bf16 %v3895, %v3892
        %v3989 = vpack.c.bf16 %v3896, %v3893
        %v3990 = vpack.c.bf16 %v3900, %v3897
        %v3991 = vpack.c.bf16 %v3901, %v3898
        %v3992 = vpack.c.bf16 %v3902, %v3899
        %v3993 = vpack.c.bf16 %v3906, %v3903
        %v3994 = vpack.c.bf16 %v3907, %v3904
        %v3995 = vpack.c.bf16 %v3908, %v3905
        %v3996 = vpack.c.bf16 %v3912, %v3909
        %v3997 = vpack.c.bf16 %v3913, %v3910
        %v3998 = vpack.c.bf16 %v3914, %v3911
        %v3999 = vpack.c.bf16 %v3918, %v3915
        %v4000 = vpack.c.bf16 %v3919, %v3916
        %v4001 = vpack.c.bf16 %v3920, %v3917
        %v4002 = vpack.c.bf16 %v3924, %v3921
        %v4003 = vpack.c.bf16 %v3925, %v3922
        %v4004 = vpack.c.bf16 %v3926, %v3923
        %v4005 = vpack.c.bf16 %v3930, %v3927
        %v4006 = vpack.c.bf16 %v3931, %v3928
        %v4007 = vpack.c.bf16 %v3932, %v3929
        %v4008 = vpack.c.bf16 %v3936, %v3933
        %v4009 = vpack.c.bf16 %v3937, %v3934
        %v4010 = vpack.c.bf16 %v3938, %v3935
        %v4011 = vpack.c.bf16 %v3942, %v3939
        %v4012 = vpack.c.bf16 %v3943, %v3940
        %v4013 = vpack.c.bf16 %v3944, %v3941
        %v4014 = vpack.c.bf16 %v3948, %v3945
        %v4015 = vpack.c.bf16 %v3949, %v3946
        %v4016 = vpack.c.bf16 %v3950, %v3947
        %v4017 = vpack.c.bf16 %v3954, %v3951
        %v4018 = vpack.c.bf16 %v3955, %v3952
        %v4019 = vpack.c.bf16 %v3956, %v3953
        %v4020 = vpack.c.bf16 %v3960, %v3957
        %v4021 = vpack.c.bf16 %v3961, %v3958
        %v4022 = vpack.c.bf16 %v3962, %v3959
        %v4023 = vpack.c.bf16 %v3966, %v3963
        %v4024 = vpack.c.bf16 %v3967, %v3964
        %v4025 = vpack.c.bf16 %v3968, %v3965
        %v4026 = vpack.c.bf16 %v3972, %v3969
        %v4027 = vpack.c.bf16 %v3973, %v3970
        %v4028 = vpack.c.bf16 %v3974, %v3971
        %v4029 = vpack.c.bf16 %v3978, %v3975
        %v4030 = vpack.c.bf16 %v3979, %v3976
        %v4031 = vpack.c.bf16 %v3980, %v3977
        %v4032 = vpack.c.bf16 %v3984, %v3981
        %v4033 = vpack.c.bf16 %v3985, %v3982
        %v4034 = vpack.c.bf16 %v3986, %v3983
        %v4035 = vld [vmem:[%s3] sm:$0xff]
        %v4036 = vld [vmem:[%s3 + $0x8] sm:$0xff]
        %v4037 = vld [vmem:[%s3 + $0x10] sm:$0xff]
        %v4038 = vld [vmem:[%s3 + $0x18] sm:$0xff]
        %v4039 = vld [vmem:[%s3 + $0x20] sm:$0xff]
        %v4040 = vld [vmem:[%s3 + $0x28] sm:$0xff]
        %v4041 = vld [vmem:[%s3 + $0x30] sm:$0xff]
        %v4042 = vld [vmem:[%s3 + $0x38] sm:$0xff]
        %v4043 = vld [vmem:[%s3 + $0x40] sm:$0xff]
        %v4044 = vld [vmem:[%s3 + $0x48] sm:$0xff]
        %v4045 = vld [vmem:[%s3 + $0x50] sm:$0xff]
        %v4046 = vld [vmem:[%s3 + $0x58] sm:$0xff]
        %v4047 = vld [vmem:[%s3 + $0x60] sm:$0xff]
        %v4048 = vld [vmem:[%s3 + $0x68] sm:$0xff]
        %v4063 = vunpack.c.l.b16 %v4035
        %v4064 = vunpack.c.h.b16 %v4035
        %v4065 = vunpack.c.l.b16 %v4036
        %v4066 = vunpack.c.h.b16 %v4036
        %v4067 = vunpack.c.l.b16 %v4037
        %v4068 = vunpack.c.h.b16 %v4037
        %v4069 = vunpack.c.l.b16 %v4038
        %v4070 = vunpack.c.h.b16 %v4038
        %v4071 = vunpack.c.l.b16 %v4039
        %v4072 = vunpack.c.h.b16 %v4039
        %v4073 = vunpack.c.l.b16 %v4040
        %v4074 = vunpack.c.h.b16 %v4040
        %v4075 = vunpack.c.l.b16 %v4041
        %v4076 = vunpack.c.h.b16 %v4041
        %v4077 = vunpack.c.l.b16 %v4042
        %v4078 = vunpack.c.h.b16 %v4042
        %v4079 = vunpack.c.l.b16 %v4043
        %v4080 = vunpack.c.h.b16 %v4043
        %v4081 = vunpack.c.l.b16 %v4044
        %v4082 = vunpack.c.h.b16 %v4044
        %v4083 = vunpack.c.l.b16 %v4045
        %v4084 = vunpack.c.h.b16 %v4045
        %v4085 = vunpack.c.l.b16 %v4046
        %v4086 = vunpack.c.h.b16 %v4046
        %v4087 = vunpack.c.l.b16 %v4047
        %v4088 = vunpack.c.h.b16 %v4047
        %v4089 = vunpack.c.l.b16 %v4048
        %v4090 = vunpack.c.h.b16 %v4048
        %v4091 = vpack.c.b16 %v4065, %v4063
        %v4092 = vpack.c.b16 %v4066, %v4064
        %v4093 = vpack.c.b16 %v4069, %v4067
        %v4094 = vpack.c.b16 %v4070, %v4068
        %v4095 = vpack.c.b16 %v4073, %v4071
        %v4096 = vpack.c.b16 %v4074, %v4072
        %v4097 = vpack.c.b16 %v4077, %v4075
        %v4098 = vpack.c.b16 %v4078, %v4076
        %v4099 = vpack.c.b16 %v4081, %v4079
        %v4100 = vpack.c.b16 %v4082, %v4080
        %v4101 = vpack.c.b16 %v4085, %v4083
        %v4102 = vpack.c.b16 %v4086, %v4084
        %v4103 = vpack.c.b16 %v4089, %v4087
        %v4104 = vpack.c.b16 %v4090, %v4088
        %vm4112 = vcmask 1014784
        %v4114 = vsel %vm4112, %v4092, 0
        %v4117 = vsel %vm4112, %v4094, 0
        %v4120 = vsel %vm4112, %v4096, 0
        %v4123 = vsel %vm4112, %v4098, 0
        %v4126 = vsel %vm4112, %v4100, 0
        %v4129 = vsel %vm4112, %v4102, 0
        %v4132 = vsel %vm4112, %v4104, 0
        %vm4134 = vcmask 1045504
        %v4136 = vsel %vm4134, %v4032, 0
        %v4139 = vsel %vm4134, %v4033, 0
        %v4142 = vsel %vm4134, %v4034, 0
        %4144 = vmatprep.subr.bf16.mxu0 %v3988
        %4145 = vmatpush1.bf16.msra.mxu0 %v3987
        %4146 = vmatprep.subr.bf16.mxu0 %v3991
        %4147 = vmatpush1.bf16.msra.mxu0 %v3990
        %4148 = vmatprep.subr.bf16.mxu0 %v3994
        %4149 = vmatpush1.bf16.msra.mxu0 %v3993
        %4150 = vmatprep.subr.bf16.mxu0 %v3997
        %4151 = vmatpush1.bf16.msra.mxu0 %v3996
        %4152 = vmatprep.subr.bf16.mxu0 %v4000
        %4153 = vmatpush1.bf16.msra.mxu0 %v3999
        %4154 = vmatprep.subr.bf16.mxu0 %v4003
        %4155 = vmatpush1.bf16.msra.mxu0 %v4002
        %4156 = vmatprep.subr.bf16.mxu0 %v4006
        %4157 = vmatpush1.bf16.msra.mxu0 %v4005
        %4158 = vmatprep.subr.bf16.mxu0 %v4009
        %4159 = vmatpush1.bf16.msra.mxu0 %v4008
        %4160 = vmatprep.subr.bf16.mxu0 %v4012
        %4161 = vmatpush1.bf16.msra.mxu0 %v4011
        %4162 = vmatprep.subr.bf16.mxu0 %v4015
        %4163 = vmatpush1.bf16.msra.mxu0 %v4014
        %4164 = vmatprep.subr.bf16.mxu0 %v4018
        %4165 = vmatpush1.bf16.msra.mxu0 %v4017
        %4166 = vmatprep.subr.bf16.mxu0 %v4021
        %4167 = vmatpush1.bf16.msra.mxu0 %v4020
        %4168 = vmatprep.subr.bf16.mxu0 %v4024
        %4169 = vmatpush1.bf16.msra.mxu0 %v4023
        %4170 = vmatprep.subr.bf16.mxu0 %v4027
        %4171 = vmatpush1.bf16.msra.mxu0 %v4026
        %4172 = vmatprep.subr.bf16.mxu0 %v4030
        %4173 = vmatpush1.bf16.msra.mxu0 %v4029
        %4174 = vmatprep.subr.bf16.mxu0 %v4139
        %4175 = vmatpush1.bf16.msra.mxu0 %v4136
        %4176 = vmatprep.mubr.bf16.mxu0 %v4114
        %4177 = vmatmul.mubr.bf16.gmra.mrb[0].mxu0 %v4091
        %v4178 = vpop.f32.mrb[0].mxu0
        %v4179 = vadd.f32 0.0, %v4178
        %v4180 = vpop.f32.mrb[0].mxu0
        %v4181 = vadd.f32 0.0, %v4180
        %v4182 = vpop.f32.mrb[0].mxu0
        %v4183 = vadd.f32 0.0, %v4182
        %v4184 = vpop.f32.mrb[0].mxu0
        %v4185 = vadd.f32 0.0, %v4184
        %4186 = vmatprep.mubr.bf16.mxu0 %v4117
        %4187 = vmatmul.mubr.bf16.gmra.mrb[0].mxu0 %v4093
        %v4188 = vpop.f32.mrb[0].mxu0
        %v4189 = vadd.f32 0.0, %v4188
        %v4190 = vpop.f32.mrb[0].mxu0
        %v4191 = vadd.f32 0.0, %v4190
        %v4192 = vpop.f32.mrb[0].mxu0
        %v4193 = vadd.f32 0.0, %v4192
        %v4194 = vpop.f32.mrb[0].mxu0
        %v4195 = vadd.f32 0.0, %v4194
        %4196 = vmatprep.mubr.bf16.mxu0 %v4120
        %4197 = vmatmul.mubr.bf16.gmra.mrb[0].mxu0 %v4095
        %v4198 = vpop.f32.mrb[0].mxu0
        %v4199 = vadd.f32 0.0, %v4198
        %v4200 = vpop.f32.mrb[0].mxu0
        %v4201 = vadd.f32 0.0, %v4200
        %v4202 = vpop.f32.mrb[0].mxu0
        %v4203 = vadd.f32 0.0, %v4202
        %v4204 = vpop.f32.mrb[0].mxu0
        %v4205 = vadd.f32 0.0, %v4204
        %4206 = vmatprep.mubr.bf16.mxu0 %v4123
        %4207 = vmatmul.mubr.bf16.gmra.mrb[0].mxu0 %v4097
        %v4208 = vpop.f32.mrb[0].mxu0
        %v4209 = vadd.f32 0.0, %v4208
        %v4210 = vpop.f32.mrb[0].mxu0
        %v4211 = vadd.f32 0.0, %v4210
        %v4212 = vpop.f32.mrb[0].mxu0
        %v4213 = vadd.f32 0.0, %v4212
        %v4214 = vpop.f32.mrb[0].mxu0
        %v4215 = vadd.f32 0.0, %v4214
        %4216 = vmatprep.mubr.bf16.mxu0 %v4126
        %4217 = vmatmul.mubr.bf16.gmra.mrb[0].mxu0 %v4099
        %v4218 = vpop.f32.mrb[0].mxu0
        %v4219 = vadd.f32 0.0, %v4218
        %v4220 = vpop.f32.mrb[0].mxu0
        %v4221 = vadd.f32 0.0, %v4220
        %v4222 = vpop.f32.mrb[0].mxu0
        %v4223 = vadd.f32 0.0, %v4222
        %v4224 = vpop.f32.mrb[0].mxu0
        %v4225 = vadd.f32 0.0, %v4224
        %4226 = vmatprep.mubr.bf16.mxu0 %v4129
        %4227 = vmatmul.mubr.bf16.gmra.mrb[0].mxu0 %v4101
        %v4228 = vpop.f32.mrb[0].mxu0
        %v4229 = vadd.f32 0.0, %v4228
        %v4230 = vpop.f32.mrb[0].mxu0
        %v4231 = vadd.f32 0.0, %v4230
        %v4232 = vpop.f32.mrb[0].mxu0
        %v4233 = vadd.f32 0.0, %v4232
        %v4234 = vpop.f32.mrb[0].mxu0
        %v4235 = vadd.f32 0.0, %v4234
        %4236 = vmatprep.mubr.bf16.mxu0 %v4132
        %4237 = vmatmul.mubr.bf16.gmra.mrb[0].mxu0 %v4103
        %v4238 = vpop.f32.mrb[0].mxu0
        %v4239 = vadd.f32 0.0, %v4238
        %v4240 = vpop.f32.mrb[0].mxu0
        %v4241 = vadd.f32 0.0, %v4240
        %v4242 = vpop.f32.mrb[0].mxu0
        %v4243 = vadd.f32 0.0, %v4242
        %v4244 = vpop.f32.mrb[0].mxu0
        %v4245 = vadd.f32 0.0, %v4244
        %4246 = vdwg.mxu0
        %4247 = vmatprep.subr.bf16.mxu0 0
        %4248 = vmatpush1.bf16.msra.mxu0 %v3989
        %4249 = vmatprep.subr.bf16.mxu0 0
        %4250 = vmatpush1.bf16.msra.mxu0 %v3992
        %4251 = vmatprep.subr.bf16.mxu0 0
        %4252 = vmatpush1.bf16.msra.mxu0 %v3995
        %4253 = vmatprep.subr.bf16.mxu0 0
        %4254 = vmatpush1.bf16.msra.mxu0 %v3998
        %4255 = vmatprep.subr.bf16.mxu0 0
        %4256 = vmatpush1.bf16.msra.mxu0 %v4001
        %4257 = vmatprep.subr.bf16.mxu0 0
        %4258 = vmatpush1.bf16.msra.mxu0 %v4004
        %4259 = vmatprep.subr.bf16.mxu0 0
        %4260 = vmatpush1.bf16.msra.mxu0 %v4007
        %4261 = vmatprep.subr.bf16.mxu0 0
        %4262 = vmatpush1.bf16.msra.mxu0 %v4010
        %4263 = vmatprep.subr.bf16.mxu0 0
        %4264 = vmatpush1.bf16.msra.mxu0 %v4013
        %4265 = vmatprep.subr.bf16.mxu0 0
        %4266 = vmatpush1.bf16.msra.mxu0 %v4016
        %4267 = vmatprep.subr.bf16.mxu0 0
        %4268 = vmatpush1.bf16.msra.mxu0 %v4019
        %4269 = vmatprep.subr.bf16.mxu0 0
        %4270 = vmatpush1.bf16.msra.mxu0 %v4022
        %4271 = vmatprep.subr.bf16.mxu0 0
        %4272 = vmatpush1.bf16.msra.mxu0 %v4025
        %4273 = vmatprep.subr.bf16.mxu0 0
        %4274 = vmatpush1.bf16.msra.mxu0 %v4028
        %4275 = vmatprep.subr.bf16.mxu0 0
        %4276 = vmatpush1.bf16.msra.mxu0 %v4031
        %4277 = vmatprep.subr.bf16.mxu0 0
        %4278 = vmatpush1.bf16.msra.mxu0 %v4142
        %4279 = vmatprep.mubr.bf16.mxu0 %v4114
        %4280 = vmatmul.mubr.bf16.gmra.mrb[0].mxu0 %v4091
        %v4281 = vpop.f32.mrb[0].mxu0
        %v4282 = vadd.f32 0.0, %v4281
        %v4283 = vpop.f32.mrb[0].mxu0
        %v4284 = vpop.f32.mrb[0].mxu0
        %v4285 = vadd.f32 0.0, %v4284
        %v4286 = vpop.f32.mrb[0].mxu0
        %4287 = vmatprep.mubr.bf16.mxu0 %v4117
        %4288 = vmatmul.mubr.bf16.gmra.mrb[0].mxu0 %v4093
        %v4289 = vpop.f32.mrb[0].mxu0
        %v4290 = vadd.f32 0.0, %v4289
        %v4291 = vpop.f32.mrb[0].mxu0
        %v4292 = vpop.f32.mrb[0].mxu0
        %v4293 = vadd.f32 0.0, %v4292
        %v4294 = vpop.f32.mrb[0].mxu0
        %4295 = vmatprep.mubr.bf16.mxu0 %v4120
        %4296 = vmatmul.mubr.bf16.gmra.mrb[0].mxu0 %v4095
        %v4297 = vpop.f32.mrb[0].mxu0
        %v4298 = vadd.f32 0.0, %v4297
        %v4299 = vpop.f32.mrb[0].mxu0
        %v4300 = vpop.f32.mrb[0].mxu0
        %v4301 = vadd.f32 0.0, %v4300
        %v4302 = vpop.f32.mrb[0].mxu0
        %4303 = vmatprep.mubr.bf16.mxu0 %v4123
        %4304 = vmatmul.mubr.bf16.gmra.mrb[0].mxu0 %v4097
        %v4305 = vpop.f32.mrb[0].mxu0
        %v4306 = vadd.f32 0.0, %v4305
        %v4307 = vpop.f32.mrb[0].mxu0
        %v4308 = vpop.f32.mrb[0].mxu0
        %v4309 = vadd.f32 0.0, %v4308
        %v4310 = vpop.f32.mrb[0].mxu0
        %4311 = vmatprep.mubr.bf16.mxu0 %v4126
        %4312 = vmatmul.mubr.bf16.gmra.mrb[0].mxu0 %v4099
        %v4313 = vpop.f32.mrb[0].mxu0
        %v4314 = vadd.f32 0.0, %v4313
        %v4315 = vpop.f32.mrb[0].mxu0
        %v4316 = vpop.f32.mrb[0].mxu0
        %v4317 = vadd.f32 0.0, %v4316
        %v4318 = vpop.f32.mrb[0].mxu0
        %4319 = vmatprep.mubr.bf16.mxu0 %v4129
        %4320 = vmatmul.mubr.bf16.gmra.mrb[0].mxu0 %v4101
        %v4321 = vpop.f32.mrb[0].mxu0
        %v4322 = vadd.f32 0.0, %v4321
        %v4323 = vpop.f32.mrb[0].mxu0
        %v4324 = vpop.f32.mrb[0].mxu0
        %v4325 = vadd.f32 0.0, %v4324
        %v4326 = vpop.f32.mrb[0].mxu0
        %4327 = vmatprep.mubr.bf16.mxu0 %v4132
        %4328 = vmatmul.mubr.bf16.gmra.mrb[0].mxu0 %v4103
        %v4329 = vpop.f32.mrb[0].mxu0
        %v4330 = vadd.f32 0.0, %v4329
        %v4331 = vpop.f32.mrb[0].mxu0
        %v4332 = vpop.f32.mrb[0].mxu0
        %v4333 = vadd.f32 0.0, %v4332
        %v4334 = vpop.f32.mrb[0].mxu0
        %4335 = vdwg.mxu0
        %s4336 = scalar_lea.vmem %s3, 112
        %v4337 = vld [vmem:[%s4336] sm:$0xff]
        %v4338 = vld [vmem:[%s4336 + $0x8] sm:$0xff]
        %v4339 = vld [vmem:[%s4336 + $0x10] sm:$0xff]
        %v4340 = vld [vmem:[%s4336 + $0x18] sm:$0xff]
        %v4341 = vld [vmem:[%s4336 + $0x20] sm:$0xff]
        %v4342 = vld [vmem:[%s4336 + $0x28] sm:$0xff]
        %v4343 = vld [vmem:[%s4336 + $0x30] sm:$0xff]
        %v4344 = vld [vmem:[%s4336 + $0x38] sm:$0xff]
        %v4345 = vld [vmem:[%s4336 + $0x40] sm:$0xff]
        %v4346 = vld [vmem:[%s4336 + $0x48] sm:$0xff]
        %v4347 = vld [vmem:[%s4336 + $0x50] sm:$0xff]
        %v4348 = vld [vmem:[%s4336 + $0x58] sm:$0xff]
        %v4349 = vld [vmem:[%s4336 + $0x60] sm:$0xff]
        %v4350 = vld [vmem:[%s4336 + $0x68] sm:$0xff]
        %v4365 = vunpack.c.l.b16 %v4337
        %v4366 = vunpack.c.h.b16 %v4337
        %v4367 = vunpack.c.l.b16 %v4338
        %v4368 = vunpack.c.h.b16 %v4338
        %v4369 = vunpack.c.l.b16 %v4339
        %v4370 = vunpack.c.h.b16 %v4339
        %v4371 = vunpack.c.l.b16 %v4340
        %v4372 = vunpack.c.h.b16 %v4340
        %v4373 = vunpack.c.l.b16 %v4341
        %v4374 = vunpack.c.h.b16 %v4341
        %v4375 = vunpack.c.l.b16 %v4342
        %v4376 = vunpack.c.h.b16 %v4342
        %v4377 = vunpack.c.l.b16 %v4343
        %v4378 = vunpack.c.h.b16 %v4343
        %v4379 = vunpack.c.l.b16 %v4344
        %v4380 = vunpack.c.h.b16 %v4344
        %v4381 = vunpack.c.l.b16 %v4345
        %v4382 = vunpack.c.h.b16 %v4345
        %v4383 = vunpack.c.l.b16 %v4346
        %v4384 = vunpack.c.h.b16 %v4346
        %v4385 = vunpack.c.l.b16 %v4347
        %v4386 = vunpack.c.h.b16 %v4347
        %v4387 = vunpack.c.l.b16 %v4348
        %v4388 = vunpack.c.h.b16 %v4348
        %v4389 = vunpack.c.l.b16 %v4349
        %v4390 = vunpack.c.h.b16 %v4349
        %v4391 = vunpack.c.l.b16 %v4350
        %v4392 = vunpack.c.h.b16 %v4350
        %v4393 = vpack.c.b16 %v4367, %v4365
        %v4394 = vpack.c.b16 %v4368, %v4366
        %v4395 = vpack.c.b16 %v4371, %v4369
        %v4396 = vpack.c.b16 %v4372, %v4370
        %v4397 = vpack.c.b16 %v4375, %v4373
        %v4398 = vpack.c.b16 %v4376, %v4374
        %v4399 = vpack.c.b16 %v4379, %v4377
        %v4400 = vpack.c.b16 %v4380, %v4378
        %v4401 = vpack.c.b16 %v4383, %v4381
        %v4402 = vpack.c.b16 %v4384, %v4382
        %v4403 = vpack.c.b16 %v4387, %v4385
        %v4404 = vpack.c.b16 %v4388, %v4386
        %v4405 = vpack.c.b16 %v4391, %v4389
        %v4406 = vpack.c.b16 %v4392, %v4390
        %v4415 = vsel %vm4112, %v4394, 0
        %v4418 = vsel %vm4112, %v4396, 0
        %v4421 = vsel %vm4112, %v4398, 0
        %v4424 = vsel %vm4112, %v4400, 0
        %v4427 = vsel %vm4112, %v4402, 0
        %v4430 = vsel %vm4112, %v4404, 0
        %v4433 = vsel %vm4112, %v4406, 0
        %4435 = vmatprep.subr.bf16.mxu0 %v3988
        %4436 = vmatpush1.bf16.msra.mxu0 %v3987
        %4437 = vmatprep.subr.bf16.mxu0 %v3991
        %4438 = vmatpush1.bf16.msra.mxu0 %v3990
        %4439 = vmatprep.subr.bf16.mxu0 %v3994
        %4440 = vmatpush1.bf16.msra.mxu0 %v3993
        %4441 = vmatprep.subr.bf16.mxu0 %v3997
        %4442 = vmatpush1.bf16.msra.mxu0 %v3996
        %4443 = vmatprep.subr.bf16.mxu0 %v4000
        %4444 = vmatpush1.bf16.msra.mxu0 %v3999
        %4445 = vmatprep.subr.bf16.mxu0 %v4003
        %4446 = vmatpush1.bf16.msra.mxu0 %v4002
        %4447 = vmatprep.subr.bf16.mxu0 %v4006
        %4448 = vmatpush1.bf16.msra.mxu0 %v4005
        %4449 = vmatprep.subr.bf16.mxu0 %v4009
        %4450 = vmatpush1.bf16.msra.mxu0 %v4008
        %4451 = vmatprep.subr.bf16.mxu0 %v4012
        %4452 = vmatpush1.bf16.msra.mxu0 %v4011
        %4453 = vmatprep.subr.bf16.mxu0 %v4015
        %4454 = vmatpush1.bf16.msra.mxu0 %v4014
        %4455 = vmatprep.subr.bf16.mxu0 %v4018
        %4456 = vmatpush1.bf16.msra.mxu0 %v4017
        %4457 = vmatprep.subr.bf16.mxu0 %v4021
        %4458 = vmatpush1.bf16.msra.mxu0 %v4020
        %4459 = vmatprep.subr.bf16.mxu0 %v4024
        %4460 = vmatpush1.bf16.msra.mxu0 %v4023
        %4461 = vmatprep.subr.bf16.mxu0 %v4027
        %4462 = vmatpush1.bf16.msra.mxu0 %v4026
        %4463 = vmatprep.subr.bf16.mxu0 %v4030
        %4464 = vmatpush1.bf16.msra.mxu0 %v4029
        %4465 = vmatprep.subr.bf16.mxu0 %v4139
        %4466 = vmatpush1.bf16.msra.mxu0 %v4136
        %4467 = vmatprep.mubr.bf16.mxu0 %v4415
        %4468 = vmatmul.mubr.bf16.gmra.mrb[0].mxu0 %v4393
        %v4469 = vpop.f32.mrb[0].mxu0
        %v4470 = vadd.f32 0.0, %v4469
        %v4471 = vpop.f32.mrb[0].mxu0
        %v4472 = vadd.f32 0.0, %v4471
        %v4473 = vpop.f32.mrb[0].mxu0
        %v4474 = vadd.f32 0.0, %v4473
        %v4475 = vpop.f32.mrb[0].mxu0
        %v4476 = vadd.f32 0.0, %v4475
        %4477 = vmatprep.mubr.bf16.mxu0 %v4418
        %4478 = vmatmul.mubr.bf16.gmra.mrb[0].mxu0 %v4395
        %v4479 = vpop.f32.mrb[0].mxu0
        %v4480 = vadd.f32 0.0, %v4479
        %v4481 = vpop.f32.mrb[0].mxu0
        %v4482 = vadd.f32 0.0, %v4481
        %v4483 = vpop.f32.mrb[0].mxu0
        %v4484 = vadd.f32 0.0, %v4483
        %v4485 = vpop.f32.mrb[0].mxu0
        %v4486 = vadd.f32 0.0, %v4485
        %4487 = vmatprep.mubr.bf16.mxu0 %v4421
        %4488 = vmatmul.mubr.bf16.gmra.mrb[0].mxu0 %v4397
        %v4489 = vpop.f32.mrb[0].mxu0
        %v4490 = vadd.f32 0.0, %v4489
        %v4491 = vpop.f32.mrb[0].mxu0
        %v4492 = vadd.f32 0.0, %v4491
        %v4493 = vpop.f32.mrb[0].mxu0
        %v4494 = vadd.f32 0.0, %v4493
        %v4495 = vpop.f32.mrb[0].mxu0
        %v4496 = vadd.f32 0.0, %v4495
        %4497 = vmatprep.mubr.bf16.mxu0 %v4424
        %4498 = vmatmul.mubr.bf16.gmra.mrb[0].mxu0 %v4399
        %v4499 = vpop.f32.mrb[0].mxu0
        %v4500 = vadd.f32 0.0, %v4499
        %v4501 = vpop.f32.mrb[0].mxu0
        %v4502 = vadd.f32 0.0, %v4501
        %v4503 = vpop.f32.mrb[0].mxu0
        %v4504 = vadd.f32 0.0, %v4503
        %v4505 = vpop.f32.mrb[0].mxu0
        %v4506 = vadd.f32 0.0, %v4505
        %4507 = vmatprep.mubr.bf16.mxu0 %v4427
        %4508 = vmatmul.mubr.bf16.gmra.mrb[0].mxu0 %v4401
        %v4509 = vpop.f32.mrb[0].mxu0
        %v4510 = vadd.f32 0.0, %v4509
        %v4511 = vpop.f32.mrb[0].mxu0
        %v4512 = vadd.f32 0.0, %v4511
        %v4513 = vpop.f32.mrb[0].mxu0
        %v4514 = vadd.f32 0.0, %v4513
        %v4515 = vpop.f32.mrb[0].mxu0
        %v4516 = vadd.f32 0.0, %v4515
        %4517 = vmatprep.mubr.bf16.mxu0 %v4430
        %4518 = vmatmul.mubr.bf16.gmra.mrb[0].mxu0 %v4403
        %v4519 = vpop.f32.mrb[0].mxu0
        %v4520 = vadd.f32 0.0, %v4519
        %v4521 = vpop.f32.mrb[0].mxu0
        %v4522 = vadd.f32 0.0, %v4521
        %v4523 = vpop.f32.mrb[0].mxu0
        %v4524 = vadd.f32 0.0, %v4523
        %v4525 = vpop.f32.mrb[0].mxu0
        %v4526 = vadd.f32 0.0, %v4525
        %4527 = vmatprep.mubr.bf16.mxu0 %v4433
        %4528 = vmatmul.mubr.bf16.gmra.mrb[0].mxu0 %v4405
        %v4529 = vpop.f32.mrb[0].mxu0
        %v4530 = vadd.f32 0.0, %v4529
        %v4531 = vpop.f32.mrb[0].mxu0
        %v4532 = vadd.f32 0.0, %v4531
        %v4533 = vpop.f32.mrb[0].mxu0
        %v4534 = vadd.f32 0.0, %v4533
        %v4535 = vpop.f32.mrb[0].mxu0
        %v4536 = vadd.f32 0.0, %v4535
        %4537 = vdwg.mxu0
        %4538 = vmatprep.subr.bf16.mxu0 0
        %4539 = vmatpush1.bf16.msra.mxu0 %v3989
        %4540 = vmatprep.subr.bf16.mxu0 0
        %4541 = vmatpush1.bf16.msra.mxu0 %v3992
        %4542 = vmatprep.subr.bf16.mxu0 0
        %4543 = vmatpush1.bf16.msra.mxu0 %v3995
        %4544 = vmatprep.subr.bf16.mxu0 0
        %4545 = vmatpush1.bf16.msra.mxu0 %v3998
        %4546 = vmatprep.subr.bf16.mxu0 0
        %4547 = vmatpush1.bf16.msra.mxu0 %v4001
        %4548 = vmatprep.subr.bf16.mxu0 0
        %4549 = vmatpush1.bf16.msra.mxu0 %v4004
        %4550 = vmatprep.subr.bf16.mxu0 0
        %4551 = vmatpush1.bf16.msra.mxu0 %v4007
        %4552 = vmatprep.subr.bf16.mxu0 0
        %4553 = vmatpush1.bf16.msra.mxu0 %v4010
        %4554 = vmatprep.subr.bf16.mxu0 0
        %4555 = vmatpush1.bf16.msra.mxu0 %v4013
        %4556 = vmatprep.subr.bf16.mxu0 0
        %4557 = vmatpush1.bf16.msra.mxu0 %v4016
        %4558 = vmatprep.subr.bf16.mxu0 0
        %4559 = vmatpush1.bf16.msra.mxu0 %v4019
        %4560 = vmatprep.subr.bf16.mxu0 0
        %4561 = vmatpush1.bf16.msra.mxu0 %v4022
        %4562 = vmatprep.subr.bf16.mxu0 0
        %4563 = vmatpush1.bf16.msra.mxu0 %v4025
        %4564 = vmatprep.subr.bf16.mxu0 0
        %4565 = vmatpush1.bf16.msra.mxu0 %v4028
        %4566 = vmatprep.subr.bf16.mxu0 0
        %4567 = vmatpush1.bf16.msra.mxu0 %v4031
        %4568 = vmatprep.subr.bf16.mxu0 0
        %4569 = vmatpush1.bf16.msra.mxu0 %v4142
        %4570 = vmatprep.mubr.bf16.mxu0 %v4415
        %4571 = vmatmul.mubr.bf16.gmra.mrb[0].mxu0 %v4393
        %v4572 = vpop.f32.mrb[0].mxu0
        %v4573 = vadd.f32 0.0, %v4572
        %v4574 = vpop.f32.mrb[0].mxu0
        %v4575 = vpop.f32.mrb[0].mxu0
        %v4576 = vadd.f32 0.0, %v4575
        %v4577 = vpop.f32.mrb[0].mxu0
        %4578 = vmatprep.mubr.bf16.mxu0 %v4418
        %4579 = vmatmul.mubr.bf16.gmra.mrb[0].mxu0 %v4395
        %v4580 = vpop.f32.mrb[0].mxu0
        %v4581 = vadd.f32 0.0, %v4580
        %v4582 = vpop.f32.mrb[0].mxu0
        %v4583 = vpop.f32.mrb[0].mxu0
        %v4584 = vadd.f32 0.0, %v4583
        %v4585 = vpop.f32.mrb[0].mxu0
        %4586 = vmatprep.mubr.bf16.mxu0 %v4421
        %4587 = vmatmul.mubr.bf16.gmra.mrb[0].mxu0 %v4397
        %v4588 = vpop.f32.mrb[0].mxu0
        %v4589 = vadd.f32 0.0, %v4588
        %v4590 = vpop.f32.mrb[0].mxu0
        %v4591 = vpop.f32.mrb[0].mxu0
        %v4592 = vadd.f32 0.0, %v4591
        %v4593 = vpop.f32.mrb[0].mxu0
        %4594 = vmatprep.mubr.bf16.mxu0 %v4424
        %4595 = vmatmul.mubr.bf16.gmra.mrb[0].mxu0 %v4399
        %v4596 = vpop.f32.mrb[0].mxu0
        %v4597 = vadd.f32 0.0, %v4596
        %v4598 = vpop.f32.mrb[0].mxu0
        %v4599 = vpop.f32.mrb[0].mxu0
        %v4600 = vadd.f32 0.0, %v4599
        %v4601 = vpop.f32.mrb[0].mxu0
        %4602 = vmatprep.mubr.bf16.mxu0 %v4427
        %4603 = vmatmul.mubr.bf16.gmra.mrb[0].mxu0 %v4401
        %v4604 = vpop.f32.mrb[0].mxu0
        %v4605 = vadd.f32 0.0, %v4604
        %v4606 = vpop.f32.mrb[0].mxu0
        %v4607 = vpop.f32.mrb[0].mxu0
        %v4608 = vadd.f32 0.0, %v4607
        %v4609 = vpop.f32.mrb[0].mxu0
        %4610 = vmatprep.mubr.bf16.mxu0 %v4430
        %4611 = vmatmul.mubr.bf16.gmra.mrb[0].mxu0 %v4403
        %v4612 = vpop.f32.mrb[0].mxu0
        %v4613 = vadd.f32 0.0, %v4612
        %v4614 = vpop.f32.mrb[0].mxu0
        %v4615 = vpop.f32.mrb[0].mxu0
        %v4616 = vadd.f32 0.0, %v4615
        %v4617 = vpop.f32.mrb[0].mxu0
        %4618 = vmatprep.mubr.bf16.mxu0 %v4433
        %4619 = vmatmul.mubr.bf16.gmra.mrb[0].mxu0 %v4405
        %v4620 = vpop.f32.mrb[0].mxu0
        %v4621 = vadd.f32 0.0, %v4620
        %v4622 = vpop.f32.mrb[0].mxu0
        %v4623 = vpop.f32.mrb[0].mxu0
        %v4624 = vadd.f32 0.0, %v4623
        %v4625 = vpop.f32.mrb[0].mxu0
        %4626 = vdwg.mxu0
        %v4627 = vmax.f32 %v4179, %v4470
        %v4628 = vmax.f32 %v4181, %v4472
        %v4629 = vmax.f32 %v4282, %v4573
        %v4630 = vmax.f32 %v4183, %v4474
        %v4631 = vmax.f32 %v4185, %v4476
        %v4632 = vmax.f32 %v4285, %v4576
        %v4633 = vmax.f32 %v4189, %v4480
        %v4634 = vmax.f32 %v4191, %v4482
        %v4635 = vmax.f32 %v4290, %v4581
        %v4636 = vmax.f32 %v4193, %v4484
        %v4637 = vmax.f32 %v4195, %v4486
        %v4638 = vmax.f32 %v4293, %v4584
        %v4639 = vmax.f32 %v4199, %v4490
        %v4640 = vmax.f32 %v4201, %v4492
        %v4641 = vmax.f32 %v4298, %v4589
        %v4642 = vmax.f32 %v4203, %v4494
        %v4643 = vmax.f32 %v4205, %v4496
        %v4644 = vmax.f32 %v4301, %v4592
        %v4645 = vmax.f32 %v4209, %v4500
        %v4646 = vmax.f32 %v4211, %v4502
        %v4647 = vmax.f32 %v4306, %v4597
        %v4648 = vmax.f32 %v4213, %v4504
        %v4649 = vmax.f32 %v4215, %v4506
        %v4650 = vmax.f32 %v4309, %v4600
        %v4651 = vmax.f32 %v4219, %v4510
        %v4652 = vmax.f32 %v4221, %v4512
        %v4653 = vmax.f32 %v4314, %v4605
        %v4654 = vmax.f32 %v4223, %v4514
        %v4655 = vmax.f32 %v4225, %v4516
        %v4656 = vmax.f32 %v4317, %v4608
        %v4657 = vmax.f32 %v4229, %v4520
        %v4658 = vmax.f32 %v4231, %v4522
        %v4659 = vmax.f32 %v4322, %v4613
        %v4660 = vmax.f32 %v4233, %v4524
        %v4661 = vmax.f32 %v4235, %v4526
        %v4662 = vmax.f32 %v4325, %v4616
        %v4663 = vmax.f32 %v4239, %v4530
        %v4664 = vmax.f32 %v4241, %v4532
        %v4665 = vmax.f32 %v4330, %v4621
        %v4666 = vmax.f32 %v4243, %v4534
        %v4667 = vmax.f32 %v4245, %v4536
        %v4668 = vmax.f32 %v4333, %v4624
        %v4669 = vpack.c.bf16 %v4630, %v4627
        %v4670 = vpack.c.bf16 %v4631, %v4628
        %v4671 = vpack.c.bf16 %v4632, %v4629
        %v4672 = vpack.c.bf16 %v4636, %v4633
        %v4673 = vpack.c.bf16 %v4637, %v4634
        %v4674 = vpack.c.bf16 %v4638, %v4635
        %v4675 = vpack.c.bf16 %v4642, %v4639
        %v4676 = vpack.c.bf16 %v4643, %v4640
        %v4677 = vpack.c.bf16 %v4644, %v4641
        %v4678 = vpack.c.bf16 %v4648, %v4645
        %v4679 = vpack.c.bf16 %v4649, %v4646
        %v4680 = vpack.c.bf16 %v4650, %v4647
        %v4681 = vpack.c.bf16 %v4654, %v4651
        %v4682 = vpack.c.bf16 %v4655, %v4652
        %v4683 = vpack.c.bf16 %v4656, %v4653
        %v4684 = vpack.c.bf16 %v4660, %v4657
        %v4685 = vpack.c.bf16 %v4661, %v4658
        %v4686 = vpack.c.bf16 %v4662, %v4659
        %v4687 = vpack.c.bf16 %v4666, %v4663
        %v4688 = vpack.c.bf16 %v4667, %v4664
        %v4689 = vpack.c.bf16 %v4668, %v4665
        %v4690 = vld [vmem:[%s4] sm:$0xff]
        %v4691 = vld [vmem:[%s4 + $0x8] sm:$0xff]
        %v4692 = vld [vmem:[%s4 + $0x10] sm:$0xff]
        %v4693 = vld [vmem:[%s4 + $0x18] sm:$0xff]
        %v4694 = vld [vmem:[%s4 + $0x20] sm:$0xff]
        %v4695 = vld [vmem:[%s4 + $0x28] sm:$0xff]
        %v4696 = vld [vmem:[%s4 + $0x30] sm:$0xff]
        %v4697 = vld [vmem:[%s4 + $0x38] sm:$0xff]
        %v4698 = vld [vmem:[%s4 + $0x40] sm:$0xff]
        %v4699 = vld [vmem:[%s4 + $0x48] sm:$0xff]
        %v4700 = vld [vmem:[%s4 + $0x50] sm:$0xff]
        %v4701 = vld [vmem:[%s4 + $0x58] sm:$0xff]
        %v4702 = vld [vmem:[%s4 + $0x60] sm:$0xff]
        %v4703 = vld [vmem:[%s4 + $0x68] sm:$0xff]
        %v4704 = vld [vmem:[%s4 + $0x70] sm:$0xff]
        %v4705 = vld [vmem:[%s4 + $0x78] sm:$0xff]
        %v4706 = vld [vmem:[%s4 + $0x80] sm:$0xff]
        %v4707 = vld [vmem:[%s4 + $0x88] sm:$0xff]
        %v4708 = vld [vmem:[%s4 + $0x90] sm:$0xff]
        %v4709 = vld [vmem:[%s4 + $0x98] sm:$0xff]
        %v4710 = vld [vmem:[%s4 + $0xa0] sm:$0xff]
        %v4711 = vld [vmem:[%s4 + $0xa8] sm:$0xff]
        %v4712 = vld [vmem:[%s4 + $0xb0] sm:$0xff]
        %v4713 = vld [vmem:[%s4 + $0xb8] sm:$0xff]
        %v4714 = vld [vmem:[%s4 + $0xc0] sm:$0xff]
        %v4715 = vld [vmem:[%s4 + $0xc8] sm:$0xff]
        %v4716 = vld [vmem:[%s4 + $0xd0] sm:$0xff]
        %v4717 = vld [vmem:[%s4 + $0xd8] sm:$0xff]
        %v4718 = vld [vmem:[%s4 + $0xe0] sm:$0xff]
        %v4719 = vld [vmem:[%s4 + $0xe8] sm:$0xff]
        %v4720 = vld [vmem:[%s4 + $0xf0] sm:$0xff]
        %v4721 = vld [vmem:[%s4 + $0xf8] sm:$0xff]
        %v4722 = vld [vmem:[%s4 + $0x100] sm:$0xff]
        %v4723 = vld [vmem:[%s4 + $0x108] sm:$0xff]
        %v4724 = vld [vmem:[%s4 + $0x110] sm:$0xff]
        %v4725 = vld [vmem:[%s4 + $0x118] sm:$0xff]
        %v4726 = vld [vmem:[%s4 + $0x120] sm:$0xff]
        %v4727 = vld [vmem:[%s4 + $0x128] sm:$0xff]
        %v4728 = vld [vmem:[%s4 + $0x130] sm:$0xff]
        %v4729 = vld [vmem:[%s4 + $0x138] sm:$0xff]
        %v4730 = vld [vmem:[%s4 + $0x140] sm:$0xff]
        %v4731 = vld [vmem:[%s4 + $0x148] sm:$0xff]
        %v4774 = vunpack.c.l.b16 %v4690
        %v4775 = vunpack.c.h.b16 %v4690
        %v4776 = vunpack.c.l.b16 %v4691
        %v4777 = vunpack.c.h.b16 %v4691
        %v4778 = vunpack.c.l.b16 %v4692
        %v4779 = vunpack.c.h.b16 %v4692
        %v4780 = vunpack.c.l.b16 %v4693
        %v4781 = vunpack.c.h.b16 %v4693
        %v4782 = vunpack.c.l.b16 %v4694
        %v4783 = vunpack.c.h.b16 %v4694
        %v4784 = vunpack.c.l.b16 %v4695
        %v4785 = vunpack.c.h.b16 %v4695
        %v4786 = vunpack.c.l.b16 %v4696
        %v4787 = vunpack.c.h.b16 %v4696
        %v4788 = vunpack.c.l.b16 %v4697
        %v4789 = vunpack.c.h.b16 %v4697
        %v4790 = vunpack.c.l.b16 %v4698
        %v4791 = vunpack.c.h.b16 %v4698
        %v4792 = vunpack.c.l.b16 %v4699
        %v4793 = vunpack.c.h.b16 %v4699
        %v4794 = vunpack.c.l.b16 %v4700
        %v4795 = vunpack.c.h.b16 %v4700
        %v4796 = vunpack.c.l.b16 %v4701
        %v4797 = vunpack.c.h.b16 %v4701
        %v4798 = vunpack.c.l.b16 %v4702
        %v4799 = vunpack.c.h.b16 %v4702
        %v4800 = vunpack.c.l.b16 %v4703
        %v4801 = vunpack.c.h.b16 %v4703
        %v4802 = vunpack.c.l.b16 %v4704
        %v4803 = vunpack.c.h.b16 %v4704
        %v4804 = vunpack.c.l.b16 %v4705
        %v4805 = vunpack.c.h.b16 %v4705
        %v4806 = vunpack.c.l.b16 %v4706
        %v4807 = vunpack.c.h.b16 %v4706
        %v4808 = vunpack.c.l.b16 %v4707
        %v4809 = vunpack.c.h.b16 %v4707
        %v4810 = vunpack.c.l.b16 %v4708
        %v4811 = vunpack.c.h.b16 %v4708
        %v4812 = vunpack.c.l.b16 %v4709
        %v4813 = vunpack.c.h.b16 %v4709
        %v4814 = vunpack.c.l.b16 %v4710
        %v4815 = vunpack.c.h.b16 %v4710
        %v4816 = vunpack.c.l.b16 %v4711
        %v4817 = vunpack.c.h.b16 %v4711
        %v4818 = vunpack.c.l.b16 %v4712
        %v4819 = vunpack.c.h.b16 %v4712
        %v4820 = vunpack.c.l.b16 %v4713
        %v4821 = vunpack.c.h.b16 %v4713
        %v4822 = vunpack.c.l.b16 %v4714
        %v4823 = vunpack.c.h.b16 %v4714
        %v4824 = vunpack.c.l.b16 %v4715
        %v4825 = vunpack.c.h.b16 %v4715
        %v4826 = vunpack.c.l.b16 %v4716
        %v4827 = vunpack.c.h.b16 %v4716
        %v4828 = vunpack.c.l.b16 %v4717
        %v4829 = vunpack.c.h.b16 %v4717
        %v4830 = vunpack.c.l.b16 %v4718
        %v4831 = vunpack.c.h.b16 %v4718
        %v4832 = vunpack.c.l.b16 %v4719
        %v4833 = vunpack.c.h.b16 %v4719
        %v4834 = vunpack.c.l.b16 %v4720
        %v4835 = vunpack.c.h.b16 %v4720
        %v4836 = vunpack.c.l.b16 %v4721
        %v4837 = vunpack.c.h.b16 %v4721
        %v4838 = vunpack.c.l.b16 %v4722
        %v4839 = vunpack.c.h.b16 %v4722
        %v4840 = vunpack.c.l.b16 %v4723
        %v4841 = vunpack.c.h.b16 %v4723
        %v4842 = vunpack.c.l.b16 %v4724
        %v4843 = vunpack.c.h.b16 %v4724
        %v4844 = vunpack.c.l.b16 %v4725
        %v4845 = vunpack.c.h.b16 %v4725
        %v4846 = vunpack.c.l.b16 %v4726
        %v4847 = vunpack.c.h.b16 %v4726
        %v4848 = vunpack.c.l.b16 %v4727
        %v4849 = vunpack.c.h.b16 %v4727
        %v4850 = vunpack.c.l.b16 %v4728
        %v4851 = vunpack.c.h.b16 %v4728
        %v4852 = vunpack.c.l.b16 %v4729
        %v4853 = vunpack.c.h.b16 %v4729
        %v4854 = vunpack.c.l.b16 %v4730
        %v4855 = vunpack.c.h.b16 %v4730
        %v4856 = vunpack.c.l.b16 %v4731
        %v4857 = vunpack.c.h.b16 %v4731
        %v4858 = vpack.c.b16 %v4776, %v4774
        %v4859 = vpack.c.b16 %v4777, %v4775
        %v4860 = vpack.c.b16 %v4780, %v4778
        %v4861 = vpack.c.b16 %v4781, %v4779
        %v4862 = vpack.c.b16 %v4784, %v4782
        %v4863 = vpack.c.b16 %v4785, %v4783
        %v4864 = vpack.c.b16 %v4788, %v4786
        %v4865 = vpack.c.b16 %v4789, %v4787
        %v4866 = vpack.c.b16 %v4792, %v4790
        %v4867 = vpack.c.b16 %v4793, %v4791
        %v4868 = vpack.c.b16 %v4796, %v4794
        %v4869 = vpack.c.b16 %v4797, %v4795
        %v4870 = vpack.c.b16 %v4800, %v4798
        %v4871 = vpack.c.b16 %v4801, %v4799
        %v4872 = vpack.c.b16 %v4804, %v4802
        %v4873 = vpack.c.b16 %v4805, %v4803
        %v4874 = vpack.c.b16 %v4808, %v4806
        %v4875 = vpack.c.b16 %v4809, %v4807
        %v4876 = vpack.c.b16 %v4812, %v4810
        %v4877 = vpack.c.b16 %v4813, %v4811
        %v4878 = vpack.c.b16 %v4816, %v4814
        %v4879 = vpack.c.b16 %v4817, %v4815
        %v4880 = vpack.c.b16 %v4820, %v4818
        %v4881 = vpack.c.b16 %v4821, %v4819
        %v4882 = vpack.c.b16 %v4824, %v4822
        %v4883 = vpack.c.b16 %v4825, %v4823
        %v4884 = vpack.c.b16 %v4828, %v4826
        %v4885 = vpack.c.b16 %v4829, %v4827
        %v4886 = vpack.c.b16 %v4832, %v4830
        %v4887 = vpack.c.b16 %v4833, %v4831
        %v4888 = vpack.c.b16 %v4836, %v4834
        %v4889 = vpack.c.b16 %v4837, %v4835
        %v4890 = vpack.c.b16 %v4840, %v4838
        %v4891 = vpack.c.b16 %v4841, %v4839
        %v4892 = vpack.c.b16 %v4844, %v4842
        %v4893 = vpack.c.b16 %v4845, %v4843
        %v4894 = vpack.c.b16 %v4848, %v4846
        %v4895 = vpack.c.b16 %v4849, %v4847
        %v4896 = vpack.c.b16 %v4852, %v4850
        %v4897 = vpack.c.b16 %v4853, %v4851
        %v4898 = vpack.c.b16 %v4856, %v4854
        %v4899 = vpack.c.b16 %v4857, %v4855
        %vm4942 = vcmask 654336
        %v4944 = vsel %vm4942, %v4671, 0
        %v4947 = vsel %vm4942, %v4674, 0
        %v4950 = vsel %vm4942, %v4677, 0
        %v4953 = vsel %vm4942, %v4680, 0
        %v4956 = vsel %vm4942, %v4683, 0
        %v4959 = vsel %vm4942, %v4686, 0
        %v4962 = vsel %vm4942, %v4689, 0
        %4964 = vmatprep.subr.bf16.mxu0 %v4859
        %4965 = vmatpush1.bf16.msra.mxu0 %v4858
        %4966 = vmatprep.subr.bf16.mxu0 %v4861
        %4967 = vmatpush1.bf16.msra.mxu0 %v4860
        %4968 = vmatprep.subr.bf16.mxu0 %v4863
        %4969 = vmatpush1.bf16.msra.mxu0 %v4862
        %4970 = vmatprep.subr.bf16.mxu0 %v4865
        %4971 = vmatpush1.bf16.msra.mxu0 %v4864
        %4972 = vmatprep.subr.bf16.mxu0 %v4867
        %4973 = vmatpush1.bf16.msra.mxu0 %v4866
        %4974 = vmatprep.subr.bf16.mxu0 %v4869
        %4975 = vmatpush1.bf16.msra.mxu0 %v4868
        %4976 = vmatprep.subr.bf16.mxu0 %v4871
        %4977 = vmatpush1.bf16.msra.mxu0 %v4870
        %4978 = vmatprep.subr.bf16.mxu0 %v4873
        %4979 = vmatpush1.bf16.msra.mxu0 %v4872
        %4980 = vmatprep.subr.bf16.mxu0 %v4875
        %4981 = vmatpush1.bf16.msra.mxu0 %v4874
        %4982 = vmatprep.subr.bf16.mxu0 %v4877
        %4983 = vmatpush1.bf16.msra.mxu0 %v4876
        %4984 = vmatprep.subr.bf16.mxu0 %v4879
        %4985 = vmatpush1.bf16.msra.mxu0 %v4878
        %4986 = vmatprep.subr.bf16.mxu0 %v4881
        %4987 = vmatpush1.bf16.msra.mxu0 %v4880
        %4988 = vmatprep.subr.bf16.mxu0 %v4883
        %4989 = vmatpush1.bf16.msra.mxu0 %v4882
        %4990 = vmatprep.subr.bf16.mxu0 %v4885
        %4991 = vmatpush1.bf16.msra.mxu0 %v4884
        %4992 = vmatprep.subr.bf16.mxu0 %v4887
        %4993 = vmatpush1.bf16.msra.mxu0 %v4886
        %4994 = vmatprep.subr.bf16.mxu0 %v4889
        %4995 = vmatpush1.bf16.msra.mxu0 %v4888
        %4996 = vmatprep.mubr.bf16.mxu0 %v4670
        %4997 = vmatmul.mubr.bf16.gmra.mrb[0].mxu0 %v4669
        %v4998 = vpop.f32.mrb[0].mxu0
        %v4999 = vadd.f32 0.0, %v4998
        %v5000 = vpop.f32.mrb[0].mxu0
        %v5001 = vadd.f32 0.0, %v5000
        %v5002 = vpop.f32.mrb[0].mxu0
        %v5003 = vadd.f32 0.0, %v5002
        %v5004 = vpop.f32.mrb[0].mxu0
        %v5005 = vadd.f32 0.0, %v5004
        %5006 = vmatprep.mubr.bf16.mxu0 %v4673
        %5007 = vmatmul.mubr.bf16.gmra.mrb[0].mxu0 %v4672
        %v5008 = vpop.f32.mrb[0].mxu0
        %v5009 = vadd.f32 0.0, %v5008
        %v5010 = vpop.f32.mrb[0].mxu0
        %v5011 = vadd.f32 0.0, %v5010
        %v5012 = vpop.f32.mrb[0].mxu0
        %v5013 = vadd.f32 0.0, %v5012
        %v5014 = vpop.f32.mrb[0].mxu0
        %v5015 = vadd.f32 0.0, %v5014
        %5016 = vmatprep.mubr.bf16.mxu0 %v4676
        %5017 = vmatmul.mubr.bf16.gmra.mrb[0].mxu0 %v4675
        %v5018 = vpop.f32.mrb[0].mxu0
        %v5019 = vadd.f32 0.0, %v5018
        %v5020 = vpop.f32.mrb[0].mxu0
        %v5021 = vadd.f32 0.0, %v5020
        %v5022 = vpop.f32.mrb[0].mxu0
        %v5023 = vadd.f32 0.0, %v5022
        %v5024 = vpop.f32.mrb[0].mxu0
        %v5025 = vadd.f32 0.0, %v5024
        %5026 = vmatprep.mubr.bf16.mxu0 %v4679
        %5027 = vmatmul.mubr.bf16.gmra.mrb[0].mxu0 %v4678
        %v5028 = vpop.f32.mrb[0].mxu0
        %v5029 = vadd.f32 0.0, %v5028
        %v5030 = vpop.f32.mrb[0].mxu0
        %v5031 = vadd.f32 0.0, %v5030
        %v5032 = vpop.f32.mrb[0].mxu0
        %v5033 = vadd.f32 0.0, %v5032
        %v5034 = vpop.f32.mrb[0].mxu0
        %v5035 = vadd.f32 0.0, %v5034
        %5036 = vmatprep.mubr.bf16.mxu0 %v4682
        %5037 = vmatmul.mubr.bf16.gmra.mrb[0].mxu0 %v4681
        %v5038 = vpop.f32.mrb[0].mxu0
        %v5039 = vadd.f32 0.0, %v5038
        %v5040 = vpop.f32.mrb[0].mxu0
        %v5041 = vadd.f32 0.0, %v5040
        %v5042 = vpop.f32.mrb[0].mxu0
        %v5043 = vadd.f32 0.0, %v5042
        %v5044 = vpop.f32.mrb[0].mxu0
        %v5045 = vadd.f32 0.0, %v5044
        %5046 = vmatprep.mubr.bf16.mxu0 %v4685
        %5047 = vmatmul.mubr.bf16.gmra.mrb[0].mxu0 %v4684
        %v5048 = vpop.f32.mrb[0].mxu0
        %v5049 = vadd.f32 0.0, %v5048
        %v5050 = vpop.f32.mrb[0].mxu0
        %v5051 = vadd.f32 0.0, %v5050
        %v5052 = vpop.f32.mrb[0].mxu0
        %v5053 = vadd.f32 0.0, %v5052
        %v5054 = vpop.f32.mrb[0].mxu0
        %v5055 = vadd.f32 0.0, %v5054
        %5056 = vmatprep.mubr.bf16.mxu0 %v4688
        %5057 = vmatmul.mubr.bf16.gmra.mrb[0].mxu0 %v4687
        %v5058 = vpop.f32.mrb[0].mxu0
        %v5059 = vadd.f32 0.0, %v5058
        %v5060 = vpop.f32.mrb[0].mxu0
        %v5061 = vadd.f32 0.0, %v5060
        %v5062 = vpop.f32.mrb[0].mxu0
        %v5063 = vadd.f32 0.0, %v5062
        %v5064 = vpop.f32.mrb[0].mxu0
        %v5065 = vadd.f32 0.0, %v5064
        %5066 = vdwg.mxu0
        %5067 = vmatprep.subr.bf16.mxu0 %v4891
        %5068 = vmatpush1.bf16.msra.mxu0 %v4890
        %5069 = vmatprep.subr.bf16.mxu0 %v4893
        %5070 = vmatpush1.bf16.msra.mxu0 %v4892
        %5071 = vmatprep.subr.bf16.mxu0 %v4895
        %5072 = vmatpush1.bf16.msra.mxu0 %v4894
        %5073 = vmatprep.subr.bf16.mxu0 %v4897
        %5074 = vmatpush1.bf16.msra.mxu0 %v4896
        %5075 = vmatprep.subr.bf16.mxu0 %v4899
        %5076 = vmatpush1.bf16.msra.mxu0 %v4898
        %5077 = vmatprep.subr.bf16.mxu0 0
        %5078 = vmatpush1.bf16.msra.mxu0 0
        %5079 = vmatprep.subr.bf16.mxu0 0
        %5080 = vmatpush1.bf16.msra.mxu0 0
        %5081 = vmatprep.subr.bf16.mxu0 0
        %5082 = vmatpush1.bf16.msra.mxu0 0
        %5083 = vmatprep.subr.bf16.mxu0 0
        %5084 = vmatpush1.bf16.msra.mxu0 0
        %5085 = vmatprep.subr.bf16.mxu0 0
        %5086 = vmatpush1.bf16.msra.mxu0 0
        %5087 = vmatprep.subr.bf16.mxu0 0
        %5088 = vmatpush1.bf16.msra.mxu0 0
        %5089 = vmatprep.subr.bf16.mxu0 0
        %5090 = vmatpush1.bf16.msra.mxu0 0
        %5091 = vmatprep.subr.bf16.mxu0 0
        %5092 = vmatpush1.bf16.msra.mxu0 0
        %5093 = vmatprep.subr.bf16.mxu0 0
        %5094 = vmatpush1.bf16.msra.mxu0 0
        %5095 = vmatprep.subr.bf16.mxu0 0
        %5096 = vmatpush1.bf16.msra.mxu0 0
        %5097 = vmatprep.subr.bf16.mxu0 0
        %5098 = vmatpush1.bf16.msra.mxu0 0
        %5099 = vmatprep.mubr.bf16.mxu0 0
        %5100 = vmatmul.mubr.bf16.gmra.mrb[0].mxu0 %v4944
        %v5101 = vpop.f32.mrb[0].mxu0
        %v5102 = vadd.f32 %v4999, %v5101
        %v5103 = vpop.f32.mrb[0].mxu0
        %v5104 = vadd.f32 %v5001, %v5103
        %v5105 = vpop.f32.mrb[0].mxu0
        %v5106 = vadd.f32 %v5003, %v5105
        %v5107 = vpop.f32.mrb[0].mxu0
        %v5108 = vadd.f32 %v5005, %v5107
        %5109 = vmatprep.mubr.bf16.mxu0 0
        %5110 = vmatmul.mubr.bf16.gmra.mrb[0].mxu0 %v4947
        %v5111 = vpop.f32.mrb[0].mxu0
        %v5112 = vadd.f32 %v5009, %v5111
        %v5113 = vpop.f32.mrb[0].mxu0
        %v5114 = vadd.f32 %v5011, %v5113
        %v5115 = vpop.f32.mrb[0].mxu0
        %v5116 = vadd.f32 %v5013, %v5115
        %v5117 = vpop.f32.mrb[0].mxu0
        %v5118 = vadd.f32 %v5015, %v5117
        %5119 = vmatprep.mubr.bf16.mxu0 0
        %5120 = vmatmul.mubr.bf16.gmra.mrb[0].mxu0 %v4950
        %v5121 = vpop.f32.mrb[0].mxu0
        %v5122 = vadd.f32 %v5019, %v5121
        %v5123 = vpop.f32.mrb[0].mxu0
        %v5124 = vadd.f32 %v5021, %v5123
        %v5125 = vpop.f32.mrb[0].mxu0
        %v5126 = vadd.f32 %v5023, %v5125
        %v5127 = vpop.f32.mrb[0].mxu0
        %v5128 = vadd.f32 %v5025, %v5127
        %5129 = vmatprep.mubr.bf16.mxu0 0
        %5130 = vmatmul.mubr.bf16.gmra.mrb[0].mxu0 %v4953
        %v5131 = vpop.f32.mrb[0].mxu0
        %v5132 = vadd.f32 %v5029, %v5131
        %v5133 = vpop.f32.mrb[0].mxu0
        %v5134 = vadd.f32 %v5031, %v5133
        %v5135 = vpop.f32.mrb[0].mxu0
        %v5136 = vadd.f32 %v5033, %v5135
        %v5137 = vpop.f32.mrb[0].mxu0
        %v5138 = vadd.f32 %v5035, %v5137
        %5139 = vmatprep.mubr.bf16.mxu0 0
        %5140 = vmatmul.mubr.bf16.gmra.mrb[0].mxu0 %v4956
        %v5141 = vpop.f32.mrb[0].mxu0
        %v5142 = vadd.f32 %v5039, %v5141
        %v5143 = vpop.f32.mrb[0].mxu0
        %v5144 = vadd.f32 %v5041, %v5143
        %v5145 = vpop.f32.mrb[0].mxu0
        %v5146 = vadd.f32 %v5043, %v5145
        %v5147 = vpop.f32.mrb[0].mxu0
        %v5148 = vadd.f32 %v5045, %v5147
        %5149 = vmatprep.mubr.bf16.mxu0 0
        %5150 = vmatmul.mubr.bf16.gmra.mrb[0].mxu0 %v4959
        %v5151 = vpop.f32.mrb[0].mxu0
        %v5152 = vadd.f32 %v5049, %v5151
        %v5153 = vpop.f32.mrb[0].mxu0
        %v5154 = vadd.f32 %v5051, %v5153
        %v5155 = vpop.f32.mrb[0].mxu0
        %v5156 = vadd.f32 %v5053, %v5155
        %v5157 = vpop.f32.mrb[0].mxu0
        %v5158 = vadd.f32 %v5055, %v5157
        %5159 = vmatprep.mubr.bf16.mxu0 0
        %5160 = vmatmul.mubr.bf16.gmra.mrb[0].mxu0 %v4962
        %v5161 = vpop.f32.mrb[0].mxu0
        %v5162 = vadd.f32 %v5059, %v5161
        %v5163 = vpop.f32.mrb[0].mxu0
        %v5164 = vadd.f32 %v5061, %v5163
        %v5165 = vpop.f32.mrb[0].mxu0
        %v5166 = vadd.f32 %v5063, %v5165
        %v5167 = vpop.f32.mrb[0].mxu0
        %v5168 = vadd.f32 %v5065, %v5167
        %5169 = vdwg.mxu0
        %s5170 = scalar_lea.vmem %s4, 336
        %v5171 = vld [vmem:[%s5170] sm:$0xff]
        %v5172 = vld [vmem:[%s5170 + $0x8] sm:$0xff]
        %v5173 = vld [vmem:[%s5170 + $0x10] sm:$0xff]
        %v5174 = vld [vmem:[%s5170 + $0x18] sm:$0xff]
        %v5175 = vld [vmem:[%s5170 + $0x20] sm:$0xff]
        %v5176 = vld [vmem:[%s5170 + $0x28] sm:$0xff]
        %v5177 = vld [vmem:[%s5170 + $0x30] sm:$0xff]
        %v5178 = vld [vmem:[%s5170 + $0x38] sm:$0xff]
        %v5179 = vld [vmem:[%s5170 + $0x40] sm:$0xff]
        %v5180 = vld [vmem:[%s5170 + $0x48] sm:$0xff]
        %v5181 = vld [vmem:[%s5170 + $0x50] sm:$0xff]
        %v5182 = vld [vmem:[%s5170 + $0x58] sm:$0xff]
        %v5183 = vld [vmem:[%s5170 + $0x60] sm:$0xff]
        %v5184 = vld [vmem:[%s5170 + $0x68] sm:$0xff]
        %v5185 = vld [vmem:[%s5170 + $0x70] sm:$0xff]
        %v5186 = vld [vmem:[%s5170 + $0x78] sm:$0xff]
        %v5187 = vld [vmem:[%s5170 + $0x80] sm:$0xff]
        %v5188 = vld [vmem:[%s5170 + $0x88] sm:$0xff]
        %v5189 = vld [vmem:[%s5170 + $0x90] sm:$0xff]
        %v5190 = vld [vmem:[%s5170 + $0x98] sm:$0xff]
        %v5191 = vld [vmem:[%s5170 + $0xa0] sm:$0xff]
        %v5192 = vld [vmem:[%s5170 + $0xa8] sm:$0xff]
        %v5193 = vld [vmem:[%s5170 + $0xb0] sm:$0xff]
        %v5194 = vld [vmem:[%s5170 + $0xb8] sm:$0xff]
        %v5195 = vld [vmem:[%s5170 + $0xc0] sm:$0xff]
        %v5196 = vld [vmem:[%s5170 + $0xc8] sm:$0xff]
        %v5197 = vld [vmem:[%s5170 + $0xd0] sm:$0xff]
        %v5198 = vld [vmem:[%s5170 + $0xd8] sm:$0xff]
        %v5199 = vld [vmem:[%s5170 + $0xe0] sm:$0xff]
        %v5200 = vld [vmem:[%s5170 + $0xe8] sm:$0xff]
        %v5201 = vld [vmem:[%s5170 + $0xf0] sm:$0xff]
        %v5202 = vld [vmem:[%s5170 + $0xf8] sm:$0xff]
        %v5203 = vld [vmem:[%s5170 + $0x100] sm:$0xff]
        %v5204 = vld [vmem:[%s5170 + $0x108] sm:$0xff]
        %v5205 = vld [vmem:[%s5170 + $0x110] sm:$0xff]
        %v5206 = vld [vmem:[%s5170 + $0x118] sm:$0xff]
        %v5207 = vld [vmem:[%s5170 + $0x120] sm:$0xff]
        %v5208 = vld [vmem:[%s5170 + $0x128] sm:$0xff]
        %v5209 = vld [vmem:[%s5170 + $0x130] sm:$0xff]
        %v5210 = vld [vmem:[%s5170 + $0x138] sm:$0xff]
        %v5211 = vld [vmem:[%s5170 + $0x140] sm:$0xff]
        %v5212 = vld [vmem:[%s5170 + $0x148] sm:$0xff]
        %v5255 = vunpack.c.l.b16 %v5171
        %v5256 = vunpack.c.h.b16 %v5171
        %v5257 = vunpack.c.l.b16 %v5172
        %v5258 = vunpack.c.h.b16 %v5172
        %v5259 = vunpack.c.l.b16 %v5173
        %v5260 = vunpack.c.h.b16 %v5173
        %v5261 = vunpack.c.l.b16 %v5174
        %v5262 = vunpack.c.h.b16 %v5174
        %v5263 = vunpack.c.l.b16 %v5175
        %v5264 = vunpack.c.h.b16 %v5175
        %v5265 = vunpack.c.l.b16 %v5176
        %v5266 = vunpack.c.h.b16 %v5176
        %v5267 = vunpack.c.l.b16 %v5177
        %v5268 = vunpack.c.h.b16 %v5177
        %v5269 = vunpack.c.l.b16 %v5178
        %v5270 = vunpack.c.h.b16 %v5178
        %v5271 = vunpack.c.l.b16 %v5179
        %v5272 = vunpack.c.h.b16 %v5179
        %v5273 = vunpack.c.l.b16 %v5180
        %v5274 = vunpack.c.h.b16 %v5180
        %v5275 = vunpack.c.l.b16 %v5181
        %v5276 = vunpack.c.h.b16 %v5181
        %v5277 = vunpack.c.l.b16 %v5182
        %v5278 = vunpack.c.h.b16 %v5182
        %v5279 = vunpack.c.l.b16 %v5183
        %v5280 = vunpack.c.h.b16 %v5183
        %v5281 = vunpack.c.l.b16 %v5184
        %v5282 = vunpack.c.h.b16 %v5184
        %v5283 = vunpack.c.l.b16 %v5185
        %v5284 = vunpack.c.h.b16 %v5185
        %v5285 = vunpack.c.l.b16 %v5186
        %v5286 = vunpack.c.h.b16 %v5186
        %v5287 = vunpack.c.l.b16 %v5187
        %v5288 = vunpack.c.h.b16 %v5187
        %v5289 = vunpack.c.l.b16 %v5188
        %v5290 = vunpack.c.h.b16 %v5188
        %v5291 = vunpack.c.l.b16 %v5189
        %v5292 = vunpack.c.h.b16 %v5189
        %v5293 = vunpack.c.l.b16 %v5190
        %v5294 = vunpack.c.h.b16 %v5190
        %v5295 = vunpack.c.l.b16 %v5191
        %v5296 = vunpack.c.h.b16 %v5191
        %v5297 = vunpack.c.l.b16 %v5192
        %v5298 = vunpack.c.h.b16 %v5192
        %v5299 = vunpack.c.l.b16 %v5193
        %v5300 = vunpack.c.h.b16 %v5193
        %v5301 = vunpack.c.l.b16 %v5194
        %v5302 = vunpack.c.h.b16 %v5194
        %v5303 = vunpack.c.l.b16 %v5195
        %v5304 = vunpack.c.h.b16 %v5195
        %v5305 = vunpack.c.l.b16 %v5196
        %v5306 = vunpack.c.h.b16 %v5196
        %v5307 = vunpack.c.l.b16 %v5197
        %v5308 = vunpack.c.h.b16 %v5197
        %v5309 = vunpack.c.l.b16 %v5198
        %v5310 = vunpack.c.h.b16 %v5198
        %v5311 = vunpack.c.l.b16 %v5199
        %v5312 = vunpack.c.h.b16 %v5199
        %v5313 = vunpack.c.l.b16 %v5200
        %v5314 = vunpack.c.h.b16 %v5200
        %v5315 = vunpack.c.l.b16 %v5201
        %v5316 = vunpack.c.h.b16 %v5201
        %v5317 = vunpack.c.l.b16 %v5202
        %v5318 = vunpack.c.h.b16 %v5202
        %v5319 = vunpack.c.l.b16 %v5203
        %v5320 = vunpack.c.h.b16 %v5203
        %v5321 = vunpack.c.l.b16 %v5204
        %v5322 = vunpack.c.h.b16 %v5204
        %v5323 = vunpack.c.l.b16 %v5205
        %v5324 = vunpack.c.h.b16 %v5205
        %v5325 = vunpack.c.l.b16 %v5206
        %v5326 = vunpack.c.h.b16 %v5206
        %v5327 = vunpack.c.l.b16 %v5207
        %v5328 = vunpack.c.h.b16 %v5207
        %v5329 = vunpack.c.l.b16 %v5208
        %v5330 = vunpack.c.h.b16 %v5208
        %v5331 = vunpack.c.l.b16 %v5209
        %v5332 = vunpack.c.h.b16 %v5209
        %v5333 = vunpack.c.l.b16 %v5210
        %v5334 = vunpack.c.h.b16 %v5210
        %v5335 = vunpack.c.l.b16 %v5211
        %v5336 = vunpack.c.h.b16 %v5211
        %v5337 = vunpack.c.l.b16 %v5212
        %v5338 = vunpack.c.h.b16 %v5212
        %v5339 = vpack.c.b16 %v5257, %v5255
        %v5340 = vpack.c.b16 %v5258, %v5256
        %v5341 = vpack.c.b16 %v5261, %v5259
        %v5342 = vpack.c.b16 %v5262, %v5260
        %v5343 = vpack.c.b16 %v5265, %v5263
        %v5344 = vpack.c.b16 %v5266, %v5264
        %v5345 = vpack.c.b16 %v5269, %v5267
        %v5346 = vpack.c.b16 %v5270, %v5268
        %v5347 = vpack.c.b16 %v5273, %v5271
        %v5348 = vpack.c.b16 %v5274, %v5272
        %v5349 = vpack.c.b16 %v5277, %v5275
        %v5350 = vpack.c.b16 %v5278, %v5276
        %v5351 = vpack.c.b16 %v5281, %v5279
        %v5352 = vpack.c.b16 %v5282, %v5280
        %v5353 = vpack.c.b16 %v5285, %v5283
        %v5354 = vpack.c.b16 %v5286, %v5284
        %v5355 = vpack.c.b16 %v5289, %v5287
        %v5356 = vpack.c.b16 %v5290, %v5288
        %v5357 = vpack.c.b16 %v5293, %v5291
        %v5358 = vpack.c.b16 %v5294, %v5292
        %v5359 = vpack.c.b16 %v5297, %v5295
        %v5360 = vpack.c.b16 %v5298, %v5296
        %v5361 = vpack.c.b16 %v5301, %v5299
        %v5362 = vpack.c.b16 %v5302, %v5300
        %v5363 = vpack.c.b16 %v5305, %v5303
        %v5364 = vpack.c.b16 %v5306, %v5304
        %v5365 = vpack.c.b16 %v5309, %v5307
        %v5366 = vpack.c.b16 %v5310, %v5308
        %v5367 = vpack.c.b16 %v5313, %v5311
        %v5368 = vpack.c.b16 %v5314, %v5312
        %v5369 = vpack.c.b16 %v5317, %v5315
        %v5370 = vpack.c.b16 %v5318, %v5316
        %v5371 = vpack.c.b16 %v5321, %v5319
        %v5372 = vpack.c.b16 %v5322, %v5320
        %v5373 = vpack.c.b16 %v5325, %v5323
        %v5374 = vpack.c.b16 %v5326, %v5324
        %v5375 = vpack.c.b16 %v5329, %v5327
        %v5376 = vpack.c.b16 %v5330, %v5328
        %v5377 = vpack.c.b16 %v5333, %v5331
        %v5378 = vpack.c.b16 %v5334, %v5332
        %v5379 = vpack.c.b16 %v5337, %v5335
        %v5380 = vpack.c.b16 %v5338, %v5336
        %5423 = vmatprep.subr.bf16.mxu0 %v5340
        %5424 = vmatpush1.bf16.msra.mxu0 %v5339
        %5425 = vmatprep.subr.bf16.mxu0 %v5342
        %5426 = vmatpush1.bf16.msra.mxu0 %v5341
        %5427 = vmatprep.subr.bf16.mxu0 %v5344
        %5428 = vmatpush1.bf16.msra.mxu0 %v5343
        %5429 = vmatprep.subr.bf16.mxu0 %v5346
        %5430 = vmatpush1.bf16.msra.mxu0 %v5345
        %5431 = vmatprep.subr.bf16.mxu0 %v5348
        %5432 = vmatpush1.bf16.msra.mxu0 %v5347
        %5433 = vmatprep.subr.bf16.mxu0 %v5350
        %5434 = vmatpush1.bf16.msra.mxu0 %v5349
        %5435 = vmatprep.subr.bf16.mxu0 %v5352
        %5436 = vmatpush1.bf16.msra.mxu0 %v5351
        %5437 = vmatprep.subr.bf16.mxu0 %v5354
        %5438 = vmatpush1.bf16.msra.mxu0 %v5353
        %5439 = vmatprep.subr.bf16.mxu0 %v5356
        %5440 = vmatpush1.bf16.msra.mxu0 %v5355
        %5441 = vmatprep.subr.bf16.mxu0 %v5358
        %5442 = vmatpush1.bf16.msra.mxu0 %v5357
        %5443 = vmatprep.subr.bf16.mxu0 %v5360
        %5444 = vmatpush1.bf16.msra.mxu0 %v5359
        %5445 = vmatprep.subr.bf16.mxu0 %v5362
        %5446 = vmatpush1.bf16.msra.mxu0 %v5361
        %5447 = vmatprep.subr.bf16.mxu0 %v5364
        %5448 = vmatpush1.bf16.msra.mxu0 %v5363
        %5449 = vmatprep.subr.bf16.mxu0 %v5366
        %5450 = vmatpush1.bf16.msra.mxu0 %v5365
        %5451 = vmatprep.subr.bf16.mxu0 %v5368
        %5452 = vmatpush1.bf16.msra.mxu0 %v5367
        %5453 = vmatprep.subr.bf16.mxu0 %v5370
        %5454 = vmatpush1.bf16.msra.mxu0 %v5369
        %5455 = vmatprep.mubr.bf16.mxu0 %v4670
        %5456 = vmatmul.mubr.bf16.gmra.mrb[0].mxu0 %v4669
        %v5457 = vpop.f32.mrb[0].mxu0
        %v5458 = vadd.f32 0.0, %v5457
        %v5459 = vpop.f32.mrb[0].mxu0
        %v5460 = vadd.f32 0.0, %v5459
        %v5461 = vpop.f32.mrb[0].mxu0
        %v5462 = vadd.f32 0.0, %v5461
        %v5463 = vpop.f32.mrb[0].mxu0
        %v5464 = vadd.f32 0.0, %v5463
        %5465 = vmatprep.mubr.bf16.mxu0 %v4673
        %5466 = vmatmul.mubr.bf16.gmra.mrb[0].mxu0 %v4672
        %v5467 = vpop.f32.mrb[0].mxu0
        %v5468 = vadd.f32 0.0, %v5467
        %v5469 = vpop.f32.mrb[0].mxu0
        %v5470 = vadd.f32 0.0, %v5469
        %v5471 = vpop.f32.mrb[0].mxu0
        %v5472 = vadd.f32 0.0, %v5471
        %v5473 = vpop.f32.mrb[0].mxu0
        %v5474 = vadd.f32 0.0, %v5473
        %5475 = vmatprep.mubr.bf16.mxu0 %v4676
        %5476 = vmatmul.mubr.bf16.gmra.mrb[0].mxu0 %v4675
        %v5477 = vpop.f32.mrb[0].mxu0
        %v5478 = vadd.f32 0.0, %v5477
        %v5479 = vpop.f32.mrb[0].mxu0
        %v5480 = vadd.f32 0.0, %v5479
        %v5481 = vpop.f32.mrb[0].mxu0
        %v5482 = vadd.f32 0.0, %v5481
        %v5483 = vpop.f32.mrb[0].mxu0
        %v5484 = vadd.f32 0.0, %v5483
        %5485 = vmatprep.mubr.bf16.mxu0 %v4679
        %5486 = vmatmul.mubr.bf16.gmra.mrb[0].mxu0 %v4678
        %v5487 = vpop.f32.mrb[0].mxu0
        %v5488 = vadd.f32 0.0, %v5487
        %v5489 = vpop.f32.mrb[0].mxu0
        %v5490 = vadd.f32 0.0, %v5489
        %v5491 = vpop.f32.mrb[0].mxu0
        %v5492 = vadd.f32 0.0, %v5491
        %v5493 = vpop.f32.mrb[0].mxu0
        %v5494 = vadd.f32 0.0, %v5493
        %5495 = vmatprep.mubr.bf16.mxu0 %v4682
        %5496 = vmatmul.mubr.bf16.gmra.mrb[0].mxu0 %v4681
        %v5497 = vpop.f32.mrb[0].mxu0
        %v5498 = vadd.f32 0.0, %v5497
        %v5499 = vpop.f32.mrb[0].mxu0
        %v5500 = vadd.f32 0.0, %v5499
        %v5501 = vpop.f32.mrb[0].mxu0
        %v5502 = vadd.f32 0.0, %v5501
        %v5503 = vpop.f32.mrb[0].mxu0
        %v5504 = vadd.f32 0.0, %v5503
        %5505 = vmatprep.mubr.bf16.mxu0 %v4685
        %5506 = vmatmul.mubr.bf16.gmra.mrb[0].mxu0 %v4684
        %v5507 = vpop.f32.mrb[0].mxu0
        %v5508 = vadd.f32 0.0, %v5507
        %v5509 = vpop.f32.mrb[0].mxu0
        %v5510 = vadd.f32 0.0, %v5509
        %v5511 = vpop.f32.mrb[0].mxu0
        %v5512 = vadd.f32 0.0, %v5511
        %v5513 = vpop.f32.mrb[0].mxu0
        %v5514 = vadd.f32 0.0, %v5513
        %5515 = vmatprep.mubr.bf16.mxu0 %v4688
        %5516 = vmatmul.mubr.bf16.gmra.mrb[0].mxu0 %v4687
        %v5517 = vpop.f32.mrb[0].mxu0
        %v5518 = vadd.f32 0.0, %v5517
        %v5519 = vpop.f32.mrb[0].mxu0
        %v5520 = vadd.f32 0.0, %v5519
        %v5521 = vpop.f32.mrb[0].mxu0
        %v5522 = vadd.f32 0.0, %v5521
        %v5523 = vpop.f32.mrb[0].mxu0
        %v5524 = vadd.f32 0.0, %v5523
        %5525 = vdwg.mxu0
        %5526 = vmatprep.subr.bf16.mxu0 %v5372
        %5527 = vmatpush1.bf16.msra.mxu0 %v5371
        %5528 = vmatprep.subr.bf16.mxu0 %v5374
        %5529 = vmatpush1.bf16.msra.mxu0 %v5373
        %5530 = vmatprep.subr.bf16.mxu0 %v5376
        %5531 = vmatpush1.bf16.msra.mxu0 %v5375
        %5532 = vmatprep.subr.bf16.mxu0 %v5378
        %5533 = vmatpush1.bf16.msra.mxu0 %v5377
        %5534 = vmatprep.subr.bf16.mxu0 %v5380
        %5535 = vmatpush1.bf16.msra.mxu0 %v5379
        %5536 = vmatprep.subr.bf16.mxu0 0
        %5537 = vmatpush1.bf16.msra.mxu0 0
        %5538 = vmatprep.subr.bf16.mxu0 0
        %5539 = vmatpush1.bf16.msra.mxu0 0
        %5540 = vmatprep.subr.bf16.mxu0 0
        %5541 = vmatpush1.bf16.msra.mxu0 0
        %5542 = vmatprep.subr.bf16.mxu0 0
        %5543 = vmatpush1.bf16.msra.mxu0 0
        %5544 = vmatprep.subr.bf16.mxu0 0
        %5545 = vmatpush1.bf16.msra.mxu0 0
        %5546 = vmatprep.subr.bf16.mxu0 0
        %5547 = vmatpush1.bf16.msra.mxu0 0
        %5548 = vmatprep.subr.bf16.mxu0 0
        %5549 = vmatpush1.bf16.msra.mxu0 0
        %5550 = vmatprep.subr.bf16.mxu0 0
        %5551 = vmatpush1.bf16.msra.mxu0 0
        %5552 = vmatprep.subr.bf16.mxu0 0
        %5553 = vmatpush1.bf16.msra.mxu0 0
        %5554 = vmatprep.subr.bf16.mxu0 0
        %5555 = vmatpush1.bf16.msra.mxu0 0
        %5556 = vmatprep.subr.bf16.mxu0 0
        %5557 = vmatpush1.bf16.msra.mxu0 0
        %5558 = vmatprep.mubr.bf16.mxu0 0
        %5559 = vmatmul.mubr.bf16.gmra.mrb[0].mxu0 %v4944
        %v5560 = vpop.f32.mrb[0].mxu0
        %v5561 = vadd.f32 %v5458, %v5560
        %v5562 = vpop.f32.mrb[0].mxu0
        %v5563 = vadd.f32 %v5460, %v5562
        %v5564 = vpop.f32.mrb[0].mxu0
        %v5565 = vadd.f32 %v5462, %v5564
        %v5566 = vpop.f32.mrb[0].mxu0
        %v5567 = vadd.f32 %v5464, %v5566
        %5568 = vmatprep.mubr.bf16.mxu0 0
        %5569 = vmatmul.mubr.bf16.gmra.mrb[0].mxu0 %v4947
        %v5570 = vpop.f32.mrb[0].mxu0
        %v5571 = vadd.f32 %v5468, %v5570
        %v5572 = vpop.f32.mrb[0].mxu0
        %v5573 = vadd.f32 %v5470, %v5572
        %v5574 = vpop.f32.mrb[0].mxu0
        %v5575 = vadd.f32 %v5472, %v5574
        %v5576 = vpop.f32.mrb[0].mxu0
        %v5577 = vadd.f32 %v5474, %v5576
        %5578 = vmatprep.mubr.bf16.mxu0 0
        %5579 = vmatmul.mubr.bf16.gmra.mrb[0].mxu0 %v4950
        %v5580 = vpop.f32.mrb[0].mxu0
        %v5581 = vadd.f32 %v5478, %v5580
        %v5582 = vpop.f32.mrb[0].mxu0
        %v5583 = vadd.f32 %v5480, %v5582
        %v5584 = vpop.f32.mrb[0].mxu0
        %v5585 = vadd.f32 %v5482, %v5584
        %v5586 = vpop.f32.mrb[0].mxu0
        %v5587 = vadd.f32 %v5484, %v5586
        %5588 = vmatprep.mubr.bf16.mxu0 0
        %5589 = vmatmul.mubr.bf16.gmra.mrb[0].mxu0 %v4953
        %v5590 = vpop.f32.mrb[0].mxu0
        %v5591 = vadd.f32 %v5488, %v5590
        %v5592 = vpop.f32.mrb[0].mxu0
        %v5593 = vadd.f32 %v5490, %v5592
        %v5594 = vpop.f32.mrb[0].mxu0
        %v5595 = vadd.f32 %v5492, %v5594
        %v5596 = vpop.f32.mrb[0].mxu0
        %v5597 = vadd.f32 %v5494, %v5596
        %5598 = vmatprep.mubr.bf16.mxu0 0
        %5599 = vmatmul.mubr.bf16.gmra.mrb[0].mxu0 %v4956
        %v5600 = vpop.f32.mrb[0].mxu0
        %v5601 = vadd.f32 %v5498, %v5600
        %v5602 = vpop.f32.mrb[0].mxu0
        %v5603 = vadd.f32 %v5500, %v5602
        %v5604 = vpop.f32.mrb[0].mxu0
        %v5605 = vadd.f32 %v5502, %v5604
        %v5606 = vpop.f32.mrb[0].mxu0
        %v5607 = vadd.f32 %v5504, %v5606
        %5608 = vmatprep.mubr.bf16.mxu0 0
        %5609 = vmatmul.mubr.bf16.gmra.mrb[0].mxu0 %v4959
        %v5610 = vpop.f32.mrb[0].mxu0
        %v5611 = vadd.f32 %v5508, %v5610
        %v5612 = vpop.f32.mrb[0].mxu0
        %v5613 = vadd.f32 %v5510, %v5612
        %v5614 = vpop.f32.mrb[0].mxu0
        %v5615 = vadd.f32 %v5512, %v5614
        %v5616 = vpop.f32.mrb[0].mxu0
        %v5617 = vadd.f32 %v5514, %v5616
        %5618 = vmatprep.mubr.bf16.mxu0 0
        %5619 = vmatmul.mubr.bf16.gmra.mrb[0].mxu0 %v4962
        %v5620 = vpop.f32.mrb[0].mxu0
        %v5621 = vadd.f32 %v5518, %v5620
        %v5622 = vpop.f32.mrb[0].mxu0
        %v5623 = vadd.f32 %v5520, %v5622
        %v5624 = vpop.f32.mrb[0].mxu0
        %v5625 = vadd.f32 %v5522, %v5624
        %v5626 = vpop.f32.mrb[0].mxu0
        %v5627 = vadd.f32 %v5524, %v5626
        %5628 = vdwg.mxu0
        %v5629 = vmax.f32 %v5102, %v5561
        %v5630 = vmax.f32 %v5104, %v5563
        %v5631 = vmax.f32 %v5106, %v5565
        %v5632 = vmax.f32 %v5108, %v5567
        %v5633 = vmax.f32 %v5112, %v5571
        %v5634 = vmax.f32 %v5114, %v5573
        %v5635 = vmax.f32 %v5116, %v5575
        %v5636 = vmax.f32 %v5118, %v5577
        %v5637 = vmax.f32 %v5122, %v5581
        %v5638 = vmax.f32 %v5124, %v5583
        %v5639 = vmax.f32 %v5126, %v5585
        %v5640 = vmax.f32 %v5128, %v5587
        %v5641 = vmax.f32 %v5132, %v5591
        %v5642 = vmax.f32 %v5134, %v5593
        %v5643 = vmax.f32 %v5136, %v5595
        %v5644 = vmax.f32 %v5138, %v5597
        %v5645 = vmax.f32 %v5142, %v5601
        %v5646 = vmax.f32 %v5144, %v5603
        %v5647 = vmax.f32 %v5146, %v5605
        %v5648 = vmax.f32 %v5148, %v5607
        %v5649 = vmax.f32 %v5152, %v5611
        %v5650 = vmax.f32 %v5154, %v5613
        %v5651 = vmax.f32 %v5156, %v5615
        %v5652 = vmax.f32 %v5158, %v5617
        %v5653 = vmax.f32 %v5162, %v5621
        %v5654 = vmax.f32 %v5164, %v5623
        %v5655 = vmax.f32 %v5166, %v5625
        %v5656 = vmax.f32 %v5168, %v5627
        %v5657 = vpack.c.bf16 %v5631, %v5629
        %v5658 = vpack.c.bf16 %v5632, %v5630
        %v5659 = vpack.c.bf16 %v5635, %v5633
        %v5660 = vpack.c.bf16 %v5636, %v5634
        %v5661 = vpack.c.bf16 %v5639, %v5637
        %v5662 = vpack.c.bf16 %v5640, %v5638
        %v5663 = vpack.c.bf16 %v5643, %v5641
        %v5664 = vpack.c.bf16 %v5644, %v5642
        %v5665 = vpack.c.bf16 %v5647, %v5645
        %v5666 = vpack.c.bf16 %v5648, %v5646
        %v5667 = vpack.c.bf16 %v5651, %v5649
        %v5668 = vpack.c.bf16 %v5652, %v5650
        %v5669 = vpack.c.bf16 %v5655, %v5653
        %v5670 = vpack.c.bf16 %v5656, %v5654
        %v5671 = vld [vmem:[%s5] sm:$0xff]
        %v5672 = vld [vmem:[%s5 + $0x8] sm:$0xf]
        %v5673 = vld [vmem:[%s5 + $0xc] sm:$0xff]
        %v5674 = vld [vmem:[%s5 + $0x14] sm:$0xf]
        %v5675 = vld [vmem:[%s5 + $0x18] sm:$0xff]
        %v5676 = vld [vmem:[%s5 + $0x20] sm:$0xf]
        %v5677 = vld [vmem:[%s5 + $0x24] sm:$0xff]
        %v5678 = vld [vmem:[%s5 + $0x2c] sm:$0xf]
        %v5679 = vld [vmem:[%s5 + $0x30] sm:$0xff]
        %v5680 = vld [vmem:[%s5 + $0x38] sm:$0xf]
        %v5681 = vld [vmem:[%s5 + $0x3c] sm:$0xff]
        %v5682 = vld [vmem:[%s5 + $0x44] sm:$0xf]
        %v5683 = vld [vmem:[%s5 + $0x48] sm:$0xff]
        %v5684 = vld [vmem:[%s5 + $0x50] sm:$0xf]
        %v5685 = vld [vmem:[%s5 + $0x54] sm:$0xff]
        %v5686 = vld [vmem:[%s5 + $0x5c] sm:$0xf]
        %v5687 = vld [vmem:[%s5 + $0x60] sm:$0xff]
        %v5688 = vld [vmem:[%s5 + $0x68] sm:$0xf]
        %v5689 = vld [vmem:[%s5 + $0x6c] sm:$0xff]
        %v5690 = vld [vmem:[%s5 + $0x74] sm:$0xf]
        %v5691 = vld [vmem:[%s5 + $0x78] sm:$0xff]
        %v5692 = vld [vmem:[%s5 + $0x80] sm:$0xf]
        %v5693 = vld [vmem:[%s5 + $0x84] sm:$0xff]
        %v5694 = vld [vmem:[%s5 + $0x8c] sm:$0xf]
        %v5695 = vld [vmem:[%s5 + $0x90] sm:$0xff]
        %v5696 = vld [vmem:[%s5 + $0x98] sm:$0xf]
        %v5697 = vld [vmem:[%s5 + $0x9c] sm:$0xff]
        %v5698 = vld [vmem:[%s5 + $0xa4] sm:$0xf]
        %v5699 = vld [vmem:[%s5 + $0xa8] sm:$0xff]
        %v5700 = vld [vmem:[%s5 + $0xb0] sm:$0xf]
        %v5701 = vld [vmem:[%s5 + $0xb4] sm:$0xff]
        %v5702 = vld [vmem:[%s5 + $0xbc] sm:$0xf]
        %v5703 = vld [vmem:[%s5 + $0xc0] sm:$0xff]
        %v5704 = vld [vmem:[%s5 + $0xc8] sm:$0xf]
        %v5705 = vld [vmem:[%s5 + $0xcc] sm:$0xff]
        %v5706 = vld [vmem:[%s5 + $0xd4] sm:$0xf]
        %v5707 = vld [vmem:[%s5 + $0xd8] sm:$0xff]
        %v5708 = vld [vmem:[%s5 + $0xe0] sm:$0xf]
        %v5709 = vld [vmem:[%s5 + $0xe4] sm:$0xff]
        %v5710 = vld [vmem:[%s5 + $0xec] sm:$0xf]
        %v5711 = vld [vmem:[%s5 + $0xf0] sm:$0xff]
        %v5712 = vld [vmem:[%s5 + $0xf8] sm:$0xf]
        %s5713 = scalar_lea.vmem %s5, 252
        %v5714 = vld [vmem:[%s5713] sm:$0xff]
        %v5715 = vld [vmem:[%s5713 + $0x8] sm:$0xf]
        %v5716 = vld [vmem:[%s5713 + $0xc] sm:$0xff]
        %v5717 = vld [vmem:[%s5713 + $0x14] sm:$0xf]
        %v5718 = vld [vmem:[%s5713 + $0x18] sm:$0xff]
        %v5719 = vld [vmem:[%s5713 + $0x20] sm:$0xf]
        %v5720 = vld [vmem:[%s5713 + $0x24] sm:$0xff]
        %v5721 = vld [vmem:[%s5713 + $0x2c] sm:$0xf]
        %v5722 = vld [vmem:[%s5713 + $0x30] sm:$0xff]
        %v5723 = vld [vmem:[%s5713 + $0x38] sm:$0xf]
        %v5724 = vld [vmem:[%s5713 + $0x3c] sm:$0xff]
        %v5725 = vld [vmem:[%s5713 + $0x44] sm:$0xf]
        %v5726 = vld [vmem:[%s5713 + $0x48] sm:$0xff]
        %v5727 = vld [vmem:[%s5713 + $0x50] sm:$0xf]
        %v5728 = vld [vmem:[%s5713 + $0x54] sm:$0xff]
        %v5729 = vld [vmem:[%s5713 + $0x5c] sm:$0xf]
        %v5730 = vld [vmem:[%s5713 + $0x60] sm:$0xff]
        %v5731 = vld [vmem:[%s5713 + $0x68] sm:$0xf]
        %v5732 = vld [vmem:[%s5713 + $0x6c] sm:$0xff]
        %v5733 = vld [vmem:[%s5713 + $0x74] sm:$0xf]
        %v5734 = vld [vmem:[%s5713 + $0x78] sm:$0xff]
        %v5735 = vld [vmem:[%s5713 + $0x80] sm:$0xf]
        %v5736 = vld [vmem:[%s5713 + $0x84] sm:$0xff]
        %v5737 = vld [vmem:[%s5713 + $0x8c] sm:$0xf]
        %v5738 = vld [vmem:[%s5713 + $0x90] sm:$0xff]
        %v5739 = vld [vmem:[%s5713 + $0x98] sm:$0xf]
        %v5740 = vld [vmem:[%s5713 + $0x9c] sm:$0xff]
        %v5741 = vld [vmem:[%s5713 + $0xa4] sm:$0xf]
        %v5742 = vld [vmem:[%s5713 + $0xa8] sm:$0xff]
        %v5743 = vld [vmem:[%s5713 + $0xb0] sm:$0xf]
        %v5744 = vld [vmem:[%s5713 + $0xb4] sm:$0xff]
        %v5745 = vld [vmem:[%s5713 + $0xbc] sm:$0xf]
        %v5746 = vld [vmem:[%s5713 + $0xc0] sm:$0xff]
        %v5747 = vld [vmem:[%s5713 + $0xc8] sm:$0xf]
        %v5748 = vld [vmem:[%s5713 + $0xcc] sm:$0xff]
        %v5749 = vld [vmem:[%s5713 + $0xd4] sm:$0xf]
        %v5750 = vld [vmem:[%s5713 + $0xd8] sm:$0xff]
        %v5751 = vld [vmem:[%s5713 + $0xe0] sm:$0xf]
        %v5752 = vld [vmem:[%s5713 + $0xe4] sm:$0xff]
        %v5753 = vld [vmem:[%s5713 + $0xec] sm:$0xf]
        %v5754 = vld [vmem:[%s5713 + $0xf0] sm:$0xff]
        %v5755 = vld [vmem:[%s5713 + $0xf8] sm:$0xf]
        %v5757 = vshrl.u32 %v5657, 16
        %v5759 = vshll.u32 %v5657, 16
        %v5761 = vrot.slane %v5759, 1
        %v5762 = vor.u32 %v5757, %v5761
        %v5764 = vshll.u32 %v5659, 16
        %v5766 = vrot.slane %v5764, 1
        %v5767 = vsel %vm684, %v5762, %v5766
        %v5769 = vshrl.u32 %v5658, 16
        %v5771 = vshll.u32 %v5658, 16
        %v5773 = vrot.slane %v5771, 1
        %v5774 = vor.u32 %v5769, %v5773
        %v5776 = vshll.u32 %v5660, 16
        %v5778 = vrot.slane %v5776, 1
        %v5779 = vsel %vm684, %v5774, %v5778
        %v5780 = vshrl.u32 %v5659, 16
        %v5782 = vor.u32 %v5780, %v5766
        %v5784 = vshll.u32 %v5661, 16
        %v5786 = vrot.slane %v5784, 1
        %v5787 = vsel %vm684, %v5782, %v5786
        %v5788 = vshrl.u32 %v5660, 16
        %v5790 = vor.u32 %v5788, %v5778
        %v5792 = vshll.u32 %v5662, 16
        %v5794 = vrot.slane %v5792, 1
        %v5795 = vsel %vm684, %v5790, %v5794
        %v5796 = vshrl.u32 %v5661, 16
        %v5798 = vor.u32 %v5796, %v5786
        %v5800 = vshll.u32 %v5663, 16
        %v5802 = vrot.slane %v5800, 1
        %v5803 = vsel %vm684, %v5798, %v5802
        %v5804 = vshrl.u32 %v5662, 16
        %v5806 = vor.u32 %v5804, %v5794
        %v5808 = vshll.u32 %v5664, 16
        %v5810 = vrot.slane %v5808, 1
        %v5811 = vsel %vm684, %v5806, %v5810
        %v5812 = vshrl.u32 %v5663, 16
        %v5814 = vor.u32 %v5812, %v5802
        %v5816 = vshll.u32 %v5665, 16
        %v5818 = vrot.slane %v5816, 1
        %v5819 = vsel %vm684, %v5814, %v5818
        %v5820 = vshrl.u32 %v5664, 16
        %v5822 = vor.u32 %v5820, %v5810
        %v5824 = vshll.u32 %v5666, 16
        %v5826 = vrot.slane %v5824, 1
        %v5827 = vsel %vm684, %v5822, %v5826
        %v5828 = vshrl.u32 %v5665, 16
        %v5830 = vor.u32 %v5828, %v5818
        %v5832 = vshll.u32 %v5667, 16
        %v5834 = vrot.slane %v5832, 1
        %v5835 = vsel %vm684, %v5830, %v5834
        %v5836 = vshrl.u32 %v5666, 16
        %v5838 = vor.u32 %v5836, %v5826
        %v5840 = vshll.u32 %v5668, 16
        %v5842 = vrot.slane %v5840, 1
        %v5843 = vsel %vm684, %v5838, %v5842
        %v5844 = vshrl.u32 %v5667, 16
        %v5846 = vor.u32 %v5844, %v5834
        %v5848 = vshll.u32 %v5669, 16
        %v5850 = vrot.slane %v5848, 1
        %v5851 = vsel %vm684, %v5846, %v5850
        %v5852 = vshrl.u32 %v5668, 16
        %v5854 = vor.u32 %v5852, %v5842
        %v5856 = vshll.u32 %v5670, 16
        %v5858 = vrot.slane %v5856, 1
        %v5859 = vsel %vm684, %v5854, %v5858
        %v5860 = vshrl.u32 %v5669, 16
        %v5862 = vor.u32 %v5860, %v5850
        %v5863 = vshrl.u32 %v5670, 16
        %v5865 = vor.u32 %v5863, %v5858
        %v5915 = vunpack.c.l.b16 %v5714
        %v5916 = vunpack.c.h.b16 %v5714
        %v5917 = vunpack.c.l.b16 %v5715
        %v5918 = vunpack.c.l.b16 %v5716
        %v5919 = vunpack.c.h.b16 %v5716
        %v5920 = vunpack.c.l.b16 %v5717
        %v5921 = vunpack.c.l.b16 %v5718
        %v5922 = vunpack.c.h.b16 %v5718
        %v5923 = vunpack.c.l.b16 %v5719
        %v5924 = vunpack.c.l.b16 %v5720
        %v5925 = vunpack.c.h.b16 %v5720
        %v5926 = vunpack.c.l.b16 %v5721
        %v5927 = vunpack.c.l.b16 %v5722
        %v5928 = vunpack.c.h.b16 %v5722
        %v5929 = vunpack.c.l.b16 %v5723
        %v5930 = vunpack.c.l.b16 %v5724
        %v5931 = vunpack.c.h.b16 %v5724
        %v5932 = vunpack.c.l.b16 %v5725
        %v5933 = vunpack.c.l.b16 %v5726
        %v5934 = vunpack.c.h.b16 %v5726
        %v5935 = vunpack.c.l.b16 %v5727
        %v5936 = vunpack.c.l.b16 %v5728
        %v5937 = vunpack.c.h.b16 %v5728
        %v5938 = vunpack.c.l.b16 %v5729
        %v5939 = vunpack.c.l.b16 %v5730
        %v5940 = vunpack.c.h.b16 %v5730
        %v5941 = vunpack.c.l.b16 %v5731
        %v5942 = vunpack.c.l.b16 %v5732
        %v5943 = vunpack.c.h.b16 %v5732
        %v5944 = vunpack.c.l.b16 %v5733
        %v5945 = vunpack.c.l.b16 %v5734
        %v5946 = vunpack.c.h.b16 %v5734
        %v5947 = vunpack.c.l.b16 %v5735
        %v5948 = vunpack.c.l.b16 %v5736
        %v5949 = vunpack.c.h.b16 %v5736
        %v5950 = vunpack.c.l.b16 %v5737
        %v5951 = vunpack.c.l.b16 %v5738
        %v5952 = vunpack.c.h.b16 %v5738
        %v5953 = vunpack.c.l.b16 %v5739
        %v5954 = vunpack.c.l.b16 %v5740
        %v5955 = vunpack.c.h.b16 %v5740
        %v5956 = vunpack.c.l.b16 %v5741
        %v5957 = vunpack.c.l.b16 %v5742
        %v5958 = vunpack.c.h.b16 %v5742
        %v5959 = vunpack.c.l.b16 %v5743
        %v5960 = vunpack.c.l.b16 %v5744
        %v5961 = vunpack.c.h.b16 %v5744
        %v5962 = vunpack.c.l.b16 %v5745
        %v5963 = vunpack.c.l.b16 %v5746
        %v5964 = vunpack.c.h.b16 %v5746
        %v5965 = vunpack.c.l.b16 %v5747
        %v5966 = vunpack.c.l.b16 %v5748
        %v5967 = vunpack.c.h.b16 %v5748
        %v5968 = vunpack.c.l.b16 %v5749
        %v5969 = vunpack.c.l.b16 %v5750
        %v5970 = vunpack.c.h.b16 %v5750
        %v5971 = vunpack.c.l.b16 %v5751
        %v5972 = vunpack.c.l.b16 %v5752
        %v5973 = vunpack.c.h.b16 %v5752
        %v5974 = vunpack.c.l.b16 %v5753
        %v5975 = vunpack.c.l.b16 %v5754
        %v5976 = vunpack.c.h.b16 %v5754
        %v5977 = vunpack.c.l.b16 %v5755
        %v5978 = vpack.c.b16 %v5918, %v5915
        %v5979 = vpack.c.b16 %v5919, %v5916
        %v5980 = vpack.c.b16 %v5920, %v5917
        %v5981 = vpack.c.b16 %v5924, %v5921
        %v5982 = vpack.c.b16 %v5925, %v5922
        %v5983 = vpack.c.b16 %v5926, %v5923
        %v5984 = vpack.c.b16 %v5930, %v5927
        %v5985 = vpack.c.b16 %v5931, %v5928
        %v5986 = vpack.c.b16 %v5932, %v5929
        %v5987 = vpack.c.b16 %v5936, %v5933
        %v5988 = vpack.c.b16 %v5937, %v5934
        %v5989 = vpack.c.b16 %v5938, %v5935
        %v5990 = vpack.c.b16 %v5942, %v5939
        %v5991 = vpack.c.b16 %v5943, %v5940
        %v5992 = vpack.c.b16 %v5944, %v5941
        %v5993 = vpack.c.b16 %v5948, %v5945
        %v5994 = vpack.c.b16 %v5949, %v5946
        %v5995 = vpack.c.b16 %v5950, %v5947
        %v5996 = vpack.c.b16 %v5954, %v5951
        %v5997 = vpack.c.b16 %v5955, %v5952
        %v5998 = vpack.c.b16 %v5956, %v5953
        %v5999 = vpack.c.b16 %v5960, %v5957
        %v6000 = vpack.c.b16 %v5961, %v5958
        %v6001 = vpack.c.b16 %v5962, %v5959
        %v6002 = vpack.c.b16 %v5966, %v5963
        %v6003 = vpack.c.b16 %v5967, %v5964
        %v6004 = vpack.c.b16 %v5968, %v5965
        %v6005 = vpack.c.b16 %v5972, %v5969
        %v6006 = vpack.c.b16 %v5973, %v5970
        %v6007 = vpack.c.b16 %v5974, %v5971
        %v6008 = vpack.c.b16 %v5975, %v5975
        %v6009 = vpack.c.b16 %v5976, %v5976
        %v6010 = vpack.c.b16 %v5977, %v5977
        %vm6041 = vcmask 326656
        %v6043 = vsel %vm6041, %v5779, 0
        %v6046 = vsel %vm6041, %v5795, 0
        %v6049 = vsel %vm6041, %v5811, 0
        %v6052 = vsel %vm6041, %v5827, 0
        %v6055 = vsel %vm6041, %v5843, 0
        %v6058 = vsel %vm6041, %v5859, 0
        %v6061 = vsel %vm6041, %v5865, 0
        %vm6063 = vcmask 1043456
        %v6065 = vsel %vm6063, %v6008, 0
        %v6068 = vsel %vm6063, %v6009, 0
        %v6071 = vsel %vm6063, %v6010, 0
        %6073 = vmatprep.subr.bf16.mxu0 %v5979
        %6074 = vmatpush1.bf16.msra.mxu0 %v5978
        %6075 = vmatprep.subr.bf16.mxu0 %v5982
        %6076 = vmatpush1.bf16.msra.mxu0 %v5981
        %6077 = vmatprep.subr.bf16.mxu0 %v5985
        %6078 = vmatpush1.bf16.msra.mxu0 %v5984
        %6079 = vmatprep.subr.bf16.mxu0 %v5988
        %6080 = vmatpush1.bf16.msra.mxu0 %v5987
        %6081 = vmatprep.subr.bf16.mxu0 %v5991
        %6082 = vmatpush1.bf16.msra.mxu0 %v5990
        %6083 = vmatprep.subr.bf16.mxu0 %v5994
        %6084 = vmatpush1.bf16.msra.mxu0 %v5993
        %6085 = vmatprep.subr.bf16.mxu0 %v5997
        %6086 = vmatpush1.bf16.msra.mxu0 %v5996
        %6087 = vmatprep.subr.bf16.mxu0 %v6000
        %6088 = vmatpush1.bf16.msra.mxu0 %v5999
        %6089 = vmatprep.subr.bf16.mxu0 %v6003
        %6090 = vmatpush1.bf16.msra.mxu0 %v6002
        %6091 = vmatprep.subr.bf16.mxu0 %v6006
        %6092 = vmatpush1.bf16.msra.mxu0 %v6005
        %6093 = vmatprep.subr.bf16.mxu0 %v6068
        %6094 = vmatpush1.bf16.msra.mxu0 %v6065
        %6095 = vmatprep.subr.bf16.mxu0 0
        %6096 = vmatpush1.bf16.msra.mxu0 0
        %6097 = vmatprep.subr.bf16.mxu0 0
        %6098 = vmatpush1.bf16.msra.mxu0 0
        %6099 = vmatprep.subr.bf16.mxu0 0
        %6100 = vmatpush1.bf16.msra.mxu0 0
        %6101 = vmatprep.subr.bf16.mxu0 0
        %6102 = vmatpush1.bf16.msra.mxu0 0
        %6103 = vmatprep.subr.bf16.mxu0 0
        %6104 = vmatpush1.bf16.msra.mxu0 0
        %6105 = vmatprep.mubr.bf16.mxu0 %v6043
        %6106 = vmatmul.mubr.bf16.gmra.mrb[0].mxu0 %v5767
        %v6107 = vpop.f32.mrb[0].mxu0
        %v6108 = vadd.f32 0.0, %v6107
        %v6109 = vpop.f32.mrb[0].mxu0
        %v6110 = vadd.f32 0.0, %v6109
        %v6111 = vpop.f32.mrb[0].mxu0
        %v6112 = vadd.f32 0.0, %v6111
        %v6113 = vpop.f32.mrb[0].mxu0
        %v6114 = vadd.f32 0.0, %v6113
        %6115 = vmatprep.mubr.bf16.mxu0 %v6046
        %6116 = vmatmul.mubr.bf16.gmra.mrb[0].mxu0 %v5787
        %v6117 = vpop.f32.mrb[0].mxu0
        %v6118 = vadd.f32 0.0, %v6117
        %v6119 = vpop.f32.mrb[0].mxu0
        %v6120 = vadd.f32 0.0, %v6119
        %v6121 = vpop.f32.mrb[0].mxu0
        %v6122 = vadd.f32 0.0, %v6121
        %v6123 = vpop.f32.mrb[0].mxu0
        %v6124 = vadd.f32 0.0, %v6123
        %6125 = vmatprep.mubr.bf16.mxu0 %v6049
        %6126 = vmatmul.mubr.bf16.gmra.mrb[0].mxu0 %v5803
        %v6127 = vpop.f32.mrb[0].mxu0
        %v6128 = vadd.f32 0.0, %v6127
        %v6129 = vpop.f32.mrb[0].mxu0
        %v6130 = vadd.f32 0.0, %v6129
        %v6131 = vpop.f32.mrb[0].mxu0
        %v6132 = vadd.f32 0.0, %v6131
        %v6133 = vpop.f32.mrb[0].mxu0
        %v6134 = vadd.f32 0.0, %v6133
        %6135 = vmatprep.mubr.bf16.mxu0 %v6052
        %6136 = vmatmul.mubr.bf16.gmra.mrb[0].mxu0 %v5819
        %v6137 = vpop.f32.mrb[0].mxu0
        %v6138 = vadd.f32 0.0, %v6137
        %v6139 = vpop.f32.mrb[0].mxu0
        %v6140 = vadd.f32 0.0, %v6139
        %v6141 = vpop.f32.mrb[0].mxu0
        %v6142 = vadd.f32 0.0, %v6141
        %v6143 = vpop.f32.mrb[0].mxu0
        %v6144 = vadd.f32 0.0, %v6143
        %6145 = vmatprep.mubr.bf16.mxu0 %v6055
        %6146 = vmatmul.mubr.bf16.gmra.mrb[0].mxu0 %v5835
        %v6147 = vpop.f32.mrb[0].mxu0
        %v6148 = vadd.f32 0.0, %v6147
        %v6149 = vpop.f32.mrb[0].mxu0
        %v6150 = vadd.f32 0.0, %v6149
        %v6151 = vpop.f32.mrb[0].mxu0
        %v6152 = vadd.f32 0.0, %v6151
        %v6153 = vpop.f32.mrb[0].mxu0
        %v6154 = vadd.f32 0.0, %v6153
        %6155 = vmatprep.mubr.bf16.mxu0 %v6058
        %6156 = vmatmul.mubr.bf16.gmra.mrb[0].mxu0 %v5851
        %v6157 = vpop.f32.mrb[0].mxu0
        %v6158 = vadd.f32 0.0, %v6157
        %v6159 = vpop.f32.mrb[0].mxu0
        %v6160 = vadd.f32 0.0, %v6159
        %v6161 = vpop.f32.mrb[0].mxu0
        %v6162 = vadd.f32 0.0, %v6161
        %v6163 = vpop.f32.mrb[0].mxu0
        %v6164 = vadd.f32 0.0, %v6163
        %6165 = vmatprep.mubr.bf16.mxu0 %v6061
        %6166 = vmatmul.mubr.bf16.gmra.mrb[0].mxu0 %v5862
        %v6167 = vpop.f32.mrb[0].mxu0
        %v6168 = vadd.f32 0.0, %v6167
        %v6169 = vpop.f32.mrb[0].mxu0
        %v6170 = vadd.f32 0.0, %v6169
        %v6171 = vpop.f32.mrb[0].mxu0
        %v6172 = vadd.f32 0.0, %v6171
        %v6173 = vpop.f32.mrb[0].mxu0
        %v6174 = vadd.f32 0.0, %v6173
        %6175 = vdwg.mxu0
        %6176 = vmatprep.subr.bf16.mxu0 0
        %6177 = vmatpush1.bf16.msra.mxu0 %v5980
        %6178 = vmatprep.subr.bf16.mxu0 0
        %6179 = vmatpush1.bf16.msra.mxu0 %v5983
        %6180 = vmatprep.subr.bf16.mxu0 0
        %6181 = vmatpush1.bf16.msra.mxu0 %v5986
        %6182 = vmatprep.subr.bf16.mxu0 0
        %6183 = vmatpush1.bf16.msra.mxu0 %v5989
        %6184 = vmatprep.subr.bf16.mxu0 0
        %6185 = vmatpush1.bf16.msra.mxu0 %v5992
        %6186 = vmatprep.subr.bf16.mxu0 0
        %6187 = vmatpush1.bf16.msra.mxu0 %v5995
        %6188 = vmatprep.subr.bf16.mxu0 0
        %6189 = vmatpush1.bf16.msra.mxu0 %v5998
        %6190 = vmatprep.subr.bf16.mxu0 0
        %6191 = vmatpush1.bf16.msra.mxu0 %v6001
        %6192 = vmatprep.subr.bf16.mxu0 0
        %6193 = vmatpush1.bf16.msra.mxu0 %v6004
        %6194 = vmatprep.subr.bf16.mxu0 0
        %6195 = vmatpush1.bf16.msra.mxu0 %v6007
        %6196 = vmatprep.subr.bf16.mxu0 0
        %6197 = vmatpush1.bf16.msra.mxu0 %v6071
        %6198 = vmatprep.subr.bf16.mxu0 0
        %6199 = vmatpush1.bf16.msra.mxu0 0
        %6200 = vmatprep.subr.bf16.mxu0 0
        %6201 = vmatpush1.bf16.msra.mxu0 0
        %6202 = vmatprep.subr.bf16.mxu0 0
        %6203 = vmatpush1.bf16.msra.mxu0 0
        %6204 = vmatprep.subr.bf16.mxu0 0
        %6205 = vmatpush1.bf16.msra.mxu0 0
        %6206 = vmatprep.subr.bf16.mxu0 0
        %6207 = vmatpush1.bf16.msra.mxu0 0
        %6208 = vmatprep.mubr.bf16.mxu0 %v6043
        %6209 = vmatmul.mubr.bf16.gmra.mrb[0].mxu0 %v5767
        %v6210 = vpop.f32.mrb[0].mxu0
        %v6211 = vadd.f32 0.0, %v6210
        %v6212 = vpop.f32.mrb[0].mxu0
        %v6213 = vpop.f32.mrb[0].mxu0
        %v6214 = vadd.f32 0.0, %v6213
        %v6215 = vpop.f32.mrb[0].mxu0
        %6216 = vmatprep.mubr.bf16.mxu0 %v6046
        %6217 = vmatmul.mubr.bf16.gmra.mrb[0].mxu0 %v5787
        %v6218 = vpop.f32.mrb[0].mxu0
        %v6219 = vadd.f32 0.0, %v6218
        %v6220 = vpop.f32.mrb[0].mxu0
        %v6221 = vpop.f32.mrb[0].mxu0
        %v6222 = vadd.f32 0.0, %v6221
        %v6223 = vpop.f32.mrb[0].mxu0
        %6224 = vmatprep.mubr.bf16.mxu0 %v6049
        %6225 = vmatmul.mubr.bf16.gmra.mrb[0].mxu0 %v5803
        %v6226 = vpop.f32.mrb[0].mxu0
        %v6227 = vadd.f32 0.0, %v6226
        %v6228 = vpop.f32.mrb[0].mxu0
        %v6229 = vpop.f32.mrb[0].mxu0
        %v6230 = vadd.f32 0.0, %v6229
        %v6231 = vpop.f32.mrb[0].mxu0
        %6232 = vmatprep.mubr.bf16.mxu0 %v6052
        %6233 = vmatmul.mubr.bf16.gmra.mrb[0].mxu0 %v5819
        %v6234 = vpop.f32.mrb[0].mxu0
        %v6235 = vadd.f32 0.0, %v6234
        %v6236 = vpop.f32.mrb[0].mxu0
        %v6237 = vpop.f32.mrb[0].mxu0
        %v6238 = vadd.f32 0.0, %v6237
        %v6239 = vpop.f32.mrb[0].mxu0
        %6240 = vmatprep.mubr.bf16.mxu0 %v6055
        %6241 = vmatmul.mubr.bf16.gmra.mrb[0].mxu0 %v5835
        %v6242 = vpop.f32.mrb[0].mxu0
        %v6243 = vadd.f32 0.0, %v6242
        %v6244 = vpop.f32.mrb[0].mxu0
        %v6245 = vpop.f32.mrb[0].mxu0
        %v6246 = vadd.f32 0.0, %v6245
        %v6247 = vpop.f32.mrb[0].mxu0
        %6248 = vmatprep.mubr.bf16.mxu0 %v6058
        %6249 = vmatmul.mubr.bf16.gmra.mrb[0].mxu0 %v5851
        %v6250 = vpop.f32.mrb[0].mxu0
        %v6251 = vadd.f32 0.0, %v6250
        %v6252 = vpop.f32.mrb[0].mxu0
        %v6253 = vpop.f32.mrb[0].mxu0
        %v6254 = vadd.f32 0.0, %v6253
        %v6255 = vpop.f32.mrb[0].mxu0
        %6256 = vmatprep.mubr.bf16.mxu0 %v6061
        %6257 = vmatmul.mubr.bf16.gmra.mrb[0].mxu0 %v5862
        %v6258 = vpop.f32.mrb[0].mxu0
        %v6259 = vadd.f32 0.0, %v6258
        %v6260 = vpop.f32.mrb[0].mxu0
        %v6261 = vpop.f32.mrb[0].mxu0
        %v6262 = vadd.f32 0.0, %v6261
        %v6263 = vpop.f32.mrb[0].mxu0
        %6264 = vdwg.mxu0
        %v6307 = vunpack.c.l.b16 %v5671
        %v6308 = vunpack.c.h.b16 %v5671
        %v6309 = vunpack.c.l.b16 %v5672
        %v6310 = vunpack.c.l.b16 %v5673
        %v6311 = vunpack.c.h.b16 %v5673
        %v6312 = vunpack.c.l.b16 %v5674
        %v6313 = vunpack.c.l.b16 %v5675
        %v6314 = vunpack.c.h.b16 %v5675
        %v6315 = vunpack.c.l.b16 %v5676
        %v6316 = vunpack.c.l.b16 %v5677
        %v6317 = vunpack.c.h.b16 %v5677
        %v6318 = vunpack.c.l.b16 %v5678
        %v6319 = vunpack.c.l.b16 %v5679
        %v6320 = vunpack.c.h.b16 %v5679
        %v6321 = vunpack.c.l.b16 %v5680
        %v6322 = vunpack.c.l.b16 %v5681
        %v6323 = vunpack.c.h.b16 %v5681
        %v6324 = vunpack.c.l.b16 %v5682
        %v6325 = vunpack.c.l.b16 %v5683
        %v6326 = vunpack.c.h.b16 %v5683
        %v6327 = vunpack.c.l.b16 %v5684
        %v6328 = vunpack.c.l.b16 %v5685
        %v6329 = vunpack.c.h.b16 %v5685
        %v6330 = vunpack.c.l.b16 %v5686
        %v6331 = vunpack.c.l.b16 %v5687
        %v6332 = vunpack.c.h.b16 %v5687
        %v6333 = vunpack.c.l.b16 %v5688
        %v6334 = vunpack.c.l.b16 %v5689
        %v6335 = vunpack.c.h.b16 %v5689
        %v6336 = vunpack.c.l.b16 %v5690
        %v6337 = vunpack.c.l.b16 %v5691
        %v6338 = vunpack.c.h.b16 %v5691
        %v6339 = vunpack.c.l.b16 %v5692
        %v6340 = vunpack.c.l.b16 %v5693
        %v6341 = vunpack.c.h.b16 %v5693
        %v6342 = vunpack.c.l.b16 %v5694
        %v6343 = vunpack.c.l.b16 %v5695
        %v6344 = vunpack.c.h.b16 %v5695
        %v6345 = vunpack.c.l.b16 %v5696
        %v6346 = vunpack.c.l.b16 %v5697
        %v6347 = vunpack.c.h.b16 %v5697
        %v6348 = vunpack.c.l.b16 %v5698
        %v6349 = vunpack.c.l.b16 %v5699
        %v6350 = vunpack.c.h.b16 %v5699
        %v6351 = vunpack.c.l.b16 %v5700
        %v6352 = vunpack.c.l.b16 %v5701
        %v6353 = vunpack.c.h.b16 %v5701
        %v6354 = vunpack.c.l.b16 %v5702
        %v6355 = vunpack.c.l.b16 %v5703
        %v6356 = vunpack.c.h.b16 %v5703
        %v6357 = vunpack.c.l.b16 %v5704
        %v6358 = vunpack.c.l.b16 %v5705
        %v6359 = vunpack.c.h.b16 %v5705
        %v6360 = vunpack.c.l.b16 %v5706
        %v6361 = vunpack.c.l.b16 %v5707
        %v6362 = vunpack.c.h.b16 %v5707
        %v6363 = vunpack.c.l.b16 %v5708
        %v6364 = vunpack.c.l.b16 %v5709
        %v6365 = vunpack.c.h.b16 %v5709
        %v6366 = vunpack.c.l.b16 %v5710
        %v6367 = vunpack.c.l.b16 %v5711
        %v6368 = vunpack.c.h.b16 %v5711
        %v6369 = vunpack.c.l.b16 %v5712
        %v6370 = vpack.c.b16 %v6310, %v6307
        %v6371 = vpack.c.b16 %v6311, %v6308
        %v6372 = vpack.c.b16 %v6312, %v6309
        %v6373 = vpack.c.b16 %v6316, %v6313
        %v6374 = vpack.c.b16 %v6317, %v6314
        %v6375 = vpack.c.b16 %v6318, %v6315
        %v6376 = vpack.c.b16 %v6322, %v6319
        %v6377 = vpack.c.b16 %v6323, %v6320
        %v6378 = vpack.c.b16 %v6324, %v6321
        %v6379 = vpack.c.b16 %v6328, %v6325
        %v6380 = vpack.c.b16 %v6329, %v6326
        %v6381 = vpack.c.b16 %v6330, %v6327
        %v6382 = vpack.c.b16 %v6334, %v6331
        %v6383 = vpack.c.b16 %v6335, %v6332
        %v6384 = vpack.c.b16 %v6336, %v6333
        %v6385 = vpack.c.b16 %v6340, %v6337
        %v6386 = vpack.c.b16 %v6341, %v6338
        %v6387 = vpack.c.b16 %v6342, %v6339
        %v6388 = vpack.c.b16 %v6346, %v6343
        %v6389 = vpack.c.b16 %v6347, %v6344
        %v6390 = vpack.c.b16 %v6348, %v6345
        %v6391 = vpack.c.b16 %v6352, %v6349
        %v6392 = vpack.c.b16 %v6353, %v6350
        %v6393 = vpack.c.b16 %v6354, %v6351
        %v6394 = vpack.c.b16 %v6358, %v6355
        %v6395 = vpack.c.b16 %v6359, %v6356
        %v6396 = vpack.c.b16 %v6360, %v6357
        %v6397 = vpack.c.b16 %v6364, %v6361
        %v6398 = vpack.c.b16 %v6365, %v6362
        %v6399 = vpack.c.b16 %v6366, %v6363
        %v6400 = vpack.c.b16 %v6367, %v6367
        %v6401 = vpack.c.b16 %v6368, %v6368
        %v6402 = vpack.c.b16 %v6369, %v6369
        %v6433 = vsel %vm6041, %v5658, 0
        %v6435 = vsel %vm6041, %v5660, 0
        %v6437 = vsel %vm6041, %v5662, 0
        %v6439 = vsel %vm6041, %v5664, 0
        %v6441 = vsel %vm6041, %v5666, 0
        %v6443 = vsel %vm6041, %v5668, 0
        %v6445 = vsel %vm6041, %v5670, 0
        %v6448 = vsel %vm6063, %v6400, 0
        %v6451 = vsel %vm6063, %v6401, 0
        %v6454 = vsel %vm6063, %v6402, 0
        %6456 = vmatprep.subr.bf16.mxu0 %v6371
        %6457 = vmatpush1.bf16.msra.mxu0 %v6370
        %6458 = vmatprep.subr.bf16.mxu0 %v6374
        %6459 = vmatpush1.bf16.msra.mxu0 %v6373
        %6460 = vmatprep.subr.bf16.mxu0 %v6377
        %6461 = vmatpush1.bf16.msra.mxu0 %v6376
        %6462 = vmatprep.subr.bf16.mxu0 %v6380
        %6463 = vmatpush1.bf16.msra.mxu0 %v6379
        %6464 = vmatprep.subr.bf16.mxu0 %v6383
        %6465 = vmatpush1.bf16.msra.mxu0 %v6382
        %6466 = vmatprep.subr.bf16.mxu0 %v6386
        %6467 = vmatpush1.bf16.msra.mxu0 %v6385
        %6468 = vmatprep.subr.bf16.mxu0 %v6389
        %6469 = vmatpush1.bf16.msra.mxu0 %v6388
        %6470 = vmatprep.subr.bf16.mxu0 %v6392
        %6471 = vmatpush1.bf16.msra.mxu0 %v6391
        %6472 = vmatprep.subr.bf16.mxu0 %v6395
        %6473 = vmatpush1.bf16.msra.mxu0 %v6394
        %6474 = vmatprep.subr.bf16.mxu0 %v6398
        %6475 = vmatpush1.bf16.msra.mxu0 %v6397
        %6476 = vmatprep.subr.bf16.mxu0 %v6451
        %6477 = vmatpush1.bf16.msra.mxu0 %v6448
        %6478 = vmatprep.subr.bf16.mxu0 0
        %6479 = vmatpush1.bf16.msra.mxu0 0
        %6480 = vmatprep.subr.bf16.mxu0 0
        %6481 = vmatpush1.bf16.msra.mxu0 0
        %6482 = vmatprep.subr.bf16.mxu0 0
        %6483 = vmatpush1.bf16.msra.mxu0 0
        %6484 = vmatprep.subr.bf16.mxu0 0
        %6485 = vmatpush1.bf16.msra.mxu0 0
        %6486 = vmatprep.subr.bf16.mxu0 0
        %6487 = vmatpush1.bf16.msra.mxu0 0
        %6488 = vmatprep.mubr.bf16.mxu0 %v6433
        %6489 = vmatmul.mubr.bf16.gmra.mrb[0].mxu0 %v5657
        %v6490 = vpop.f32.mrb[0].mxu0
        %v6491 = vadd.f32 %v6108, %v6490
        %v6492 = vpop.f32.mrb[0].mxu0
        %v6493 = vadd.f32 %v6110, %v6492
        %v6494 = vpop.f32.mrb[0].mxu0
        %v6495 = vadd.f32 %v6112, %v6494
        %v6496 = vpop.f32.mrb[0].mxu0
        %v6497 = vadd.f32 %v6114, %v6496
        %6498 = vmatprep.mubr.bf16.mxu0 %v6435
        %6499 = vmatmul.mubr.bf16.gmra.mrb[0].mxu0 %v5659
        %v6500 = vpop.f32.mrb[0].mxu0
        %v6501 = vadd.f32 %v6118, %v6500
        %v6502 = vpop.f32.mrb[0].mxu0
        %v6503 = vadd.f32 %v6120, %v6502
        %v6504 = vpop.f32.mrb[0].mxu0
        %v6505 = vadd.f32 %v6122, %v6504
        %v6506 = vpop.f32.mrb[0].mxu0
        %v6507 = vadd.f32 %v6124, %v6506
        %6508 = vmatprep.mubr.bf16.mxu0 %v6437
        %6509 = vmatmul.mubr.bf16.gmra.mrb[0].mxu0 %v5661
        %v6510 = vpop.f32.mrb[0].mxu0
        %v6511 = vadd.f32 %v6128, %v6510
        %v6512 = vpop.f32.mrb[0].mxu0
        %v6513 = vadd.f32 %v6130, %v6512
        %v6514 = vpop.f32.mrb[0].mxu0
        %v6515 = vadd.f32 %v6132, %v6514
        %v6516 = vpop.f32.mrb[0].mxu0
        %v6517 = vadd.f32 %v6134, %v6516
        %6518 = vmatprep.mubr.bf16.mxu0 %v6439
        %6519 = vmatmul.mubr.bf16.gmra.mrb[0].mxu0 %v5663
        %v6520 = vpop.f32.mrb[0].mxu0
        %v6521 = vadd.f32 %v6138, %v6520
        %v6522 = vpop.f32.mrb[0].mxu0
        %v6523 = vadd.f32 %v6140, %v6522
        %v6524 = vpop.f32.mrb[0].mxu0
        %v6525 = vadd.f32 %v6142, %v6524
        %v6526 = vpop.f32.mrb[0].mxu0
        %v6527 = vadd.f32 %v6144, %v6526
        %6528 = vmatprep.mubr.bf16.mxu0 %v6441
        %6529 = vmatmul.mubr.bf16.gmra.mrb[0].mxu0 %v5665
        %v6530 = vpop.f32.mrb[0].mxu0
        %v6531 = vadd.f32 %v6148, %v6530
        %v6532 = vpop.f32.mrb[0].mxu0
        %v6533 = vadd.f32 %v6150, %v6532
        %v6534 = vpop.f32.mrb[0].mxu0
        %v6535 = vadd.f32 %v6152, %v6534
        %v6536 = vpop.f32.mrb[0].mxu0
        %v6537 = vadd.f32 %v6154, %v6536
        %6538 = vmatprep.mubr.bf16.mxu0 %v6443
        %6539 = vmatmul.mubr.bf16.gmra.mrb[0].mxu0 %v5667
        %v6540 = vpop.f32.mrb[0].mxu0
        %v6541 = vadd.f32 %v6158, %v6540
        %v6542 = vpop.f32.mrb[0].mxu0
        %v6543 = vadd.f32 %v6160, %v6542
        %v6544 = vpop.f32.mrb[0].mxu0
        %v6545 = vadd.f32 %v6162, %v6544
        %v6546 = vpop.f32.mrb[0].mxu0
        %v6547 = vadd.f32 %v6164, %v6546
        %6548 = vmatprep.mubr.bf16.mxu0 %v6445
        %6549 = vmatmul.mubr.bf16.gmra.mrb[0].mxu0 %v5669
        %v6550 = vpop.f32.mrb[0].mxu0
        %v6551 = vadd.f32 %v6168, %v6550
        %v6552 = vpop.f32.mrb[0].mxu0
        %v6553 = vadd.f32 %v6170, %v6552
        %v6554 = vpop.f32.mrb[0].mxu0
        %v6555 = vadd.f32 %v6172, %v6554
        %v6556 = vpop.f32.mrb[0].mxu0
        %v6557 = vadd.f32 %v6174, %v6556
        %6558 = vdwg.mxu0
        %6559 = vmatprep.subr.bf16.mxu0 0
        %6560 = vmatpush1.bf16.msra.mxu0 %v6372
        %6561 = vmatprep.subr.bf16.mxu0 0
        %6562 = vmatpush1.bf16.msra.mxu0 %v6375
        %6563 = vmatprep.subr.bf16.mxu0 0
        %6564 = vmatpush1.bf16.msra.mxu0 %v6378
        %6565 = vmatprep.subr.bf16.mxu0 0
        %6566 = vmatpush1.bf16.msra.mxu0 %v6381
        %6567 = vmatprep.subr.bf16.mxu0 0
        %6568 = vmatpush1.bf16.msra.mxu0 %v6384
        %6569 = vmatprep.subr.bf16.mxu0 0
        %6570 = vmatpush1.bf16.msra.mxu0 %v6387
        %6571 = vmatprep.subr.bf16.mxu0 0
        %6572 = vmatpush1.bf16.msra.mxu0 %v6390
        %6573 = vmatprep.subr.bf16.mxu0 0
        %6574 = vmatpush1.bf16.msra.mxu0 %v6393
        %6575 = vmatprep.subr.bf16.mxu0 0
        %6576 = vmatpush1.bf16.msra.mxu0 %v6396
        %6577 = vmatprep.subr.bf16.mxu0 0
        %6578 = vmatpush1.bf16.msra.mxu0 %v6399
        %6579 = vmatprep.subr.bf16.mxu0 0
        %6580 = vmatpush1.bf16.msra.mxu0 %v6454
        %6581 = vmatprep.subr.bf16.mxu0 0
        %6582 = vmatpush1.bf16.msra.mxu0 0
        %6583 = vmatprep.subr.bf16.mxu0 0
        %6584 = vmatpush1.bf16.msra.mxu0 0
        %6585 = vmatprep.subr.bf16.mxu0 0
        %6586 = vmatpush1.bf16.msra.mxu0 0
        %6587 = vmatprep.subr.bf16.mxu0 0
        %6588 = vmatpush1.bf16.msra.mxu0 0
        %6589 = vmatprep.subr.bf16.mxu0 0
        %6590 = vmatpush1.bf16.msra.mxu0 0
        %6591 = vmatprep.mubr.bf16.mxu0 %v6433
        %6592 = vmatmul.mubr.bf16.gmra.mrb[0].mxu0 %v5657
        %v6593 = vpop.f32.mrb[0].mxu0
        %v6594 = vadd.f32 %v6211, %v6593
        %v6595 = vpop.f32.mrb[0].mxu0
        %v6596 = vpop.f32.mrb[0].mxu0
        %v6597 = vadd.f32 %v6214, %v6596
        %v6598 = vpop.f32.mrb[0].mxu0
        %6599 = vmatprep.mubr.bf16.mxu0 %v6435
        %6600 = vmatmul.mubr.bf16.gmra.mrb[0].mxu0 %v5659
        %v6601 = vpop.f32.mrb[0].mxu0
        %v6602 = vadd.f32 %v6219, %v6601
        %v6603 = vpop.f32.mrb[0].mxu0
        %v6604 = vpop.f32.mrb[0].mxu0
        %v6605 = vadd.f32 %v6222, %v6604
        %v6606 = vpop.f32.mrb[0].mxu0
        %6607 = vmatprep.mubr.bf16.mxu0 %v6437
        %6608 = vmatmul.mubr.bf16.gmra.mrb[0].mxu0 %v5661
        %v6609 = vpop.f32.mrb[0].mxu0
        %v6610 = vadd.f32 %v6227, %v6609
        %v6611 = vpop.f32.mrb[0].mxu0
        %v6612 = vpop.f32.mrb[0].mxu0
        %v6613 = vadd.f32 %v6230, %v6612
        %v6614 = vpop.f32.mrb[0].mxu0
        %6615 = vmatprep.mubr.bf16.mxu0 %v6439
        %6616 = vmatmul.mubr.bf16.gmra.mrb[0].mxu0 %v5663
        %v6617 = vpop.f32.mrb[0].mxu0
        %v6618 = vadd.f32 %v6235, %v6617
        %v6619 = vpop.f32.mrb[0].mxu0
        %v6620 = vpop.f32.mrb[0].mxu0
        %v6621 = vadd.f32 %v6238, %v6620
        %v6622 = vpop.f32.mrb[0].mxu0
        %6623 = vmatprep.mubr.bf16.mxu0 %v6441
        %6624 = vmatmul.mubr.bf16.gmra.mrb[0].mxu0 %v5665
        %v6625 = vpop.f32.mrb[0].mxu0
        %v6626 = vadd.f32 %v6243, %v6625
        %v6627 = vpop.f32.mrb[0].mxu0
        %v6628 = vpop.f32.mrb[0].mxu0
        %v6629 = vadd.f32 %v6246, %v6628
        %v6630 = vpop.f32.mrb[0].mxu0
        %6631 = vmatprep.mubr.bf16.mxu0 %v6443
        %6632 = vmatmul.mubr.bf16.gmra.mrb[0].mxu0 %v5667
        %v6633 = vpop.f32.mrb[0].mxu0
        %v6634 = vadd.f32 %v6251, %v6633
        %v6635 = vpop.f32.mrb[0].mxu0
        %v6636 = vpop.f32.mrb[0].mxu0
        %v6637 = vadd.f32 %v6254, %v6636
        %v6638 = vpop.f32.mrb[0].mxu0
        %6639 = vmatprep.mubr.bf16.mxu0 %v6445
        %6640 = vmatmul.mubr.bf16.gmra.mrb[0].mxu0 %v5669
        %v6641 = vpop.f32.mrb[0].mxu0
        %v6642 = vadd.f32 %v6259, %v6641
        %v6643 = vpop.f32.mrb[0].mxu0
        %v6644 = vpop.f32.mrb[0].mxu0
        %v6645 = vadd.f32 %v6262, %v6644
        %v6646 = vpop.f32.mrb[0].mxu0
        %6647 = vdwg.mxu0
        %s6648 = scalar_lea.vmem %s5, 504
        %v6649 = vld [vmem:[%s6648] sm:$0xff]
        %v6650 = vld [vmem:[%s6648 + $0x8] sm:$0xf]
        %v6651 = vld [vmem:[%s6648 + $0xc] sm:$0xff]
        %v6652 = vld [vmem:[%s6648 + $0x14] sm:$0xf]
        %v6653 = vld [vmem:[%s6648 + $0x18] sm:$0xff]
        %v6654 = vld [vmem:[%s6648 + $0x20] sm:$0xf]
        %v6655 = vld [vmem:[%s6648 + $0x24] sm:$0xff]
        %v6656 = vld [vmem:[%s6648 + $0x2c] sm:$0xf]
        %v6657 = vld [vmem:[%s6648 + $0x30] sm:$0xff]
        %v6658 = vld [vmem:[%s6648 + $0x38] sm:$0xf]
        %v6659 = vld [vmem:[%s6648 + $0x3c] sm:$0xff]
        %v6660 = vld [vmem:[%s6648 + $0x44] sm:$0xf]
        %v6661 = vld [vmem:[%s6648 + $0x48] sm:$0xff]
        %v6662 = vld [vmem:[%s6648 + $0x50] sm:$0xf]
        %v6663 = vld [vmem:[%s6648 + $0x54] sm:$0xff]
        %v6664 = vld [vmem:[%s6648 + $0x5c] sm:$0xf]
        %v6665 = vld [vmem:[%s6648 + $0x60] sm:$0xff]
        %v6666 = vld [vmem:[%s6648 + $0x68] sm:$0xf]
        %v6667 = vld [vmem:[%s6648 + $0x6c] sm:$0xff]
        %v6668 = vld [vmem:[%s6648 + $0x74] sm:$0xf]
        %v6669 = vld [vmem:[%s6648 + $0x78] sm:$0xff]
        %v6670 = vld [vmem:[%s6648 + $0x80] sm:$0xf]
        %v6671 = vld [vmem:[%s6648 + $0x84] sm:$0xff]
        %v6672 = vld [vmem:[%s6648 + $0x8c] sm:$0xf]
        %v6673 = vld [vmem:[%s6648 + $0x90] sm:$0xff]
        %v6674 = vld [vmem:[%s6648 + $0x98] sm:$0xf]
        %v6675 = vld [vmem:[%s6648 + $0x9c] sm:$0xff]
        %v6676 = vld [vmem:[%s6648 + $0xa4] sm:$0xf]
        %v6677 = vld [vmem:[%s6648 + $0xa8] sm:$0xff]
        %v6678 = vld [vmem:[%s6648 + $0xb0] sm:$0xf]
        %v6679 = vld [vmem:[%s6648 + $0xb4] sm:$0xff]
        %v6680 = vld [vmem:[%s6648 + $0xbc] sm:$0xf]
        %v6681 = vld [vmem:[%s6648 + $0xc0] sm:$0xff]
        %v6682 = vld [vmem:[%s6648 + $0xc8] sm:$0xf]
        %v6683 = vld [vmem:[%s6648 + $0xcc] sm:$0xff]
        %v6684 = vld [vmem:[%s6648 + $0xd4] sm:$0xf]
        %v6685 = vld [vmem:[%s6648 + $0xd8] sm:$0xff]
        %v6686 = vld [vmem:[%s6648 + $0xe0] sm:$0xf]
        %v6687 = vld [vmem:[%s6648 + $0xe4] sm:$0xff]
        %v6688 = vld [vmem:[%s6648 + $0xec] sm:$0xf]
        %v6689 = vld [vmem:[%s6648 + $0xf0] sm:$0xff]
        %v6690 = vld [vmem:[%s6648 + $0xf8] sm:$0xf]
        %v6705 = vrot.slane %v5657, 1
        %v6706 = vrot.slane %v5659, 1
        %v6707 = vsel %vm1818, %v6705, %v6706
        %v6708 = vrot.slane %v5658, 1
        %v6709 = vrot.slane %v5660, 1
        %v6710 = vsel %vm1818, %v6708, %v6709
        %v6711 = vrot.slane %v5661, 1
        %v6712 = vsel %vm1818, %v6706, %v6711
        %v6713 = vrot.slane %v5662, 1
        %v6714 = vsel %vm1818, %v6709, %v6713
        %v6715 = vrot.slane %v5663, 1
        %v6716 = vsel %vm1818, %v6711, %v6715
        %v6717 = vrot.slane %v5664, 1
        %v6718 = vsel %vm1818, %v6713, %v6717
        %v6719 = vrot.slane %v5665, 1
        %v6720 = vsel %vm1818, %v6715, %v6719
        %v6721 = vrot.slane %v5666, 1
        %v6722 = vsel %vm1818, %v6717, %v6721
        %v6723 = vrot.slane %v5667, 1
        %v6724 = vsel %vm1818, %v6719, %v6723
        %v6725 = vrot.slane %v5668, 1
        %v6726 = vsel %vm1818, %v6721, %v6725
        %v6727 = vrot.slane %v5669, 1
        %v6728 = vsel %vm1818, %v6723, %v6727
        %v6729 = vrot.slane %v5670, 1
        %v6730 = vsel %vm1818, %v6725, %v6729
        %v6780 = vunpack.c.l.b16 %v6649
        %v6781 = vunpack.c.h.b16 %v6649
        %v6782 = vunpack.c.l.b16 %v6650
        %v6783 = vunpack.c.l.b16 %v6651
        %v6784 = vunpack.c.h.b16 %v6651
        %v6785 = vunpack.c.l.b16 %v6652
        %v6786 = vunpack.c.l.b16 %v6653
        %v6787 = vunpack.c.h.b16 %v6653
        %v6788 = vunpack.c.l.b16 %v6654
        %v6789 = vunpack.c.l.b16 %v6655
        %v6790 = vunpack.c.h.b16 %v6655
        %v6791 = vunpack.c.l.b16 %v6656
        %v6792 = vunpack.c.l.b16 %v6657
        %v6793 = vunpack.c.h.b16 %v6657
        %v6794 = vunpack.c.l.b16 %v6658
        %v6795 = vunpack.c.l.b16 %v6659
        %v6796 = vunpack.c.h.b16 %v6659
        %v6797 = vunpack.c.l.b16 %v6660
        %v6798 = vunpack.c.l.b16 %v6661
        %v6799 = vunpack.c.h.b16 %v6661
        %v6800 = vunpack.c.l.b16 %v6662
        %v6801 = vunpack.c.l.b16 %v6663
        %v6802 = vunpack.c.h.b16 %v6663
        %v6803 = vunpack.c.l.b16 %v6664
        %v6804 = vunpack.c.l.b16 %v6665
        %v6805 = vunpack.c.h.b16 %v6665
        %v6806 = vunpack.c.l.b16 %v6666
        %v6807 = vunpack.c.l.b16 %v6667
        %v6808 = vunpack.c.h.b16 %v6667
        %v6809 = vunpack.c.l.b16 %v6668
        %v6810 = vunpack.c.l.b16 %v6669
        %v6811 = vunpack.c.h.b16 %v6669
        %v6812 = vunpack.c.l.b16 %v6670
        %v6813 = vunpack.c.l.b16 %v6671
        %v6814 = vunpack.c.h.b16 %v6671
        %v6815 = vunpack.c.l.b16 %v6672
        %v6816 = vunpack.c.l.b16 %v6673
        %v6817 = vunpack.c.h.b16 %v6673
        %v6818 = vunpack.c.l.b16 %v6674
        %v6819 = vunpack.c.l.b16 %v6675
        %v6820 = vunpack.c.h.b16 %v6675
        %v6821 = vunpack.c.l.b16 %v6676
        %v6822 = vunpack.c.l.b16 %v6677
        %v6823 = vunpack.c.h.b16 %v6677
        %v6824 = vunpack.c.l.b16 %v6678
        %v6825 = vunpack.c.l.b16 %v6679
        %v6826 = vunpack.c.h.b16 %v6679
        %v6827 = vunpack.c.l.b16 %v6680
        %v6828 = vunpack.c.l.b16 %v6681
        %v6829 = vunpack.c.h.b16 %v6681
        %v6830 = vunpack.c.l.b16 %v6682
        %v6831 = vunpack.c.l.b16 %v6683
        %v6832 = vunpack.c.h.b16 %v6683
        %v6833 = vunpack.c.l.b16 %v6684
        %v6834 = vunpack.c.l.b16 %v6685
        %v6835 = vunpack.c.h.b16 %v6685
        %v6836 = vunpack.c.l.b16 %v6686
        %v6837 = vunpack.c.l.b16 %v6687
        %v6838 = vunpack.c.h.b16 %v6687
        %v6839 = vunpack.c.l.b16 %v6688
        %v6840 = vunpack.c.l.b16 %v6689
        %v6841 = vunpack.c.h.b16 %v6689
        %v6842 = vunpack.c.l.b16 %v6690
        %v6843 = vpack.c.b16 %v6783, %v6780
        %v6844 = vpack.c.b16 %v6784, %v6781
        %v6845 = vpack.c.b16 %v6785, %v6782
        %v6846 = vpack.c.b16 %v6789, %v6786
        %v6847 = vpack.c.b16 %v6790, %v6787
        %v6848 = vpack.c.b16 %v6791, %v6788
        %v6849 = vpack.c.b16 %v6795, %v6792
        %v6850 = vpack.c.b16 %v6796, %v6793
        %v6851 = vpack.c.b16 %v6797, %v6794
        %v6852 = vpack.c.b16 %v6801, %v6798
        %v6853 = vpack.c.b16 %v6802, %v6799
        %v6854 = vpack.c.b16 %v6803, %v6800
        %v6855 = vpack.c.b16 %v6807, %v6804
        %v6856 = vpack.c.b16 %v6808, %v6805
        %v6857 = vpack.c.b16 %v6809, %v6806
        %v6858 = vpack.c.b16 %v6813, %v6810
        %v6859 = vpack.c.b16 %v6814, %v6811
        %v6860 = vpack.c.b16 %v6815, %v6812
        %v6861 = vpack.c.b16 %v6819, %v6816
        %v6862 = vpack.c.b16 %v6820, %v6817
        %v6863 = vpack.c.b16 %v6821, %v6818
        %v6864 = vpack.c.b16 %v6825, %v6822
        %v6865 = vpack.c.b16 %v6826, %v6823
        %v6866 = vpack.c.b16 %v6827, %v6824
        %v6867 = vpack.c.b16 %v6831, %v6828
        %v6868 = vpack.c.b16 %v6832, %v6829
        %v6869 = vpack.c.b16 %v6833, %v6830
        %v6870 = vpack.c.b16 %v6837, %v6834
        %v6871 = vpack.c.b16 %v6838, %v6835
        %v6872 = vpack.c.b16 %v6839, %v6836
        %v6873 = vpack.c.b16 %v6840, %v6840
        %v6874 = vpack.c.b16 %v6841, %v6841
        %v6875 = vpack.c.b16 %v6842, %v6842
        %v6907 = vsel %vm6041, %v6710, 0
        %v6910 = vsel %vm6041, %v6714, 0
        %v6913 = vsel %vm6041, %v6718, 0
        %v6916 = vsel %vm6041, %v6722, 0
        %v6919 = vsel %vm6041, %v6726, 0
        %v6922 = vsel %vm6041, %v6730, 0
        %v6925 = vsel %vm6041, %v6729, 0
        %v6928 = vsel %vm6063, %v6873, 0
        %v6931 = vsel %vm6063, %v6874, 0
        %v6934 = vsel %vm6063, %v6875, 0
        %6936 = vmatprep.subr.bf16.mxu0 %v6844
        %6937 = vmatpush1.bf16.msra.mxu0 %v6843
        %6938 = vmatprep.subr.bf16.mxu0 %v6847
        %6939 = vmatpush1.bf16.msra.mxu0 %v6846
        %6940 = vmatprep.subr.bf16.mxu0 %v6850
        %6941 = vmatpush1.bf16.msra.mxu0 %v6849
        %6942 = vmatprep.subr.bf16.mxu0 %v6853
        %6943 = vmatpush1.bf16.msra.mxu0 %v6852
        %6944 = vmatprep.subr.bf16.mxu0 %v6856
        %6945 = vmatpush1.bf16.msra.mxu0 %v6855
        %6946 = vmatprep.subr.bf16.mxu0 %v6859
        %6947 = vmatpush1.bf16.msra.mxu0 %v6858
        %6948 = vmatprep.subr.bf16.mxu0 %v6862
        %6949 = vmatpush1.bf16.msra.mxu0 %v6861
        %6950 = vmatprep.subr.bf16.mxu0 %v6865
        %6951 = vmatpush1.bf16.msra.mxu0 %v6864
        %6952 = vmatprep.subr.bf16.mxu0 %v6868
        %6953 = vmatpush1.bf16.msra.mxu0 %v6867
        %6954 = vmatprep.subr.bf16.mxu0 %v6871
        %6955 = vmatpush1.bf16.msra.mxu0 %v6870
        %6956 = vmatprep.subr.bf16.mxu0 %v6931
        %6957 = vmatpush1.bf16.msra.mxu0 %v6928
        %6958 = vmatprep.subr.bf16.mxu0 0
        %6959 = vmatpush1.bf16.msra.mxu0 0
        %6960 = vmatprep.subr.bf16.mxu0 0
        %6961 = vmatpush1.bf16.msra.mxu0 0
        %6962 = vmatprep.subr.bf16.mxu0 0
        %6963 = vmatpush1.bf16.msra.mxu0 0
        %6964 = vmatprep.subr.bf16.mxu0 0
        %6965 = vmatpush1.bf16.msra.mxu0 0
        %6966 = vmatprep.subr.bf16.mxu0 0
        %6967 = vmatpush1.bf16.msra.mxu0 0
        %6968 = vmatprep.mubr.bf16.mxu0 %v6907
        %6969 = vmatmul.mubr.bf16.gmra.mrb[0].mxu0 %v6707
        %v6970 = vpop.f32.mrb[0].mxu0
        %v6971 = vadd.f32 0.0, %v6970
        %v6972 = vpop.f32.mrb[0].mxu0
        %v6973 = vadd.f32 0.0, %v6972
        %v6974 = vpop.f32.mrb[0].mxu0
        %v6975 = vadd.f32 0.0, %v6974
        %v6976 = vpop.f32.mrb[0].mxu0
        %v6977 = vadd.f32 0.0, %v6976
        %6978 = vmatprep.mubr.bf16.mxu0 %v6910
        %6979 = vmatmul.mubr.bf16.gmra.mrb[0].mxu0 %v6712
        %v6980 = vpop.f32.mrb[0].mxu0
        %v6981 = vadd.f32 0.0, %v6980
        %v6982 = vpop.f32.mrb[0].mxu0
        %v6983 = vadd.f32 0.0, %v6982
        %v6984 = vpop.f32.mrb[0].mxu0
        %v6985 = vadd.f32 0.0, %v6984
        %v6986 = vpop.f32.mrb[0].mxu0
        %v6987 = vadd.f32 0.0, %v6986
        %6988 = vmatprep.mubr.bf16.mxu0 %v6913
        %6989 = vmatmul.mubr.bf16.gmra.mrb[0].mxu0 %v6716
        %v6990 = vpop.f32.mrb[0].mxu0
        %v6991 = vadd.f32 0.0, %v6990
        %v6992 = vpop.f32.mrb[0].mxu0
        %v6993 = vadd.f32 0.0, %v6992
        %v6994 = vpop.f32.mrb[0].mxu0
        %v6995 = vadd.f32 0.0, %v6994
        %v6996 = vpop.f32.mrb[0].mxu0
        %v6997 = vadd.f32 0.0, %v6996
        %6998 = vmatprep.mubr.bf16.mxu0 %v6916
        %6999 = vmatmul.mubr.bf16.gmra.mrb[0].mxu0 %v6720
        %v7000 = vpop.f32.mrb[0].mxu0
        %v7001 = vadd.f32 0.0, %v7000
        %v7002 = vpop.f32.mrb[0].mxu0
        %v7003 = vadd.f32 0.0, %v7002
        %v7004 = vpop.f32.mrb[0].mxu0
        %v7005 = vadd.f32 0.0, %v7004
        %v7006 = vpop.f32.mrb[0].mxu0
        %v7007 = vadd.f32 0.0, %v7006
        %7008 = vmatprep.mubr.bf16.mxu0 %v6919
        %7009 = vmatmul.mubr.bf16.gmra.mrb[0].mxu0 %v6724
        %v7010 = vpop.f32.mrb[0].mxu0
        %v7011 = vadd.f32 0.0, %v7010
        %v7012 = vpop.f32.mrb[0].mxu0
        %v7013 = vadd.f32 0.0, %v7012
        %v7014 = vpop.f32.mrb[0].mxu0
        %v7015 = vadd.f32 0.0, %v7014
        %v7016 = vpop.f32.mrb[0].mxu0
        %v7017 = vadd.f32 0.0, %v7016
        %7018 = vmatprep.mubr.bf16.mxu0 %v6922
        %7019 = vmatmul.mubr.bf16.gmra.mrb[0].mxu0 %v6728
        %v7020 = vpop.f32.mrb[0].mxu0
        %v7021 = vadd.f32 0.0, %v7020
        %v7022 = vpop.f32.mrb[0].mxu0
        %v7023 = vadd.f32 0.0, %v7022
        %v7024 = vpop.f32.mrb[0].mxu0
        %v7025 = vadd.f32 0.0, %v7024
        %v7026 = vpop.f32.mrb[0].mxu0
        %v7027 = vadd.f32 0.0, %v7026
        %7028 = vmatprep.mubr.bf16.mxu0 %v6925
        %7029 = vmatmul.mubr.bf16.gmra.mrb[0].mxu0 %v6727
        %v7030 = vpop.f32.mrb[0].mxu0
        %v7031 = vadd.f32 0.0, %v7030
        %v7032 = vpop.f32.mrb[0].mxu0
        %v7033 = vadd.f32 0.0, %v7032
        %v7034 = vpop.f32.mrb[0].mxu0
        %v7035 = vadd.f32 0.0, %v7034
        %v7036 = vpop.f32.mrb[0].mxu0
        %v7037 = vadd.f32 0.0, %v7036
        %7038 = vdwg.mxu0
        %7039 = vmatprep.subr.bf16.mxu0 0
        %7040 = vmatpush1.bf16.msra.mxu0 %v6845
        %7041 = vmatprep.subr.bf16.mxu0 0
        %7042 = vmatpush1.bf16.msra.mxu0 %v6848
        %7043 = vmatprep.subr.bf16.mxu0 0
        %7044 = vmatpush1.bf16.msra.mxu0 %v6851
        %7045 = vmatprep.subr.bf16.mxu0 0
        %7046 = vmatpush1.bf16.msra.mxu0 %v6854
        %7047 = vmatprep.subr.bf16.mxu0 0
        %7048 = vmatpush1.bf16.msra.mxu0 %v6857
        %7049 = vmatprep.subr.bf16.mxu0 0
        %7050 = vmatpush1.bf16.msra.mxu0 %v6860
        %7051 = vmatprep.subr.bf16.mxu0 0
        %7052 = vmatpush1.bf16.msra.mxu0 %v6863
        %7053 = vmatprep.subr.bf16.mxu0 0
        %7054 = vmatpush1.bf16.msra.mxu0 %v6866
        %7055 = vmatprep.subr.bf16.mxu0 0
        %7056 = vmatpush1.bf16.msra.mxu0 %v6869
        %7057 = vmatprep.subr.bf16.mxu0 0
        %7058 = vmatpush1.bf16.msra.mxu0 %v6872
        %7059 = vmatprep.subr.bf16.mxu0 0
        %7060 = vmatpush1.bf16.msra.mxu0 %v6934
        %7061 = vmatprep.subr.bf16.mxu0 0
        %7062 = vmatpush1.bf16.msra.mxu0 0
        %7063 = vmatprep.subr.bf16.mxu0 0
        %7064 = vmatpush1.bf16.msra.mxu0 0
        %7065 = vmatprep.subr.bf16.mxu0 0
        %7066 = vmatpush1.bf16.msra.mxu0 0
        %7067 = vmatprep.subr.bf16.mxu0 0
        %7068 = vmatpush1.bf16.msra.mxu0 0
        %7069 = vmatprep.subr.bf16.mxu0 0
        %7070 = vmatpush1.bf16.msra.mxu0 0
        %7071 = vmatprep.mubr.bf16.mxu0 %v6907
        %7072 = vmatmul.mubr.bf16.gmra.mrb[0].mxu0 %v6707
        %v7073 = vpop.f32.mrb[0].mxu0
        %v7074 = vadd.f32 0.0, %v7073
        %v7075 = vpop.f32.mrb[0].mxu0
        %v7076 = vpop.f32.mrb[0].mxu0
        %v7077 = vadd.f32 0.0, %v7076
        %v7078 = vpop.f32.mrb[0].mxu0
        %7079 = vmatprep.mubr.bf16.mxu0 %v6910
        %7080 = vmatmul.mubr.bf16.gmra.mrb[0].mxu0 %v6712
        %v7081 = vpop.f32.mrb[0].mxu0
        %v7082 = vadd.f32 0.0, %v7081
        %v7083 = vpop.f32.mrb[0].mxu0
        %v7084 = vpop.f32.mrb[0].mxu0
        %v7085 = vadd.f32 0.0, %v7084
        %v7086 = vpop.f32.mrb[0].mxu0
        %7087 = vmatprep.mubr.bf16.mxu0 %v6913
        %7088 = vmatmul.mubr.bf16.gmra.mrb[0].mxu0 %v6716
        %v7089 = vpop.f32.mrb[0].mxu0
        %v7090 = vadd.f32 0.0, %v7089
        %v7091 = vpop.f32.mrb[0].mxu0
        %v7092 = vpop.f32.mrb[0].mxu0
        %v7093 = vadd.f32 0.0, %v7092
        %v7094 = vpop.f32.mrb[0].mxu0
        %7095 = vmatprep.mubr.bf16.mxu0 %v6916
        %7096 = vmatmul.mubr.bf16.gmra.mrb[0].mxu0 %v6720
        %v7097 = vpop.f32.mrb[0].mxu0
        %v7098 = vadd.f32 0.0, %v7097
        %v7099 = vpop.f32.mrb[0].mxu0
        %v7100 = vpop.f32.mrb[0].mxu0
        %v7101 = vadd.f32 0.0, %v7100
        %v7102 = vpop.f32.mrb[0].mxu0
        %7103 = vmatprep.mubr.bf16.mxu0 %v6919
        %7104 = vmatmul.mubr.bf16.gmra.mrb[0].mxu0 %v6724
        %v7105 = vpop.f32.mrb[0].mxu0
        %v7106 = vadd.f32 0.0, %v7105
        %v7107 = vpop.f32.mrb[0].mxu0
        %v7108 = vpop.f32.mrb[0].mxu0
        %v7109 = vadd.f32 0.0, %v7108
        %v7110 = vpop.f32.mrb[0].mxu0
        %7111 = vmatprep.mubr.bf16.mxu0 %v6922
        %7112 = vmatmul.mubr.bf16.gmra.mrb[0].mxu0 %v6728
        %v7113 = vpop.f32.mrb[0].mxu0
        %v7114 = vadd.f32 0.0, %v7113
        %v7115 = vpop.f32.mrb[0].mxu0
        %v7116 = vpop.f32.mrb[0].mxu0
        %v7117 = vadd.f32 0.0, %v7116
        %v7118 = vpop.f32.mrb[0].mxu0
        %7119 = vmatprep.mubr.bf16.mxu0 %v6925
        %7120 = vmatmul.mubr.bf16.gmra.mrb[0].mxu0 %v6727
        %v7121 = vpop.f32.mrb[0].mxu0
        %v7122 = vadd.f32 0.0, %v7121
        %v7123 = vpop.f32.mrb[0].mxu0
        %v7124 = vpop.f32.mrb[0].mxu0
        %v7125 = vadd.f32 0.0, %v7124
        %v7126 = vpop.f32.mrb[0].mxu0
        %7127 = vdwg.mxu0
        %v7128 = vadd.f32 %v6491, %v6971
        %v7129 = vadd.f32 %v6493, %v6973
        %v7130 = vadd.f32 %v6594, %v7074
        %v7131 = vadd.f32 %v6495, %v6975
        %v7132 = vadd.f32 %v6497, %v6977
        %v7133 = vadd.f32 %v6597, %v7077
        %v7134 = vadd.f32 %v6501, %v6981
        %v7135 = vadd.f32 %v6503, %v6983
        %v7136 = vadd.f32 %v6602, %v7082
        %v7137 = vadd.f32 %v6505, %v6985
        %v7138 = vadd.f32 %v6507, %v6987
        %v7139 = vadd.f32 %v6605, %v7085
        %v7140 = vadd.f32 %v6511, %v6991
        %v7141 = vadd.f32 %v6513, %v6993
        %v7142 = vadd.f32 %v6610, %v7090
        %v7143 = vadd.f32 %v6515, %v6995
        %v7144 = vadd.f32 %v6517, %v6997
        %v7145 = vadd.f32 %v6613, %v7093
        %v7146 = vadd.f32 %v6521, %v7001
        %v7147 = vadd.f32 %v6523, %v7003
        %v7148 = vadd.f32 %v6618, %v7098
        %v7149 = vadd.f32 %v6525, %v7005
        %v7150 = vadd.f32 %v6527, %v7007
        %v7151 = vadd.f32 %v6621, %v7101
        %v7152 = vadd.f32 %v6531, %v7011
        %v7153 = vadd.f32 %v6533, %v7013
        %v7154 = vadd.f32 %v6626, %v7106
        %v7155 = vadd.f32 %v6535, %v7015
        %v7156 = vadd.f32 %v6537, %v7017
        %v7157 = vadd.f32 %v6629, %v7109
        %v7158 = vadd.f32 %v6541, %v7021
        %v7159 = vadd.f32 %v6543, %v7023
        %v7160 = vadd.f32 %v6634, %v7114
        %v7161 = vadd.f32 %v6545, %v7025
        %v7162 = vadd.f32 %v6547, %v7027
        %v7163 = vadd.f32 %v6637, %v7117
        %v7164 = vadd.f32 %v6551, %v7031
        %v7165 = vadd.f32 %v6553, %v7033
        %v7166 = vadd.f32 %v6642, %v7122
        %v7167 = vadd.f32 %v6555, %v7035
        %v7168 = vadd.f32 %v6557, %v7037
        %v7169 = vadd.f32 %v6645, %v7125
        %s7170 = scalar_lea.vmem %s5, 756
        %v7171 = vld [vmem:[%s7170] sm:$0xff]
        %v7172 = vld [vmem:[%s7170 + $0x8] sm:$0xf]
        %v7173 = vld [vmem:[%s7170 + $0xc] sm:$0xff]
        %v7174 = vld [vmem:[%s7170 + $0x14] sm:$0xf]
        %v7175 = vld [vmem:[%s7170 + $0x18] sm:$0xff]
        %v7176 = vld [vmem:[%s7170 + $0x20] sm:$0xf]
        %v7177 = vld [vmem:[%s7170 + $0x24] sm:$0xff]
        %v7178 = vld [vmem:[%s7170 + $0x2c] sm:$0xf]
        %v7179 = vld [vmem:[%s7170 + $0x30] sm:$0xff]
        %v7180 = vld [vmem:[%s7170 + $0x38] sm:$0xf]
        %v7181 = vld [vmem:[%s7170 + $0x3c] sm:$0xff]
        %v7182 = vld [vmem:[%s7170 + $0x44] sm:$0xf]
        %v7183 = vld [vmem:[%s7170 + $0x48] sm:$0xff]
        %v7184 = vld [vmem:[%s7170 + $0x50] sm:$0xf]
        %v7185 = vld [vmem:[%s7170 + $0x54] sm:$0xff]
        %v7186 = vld [vmem:[%s7170 + $0x5c] sm:$0xf]
        %v7187 = vld [vmem:[%s7170 + $0x60] sm:$0xff]
        %v7188 = vld [vmem:[%s7170 + $0x68] sm:$0xf]
        %v7189 = vld [vmem:[%s7170 + $0x6c] sm:$0xff]
        %v7190 = vld [vmem:[%s7170 + $0x74] sm:$0xf]
        %v7191 = vld [vmem:[%s7170 + $0x78] sm:$0xff]
        %v7192 = vld [vmem:[%s7170 + $0x80] sm:$0xf]
        %v7193 = vld [vmem:[%s7170 + $0x84] sm:$0xff]
        %v7194 = vld [vmem:[%s7170 + $0x8c] sm:$0xf]
        %v7195 = vld [vmem:[%s7170 + $0x90] sm:$0xff]
        %v7196 = vld [vmem:[%s7170 + $0x98] sm:$0xf]
        %v7197 = vld [vmem:[%s7170 + $0x9c] sm:$0xff]
        %v7198 = vld [vmem:[%s7170 + $0xa4] sm:$0xf]
        %v7199 = vld [vmem:[%s7170 + $0xa8] sm:$0xff]
        %v7200 = vld [vmem:[%s7170 + $0xb0] sm:$0xf]
        %v7201 = vld [vmem:[%s7170 + $0xb4] sm:$0xff]
        %v7202 = vld [vmem:[%s7170 + $0xbc] sm:$0xf]
        %v7203 = vld [vmem:[%s7170 + $0xc0] sm:$0xff]
        %v7204 = vld [vmem:[%s7170 + $0xc8] sm:$0xf]
        %v7205 = vld [vmem:[%s7170 + $0xcc] sm:$0xff]
        %v7206 = vld [vmem:[%s7170 + $0xd4] sm:$0xf]
        %v7207 = vld [vmem:[%s7170 + $0xd8] sm:$0xff]
        %v7208 = vld [vmem:[%s7170 + $0xe0] sm:$0xf]
        %v7209 = vld [vmem:[%s7170 + $0xe4] sm:$0xff]
        %v7210 = vld [vmem:[%s7170 + $0xec] sm:$0xf]
        %v7211 = vld [vmem:[%s7170 + $0xf0] sm:$0xff]
        %v7212 = vld [vmem:[%s7170 + $0xf8] sm:$0xf]
        %v7213 = vrot.slane %v5757, 1
        %v7214 = vrot.slane %v5759, 2
        %v7215 = vor.u32 %v7213, %v7214
        %v7216 = vrot.slane %v5780, 1
        %v7217 = vrot.slane %v5764, 2
        %v7218 = vor.u32 %v7216, %v7217
        %v7219 = vsel %vm2469, %v7215, %v7218
        %v7220 = vrot.slane %v5769, 1
        %v7221 = vrot.slane %v5771, 2
        %v7222 = vor.u32 %v7220, %v7221
        %v7223 = vrot.slane %v5788, 1
        %v7224 = vrot.slane %v5776, 2
        %v7225 = vor.u32 %v7223, %v7224
        %v7226 = vsel %vm2469, %v7222, %v7225
        %v7227 = vrot.slane %v5796, 1
        %v7228 = vrot.slane %v5784, 2
        %v7229 = vor.u32 %v7227, %v7228
        %v7230 = vsel %vm2469, %v7218, %v7229
        %v7231 = vrot.slane %v5804, 1
        %v7232 = vrot.slane %v5792, 2
        %v7233 = vor.u32 %v7231, %v7232
        %v7234 = vsel %vm2469, %v7225, %v7233
        %v7235 = vrot.slane %v5812, 1
        %v7236 = vrot.slane %v5800, 2
        %v7237 = vor.u32 %v7235, %v7236
        %v7238 = vsel %vm2469, %v7229, %v7237
        %v7239 = vrot.slane %v5820, 1
        %v7240 = vrot.slane %v5808, 2
        %v7241 = vor.u32 %v7239, %v7240
        %v7242 = vsel %vm2469, %v7233, %v7241
        %v7243 = vrot.slane %v5828, 1
        %v7244 = vrot.slane %v5816, 2
        %v7245 = vor.u32 %v7243, %v7244
        %v7246 = vsel %vm2469, %v7237, %v7245
        %v7247 = vrot.slane %v5836, 1
        %v7248 = vrot.slane %v5824, 2
        %v7249 = vor.u32 %v7247, %v7248
        %v7250 = vsel %vm2469, %v7241, %v7249
        %v7251 = vrot.slane %v5844, 1
        %v7252 = vrot.slane %v5832, 2
        %v7253 = vor.u32 %v7251, %v7252
        %v7254 = vsel %vm2469, %v7245, %v7253
        %v7255 = vrot.slane %v5852, 1
        %v7256 = vrot.slane %v5840, 2
        %v7257 = vor.u32 %v7255, %v7256
        %v7258 = vsel %vm2469, %v7249, %v7257
        %v7259 = vrot.slane %v5860, 1
        %v7260 = vrot.slane %v5848, 2
        %v7261 = vor.u32 %v7259, %v7260
        %v7262 = vsel %vm2469, %v7253, %v7261
        %v7263 = vrot.slane %v5863, 1
        %v7264 = vrot.slane %v5856, 2
        %v7265 = vor.u32 %v7263, %v7264
        %v7266 = vsel %vm2469, %v7257, %v7265
        %v7316 = vunpack.c.l.b16 %v7171
        %v7317 = vunpack.c.h.b16 %v7171
        %v7318 = vunpack.c.l.b16 %v7172
        %v7319 = vunpack.c.l.b16 %v7173
        %v7320 = vunpack.c.h.b16 %v7173
        %v7321 = vunpack.c.l.b16 %v7174
        %v7322 = vunpack.c.l.b16 %v7175
        %v7323 = vunpack.c.h.b16 %v7175
        %v7324 = vunpack.c.l.b16 %v7176
        %v7325 = vunpack.c.l.b16 %v7177
        %v7326 = vunpack.c.h.b16 %v7177
        %v7327 = vunpack.c.l.b16 %v7178
        %v7328 = vunpack.c.l.b16 %v7179
        %v7329 = vunpack.c.h.b16 %v7179
        %v7330 = vunpack.c.l.b16 %v7180
        %v7331 = vunpack.c.l.b16 %v7181
        %v7332 = vunpack.c.h.b16 %v7181
        %v7333 = vunpack.c.l.b16 %v7182
        %v7334 = vunpack.c.l.b16 %v7183
        %v7335 = vunpack.c.h.b16 %v7183
        %v7336 = vunpack.c.l.b16 %v7184
        %v7337 = vunpack.c.l.b16 %v7185
        %v7338 = vunpack.c.h.b16 %v7185
        %v7339 = vunpack.c.l.b16 %v7186
        %v7340 = vunpack.c.l.b16 %v7187
        %v7341 = vunpack.c.h.b16 %v7187
        %v7342 = vunpack.c.l.b16 %v7188
        %v7343 = vunpack.c.l.b16 %v7189
        %v7344 = vunpack.c.h.b16 %v7189
        %v7345 = vunpack.c.l.b16 %v7190
        %v7346 = vunpack.c.l.b16 %v7191
        %v7347 = vunpack.c.h.b16 %v7191
        %v7348 = vunpack.c.l.b16 %v7192
        %v7349 = vunpack.c.l.b16 %v7193
        %v7350 = vunpack.c.h.b16 %v7193
        %v7351 = vunpack.c.l.b16 %v7194
        %v7352 = vunpack.c.l.b16 %v7195
        %v7353 = vunpack.c.h.b16 %v7195
        %v7354 = vunpack.c.l.b16 %v7196
        %v7355 = vunpack.c.l.b16 %v7197
        %v7356 = vunpack.c.h.b16 %v7197
        %v7357 = vunpack.c.l.b16 %v7198
        %v7358 = vunpack.c.l.b16 %v7199
        %v7359 = vunpack.c.h.b16 %v7199
        %v7360 = vunpack.c.l.b16 %v7200
        %v7361 = vunpack.c.l.b16 %v7201
        %v7362 = vunpack.c.h.b16 %v7201
        %v7363 = vunpack.c.l.b16 %v7202
        %v7364 = vunpack.c.l.b16 %v7203
        %v7365 = vunpack.c.h.b16 %v7203
        %v7366 = vunpack.c.l.b16 %v7204
        %v7367 = vunpack.c.l.b16 %v7205
        %v7368 = vunpack.c.h.b16 %v7205
        %v7369 = vunpack.c.l.b16 %v7206
        %v7370 = vunpack.c.l.b16 %v7207
        %v7371 = vunpack.c.h.b16 %v7207
        %v7372 = vunpack.c.l.b16 %v7208
        %v7373 = vunpack.c.l.b16 %v7209
        %v7374 = vunpack.c.h.b16 %v7209
        %v7375 = vunpack.c.l.b16 %v7210
        %v7376 = vunpack.c.l.b16 %v7211
        %v7377 = vunpack.c.h.b16 %v7211
        %v7378 = vunpack.c.l.b16 %v7212
        %v7379 = vpack.c.b16 %v7319, %v7316
        %v7380 = vpack.c.b16 %v7320, %v7317
        %v7381 = vpack.c.b16 %v7321, %v7318
        %v7382 = vpack.c.b16 %v7325, %v7322
        %v7383 = vpack.c.b16 %v7326, %v7323
        %v7384 = vpack.c.b16 %v7327, %v7324
        %v7385 = vpack.c.b16 %v7331, %v7328
        %v7386 = vpack.c.b16 %v7332, %v7329
        %v7387 = vpack.c.b16 %v7333, %v7330
        %v7388 = vpack.c.b16 %v7337, %v7334
        %v7389 = vpack.c.b16 %v7338, %v7335
        %v7390 = vpack.c.b16 %v7339, %v7336
        %v7391 = vpack.c.b16 %v7343, %v7340
        %v7392 = vpack.c.b16 %v7344, %v7341
        %v7393 = vpack.c.b16 %v7345, %v7342
        %v7394 = vpack.c.b16 %v7349, %v7346
        %v7395 = vpack.c.b16 %v7350, %v7347
        %v7396 = vpack.c.b16 %v7351, %v7348
        %v7397 = vpack.c.b16 %v7355, %v7352
        %v7398 = vpack.c.b16 %v7356, %v7353
        %v7399 = vpack.c.b16 %v7357, %v7354
        %v7400 = vpack.c.b16 %v7361, %v7358
        %v7401 = vpack.c.b16 %v7362, %v7359
        %v7402 = vpack.c.b16 %v7363, %v7360
        %v7403 = vpack.c.b16 %v7367, %v7364
        %v7404 = vpack.c.b16 %v7368, %v7365
        %v7405 = vpack.c.b16 %v7369, %v7366
        %v7406 = vpack.c.b16 %v7373, %v7370
        %v7407 = vpack.c.b16 %v7374, %v7371
        %v7408 = vpack.c.b16 %v7375, %v7372
        %v7409 = vpack.c.b16 %v7376, %v7376
        %v7410 = vpack.c.b16 %v7377, %v7377
        %v7411 = vpack.c.b16 %v7378, %v7378
        %v7443 = vsel %vm6041, %v7226, 0
        %v7446 = vsel %vm6041, %v7234, 0
        %v7449 = vsel %vm6041, %v7242, 0
        %v7452 = vsel %vm6041, %v7250, 0
        %v7455 = vsel %vm6041, %v7258, 0
        %v7458 = vsel %vm6041, %v7266, 0
        %v7461 = vsel %vm6041, %v7265, 0
        %v7464 = vsel %vm6063, %v7409, 0
        %v7467 = vsel %vm6063, %v7410, 0
        %v7470 = vsel %vm6063, %v7411, 0
        %7472 = vmatprep.subr.bf16.mxu0 %v7380
        %7473 = vmatpush1.bf16.msra.mxu0 %v7379
        %7474 = vmatprep.subr.bf16.mxu0 %v7383
        %7475 = vmatpush1.bf16.msra.mxu0 %v7382
        %7476 = vmatprep.subr.bf16.mxu0 %v7386
        %7477 = vmatpush1.bf16.msra.mxu0 %v7385
        %7478 = vmatprep.subr.bf16.mxu0 %v7389
        %7479 = vmatpush1.bf16.msra.mxu0 %v7388
        %7480 = vmatprep.subr.bf16.mxu0 %v7392
        %7481 = vmatpush1.bf16.msra.mxu0 %v7391
        %7482 = vmatprep.subr.bf16.mxu0 %v7395
        %7483 = vmatpush1.bf16.msra.mxu0 %v7394
        %7484 = vmatprep.subr.bf16.mxu0 %v7398
        %7485 = vmatpush1.bf16.msra.mxu0 %v7397
        %7486 = vmatprep.subr.bf16.mxu0 %v7401
        %7487 = vmatpush1.bf16.msra.mxu0 %v7400
        %7488 = vmatprep.subr.bf16.mxu0 %v7404
        %7489 = vmatpush1.bf16.msra.mxu0 %v7403
        %7490 = vmatprep.subr.bf16.mxu0 %v7407
        %7491 = vmatpush1.bf16.msra.mxu0 %v7406
        %7492 = vmatprep.subr.bf16.mxu0 %v7467
        %7493 = vmatpush1.bf16.msra.mxu0 %v7464
        %7494 = vmatprep.subr.bf16.mxu0 0
        %7495 = vmatpush1.bf16.msra.mxu0 0
        %7496 = vmatprep.subr.bf16.mxu0 0
        %7497 = vmatpush1.bf16.msra.mxu0 0
        %7498 = vmatprep.subr.bf16.mxu0 0
        %7499 = vmatpush1.bf16.msra.mxu0 0
        %7500 = vmatprep.subr.bf16.mxu0 0
        %7501 = vmatpush1.bf16.msra.mxu0 0
        %7502 = vmatprep.subr.bf16.mxu0 0
        %7503 = vmatpush1.bf16.msra.mxu0 0
        %7504 = vmatprep.mubr.bf16.mxu0 %v7443
        %7505 = vmatmul.mubr.bf16.gmra.mrb[0].mxu0 %v7219
        %v7506 = vpop.f32.mrb[0].mxu0
        %v7507 = vadd.f32 0.0, %v7506
        %v7508 = vpop.f32.mrb[0].mxu0
        %v7509 = vadd.f32 0.0, %v7508
        %v7510 = vpop.f32.mrb[0].mxu0
        %v7511 = vadd.f32 0.0, %v7510
        %v7512 = vpop.f32.mrb[0].mxu0
        %v7513 = vadd.f32 0.0, %v7512
        %7514 = vmatprep.mubr.bf16.mxu0 %v7446
        %7515 = vmatmul.mubr.bf16.gmra.mrb[0].mxu0 %v7230
        %v7516 = vpop.f32.mrb[0].mxu0
        %v7517 = vadd.f32 0.0, %v7516
        %v7518 = vpop.f32.mrb[0].mxu0
        %v7519 = vadd.f32 0.0, %v7518
        %v7520 = vpop.f32.mrb[0].mxu0
        %v7521 = vadd.f32 0.0, %v7520
        %v7522 = vpop.f32.mrb[0].mxu0
        %v7523 = vadd.f32 0.0, %v7522
        %7524 = vmatprep.mubr.bf16.mxu0 %v7449
        %7525 = vmatmul.mubr.bf16.gmra.mrb[0].mxu0 %v7238
        %v7526 = vpop.f32.mrb[0].mxu0
        %v7527 = vadd.f32 0.0, %v7526
        %v7528 = vpop.f32.mrb[0].mxu0
        %v7529 = vadd.f32 0.0, %v7528
        %v7530 = vpop.f32.mrb[0].mxu0
        %v7531 = vadd.f32 0.0, %v7530
        %v7532 = vpop.f32.mrb[0].mxu0
        %v7533 = vadd.f32 0.0, %v7532
        %7534 = vmatprep.mubr.bf16.mxu0 %v7452
        %7535 = vmatmul.mubr.bf16.gmra.mrb[0].mxu0 %v7246
        %v7536 = vpop.f32.mrb[0].mxu0
        %v7537 = vadd.f32 0.0, %v7536
        %v7538 = vpop.f32.mrb[0].mxu0
        %v7539 = vadd.f32 0.0, %v7538
        %v7540 = vpop.f32.mrb[0].mxu0
        %v7541 = vadd.f32 0.0, %v7540
        %v7542 = vpop.f32.mrb[0].mxu0
        %v7543 = vadd.f32 0.0, %v7542
        %7544 = vmatprep.mubr.bf16.mxu0 %v7455
        %7545 = vmatmul.mubr.bf16.gmra.mrb[0].mxu0 %v7254
        %v7546 = vpop.f32.mrb[0].mxu0
        %v7547 = vadd.f32 0.0, %v7546
        %v7548 = vpop.f32.mrb[0].mxu0
        %v7549 = vadd.f32 0.0, %v7548
        %v7550 = vpop.f32.mrb[0].mxu0
        %v7551 = vadd.f32 0.0, %v7550
        %v7552 = vpop.f32.mrb[0].mxu0
        %v7553 = vadd.f32 0.0, %v7552
        %7554 = vmatprep.mubr.bf16.mxu0 %v7458
        %7555 = vmatmul.mubr.bf16.gmra.mrb[0].mxu0 %v7262
        %v7556 = vpop.f32.mrb[0].mxu0
        %v7557 = vadd.f32 0.0, %v7556
        %v7558 = vpop.f32.mrb[0].mxu0
        %v7559 = vadd.f32 0.0, %v7558
        %v7560 = vpop.f32.mrb[0].mxu0
        %v7561 = vadd.f32 0.0, %v7560
        %v7562 = vpop.f32.mrb[0].mxu0
        %v7563 = vadd.f32 0.0, %v7562
        %7564 = vmatprep.mubr.bf16.mxu0 %v7461
        %7565 = vmatmul.mubr.bf16.gmra.mrb[0].mxu0 %v7261
        %v7566 = vpop.f32.mrb[0].mxu0
        %v7567 = vadd.f32 0.0, %v7566
        %v7568 = vpop.f32.mrb[0].mxu0
        %v7569 = vadd.f32 0.0, %v7568
        %v7570 = vpop.f32.mrb[0].mxu0
        %v7571 = vadd.f32 0.0, %v7570
        %v7572 = vpop.f32.mrb[0].mxu0
        %v7573 = vadd.f32 0.0, %v7572
        %7574 = vdwg.mxu0
        %7575 = vmatprep.subr.bf16.mxu0 0
        %7576 = vmatpush1.bf16.msra.mxu0 %v7381
        %7577 = vmatprep.subr.bf16.mxu0 0
        %7578 = vmatpush1.bf16.msra.mxu0 %v7384
        %7579 = vmatprep.subr.bf16.mxu0 0
        %7580 = vmatpush1.bf16.msra.mxu0 %v7387
        %7581 = vmatprep.subr.bf16.mxu0 0
        %7582 = vmatpush1.bf16.msra.mxu0 %v7390
        %7583 = vmatprep.subr.bf16.mxu0 0
        %7584 = vmatpush1.bf16.msra.mxu0 %v7393
        %7585 = vmatprep.subr.bf16.mxu0 0
        %7586 = vmatpush1.bf16.msra.mxu0 %v7396
        %7587 = vmatprep.subr.bf16.mxu0 0
        %7588 = vmatpush1.bf16.msra.mxu0 %v7399
        %7589 = vmatprep.subr.bf16.mxu0 0
        %7590 = vmatpush1.bf16.msra.mxu0 %v7402
        %7591 = vmatprep.subr.bf16.mxu0 0
        %7592 = vmatpush1.bf16.msra.mxu0 %v7405
        %7593 = vmatprep.subr.bf16.mxu0 0
        %7594 = vmatpush1.bf16.msra.mxu0 %v7408
        %7595 = vmatprep.subr.bf16.mxu0 0
        %7596 = vmatpush1.bf16.msra.mxu0 %v7470
        %7597 = vmatprep.subr.bf16.mxu0 0
        %7598 = vmatpush1.bf16.msra.mxu0 0
        %7599 = vmatprep.subr.bf16.mxu0 0
        %7600 = vmatpush1.bf16.msra.mxu0 0
        %7601 = vmatprep.subr.bf16.mxu0 0
        %7602 = vmatpush1.bf16.msra.mxu0 0
        %7603 = vmatprep.subr.bf16.mxu0 0
        %7604 = vmatpush1.bf16.msra.mxu0 0
        %7605 = vmatprep.subr.bf16.mxu0 0
        %7606 = vmatpush1.bf16.msra.mxu0 0
        %7607 = vmatprep.mubr.bf16.mxu0 %v7443
        %7608 = vmatmul.mubr.bf16.gmra.mrb[0].mxu0 %v7219
        %v7609 = vpop.f32.mrb[0].mxu0
        %v7610 = vadd.f32 0.0, %v7609
        %v7611 = vpop.f32.mrb[0].mxu0
        %v7612 = vpop.f32.mrb[0].mxu0
        %v7613 = vadd.f32 0.0, %v7612
        %v7614 = vpop.f32.mrb[0].mxu0
        %7615 = vmatprep.mubr.bf16.mxu0 %v7446
        %7616 = vmatmul.mubr.bf16.gmra.mrb[0].mxu0 %v7230
        %v7617 = vpop.f32.mrb[0].mxu0
        %v7618 = vadd.f32 0.0, %v7617
        %v7619 = vpop.f32.mrb[0].mxu0
        %v7620 = vpop.f32.mrb[0].mxu0
        %v7621 = vadd.f32 0.0, %v7620
        %v7622 = vpop.f32.mrb[0].mxu0
        %7623 = vmatprep.mubr.bf16.mxu0 %v7449
        %7624 = vmatmul.mubr.bf16.gmra.mrb[0].mxu0 %v7238
        %v7625 = vpop.f32.mrb[0].mxu0
        %v7626 = vadd.f32 0.0, %v7625
        %v7627 = vpop.f32.mrb[0].mxu0
        %v7628 = vpop.f32.mrb[0].mxu0
        %v7629 = vadd.f32 0.0, %v7628
        %v7630 = vpop.f32.mrb[0].mxu0
        %7631 = vmatprep.mubr.bf16.mxu0 %v7452
        %7632 = vmatmul.mubr.bf16.gmra.mrb[0].mxu0 %v7246
        %v7633 = vpop.f32.mrb[0].mxu0
        %v7634 = vadd.f32 0.0, %v7633
        %v7635 = vpop.f32.mrb[0].mxu0
        %v7636 = vpop.f32.mrb[0].mxu0
        %v7637 = vadd.f32 0.0, %v7636
        %v7638 = vpop.f32.mrb[0].mxu0
        %7639 = vmatprep.mubr.bf16.mxu0 %v7455
        %7640 = vmatmul.mubr.bf16.gmra.mrb[0].mxu0 %v7254
        %v7641 = vpop.f32.mrb[0].mxu0
        %v7642 = vadd.f32 0.0, %v7641
        %v7643 = vpop.f32.mrb[0].mxu0
        %v7644 = vpop.f32.mrb[0].mxu0
        %v7645 = vadd.f32 0.0, %v7644
        %v7646 = vpop.f32.mrb[0].mxu0
        %7647 = vmatprep.mubr.bf16.mxu0 %v7458
        %7648 = vmatmul.mubr.bf16.gmra.mrb[0].mxu0 %v7262
        %v7649 = vpop.f32.mrb[0].mxu0
        %v7650 = vadd.f32 0.0, %v7649
        %v7651 = vpop.f32.mrb[0].mxu0
        %v7652 = vpop.f32.mrb[0].mxu0
        %v7653 = vadd.f32 0.0, %v7652
        %v7654 = vpop.f32.mrb[0].mxu0
        %7655 = vmatprep.mubr.bf16.mxu0 %v7461
        %7656 = vmatmul.mubr.bf16.gmra.mrb[0].mxu0 %v7261
        %v7657 = vpop.f32.mrb[0].mxu0
        %v7658 = vadd.f32 0.0, %v7657
        %v7659 = vpop.f32.mrb[0].mxu0
        %v7660 = vpop.f32.mrb[0].mxu0
        %v7661 = vadd.f32 0.0, %v7660
        %v7662 = vpop.f32.mrb[0].mxu0
        %7663 = vdwg.mxu0
        %v7664 = vadd.f32 %v7128, %v7507
        %v7665 = vadd.f32 %v7129, %v7509
        %v7666 = vadd.f32 %v7130, %v7610
        %v7667 = vadd.f32 %v7131, %v7511
        %v7668 = vadd.f32 %v7132, %v7513
        %v7669 = vadd.f32 %v7133, %v7613
        %v7670 = vadd.f32 %v7134, %v7517
        %v7671 = vadd.f32 %v7135, %v7519
        %v7672 = vadd.f32 %v7136, %v7618
        %v7673 = vadd.f32 %v7137, %v7521
        %v7674 = vadd.f32 %v7138, %v7523
        %v7675 = vadd.f32 %v7139, %v7621
        %v7676 = vadd.f32 %v7140, %v7527
        %v7677 = vadd.f32 %v7141, %v7529
        %v7678 = vadd.f32 %v7142, %v7626
        %v7679 = vadd.f32 %v7143, %v7531
        %v7680 = vadd.f32 %v7144, %v7533
        %v7681 = vadd.f32 %v7145, %v7629
        %v7682 = vadd.f32 %v7146, %v7537
        %v7683 = vadd.f32 %v7147, %v7539
        %v7684 = vadd.f32 %v7148, %v7634
        %v7685 = vadd.f32 %v7149, %v7541
        %v7686 = vadd.f32 %v7150, %v7543
        %v7687 = vadd.f32 %v7151, %v7637
        %v7688 = vadd.f32 %v7152, %v7547
        %v7689 = vadd.f32 %v7153, %v7549
        %v7690 = vadd.f32 %v7154, %v7642
        %v7691 = vadd.f32 %v7155, %v7551
        %v7692 = vadd.f32 %v7156, %v7553
        %v7693 = vadd.f32 %v7157, %v7645
        %v7694 = vadd.f32 %v7158, %v7557
        %v7695 = vadd.f32 %v7159, %v7559
        %v7696 = vadd.f32 %v7160, %v7650
        %v7697 = vadd.f32 %v7161, %v7561
        %v7698 = vadd.f32 %v7162, %v7563
        %v7699 = vadd.f32 %v7163, %v7653
        %v7700 = vadd.f32 %v7164, %v7567
        %v7701 = vadd.f32 %v7165, %v7569
        %v7702 = vadd.f32 %v7166, %v7658
        %v7703 = vadd.f32 %v7167, %v7571
        %v7704 = vadd.f32 %v7168, %v7573
        %v7705 = vadd.f32 %v7169, %v7661
        %s7706 = scalar_lea.vmem %s5, 1008
        %v7707 = vld [vmem:[%s7706] sm:$0xff]
        %v7708 = vld [vmem:[%s7706 + $0x8] sm:$0xf]
        %v7709 = vld [vmem:[%s7706 + $0xc] sm:$0xff]
        %v7710 = vld [vmem:[%s7706 + $0x14] sm:$0xf]
        %v7711 = vld [vmem:[%s7706 + $0x18] sm:$0xff]
        %v7712 = vld [vmem:[%s7706 + $0x20] sm:$0xf]
        %v7713 = vld [vmem:[%s7706 + $0x24] sm:$0xff]
        %v7714 = vld [vmem:[%s7706 + $0x2c] sm:$0xf]
        %v7715 = vld [vmem:[%s7706 + $0x30] sm:$0xff]
        %v7716 = vld [vmem:[%s7706 + $0x38] sm:$0xf]
        %v7717 = vld [vmem:[%s7706 + $0x3c] sm:$0xff]
        %v7718 = vld [vmem:[%s7706 + $0x44] sm:$0xf]
        %v7719 = vld [vmem:[%s7706 + $0x48] sm:$0xff]
        %v7720 = vld [vmem:[%s7706 + $0x50] sm:$0xf]
        %v7721 = vld [vmem:[%s7706 + $0x54] sm:$0xff]
        %v7722 = vld [vmem:[%s7706 + $0x5c] sm:$0xf]
        %v7723 = vld [vmem:[%s7706 + $0x60] sm:$0xff]
        %v7724 = vld [vmem:[%s7706 + $0x68] sm:$0xf]
        %v7725 = vld [vmem:[%s7706 + $0x6c] sm:$0xff]
        %v7726 = vld [vmem:[%s7706 + $0x74] sm:$0xf]
        %v7727 = vld [vmem:[%s7706 + $0x78] sm:$0xff]
        %v7728 = vld [vmem:[%s7706 + $0x80] sm:$0xf]
        %v7729 = vld [vmem:[%s7706 + $0x84] sm:$0xff]
        %v7730 = vld [vmem:[%s7706 + $0x8c] sm:$0xf]
        %v7731 = vld [vmem:[%s7706 + $0x90] sm:$0xff]
        %v7732 = vld [vmem:[%s7706 + $0x98] sm:$0xf]
        %v7733 = vld [vmem:[%s7706 + $0x9c] sm:$0xff]
        %v7734 = vld [vmem:[%s7706 + $0xa4] sm:$0xf]
        %v7735 = vld [vmem:[%s7706 + $0xa8] sm:$0xff]
        %v7736 = vld [vmem:[%s7706 + $0xb0] sm:$0xf]
        %v7737 = vld [vmem:[%s7706 + $0xb4] sm:$0xff]
        %v7738 = vld [vmem:[%s7706 + $0xbc] sm:$0xf]
        %v7739 = vld [vmem:[%s7706 + $0xc0] sm:$0xff]
        %v7740 = vld [vmem:[%s7706 + $0xc8] sm:$0xf]
        %v7741 = vld [vmem:[%s7706 + $0xcc] sm:$0xff]
        %v7742 = vld [vmem:[%s7706 + $0xd4] sm:$0xf]
        %v7743 = vld [vmem:[%s7706 + $0xd8] sm:$0xff]
        %v7744 = vld [vmem:[%s7706 + $0xe0] sm:$0xf]
        %v7745 = vld [vmem:[%s7706 + $0xe4] sm:$0xff]
        %v7746 = vld [vmem:[%s7706 + $0xec] sm:$0xf]
        %v7747 = vld [vmem:[%s7706 + $0xf0] sm:$0xff]
        %v7748 = vld [vmem:[%s7706 + $0xf8] sm:$0xf]
        %v7749 = vrot.slane %v5657, 2
        %v7750 = vrot.slane %v5659, 2
        %v7751 = vsel %vm3152, %v7749, %v7750
        %v7752 = vrot.slane %v5658, 2
        %v7753 = vrot.slane %v5660, 2
        %v7754 = vsel %vm3152, %v7752, %v7753
        %v7755 = vrot.slane %v5661, 2
        %v7756 = vsel %vm3152, %v7750, %v7755
        %v7757 = vrot.slane %v5662, 2
        %v7758 = vsel %vm3152, %v7753, %v7757
        %v7759 = vrot.slane %v5663, 2
        %v7760 = vsel %vm3152, %v7755, %v7759
        %v7761 = vrot.slane %v5664, 2
        %v7762 = vsel %vm3152, %v7757, %v7761
        %v7763 = vrot.slane %v5665, 2
        %v7764 = vsel %vm3152, %v7759, %v7763
        %v7765 = vrot.slane %v5666, 2
        %v7766 = vsel %vm3152, %v7761, %v7765
        %v7767 = vrot.slane %v5667, 2
        %v7768 = vsel %vm3152, %v7763, %v7767
        %v7769 = vrot.slane %v5668, 2
        %v7770 = vsel %vm3152, %v7765, %v7769
        %v7771 = vrot.slane %v5669, 2
        %v7772 = vsel %vm3152, %v7767, %v7771
        %v7773 = vrot.slane %v5670, 2
        %v7774 = vsel %vm3152, %v7769, %v7773
        %v7824 = vunpack.c.l.b16 %v7707
        %v7825 = vunpack.c.h.b16 %v7707
        %v7826 = vunpack.c.l.b16 %v7708
        %v7827 = vunpack.c.l.b16 %v7709
        %v7828 = vunpack.c.h.b16 %v7709
        %v7829 = vunpack.c.l.b16 %v7710
        %v7830 = vunpack.c.l.b16 %v7711
        %v7831 = vunpack.c.h.b16 %v7711
        %v7832 = vunpack.c.l.b16 %v7712
        %v7833 = vunpack.c.l.b16 %v7713
        %v7834 = vunpack.c.h.b16 %v7713
        %v7835 = vunpack.c.l.b16 %v7714
        %v7836 = vunpack.c.l.b16 %v7715
        %v7837 = vunpack.c.h.b16 %v7715
        %v7838 = vunpack.c.l.b16 %v7716
        %v7839 = vunpack.c.l.b16 %v7717
        %v7840 = vunpack.c.h.b16 %v7717
        %v7841 = vunpack.c.l.b16 %v7718
        %v7842 = vunpack.c.l.b16 %v7719
        %v7843 = vunpack.c.h.b16 %v7719
        %v7844 = vunpack.c.l.b16 %v7720
        %v7845 = vunpack.c.l.b16 %v7721
        %v7846 = vunpack.c.h.b16 %v7721
        %v7847 = vunpack.c.l.b16 %v7722
        %v7848 = vunpack.c.l.b16 %v7723
        %v7849 = vunpack.c.h.b16 %v7723
        %v7850 = vunpack.c.l.b16 %v7724
        %v7851 = vunpack.c.l.b16 %v7725
        %v7852 = vunpack.c.h.b16 %v7725
        %v7853 = vunpack.c.l.b16 %v7726
        %v7854 = vunpack.c.l.b16 %v7727
        %v7855 = vunpack.c.h.b16 %v7727
        %v7856 = vunpack.c.l.b16 %v7728
        %v7857 = vunpack.c.l.b16 %v7729
        %v7858 = vunpack.c.h.b16 %v7729
        %v7859 = vunpack.c.l.b16 %v7730
        %v7860 = vunpack.c.l.b16 %v7731
        %v7861 = vunpack.c.h.b16 %v7731
        %v7862 = vunpack.c.l.b16 %v7732
        %v7863 = vunpack.c.l.b16 %v7733
        %v7864 = vunpack.c.h.b16 %v7733
        %v7865 = vunpack.c.l.b16 %v7734
        %v7866 = vunpack.c.l.b16 %v7735
        %v7867 = vunpack.c.h.b16 %v7735
        %v7868 = vunpack.c.l.b16 %v7736
        %v7869 = vunpack.c.l.b16 %v7737
        %v7870 = vunpack.c.h.b16 %v7737
        %v7871 = vunpack.c.l.b16 %v7738
        %v7872 = vunpack.c.l.b16 %v7739
        %v7873 = vunpack.c.h.b16 %v7739
        %v7874 = vunpack.c.l.b16 %v7740
        %v7875 = vunpack.c.l.b16 %v7741
        %v7876 = vunpack.c.h.b16 %v7741
        %v7877 = vunpack.c.l.b16 %v7742
        %v7878 = vunpack.c.l.b16 %v7743
        %v7879 = vunpack.c.h.b16 %v7743
        %v7880 = vunpack.c.l.b16 %v7744
        %v7881 = vunpack.c.l.b16 %v7745
        %v7882 = vunpack.c.h.b16 %v7745
        %v7883 = vunpack.c.l.b16 %v7746
        %v7884 = vunpack.c.l.b16 %v7747
        %v7885 = vunpack.c.h.b16 %v7747
        %v7886 = vunpack.c.l.b16 %v7748
        %v7887 = vpack.c.b16 %v7827, %v7824
        %v7888 = vpack.c.b16 %v7828, %v7825
        %v7889 = vpack.c.b16 %v7829, %v7826
        %v7890 = vpack.c.b16 %v7833, %v7830
        %v7891 = vpack.c.b16 %v7834, %v7831
        %v7892 = vpack.c.b16 %v7835, %v7832
        %v7893 = vpack.c.b16 %v7839, %v7836
        %v7894 = vpack.c.b16 %v7840, %v7837
        %v7895 = vpack.c.b16 %v7841, %v7838
        %v7896 = vpack.c.b16 %v7845, %v7842
        %v7897 = vpack.c.b16 %v7846, %v7843
        %v7898 = vpack.c.b16 %v7847, %v7844
        %v7899 = vpack.c.b16 %v7851, %v7848
        %v7900 = vpack.c.b16 %v7852, %v7849
        %v7901 = vpack.c.b16 %v7853, %v7850
        %v7902 = vpack.c.b16 %v7857, %v7854
        %v7903 = vpack.c.b16 %v7858, %v7855
        %v7904 = vpack.c.b16 %v7859, %v7856
        %v7905 = vpack.c.b16 %v7863, %v7860
        %v7906 = vpack.c.b16 %v7864, %v7861
        %v7907 = vpack.c.b16 %v7865, %v7862
        %v7908 = vpack.c.b16 %v7869, %v7866
        %v7909 = vpack.c.b16 %v7870, %v7867
        %v7910 = vpack.c.b16 %v7871, %v7868
        %v7911 = vpack.c.b16 %v7875, %v7872
        %v7912 = vpack.c.b16 %v7876, %v7873
        %v7913 = vpack.c.b16 %v7877, %v7874
        %v7914 = vpack.c.b16 %v7881, %v7878
        %v7915 = vpack.c.b16 %v7882, %v7879
        %v7916 = vpack.c.b16 %v7883, %v7880
        %v7917 = vpack.c.b16 %v7884, %v7884
        %v7918 = vpack.c.b16 %v7885, %v7885
        %v7919 = vpack.c.b16 %v7886, %v7886
        %v7951 = vsel %vm6041, %v7754, 0
        %v7954 = vsel %vm6041, %v7758, 0
        %v7957 = vsel %vm6041, %v7762, 0
        %v7960 = vsel %vm6041, %v7766, 0
        %v7963 = vsel %vm6041, %v7770, 0
        %v7966 = vsel %vm6041, %v7774, 0
        %v7969 = vsel %vm6041, %v7773, 0
        %v7972 = vsel %vm6063, %v7917, 0
        %v7975 = vsel %vm6063, %v7918, 0
        %v7978 = vsel %vm6063, %v7919, 0
        %7980 = vmatprep.subr.bf16.mxu0 %v7888
        %7981 = vmatpush1.bf16.msra.mxu0 %v7887
        %7982 = vmatprep.subr.bf16.mxu0 %v7891
        %7983 = vmatpush1.bf16.msra.mxu0 %v7890
        %7984 = vmatprep.subr.bf16.mxu0 %v7894
        %7985 = vmatpush1.bf16.msra.mxu0 %v7893
        %7986 = vmatprep.subr.bf16.mxu0 %v7897
        %7987 = vmatpush1.bf16.msra.mxu0 %v7896
        %7988 = vmatprep.subr.bf16.mxu0 %v7900
        %7989 = vmatpush1.bf16.msra.mxu0 %v7899
        %7990 = vmatprep.subr.bf16.mxu0 %v7903
        %7991 = vmatpush1.bf16.msra.mxu0 %v7902
        %7992 = vmatprep.subr.bf16.mxu0 %v7906
        %7993 = vmatpush1.bf16.msra.mxu0 %v7905
        %7994 = vmatprep.subr.bf16.mxu0 %v7909
        %7995 = vmatpush1.bf16.msra.mxu0 %v7908
        %7996 = vmatprep.subr.bf16.mxu0 %v7912
        %7997 = vmatpush1.bf16.msra.mxu0 %v7911
        %7998 = vmatprep.subr.bf16.mxu0 %v7915
        %7999 = vmatpush1.bf16.msra.mxu0 %v7914
        %8000 = vmatprep.subr.bf16.mxu0 %v7975
        %8001 = vmatpush1.bf16.msra.mxu0 %v7972
        %8002 = vmatprep.subr.bf16.mxu0 0
        %8003 = vmatpush1.bf16.msra.mxu0 0
        %8004 = vmatprep.subr.bf16.mxu0 0
        %8005 = vmatpush1.bf16.msra.mxu0 0
        %8006 = vmatprep.subr.bf16.mxu0 0
        %8007 = vmatpush1.bf16.msra.mxu0 0
        %8008 = vmatprep.subr.bf16.mxu0 0
        %8009 = vmatpush1.bf16.msra.mxu0 0
        %8010 = vmatprep.subr.bf16.mxu0 0
        %8011 = vmatpush1.bf16.msra.mxu0 0
        %8012 = vmatprep.mubr.bf16.mxu0 %v7951
        %8013 = vmatmul.mubr.bf16.gmra.mrb[0].mxu0 %v7751
        %v8014 = vpop.f32.mrb[0].mxu0
        %v8015 = vadd.f32 0.0, %v8014
        %v8016 = vpop.f32.mrb[0].mxu0
        %v8017 = vadd.f32 0.0, %v8016
        %v8018 = vpop.f32.mrb[0].mxu0
        %v8019 = vadd.f32 0.0, %v8018
        %v8020 = vpop.f32.mrb[0].mxu0
        %v8021 = vadd.f32 0.0, %v8020
        %8022 = vmatprep.mubr.bf16.mxu0 %v7954
        %8023 = vmatmul.mubr.bf16.gmra.mrb[0].mxu0 %v7756
        %v8024 = vpop.f32.mrb[0].mxu0
        %v8025 = vadd.f32 0.0, %v8024
        %v8026 = vpop.f32.mrb[0].mxu0
        %v8027 = vadd.f32 0.0, %v8026
        %v8028 = vpop.f32.mrb[0].mxu0
        %v8029 = vadd.f32 0.0, %v8028
        %v8030 = vpop.f32.mrb[0].mxu0
        %v8031 = vadd.f32 0.0, %v8030
        %8032 = vmatprep.mubr.bf16.mxu0 %v7957
        %8033 = vmatmul.mubr.bf16.gmra.mrb[0].mxu0 %v7760
        %v8034 = vpop.f32.mrb[0].mxu0
        %v8035 = vadd.f32 0.0, %v8034
        %v8036 = vpop.f32.mrb[0].mxu0
        %v8037 = vadd.f32 0.0, %v8036
        %v8038 = vpop.f32.mrb[0].mxu0
        %v8039 = vadd.f32 0.0, %v8038
        %v8040 = vpop.f32.mrb[0].mxu0
        %v8041 = vadd.f32 0.0, %v8040
        %8042 = vmatprep.mubr.bf16.mxu0 %v7960
        %8043 = vmatmul.mubr.bf16.gmra.mrb[0].mxu0 %v7764
        %v8044 = vpop.f32.mrb[0].mxu0
        %v8045 = vadd.f32 0.0, %v8044
        %v8046 = vpop.f32.mrb[0].mxu0
        %v8047 = vadd.f32 0.0, %v8046
        %v8048 = vpop.f32.mrb[0].mxu0
        %v8049 = vadd.f32 0.0, %v8048
        %v8050 = vpop.f32.mrb[0].mxu0
        %v8051 = vadd.f32 0.0, %v8050
        %8052 = vmatprep.mubr.bf16.mxu0 %v7963
        %8053 = vmatmul.mubr.bf16.gmra.mrb[0].mxu0 %v7768
        %v8054 = vpop.f32.mrb[0].mxu0
        %v8055 = vadd.f32 0.0, %v8054
        %v8056 = vpop.f32.mrb[0].mxu0
        %v8057 = vadd.f32 0.0, %v8056
        %v8058 = vpop.f32.mrb[0].mxu0
        %v8059 = vadd.f32 0.0, %v8058
        %v8060 = vpop.f32.mrb[0].mxu0
        %v8061 = vadd.f32 0.0, %v8060
        %8062 = vmatprep.mubr.bf16.mxu0 %v7966
        %8063 = vmatmul.mubr.bf16.gmra.mrb[0].mxu0 %v7772
        %v8064 = vpop.f32.mrb[0].mxu0
        %v8065 = vadd.f32 0.0, %v8064
        %v8066 = vpop.f32.mrb[0].mxu0
        %v8067 = vadd.f32 0.0, %v8066
        %v8068 = vpop.f32.mrb[0].mxu0
        %v8069 = vadd.f32 0.0, %v8068
        %v8070 = vpop.f32.mrb[0].mxu0
        %v8071 = vadd.f32 0.0, %v8070
        %8072 = vmatprep.mubr.bf16.mxu0 %v7969
        %8073 = vmatmul.mubr.bf16.gmra.mrb[0].mxu0 %v7771
        %v8074 = vpop.f32.mrb[0].mxu0
        %v8075 = vadd.f32 0.0, %v8074
        %v8076 = vpop.f32.mrb[0].mxu0
        %v8077 = vadd.f32 0.0, %v8076
        %v8078 = vpop.f32.mrb[0].mxu0
        %v8079 = vadd.f32 0.0, %v8078
        %v8080 = vpop.f32.mrb[0].mxu0
        %v8081 = vadd.f32 0.0, %v8080
        %8082 = vdwg.mxu0
        %8083 = vmatprep.subr.bf16.mxu0 0
        %8084 = vmatpush1.bf16.msra.mxu0 %v7889
        %8085 = vmatprep.subr.bf16.mxu0 0
        %8086 = vmatpush1.bf16.msra.mxu0 %v7892
        %8087 = vmatprep.subr.bf16.mxu0 0
        %8088 = vmatpush1.bf16.msra.mxu0 %v7895
        %8089 = vmatprep.subr.bf16.mxu0 0
        %8090 = vmatpush1.bf16.msra.mxu0 %v7898
        %8091 = vmatprep.subr.bf16.mxu0 0
        %8092 = vmatpush1.bf16.msra.mxu0 %v7901
        %8093 = vmatprep.subr.bf16.mxu0 0
        %8094 = vmatpush1.bf16.msra.mxu0 %v7904
        %8095 = vmatprep.subr.bf16.mxu0 0
        %8096 = vmatpush1.bf16.msra.mxu0 %v7907
        %8097 = vmatprep.subr.bf16.mxu0 0
        %8098 = vmatpush1.bf16.msra.mxu0 %v7910
        %8099 = vmatprep.subr.bf16.mxu0 0
        %8100 = vmatpush1.bf16.msra.mxu0 %v7913
        %8101 = vmatprep.subr.bf16.mxu0 0
        %8102 = vmatpush1.bf16.msra.mxu0 %v7916
        %8103 = vmatprep.subr.bf16.mxu0 0
        %8104 = vmatpush1.bf16.msra.mxu0 %v7978
        %8105 = vmatprep.subr.bf16.mxu0 0
        %8106 = vmatpush1.bf16.msra.mxu0 0
        %8107 = vmatprep.subr.bf16.mxu0 0
        %8108 = vmatpush1.bf16.msra.mxu0 0
        %8109 = vmatprep.subr.bf16.mxu0 0
        %8110 = vmatpush1.bf16.msra.mxu0 0
        %8111 = vmatprep.subr.bf16.mxu0 0
        %8112 = vmatpush1.bf16.msra.mxu0 0
        %8113 = vmatprep.subr.bf16.mxu0 0
        %8114 = vmatpush1.bf16.msra.mxu0 0
        %8115 = vmatprep.mubr.bf16.mxu0 %v7951
        %8116 = vmatmul.mubr.bf16.gmra.mrb[0].mxu0 %v7751
        %v8117 = vpop.f32.mrb[0].mxu0
        %v8118 = vadd.f32 0.0, %v8117
        %v8119 = vpop.f32.mrb[0].mxu0
        %v8120 = vpop.f32.mrb[0].mxu0
        %v8121 = vadd.f32 0.0, %v8120
        %v8122 = vpop.f32.mrb[0].mxu0
        %8123 = vmatprep.mubr.bf16.mxu0 %v7954
        %8124 = vmatmul.mubr.bf16.gmra.mrb[0].mxu0 %v7756
        %v8125 = vpop.f32.mrb[0].mxu0
        %v8126 = vadd.f32 0.0, %v8125
        %v8127 = vpop.f32.mrb[0].mxu0
        %v8128 = vpop.f32.mrb[0].mxu0
        %v8129 = vadd.f32 0.0, %v8128
        %v8130 = vpop.f32.mrb[0].mxu0
        %8131 = vmatprep.mubr.bf16.mxu0 %v7957
        %8132 = vmatmul.mubr.bf16.gmra.mrb[0].mxu0 %v7760
        %v8133 = vpop.f32.mrb[0].mxu0
        %v8134 = vadd.f32 0.0, %v8133
        %v8135 = vpop.f32.mrb[0].mxu0
        %v8136 = vpop.f32.mrb[0].mxu0
        %v8137 = vadd.f32 0.0, %v8136
        %v8138 = vpop.f32.mrb[0].mxu0
        %8139 = vmatprep.mubr.bf16.mxu0 %v7960
        %8140 = vmatmul.mubr.bf16.gmra.mrb[0].mxu0 %v7764
        %v8141 = vpop.f32.mrb[0].mxu0
        %v8142 = vadd.f32 0.0, %v8141
        %v8143 = vpop.f32.mrb[0].mxu0
        %v8144 = vpop.f32.mrb[0].mxu0
        %v8145 = vadd.f32 0.0, %v8144
        %v8146 = vpop.f32.mrb[0].mxu0
        %8147 = vmatprep.mubr.bf16.mxu0 %v7963
        %8148 = vmatmul.mubr.bf16.gmra.mrb[0].mxu0 %v7768
        %v8149 = vpop.f32.mrb[0].mxu0
        %v8150 = vadd.f32 0.0, %v8149
        %v8151 = vpop.f32.mrb[0].mxu0
        %v8152 = vpop.f32.mrb[0].mxu0
        %v8153 = vadd.f32 0.0, %v8152
        %v8154 = vpop.f32.mrb[0].mxu0
        %8155 = vmatprep.mubr.bf16.mxu0 %v7966
        %8156 = vmatmul.mubr.bf16.gmra.mrb[0].mxu0 %v7772
        %v8157 = vpop.f32.mrb[0].mxu0
        %v8158 = vadd.f32 0.0, %v8157
        %v8159 = vpop.f32.mrb[0].mxu0
        %v8160 = vpop.f32.mrb[0].mxu0
        %v8161 = vadd.f32 0.0, %v8160
        %v8162 = vpop.f32.mrb[0].mxu0
        %8163 = vmatprep.mubr.bf16.mxu0 %v7969
        %8164 = vmatmul.mubr.bf16.gmra.mrb[0].mxu0 %v7771
        %v8165 = vpop.f32.mrb[0].mxu0
        %v8166 = vadd.f32 0.0, %v8165
        %v8167 = vpop.f32.mrb[0].mxu0
        %v8168 = vpop.f32.mrb[0].mxu0
        %v8169 = vadd.f32 0.0, %v8168
        %v8170 = vpop.f32.mrb[0].mxu0
        %8171 = vdwg.mxu0
        %v8172 = vadd.f32 %v7664, %v8015
        %v8173 = vadd.f32 %v7665, %v8017
        %v8174 = vadd.f32 %v7666, %v8118
        %v8175 = vadd.f32 %v7667, %v8019
        %v8176 = vadd.f32 %v7668, %v8021
        %v8177 = vadd.f32 %v7669, %v8121
        %v8178 = vadd.f32 %v7670, %v8025
        %v8179 = vadd.f32 %v7671, %v8027
        %v8180 = vadd.f32 %v7672, %v8126
        %v8181 = vadd.f32 %v7673, %v8029
        %v8182 = vadd.f32 %v7674, %v8031
        %v8183 = vadd.f32 %v7675, %v8129
        %v8184 = vadd.f32 %v7676, %v8035
        %v8185 = vadd.f32 %v7677, %v8037
        %v8186 = vadd.f32 %v7678, %v8134
        %v8187 = vadd.f32 %v7679, %v8039
        %v8188 = vadd.f32 %v7680, %v8041
        %v8189 = vadd.f32 %v7681, %v8137
        %v8190 = vadd.f32 %v7682, %v8045
        %v8191 = vadd.f32 %v7683, %v8047
        %v8192 = vadd.f32 %v7684, %v8142
        %v8193 = vadd.f32 %v7685, %v8049
        %v8194 = vadd.f32 %v7686, %v8051
        %v8195 = vadd.f32 %v7687, %v8145
        %v8196 = vadd.f32 %v7688, %v8055
        %v8197 = vadd.f32 %v7689, %v8057
        %v8198 = vadd.f32 %v7690, %v8150
        %v8199 = vadd.f32 %v7691, %v8059
        %v8200 = vadd.f32 %v7692, %v8061
        %v8201 = vadd.f32 %v7693, %v8153
        %v8202 = vadd.f32 %v7694, %v8065
        %v8203 = vadd.f32 %v7695, %v8067
        %v8204 = vadd.f32 %v7696, %v8158
        %v8205 = vadd.f32 %v7697, %v8069
        %v8206 = vadd.f32 %v7698, %v8071
        %v8207 = vadd.f32 %v7699, %v8161
        %v8208 = vadd.f32 %v7700, %v8075
        %v8209 = vadd.f32 %v7701, %v8077
        %v8210 = vadd.f32 %v7702, %v8166
        %v8211 = vadd.f32 %v7703, %v8079
        %v8212 = vadd.f32 %v7704, %v8081
        %v8213 = vadd.f32 %v7705, %v8169
        %v8214 = vld [vmem:[%s6] sm:$0x7]
        %v8216 = vlaneseq
        %v8217 = vshrl.u32 %v8216, 7
        %v8218 = vsub.s32 0, %v8217
        %v8219 = vrot.slane %v8214, %v8218
        %v8220 = vlaneseq
        %v8221 = vshrl.u32 %v8220, 7
        %v8222 = vsub.s32 1, %v8221
        %v8223 = vrot.slane %v8214, %v8222
        %v8224 = vlaneseq
        %v8225 = vshrl.u32 %v8224, 7
        %v8226 = vsub.s32 2, %v8225
        %v8227 = vrot.slane %v8214, %v8226
        %v8231 = vadd.f32 %v8172, %v8219
        %v8232 = vadd.f32 %v8173, %v8223
        %v8233 = vadd.f32 %v8174, %v8227
        %v8234 = vadd.f32 %v8175, %v8219
        %v8235 = vadd.f32 %v8176, %v8223
        %v8236 = vadd.f32 %v8177, %v8227
        %v8237 = vadd.f32 %v8178, %v8219
        %v8238 = vadd.f32 %v8179, %v8223
        %v8239 = vadd.f32 %v8180, %v8227
        %v8240 = vadd.f32 %v8181, %v8219
        %v8241 = vadd.f32 %v8182, %v8223
        %v8242 = vadd.f32 %v8183, %v8227
        %v8243 = vadd.f32 %v8184, %v8219
        %v8244 = vadd.f32 %v8185, %v8223
        %v8245 = vadd.f32 %v8186, %v8227
        %v8246 = vadd.f32 %v8187, %v8219
        %v8247 = vadd.f32 %v8188, %v8223
        %v8248 = vadd.f32 %v8189, %v8227
        %v8249 = vadd.f32 %v8190, %v8219
        %v8250 = vadd.f32 %v8191, %v8223
        %v8251 = vadd.f32 %v8192, %v8227
        %v8252 = vadd.f32 %v8193, %v8219
        %v8253 = vadd.f32 %v8194, %v8223
        %v8254 = vadd.f32 %v8195, %v8227
        %v8255 = vadd.f32 %v8196, %v8219
        %v8256 = vadd.f32 %v8197, %v8223
        %v8257 = vadd.f32 %v8198, %v8227
        %v8258 = vadd.f32 %v8199, %v8219
        %v8259 = vadd.f32 %v8200, %v8223
        %v8260 = vadd.f32 %v8201, %v8227
        %v8261 = vadd.f32 %v8202, %v8219
        %v8262 = vadd.f32 %v8203, %v8223
        %v8263 = vadd.f32 %v8204, %v8227
        %v8264 = vadd.f32 %v8205, %v8219
        %v8265 = vadd.f32 %v8206, %v8223
        %v8266 = vadd.f32 %v8207, %v8227
        %v8267 = vadd.f32 %v8208, %v8219
        %v8268 = vadd.f32 %v8209, %v8223
        %v8269 = vadd.f32 %v8210, %v8227
        %v8270 = vadd.f32 %v8211, %v8219
        %v8271 = vadd.f32 %v8212, %v8223
        %v8272 = vadd.f32 %v8213, %v8227
        %v8273 = vtanh.pop %v8231
        %v8274 = vtanh.pop %v8232
        %v8275 = vtanh.pop %v8233
        %v8276 = vtanh.pop %v8234
        %v8277 = vtanh.pop %v8235
        %v8278 = vtanh.pop %v8236
        %v8279 = vtanh.pop %v8237
        %v8280 = vtanh.pop %v8238
        %v8281 = vtanh.pop %v8239
        %v8282 = vtanh.pop %v8240
        %v8283 = vtanh.pop %v8241
        %v8284 = vtanh.pop %v8242
        %v8285 = vtanh.pop %v8243
        %v8286 = vtanh.pop %v8244
        %v8287 = vtanh.pop %v8245
        %v8288 = vtanh.pop %v8246
        %v8289 = vtanh.pop %v8247
        %v8290 = vtanh.pop %v8248
        %v8291 = vtanh.pop %v8249
        %v8292 = vtanh.pop %v8250
        %v8293 = vtanh.pop %v8251
        %v8294 = vtanh.pop %v8252
        %v8295 = vtanh.pop %v8253
        %v8296 = vtanh.pop %v8254
        %v8297 = vtanh.pop %v8255
        %v8298 = vtanh.pop %v8256
        %v8299 = vtanh.pop %v8257
        %v8300 = vtanh.pop %v8258
        %v8301 = vtanh.pop %v8259
        %v8302 = vtanh.pop %v8260
        %v8303 = vtanh.pop %v8261
        %v8304 = vtanh.pop %v8262
        %v8305 = vtanh.pop %v8263
        %v8306 = vtanh.pop %v8264
        %v8307 = vtanh.pop %v8265
        %v8308 = vtanh.pop %v8266
        %v8309 = vtanh.pop %v8267
        %v8310 = vtanh.pop %v8268
        %v8311 = vtanh.pop %v8269
        %v8312 = vtanh.pop %v8270
        %v8313 = vtanh.pop %v8271
        %v8314 = vtanh.pop %v8272
        %v8315 = vpack.c.bf16 %v8276, %v8273
        %v8316 = vpack.c.bf16 %v8277, %v8274
        %v8317 = vpack.c.bf16 %v8278, %v8275
        %v8318 = vpack.c.bf16 %v8282, %v8279
        %v8319 = vpack.c.bf16 %v8283, %v8280
        %v8320 = vpack.c.bf16 %v8284, %v8281
        %v8321 = vpack.c.bf16 %v8288, %v8285
        %v8322 = vpack.c.bf16 %v8289, %v8286
        %v8323 = vpack.c.bf16 %v8290, %v8287
        %v8324 = vpack.c.bf16 %v8294, %v8291
        %v8325 = vpack.c.bf16 %v8295, %v8292
        %v8326 = vpack.c.bf16 %v8296, %v8293
        %v8327 = vpack.c.bf16 %v8300, %v8297
        %v8328 = vpack.c.bf16 %v8301, %v8298
        %v8329 = vpack.c.bf16 %v8302, %v8299
        %v8330 = vpack.c.bf16 %v8306, %v8303
        %v8331 = vpack.c.bf16 %v8307, %v8304
        %v8332 = vpack.c.bf16 %v8308, %v8305
        %v8333 = vpack.c.bf16 %v8312, %v8309
        %v8334 = vpack.c.bf16 %v8313, %v8310
        %v8335 = vpack.c.bf16 %v8314, %v8311
        %v8336 = vld [vmem:[%s7] sm:$0xf]
        %v8337 = vld [vmem:[%s7 + $0x4] sm:$0xf]
        %v8338 = vld [vmem:[%s7 + $0x8] sm:$0xf]
        %v8339 = vld [vmem:[%s7 + $0xc] sm:$0xf]
        %v8340 = vld [vmem:[%s7 + $0x10] sm:$0xf]
        %v8346 = vunpack.c.l.b16 %v8336
        %v8347 = vunpack.c.l.b16 %v8337
        %v8348 = vunpack.c.l.b16 %v8338
        %v8349 = vunpack.c.l.b16 %v8339
        %v8350 = vunpack.c.l.b16 %v8340
        %v8351 = vpack.c.b16 %v8347, %v8346
        %v8352 = vpack.c.b16 %v8349, %v8348
        %v8353 = vpack.c.b16 %v8350, %v8350
        %vm8354 = vcmask 883712
        %v8356 = vsel %vm8354, %v8351, 0
        %v8359 = vsel %vm8354, %v8352, 0
        %v8362 = vsel %vm8354, %v8353, 0
        %v8365 = vsel %vm4134, %v8333, 0
        %v8368 = vsel %vm4134, %v8334, 0
        %v8371 = vsel %vm4134, %v8335, 0
        %8373 = vmatprep.subr.bf16.mxu0 %v8316
        %8374 = vmatpush1.bf16.msra.mxu0 %v8315
        %8375 = vmatprep.subr.bf16.mxu0 %v8319
        %8376 = vmatpush1.bf16.msra.mxu0 %v8318
        %8377 = vmatprep.subr.bf16.mxu0 %v8322
        %8378 = vmatpush1.bf16.msra.mxu0 %v8321
        %8379 = vmatprep.subr.bf16.mxu0 %v8325
        %8380 = vmatpush1.bf16.msra.mxu0 %v8324
        %8381 = vmatprep.subr.bf16.mxu0 %v8328
        %8382 = vmatpush1.bf16.msra.mxu0 %v8327
        %8383 = vmatprep.subr.bf16.mxu0 %v8331
        %8384 = vmatpush1.bf16.msra.mxu0 %v8330
        %8385 = vmatprep.subr.bf16.mxu0 %v8368
        %8386 = vmatpush1.bf16.msra.mxu0 %v8365
        %8387 = vmatprep.subr.bf16.mxu0 0
        %8388 = vmatpush1.bf16.msra.mxu0 0
        %8389 = vmatprep.subr.bf16.mxu0 0
        %8390 = vmatpush1.bf16.msra.mxu0 0
        %8391 = vmatprep.subr.bf16.mxu0 0
        %8392 = vmatpush1.bf16.msra.mxu0 0
        %8393 = vmatprep.subr.bf16.mxu0 0
        %8394 = vmatpush1.bf16.msra.mxu0 0
        %8395 = vmatprep.subr.bf16.mxu0 0
        %8396 = vmatpush1.bf16.msra.mxu0 0
        %8397 = vmatprep.subr.bf16.mxu0 0
        %8398 = vmatpush1.bf16.msra.mxu0 0
        %8399 = vmatprep.subr.bf16.mxu0 0
        %8400 = vmatpush1.bf16.msra.mxu0 0
        %8401 = vmatprep.subr.bf16.mxu0 0
        %8402 = vmatpush1.bf16.msra.mxu0 0
        %8403 = vmatprep.subr.bf16.mxu0 0
        %8404 = vmatpush1.bf16.msra.mxu0 0
        %8405 = vmatprep.mubr.bf16.mxu0 0
        %8406 = vmatmul.mubr.bf16.gmra.mrb[0].mxu0 %v8356
        %v8407 = vpop.f32.mrb[0].mxu0
        %v8408 = vadd.f32 0.0, %v8407
        %v8409 = vpop.f32.mrb[0].mxu0
        %v8410 = vadd.f32 0.0, %v8409
        %v8411 = vpop.f32.mrb[0].mxu0
        %v8412 = vadd.f32 0.0, %v8411
        %v8413 = vpop.f32.mrb[0].mxu0
        %v8414 = vadd.f32 0.0, %v8413
        %8415 = vmatprep.mubr.bf16.mxu0 0
        %8416 = vmatmul.mubr.bf16.gmra.mrb[0].mxu0 %v8359
        %v8417 = vpop.f32.mrb[0].mxu0
        %v8418 = vadd.f32 0.0, %v8417
        %v8419 = vpop.f32.mrb[0].mxu0
        %v8420 = vadd.f32 0.0, %v8419
        %v8421 = vpop.f32.mrb[0].mxu0
        %v8422 = vadd.f32 0.0, %v8421
        %v8423 = vpop.f32.mrb[0].mxu0
        %v8424 = vadd.f32 0.0, %v8423
        %8425 = vmatprep.mubr.bf16.mxu0 0
        %8426 = vmatmul.mubr.bf16.gmra.mrb[0].mxu0 %v8362
        %v8427 = vpop.f32.mrb[0].mxu0
        %v8428 = vadd.f32 0.0, %v8427
        %v8429 = vpop.f32.mrb[0].mxu0
        %v8430 = vadd.f32 0.0, %v8429
        %v8431 = vpop.f32.mrb[0].mxu0
        %v8432 = vpop.f32.mrb[0].mxu0
        %8433 = vdwg.mxu0
        %8434 = vmatprep.subr.bf16.mxu0 0
        %8435 = vmatpush1.bf16.msra.mxu0 %v8317
        %8436 = vmatprep.subr.bf16.mxu0 0
        %8437 = vmatpush1.bf16.msra.mxu0 %v8320
        %8438 = vmatprep.subr.bf16.mxu0 0
        %8439 = vmatpush1.bf16.msra.mxu0 %v8323
        %8440 = vmatprep.subr.bf16.mxu0 0
        %8441 = vmatpush1.bf16.msra.mxu0 %v8326
        %8442 = vmatprep.subr.bf16.mxu0 0
        %8443 = vmatpush1.bf16.msra.mxu0 %v8329
        %8444 = vmatprep.subr.bf16.mxu0 0
        %8445 = vmatpush1.bf16.msra.mxu0 %v8332
        %8446 = vmatprep.subr.bf16.mxu0 0
        %8447 = vmatpush1.bf16.msra.mxu0 %v8371
        %8448 = vmatprep.subr.bf16.mxu0 0
        %8449 = vmatpush1.bf16.msra.mxu0 0
        %8450 = vmatprep.subr.bf16.mxu0 0
        %8451 = vmatpush1.bf16.msra.mxu0 0
        %8452 = vmatprep.subr.bf16.mxu0 0
        %8453 = vmatpush1.bf16.msra.mxu0 0
        %8454 = vmatprep.subr.bf16.mxu0 0
        %8455 = vmatpush1.bf16.msra.mxu0 0
        %8456 = vmatprep.subr.bf16.mxu0 0
        %8457 = vmatpush1.bf16.msra.mxu0 0
        %8458 = vmatprep.subr.bf16.mxu0 0
        %8459 = vmatpush1.bf16.msra.mxu0 0
        %8460 = vmatprep.subr.bf16.mxu0 0
        %8461 = vmatpush1.bf16.msra.mxu0 0
        %8462 = vmatprep.subr.bf16.mxu0 0
        %8463 = vmatpush1.bf16.msra.mxu0 0
        %8464 = vmatprep.subr.bf16.mxu0 0
        %8465 = vmatpush1.bf16.msra.mxu0 0
        %8466 = vmatprep.mubr.bf16.mxu0 0
        %8467 = vmatmul.mubr.bf16.gmra.mrb[0].mxu0 %v8356
        %v8468 = vpop.f32.mrb[0].mxu0
        %v8469 = vadd.f32 0.0, %v8468
        %v8470 = vpop.f32.mrb[0].mxu0
        %v8471 = vpop.f32.mrb[0].mxu0
        %v8472 = vadd.f32 0.0, %v8471
        %v8473 = vpop.f32.mrb[0].mxu0
        %8474 = vmatprep.mubr.bf16.mxu0 0
        %8475 = vmatmul.mubr.bf16.gmra.mrb[0].mxu0 %v8359
        %v8476 = vpop.f32.mrb[0].mxu0
        %v8477 = vadd.f32 0.0, %v8476
        %v8478 = vpop.f32.mrb[0].mxu0
        %v8479 = vpop.f32.mrb[0].mxu0
        %v8480 = vadd.f32 0.0, %v8479
        %v8481 = vpop.f32.mrb[0].mxu0
        %8482 = vmatprep.mubr.bf16.mxu0 0
        %8483 = vmatmul.mubr.bf16.gmra.mrb[0].mxu0 %v8362
        %v8484 = vpop.f32.mrb[0].mxu0
        %v8485 = vadd.f32 0.0, %v8484
        %v8486 = vpop.f32.mrb[0].mxu0
        %v8487 = vpop.f32.mrb[0].mxu0
        %v8488 = vpop.f32.mrb[0].mxu0
        %8489 = vdwg.mxu0
        %s8490 = scalar_lea.vmem %s7, 20
        %v8491 = vld [vmem:[%s8490] sm:$0xf]
        %v8492 = vld [vmem:[%s8490 + $0x4] sm:$0xf]
        %v8493 = vld [vmem:[%s8490 + $0x8] sm:$0xf]
        %v8494 = vld [vmem:[%s8490 + $0xc] sm:$0xf]
        %v8495 = vld [vmem:[%s8490 + $0x10] sm:$0xf]
        %v8501 = vunpack.c.l.b16 %v8491
        %v8502 = vunpack.c.l.b16 %v8492
        %v8503 = vunpack.c.l.b16 %v8493
        %v8504 = vunpack.c.l.b16 %v8494
        %v8505 = vunpack.c.l.b16 %v8495
        %v8506 = vpack.c.b16 %v8502, %v8501
        %v8507 = vpack.c.b16 %v8504, %v8503
        %v8508 = vpack.c.b16 %v8505, %v8505
        %v8510 = vsel %vm8354, %v8506, 0
        %v8513 = vsel %vm8354, %v8507, 0
        %v8516 = vsel %vm8354, %v8508, 0
        %8518 = vmatprep.subr.bf16.mxu0 %v8316
        %8519 = vmatpush1.bf16.msra.mxu0 %v8315
        %8520 = vmatprep.subr.bf16.mxu0 %v8319
        %8521 = vmatpush1.bf16.msra.mxu0 %v8318
        %8522 = vmatprep.subr.bf16.mxu0 %v8322
        %8523 = vmatpush1.bf16.msra.mxu0 %v8321
        %8524 = vmatprep.subr.bf16.mxu0 %v8325
        %8525 = vmatpush1.bf16.msra.mxu0 %v8324
        %8526 = vmatprep.subr.bf16.mxu0 %v8328
        %8527 = vmatpush1.bf16.msra.mxu0 %v8327
        %8528 = vmatprep.subr.bf16.mxu0 %v8331
        %8529 = vmatpush1.bf16.msra.mxu0 %v8330
        %8530 = vmatprep.subr.bf16.mxu0 %v8368
        %8531 = vmatpush1.bf16.msra.mxu0 %v8365
        %8532 = vmatprep.subr.bf16.mxu0 0
        %8533 = vmatpush1.bf16.msra.mxu0 0
        %8534 = vmatprep.subr.bf16.mxu0 0
        %8535 = vmatpush1.bf16.msra.mxu0 0
        %8536 = vmatprep.subr.bf16.mxu0 0
        %8537 = vmatpush1.bf16.msra.mxu0 0
        %8538 = vmatprep.subr.bf16.mxu0 0
        %8539 = vmatpush1.bf16.msra.mxu0 0
        %8540 = vmatprep.subr.bf16.mxu0 0
        %8541 = vmatpush1.bf16.msra.mxu0 0
        %8542 = vmatprep.subr.bf16.mxu0 0
        %8543 = vmatpush1.bf16.msra.mxu0 0
        %8544 = vmatprep.subr.bf16.mxu0 0
        %8545 = vmatpush1.bf16.msra.mxu0 0
        %8546 = vmatprep.subr.bf16.mxu0 0
        %8547 = vmatpush1.bf16.msra.mxu0 0
        %8548 = vmatprep.subr.bf16.mxu0 0
        %8549 = vmatpush1.bf16.msra.mxu0 0
        %8550 = vmatprep.mubr.bf16.mxu0 0
        %8551 = vmatmul.mubr.bf16.gmra.mrb[0].mxu0 %v8510
        %v8552 = vpop.f32.mrb[0].mxu0
        %v8553 = vadd.f32 0.0, %v8552
        %v8554 = vpop.f32.mrb[0].mxu0
        %v8555 = vadd.f32 0.0, %v8554
        %v8556 = vpop.f32.mrb[0].mxu0
        %v8557 = vadd.f32 0.0, %v8556
        %v8558 = vpop.f32.mrb[0].mxu0
        %v8559 = vadd.f32 0.0, %v8558
        %8560 = vmatprep.mubr.bf16.mxu0 0
        %8561 = vmatmul.mubr.bf16.gmra.mrb[0].mxu0 %v8513
        %v8562 = vpop.f32.mrb[0].mxu0
        %v8563 = vadd.f32 0.0, %v8562
        %v8564 = vpop.f32.mrb[0].mxu0
        %v8565 = vadd.f32 0.0, %v8564
        %v8566 = vpop.f32.mrb[0].mxu0
        %v8567 = vadd.f32 0.0, %v8566
        %v8568 = vpop.f32.mrb[0].mxu0
        %v8569 = vadd.f32 0.0, %v8568
        %8570 = vmatprep.mubr.bf16.mxu0 0
        %8571 = vmatmul.mubr.bf16.gmra.mrb[0].mxu0 %v8516
        %v8572 = vpop.f32.mrb[0].mxu0
        %v8573 = vadd.f32 0.0, %v8572
        %v8574 = vpop.f32.mrb[0].mxu0
        %v8575 = vadd.f32 0.0, %v8574
        %v8576 = vpop.f32.mrb[0].mxu0
        %v8577 = vpop.f32.mrb[0].mxu0
        %8578 = vdwg.mxu0
        %8579 = vmatprep.subr.bf16.mxu0 0
        %8580 = vmatpush1.bf16.msra.mxu0 %v8317
        %8581 = vmatprep.subr.bf16.mxu0 0
        %8582 = vmatpush1.bf16.msra.mxu0 %v8320
        %8583 = vmatprep.subr.bf16.mxu0 0
        %8584 = vmatpush1.bf16.msra.mxu0 %v8323
        %8585 = vmatprep.subr.bf16.mxu0 0
        %8586 = vmatpush1.bf16.msra.mxu0 %v8326
        %8587 = vmatprep.subr.bf16.mxu0 0
        %8588 = vmatpush1.bf16.msra.mxu0 %v8329
        %8589 = vmatprep.subr.bf16.mxu0 0
        %8590 = vmatpush1.bf16.msra.mxu0 %v8332
        %8591 = vmatprep.subr.bf16.mxu0 0
        %8592 = vmatpush1.bf16.msra.mxu0 %v8371
        %8593 = vmatprep.subr.bf16.mxu0 0
        %8594 = vmatpush1.bf16.msra.mxu0 0
        %8595 = vmatprep.subr.bf16.mxu0 0
        %8596 = vmatpush1.bf16.msra.mxu0 0
        %8597 = vmatprep.subr.bf16.mxu0 0
        %8598 = vmatpush1.bf16.msra.mxu0 0
        %8599 = vmatprep.subr.bf16.mxu0 0
        %8600 = vmatpush1.bf16.msra.mxu0 0
        %8601 = vmatprep.subr.bf16.mxu0 0
        %8602 = vmatpush1.bf16.msra.mxu0 0
        %8603 = vmatprep.subr.bf16.mxu0 0
        %8604 = vmatpush1.bf16.msra.mxu0 0
        %8605 = vmatprep.subr.bf16.mxu0 0
        %8606 = vmatpush1.bf16.msra.mxu0 0
        %8607 = vmatprep.subr.bf16.mxu0 0
        %8608 = vmatpush1.bf16.msra.mxu0 0
        %8609 = vmatprep.subr.bf16.mxu0 0
        %8610 = vmatpush1.bf16.msra.mxu0 0
        %8611 = vmatprep.mubr.bf16.mxu0 0
        %8612 = vmatmul.mubr.bf16.gmra.mrb[0].mxu0 %v8510
        %v8613 = vpop.f32.mrb[0].mxu0
        %v8614 = vadd.f32 0.0, %v8613
        %v8615 = vpop.f32.mrb[0].mxu0
        %v8616 = vpop.f32.mrb[0].mxu0
        %v8617 = vadd.f32 0.0, %v8616
        %v8618 = vpop.f32.mrb[0].mxu0
        %8619 = vmatprep.mubr.bf16.mxu0 0
        %8620 = vmatmul.mubr.bf16.gmra.mrb[0].mxu0 %v8513
        %v8621 = vpop.f32.mrb[0].mxu0
        %v8622 = vadd.f32 0.0, %v8621
        %v8623 = vpop.f32.mrb[0].mxu0
        %v8624 = vpop.f32.mrb[0].mxu0
        %v8625 = vadd.f32 0.0, %v8624
        %v8626 = vpop.f32.mrb[0].mxu0
        %8627 = vmatprep.mubr.bf16.mxu0 0
        %8628 = vmatmul.mubr.bf16.gmra.mrb[0].mxu0 %v8516
        %v8629 = vpop.f32.mrb[0].mxu0
        %v8630 = vadd.f32 0.0, %v8629
        %v8631 = vpop.f32.mrb[0].mxu0
        %v8632 = vpop.f32.mrb[0].mxu0
        %v8633 = vpop.f32.mrb[0].mxu0
        %8634 = vdwg.mxu0
        %v8635 = vmax.f32 %v8408, %v8553
        %v8636 = vmax.f32 %v8410, %v8555
        %v8637 = vmax.f32 %v8469, %v8614
        %v8638 = vmax.f32 %v8412, %v8557
        %v8639 = vmax.f32 %v8414, %v8559
        %v8640 = vmax.f32 %v8472, %v8617
        %v8641 = vmax.f32 %v8418, %v8563
        %v8642 = vmax.f32 %v8420, %v8565
        %v8643 = vmax.f32 %v8477, %v8622
        %v8644 = vmax.f32 %v8422, %v8567
        %v8645 = vmax.f32 %v8424, %v8569
        %v8646 = vmax.f32 %v8480, %v8625
        %v8647 = vmax.f32 %v8428, %v8573
        %v8648 = vmax.f32 %v8430, %v8575
        %v8649 = vmax.f32 %v8485, %v8630
        %v8650 = vpack.c.bf16 %v8638, %v8635
        %v8651 = vpack.c.bf16 %v8639, %v8636
        %v8652 = vpack.c.bf16 %v8640, %v8637
        %v8653 = vpack.c.bf16 %v8644, %v8641
        %v8654 = vpack.c.bf16 %v8645, %v8642
        %v8655 = vpack.c.bf16 %v8646, %v8643
        %v8656 = vpack.c.bf16 %v8647, %v8647
        %v8657 = vpack.c.bf16 %v8648, %v8648
        %v8658 = vpack.c.bf16 %v8649, %v8649
        %v8659 = vld [vmem:[%s8] sm:$0xff]
        %v8660 = vld [vmem:[%s8 + $0x8] sm:$0xff]
        %v8661 = vld [vmem:[%s8 + $0x10] sm:$0xff]
        %v8662 = vld [vmem:[%s8 + $0x18] sm:$0xff]
        %v8663 = vld [vmem:[%s8 + $0x20] sm:$0xff]
        %v8664 = vld [vmem:[%s8 + $0x28] sm:$0xff]
        %v8665 = vld [vmem:[%s8 + $0x30] sm:$0xff]
        %v8666 = vld [vmem:[%s8 + $0x38] sm:$0xff]
        %v8667 = vld [vmem:[%s8 + $0x40] sm:$0xff]
        %v8668 = vld [vmem:[%s8 + $0x48] sm:$0xff]
        %v8669 = vld [vmem:[%s8 + $0x50] sm:$0xff]
        %v8670 = vld [vmem:[%s8 + $0x58] sm:$0xff]
        %v8671 = vld [vmem:[%s8 + $0x60] sm:$0xff]
        %v8672 = vld [vmem:[%s8 + $0x68] sm:$0xff]
        %v8673 = vld [vmem:[%s8 + $0x70] sm:$0xff]
        %v8674 = vld [vmem:[%s8 + $0x78] sm:$0xff]
        %v8675 = vld [vmem:[%s8 + $0x80] sm:$0xff]
        %v8676 = vld [vmem:[%s8 + $0x88] sm:$0xff]
        %v8677 = vld [vmem:[%s8 + $0x90] sm:$0xff]
        %v8678 = vld [vmem:[%s8 + $0x98] sm:$0xff]
        %v8679 = vld [vmem:[%s8 + $0xa0] sm:$0xff]
        %v8680 = vld [vmem:[%s8 + $0xa8] sm:$0xff]
        %v8681 = vld [vmem:[%s8 + $0xb0] sm:$0xff]
        %v8682 = vld [vmem:[%s8 + $0xb8] sm:$0xff]
        %v8683 = vld [vmem:[%s8 + $0xc0] sm:$0xff]
        %v8684 = vld [vmem:[%s8 + $0xc8] sm:$0xff]
        %v8685 = vld [vmem:[%s8 + $0xd0] sm:$0xff]
        %v8686 = vld [vmem:[%s8 + $0xd8] sm:$0xff]
        %v8687 = vld [vmem:[%s8 + $0xe0] sm:$0xff]
        %v8688 = vld [vmem:[%s8 + $0xe8] sm:$0xff]
        %v8689 = vld [vmem:[%s8 + $0xf0] sm:$0xff]
        %v8690 = vld [vmem:[%s8 + $0xf8] sm:$0xff]
        %v8691 = vld [vmem:[%s8 + $0x100] sm:$0xff]
        %v8692 = vld [vmem:[%s8 + $0x108] sm:$0xff]
        %v8693 = vld [vmem:[%s8 + $0x110] sm:$0xff]
        %v8694 = vld [vmem:[%s8 + $0x118] sm:$0xff]
        %v8695 = vld [vmem:[%s8 + $0x120] sm:$0xff]
        %v8696 = vld [vmem:[%s8 + $0x128] sm:$0xff]
        %v8697 = vld [vmem:[%s8 + $0x130] sm:$0xff]
        %v8698 = vld [vmem:[%s8 + $0x138] sm:$0xff]
        %v8739 = vunpack.c.l.b16 %v8659
        %v8740 = vunpack.c.h.b16 %v8659
        %v8741 = vunpack.c.l.b16 %v8660
        %v8742 = vunpack.c.h.b16 %v8660
        %v8743 = vunpack.c.l.b16 %v8661
        %v8744 = vunpack.c.h.b16 %v8661
        %v8745 = vunpack.c.l.b16 %v8662
        %v8746 = vunpack.c.h.b16 %v8662
        %v8747 = vunpack.c.l.b16 %v8663
        %v8748 = vunpack.c.h.b16 %v8663
        %v8749 = vunpack.c.l.b16 %v8664
        %v8750 = vunpack.c.h.b16 %v8664
        %v8751 = vunpack.c.l.b16 %v8665
        %v8752 = vunpack.c.h.b16 %v8665
        %v8753 = vunpack.c.l.b16 %v8666
        %v8754 = vunpack.c.h.b16 %v8666
        %v8755 = vunpack.c.l.b16 %v8667
        %v8756 = vunpack.c.h.b16 %v8667
        %v8757 = vunpack.c.l.b16 %v8668
        %v8758 = vunpack.c.h.b16 %v8668
        %v8759 = vunpack.c.l.b16 %v8669
        %v8760 = vunpack.c.h.b16 %v8669
        %v8761 = vunpack.c.l.b16 %v8670
        %v8762 = vunpack.c.h.b16 %v8670
        %v8763 = vunpack.c.l.b16 %v8671
        %v8764 = vunpack.c.h.b16 %v8671
        %v8765 = vunpack.c.l.b16 %v8672
        %v8766 = vunpack.c.h.b16 %v8672
        %v8767 = vunpack.c.l.b16 %v8673
        %v8768 = vunpack.c.h.b16 %v8673
        %v8769 = vunpack.c.l.b16 %v8674
        %v8770 = vunpack.c.h.b16 %v8674
        %v8771 = vunpack.c.l.b16 %v8675
        %v8772 = vunpack.c.h.b16 %v8675
        %v8773 = vunpack.c.l.b16 %v8676
        %v8774 = vunpack.c.h.b16 %v8676
        %v8775 = vunpack.c.l.b16 %v8677
        %v8776 = vunpack.c.h.b16 %v8677
        %v8777 = vunpack.c.l.b16 %v8678
        %v8778 = vunpack.c.h.b16 %v8678
        %v8779 = vunpack.c.l.b16 %v8679
        %v8780 = vunpack.c.h.b16 %v8679
        %v8781 = vunpack.c.l.b16 %v8680
        %v8782 = vunpack.c.h.b16 %v8680
        %v8783 = vunpack.c.l.b16 %v8681
        %v8784 = vunpack.c.h.b16 %v8681
        %v8785 = vunpack.c.l.b16 %v8682
        %v8786 = vunpack.c.h.b16 %v8682
        %v8787 = vunpack.c.l.b16 %v8683
        %v8788 = vunpack.c.h.b16 %v8683
        %v8789 = vunpack.c.l.b16 %v8684
        %v8790 = vunpack.c.h.b16 %v8684
        %v8791 = vunpack.c.l.b16 %v8685
        %v8792 = vunpack.c.h.b16 %v8685
        %v8793 = vunpack.c.l.b16 %v8686
        %v8794 = vunpack.c.h.b16 %v8686
        %v8795 = vunpack.c.l.b16 %v8687
        %v8796 = vunpack.c.h.b16 %v8687
        %v8797 = vunpack.c.l.b16 %v8688
        %v8798 = vunpack.c.h.b16 %v8688
        %v8799 = vunpack.c.l.b16 %v8689
        %v8800 = vunpack.c.h.b16 %v8689
        %v8801 = vunpack.c.l.b16 %v8690
        %v8802 = vunpack.c.h.b16 %v8690
        %v8803 = vunpack.c.l.b16 %v8691
        %v8804 = vunpack.c.h.b16 %v8691
        %v8805 = vunpack.c.l.b16 %v8692
        %v8806 = vunpack.c.h.b16 %v8692
        %v8807 = vunpack.c.l.b16 %v8693
        %v8808 = vunpack.c.h.b16 %v8693
        %v8809 = vunpack.c.l.b16 %v8694
        %v8810 = vunpack.c.h.b16 %v8694
        %v8811 = vunpack.c.l.b16 %v8695
        %v8812 = vunpack.c.h.b16 %v8695
        %v8813 = vunpack.c.l.b16 %v8696
        %v8814 = vunpack.c.h.b16 %v8696
        %v8815 = vunpack.c.l.b16 %v8697
        %v8816 = vunpack.c.h.b16 %v8697
        %v8817 = vunpack.c.l.b16 %v8698
        %v8818 = vunpack.c.h.b16 %v8698
        %v8819 = vpack.c.b16 %v8741, %v8739
        %v8820 = vpack.c.b16 %v8742, %v8740
        %v8821 = vpack.c.b16 %v8745, %v8743
        %v8822 = vpack.c.b16 %v8746, %v8744
        %v8823 = vpack.c.b16 %v8749, %v8747
        %v8824 = vpack.c.b16 %v8750, %v8748
        %v8825 = vpack.c.b16 %v8753, %v8751
        %v8826 = vpack.c.b16 %v8754, %v8752
        %v8827 = vpack.c.b16 %v8757, %v8755
        %v8828 = vpack.c.b16 %v8758, %v8756
        %v8829 = vpack.c.b16 %v8761, %v8759
        %v8830 = vpack.c.b16 %v8762, %v8760
        %v8831 = vpack.c.b16 %v8765, %v8763
        %v8832 = vpack.c.b16 %v8766, %v8764
        %v8833 = vpack.c.b16 %v8769, %v8767
        %v8834 = vpack.c.b16 %v8770, %v8768
        %v8835 = vpack.c.b16 %v8773, %v8771
        %v8836 = vpack.c.b16 %v8774, %v8772
        %v8837 = vpack.c.b16 %v8777, %v8775
        %v8838 = vpack.c.b16 %v8778, %v8776
        %v8839 = vpack.c.b16 %v8781, %v8779
        %v8840 = vpack.c.b16 %v8782, %v8780
        %v8841 = vpack.c.b16 %v8785, %v8783
        %v8842 = vpack.c.b16 %v8786, %v8784
        %v8843 = vpack.c.b16 %v8789, %v8787
        %v8844 = vpack.c.b16 %v8790, %v8788
        %v8845 = vpack.c.b16 %v8793, %v8791
        %v8846 = vpack.c.b16 %v8794, %v8792
        %v8847 = vpack.c.b16 %v8797, %v8795
        %v8848 = vpack.c.b16 %v8798, %v8796
        %v8849 = vpack.c.b16 %v8801, %v8799
        %v8850 = vpack.c.b16 %v8802, %v8800
        %v8851 = vpack.c.b16 %v8805, %v8803
        %v8852 = vpack.c.b16 %v8806, %v8804
        %v8853 = vpack.c.b16 %v8809, %v8807
        %v8854 = vpack.c.b16 %v8810, %v8808
        %v8855 = vpack.c.b16 %v8813, %v8811
        %v8856 = vpack.c.b16 %v8814, %v8812
        %v8857 = vpack.c.b16 %v8817, %v8815
        %v8858 = vpack.c.b16 %v8818, %v8816
        %vm8899 = vcmask 523264
        %v8901 = vsel %vm8899, %v8652, 0
        %v8904 = vsel %vm8899, %v8655, 0
        %v8907 = vsel %vm8899, %v8658, 0
        %8909 = vmatprep.subr.bf16.mxu0 %v8820
        %8910 = vmatpush1.bf16.msra.mxu0 %v8819
        %8911 = vmatprep.subr.bf16.mxu0 %v8822
        %8912 = vmatpush1.bf16.msra.mxu0 %v8821
        %8913 = vmatprep.subr.bf16.mxu0 %v8824
        %8914 = vmatpush1.bf16.msra.mxu0 %v8823
        %8915 = vmatprep.subr.bf16.mxu0 %v8826
        %8916 = vmatpush1.bf16.msra.mxu0 %v8825
        %8917 = vmatprep.subr.bf16.mxu0 %v8828
        %8918 = vmatpush1.bf16.msra.mxu0 %v8827
        %8919 = vmatprep.subr.bf16.mxu0 %v8830
        %8920 = vmatpush1.bf16.msra.mxu0 %v8829
        %8921 = vmatprep.subr.bf16.mxu0 %v8832
        %8922 = vmatpush1.bf16.msra.mxu0 %v8831
        %8923 = vmatprep.subr.bf16.mxu0 %v8834
        %8924 = vmatpush1.bf16.msra.mxu0 %v8833
        %8925 = vmatprep.subr.bf16.mxu0 %v8836
        %8926 = vmatpush1.bf16.msra.mxu0 %v8835
        %8927 = vmatprep.subr.bf16.mxu0 %v8838
        %8928 = vmatpush1.bf16.msra.mxu0 %v8837
        %8929 = vmatprep.subr.bf16.mxu0 %v8840
        %8930 = vmatpush1.bf16.msra.mxu0 %v8839
        %8931 = vmatprep.subr.bf16.mxu0 %v8842
        %8932 = vmatpush1.bf16.msra.mxu0 %v8841
        %8933 = vmatprep.subr.bf16.mxu0 %v8844
        %8934 = vmatpush1.bf16.msra.mxu0 %v8843
        %8935 = vmatprep.subr.bf16.mxu0 %v8846
        %8936 = vmatpush1.bf16.msra.mxu0 %v8845
        %8937 = vmatprep.subr.bf16.mxu0 %v8848
        %8938 = vmatpush1.bf16.msra.mxu0 %v8847
        %8939 = vmatprep.subr.bf16.mxu0 %v8850
        %8940 = vmatpush1.bf16.msra.mxu0 %v8849
        %8941 = vmatprep.mubr.bf16.mxu0 %v8651
        %8942 = vmatmul.mubr.bf16.gmra.mrb[0].mxu0 %v8650
        %v8943 = vpop.f32.mrb[0].mxu0
        %v8944 = vadd.f32 0.0, %v8943
        %v8945 = vpop.f32.mrb[0].mxu0
        %v8946 = vadd.f32 0.0, %v8945
        %v8947 = vpop.f32.mrb[0].mxu0
        %v8948 = vadd.f32 0.0, %v8947
        %v8949 = vpop.f32.mrb[0].mxu0
        %v8950 = vadd.f32 0.0, %v8949
        %8951 = vmatprep.mubr.bf16.mxu0 %v8654
        %8952 = vmatmul.mubr.bf16.gmra.mrb[0].mxu0 %v8653
        %v8953 = vpop.f32.mrb[0].mxu0
        %v8954 = vadd.f32 0.0, %v8953
        %v8955 = vpop.f32.mrb[0].mxu0
        %v8956 = vadd.f32 0.0, %v8955
        %v8957 = vpop.f32.mrb[0].mxu0
        %v8958 = vadd.f32 0.0, %v8957
        %v8959 = vpop.f32.mrb[0].mxu0
        %v8960 = vadd.f32 0.0, %v8959
        %8961 = vmatprep.mubr.bf16.mxu0 %v8657
        %8962 = vmatmul.mubr.bf16.gmra.mrb[0].mxu0 %v8656
        %v8963 = vpop.f32.mrb[0].mxu0
        %v8964 = vadd.f32 0.0, %v8963
        %v8965 = vpop.f32.mrb[0].mxu0
        %v8966 = vadd.f32 0.0, %v8965
        %v8967 = vpop.f32.mrb[0].mxu0
        %v8968 = vpop.f32.mrb[0].mxu0
        %8969 = vdwg.mxu0
        %8970 = vmatprep.subr.bf16.mxu0 %v8852
        %8971 = vmatpush1.bf16.msra.mxu0 %v8851
        %8972 = vmatprep.subr.bf16.mxu0 %v8854
        %8973 = vmatpush1.bf16.msra.mxu0 %v8853
        %8974 = vmatprep.subr.bf16.mxu0 %v8856
        %8975 = vmatpush1.bf16.msra.mxu0 %v8855
        %8976 = vmatprep.subr.bf16.mxu0 %v8858
        %8977 = vmatpush1.bf16.msra.mxu0 %v8857
        %8978 = vmatprep.subr.bf16.mxu0 0
        %8979 = vmatpush1.bf16.msra.mxu0 0
        %8980 = vmatprep.subr.bf16.mxu0 0
        %8981 = vmatpush1.bf16.msra.mxu0 0
        %8982 = vmatprep.subr.bf16.mxu0 0
        %8983 = vmatpush1.bf16.msra.mxu0 0
        %8984 = vmatprep.subr.bf16.mxu0 0
        %8985 = vmatpush1.bf16.msra.mxu0 0
        %8986 = vmatprep.subr.bf16.mxu0 0
        %8987 = vmatpush1.bf16.msra.mxu0 0
        %8988 = vmatprep.subr.bf16.mxu0 0
        %8989 = vmatpush1.bf16.msra.mxu0 0
        %8990 = vmatprep.subr.bf16.mxu0 0
        %8991 = vmatpush1.bf16.msra.mxu0 0
        %8992 = vmatprep.subr.bf16.mxu0 0
        %8993 = vmatpush1.bf16.msra.mxu0 0
        %8994 = vmatprep.subr.bf16.mxu0 0
        %8995 = vmatpush1.bf16.msra.mxu0 0
        %8996 = vmatprep.subr.bf16.mxu0 0
        %8997 = vmatpush1.bf16.msra.mxu0 0
        %8998 = vmatprep.subr.bf16.mxu0 0
        %8999 = vmatpush1.bf16.msra.mxu0 0
        %9000 = vmatprep.subr.bf16.mxu0 0
        %9001 = vmatpush1.bf16.msra.mxu0 0
        %9002 = vmatprep.mubr.bf16.mxu0 0
        %9003 = vmatmul.mubr.bf16.gmra.mrb[0].mxu0 %v8901
        %v9004 = vpop.f32.mrb[0].mxu0
        %v9005 = vadd.f32 %v8944, %v9004
        %v9006 = vpop.f32.mrb[0].mxu0
        %v9007 = vadd.f32 %v8946, %v9006
        %v9008 = vpop.f32.mrb[0].mxu0
        %v9009 = vadd.f32 %v8948, %v9008
        %v9010 = vpop.f32.mrb[0].mxu0
        %v9011 = vadd.f32 %v8950, %v9010
        %9012 = vmatprep.mubr.bf16.mxu0 0
        %9013 = vmatmul.mubr.bf16.gmra.mrb[0].mxu0 %v8904
        %v9014 = vpop.f32.mrb[0].mxu0
        %v9015 = vadd.f32 %v8954, %v9014
        %v9016 = vpop.f32.mrb[0].mxu0
        %v9017 = vadd.f32 %v8956, %v9016
        %v9018 = vpop.f32.mrb[0].mxu0
        %v9019 = vadd.f32 %v8958, %v9018
        %v9020 = vpop.f32.mrb[0].mxu0
        %v9021 = vadd.f32 %v8960, %v9020
        %9022 = vmatprep.mubr.bf16.mxu0 0
        %9023 = vmatmul.mubr.bf16.gmra.mrb[0].mxu0 %v8907
        %v9024 = vpop.f32.mrb[0].mxu0
        %v9025 = vadd.f32 %v8964, %v9024
        %v9026 = vpop.f32.mrb[0].mxu0
        %v9027 = vadd.f32 %v8966, %v9026
        %v9028 = vpop.f32.mrb[0].mxu0
        %v9029 = vpop.f32.mrb[0].mxu0
        %9030 = vdwg.mxu0
        %s9031 = scalar_lea.vmem %s8, 320
        %v9032 = vld [vmem:[%s9031] sm:$0xff]
        %v9033 = vld [vmem:[%s9031 + $0x8] sm:$0xff]
        %v9034 = vld [vmem:[%s9031 + $0x10] sm:$0xff]
        %v9035 = vld [vmem:[%s9031 + $0x18] sm:$0xff]
        %v9036 = vld [vmem:[%s9031 + $0x20] sm:$0xff]
        %v9037 = vld [vmem:[%s9031 + $0x28] sm:$0xff]
        %v9038 = vld [vmem:[%s9031 + $0x30] sm:$0xff]
        %v9039 = vld [vmem:[%s9031 + $0x38] sm:$0xff]
        %v9040 = vld [vmem:[%s9031 + $0x40] sm:$0xff]
        %v9041 = vld [vmem:[%s9031 + $0x48] sm:$0xff]
        %v9042 = vld [vmem:[%s9031 + $0x50] sm:$0xff]
        %v9043 = vld [vmem:[%s9031 + $0x58] sm:$0xff]
        %v9044 = vld [vmem:[%s9031 + $0x60] sm:$0xff]
        %v9045 = vld [vmem:[%s9031 + $0x68] sm:$0xff]
        %v9046 = vld [vmem:[%s9031 + $0x70] sm:$0xff]
        %v9047 = vld [vmem:[%s9031 + $0x78] sm:$0xff]
        %v9048 = vld [vmem:[%s9031 + $0x80] sm:$0xff]
        %v9049 = vld [vmem:[%s9031 + $0x88] sm:$0xff]
        %v9050 = vld [vmem:[%s9031 + $0x90] sm:$0xff]
        %v9051 = vld [vmem:[%s9031 + $0x98] sm:$0xff]
        %v9052 = vld [vmem:[%s9031 + $0xa0] sm:$0xff]
        %v9053 = vld [vmem:[%s9031 + $0xa8] sm:$0xff]
        %v9054 = vld [vmem:[%s9031 + $0xb0] sm:$0xff]
        %v9055 = vld [vmem:[%s9031 + $0xb8] sm:$0xff]
        %v9056 = vld [vmem:[%s9031 + $0xc0] sm:$0xff]
        %v9057 = vld [vmem:[%s9031 + $0xc8] sm:$0xff]
        %v9058 = vld [vmem:[%s9031 + $0xd0] sm:$0xff]
        %v9059 = vld [vmem:[%s9031 + $0xd8] sm:$0xff]
        %v9060 = vld [vmem:[%s9031 + $0xe0] sm:$0xff]
        %v9061 = vld [vmem:[%s9031 + $0xe8] sm:$0xff]
        %v9062 = vld [vmem:[%s9031 + $0xf0] sm:$0xff]
        %v9063 = vld [vmem:[%s9031 + $0xf8] sm:$0xff]
        %v9064 = vld [vmem:[%s9031 + $0x100] sm:$0xff]
        %v9065 = vld [vmem:[%s9031 + $0x108] sm:$0xff]
        %v9066 = vld [vmem:[%s9031 + $0x110] sm:$0xff]
        %v9067 = vld [vmem:[%s9031 + $0x118] sm:$0xff]
        %v9068 = vld [vmem:[%s9031 + $0x120] sm:$0xff]
        %v9069 = vld [vmem:[%s9031 + $0x128] sm:$0xff]
        %v9070 = vld [vmem:[%s9031 + $0x130] sm:$0xff]
        %v9071 = vld [vmem:[%s9031 + $0x138] sm:$0xff]
        %v9112 = vunpack.c.l.b16 %v9032
        %v9113 = vunpack.c.h.b16 %v9032
        %v9114 = vunpack.c.l.b16 %v9033
        %v9115 = vunpack.c.h.b16 %v9033
        %v9116 = vunpack.c.l.b16 %v9034
        %v9117 = vunpack.c.h.b16 %v9034
        %v9118 = vunpack.c.l.b16 %v9035
        %v9119 = vunpack.c.h.b16 %v9035
        %v9120 = vunpack.c.l.b16 %v9036
        %v9121 = vunpack.c.h.b16 %v9036
        %v9122 = vunpack.c.l.b16 %v9037
        %v9123 = vunpack.c.h.b16 %v9037
        %v9124 = vunpack.c.l.b16 %v9038
        %v9125 = vunpack.c.h.b16 %v9038
        %v9126 = vunpack.c.l.b16 %v9039
        %v9127 = vunpack.c.h.b16 %v9039
        %v9128 = vunpack.c.l.b16 %v9040
        %v9129 = vunpack.c.h.b16 %v9040
        %v9130 = vunpack.c.l.b16 %v9041
        %v9131 = vunpack.c.h.b16 %v9041
        %v9132 = vunpack.c.l.b16 %v9042
        %v9133 = vunpack.c.h.b16 %v9042
        %v9134 = vunpack.c.l.b16 %v9043
        %v9135 = vunpack.c.h.b16 %v9043
        %v9136 = vunpack.c.l.b16 %v9044
        %v9137 = vunpack.c.h.b16 %v9044
        %v9138 = vunpack.c.l.b16 %v9045
        %v9139 = vunpack.c.h.b16 %v9045
        %v9140 = vunpack.c.l.b16 %v9046
        %v9141 = vunpack.c.h.b16 %v9046
        %v9142 = vunpack.c.l.b16 %v9047
        %v9143 = vunpack.c.h.b16 %v9047
        %v9144 = vunpack.c.l.b16 %v9048
        %v9145 = vunpack.c.h.b16 %v9048
        %v9146 = vunpack.c.l.b16 %v9049
        %v9147 = vunpack.c.h.b16 %v9049
        %v9148 = vunpack.c.l.b16 %v9050
        %v9149 = vunpack.c.h.b16 %v9050
        %v9150 = vunpack.c.l.b16 %v9051
        %v9151 = vunpack.c.h.b16 %v9051
        %v9152 = vunpack.c.l.b16 %v9052
        %v9153 = vunpack.c.h.b16 %v9052
        %v9154 = vunpack.c.l.b16 %v9053
        %v9155 = vunpack.c.h.b16 %v9053
        %v9156 = vunpack.c.l.b16 %v9054
        %v9157 = vunpack.c.h.b16 %v9054
        %v9158 = vunpack.c.l.b16 %v9055
        %v9159 = vunpack.c.h.b16 %v9055
        %v9160 = vunpack.c.l.b16 %v9056
        %v9161 = vunpack.c.h.b16 %v9056
        %v9162 = vunpack.c.l.b16 %v9057
        %v9163 = vunpack.c.h.b16 %v9057
        %v9164 = vunpack.c.l.b16 %v9058
        %v9165 = vunpack.c.h.b16 %v9058
        %v9166 = vunpack.c.l.b16 %v9059
        %v9167 = vunpack.c.h.b16 %v9059
        %v9168 = vunpack.c.l.b16 %v9060
        %v9169 = vunpack.c.h.b16 %v9060
        %v9170 = vunpack.c.l.b16 %v9061
        %v9171 = vunpack.c.h.b16 %v9061
        %v9172 = vunpack.c.l.b16 %v9062
        %v9173 = vunpack.c.h.b16 %v9062
        %v9174 = vunpack.c.l.b16 %v9063
        %v9175 = vunpack.c.h.b16 %v9063
        %v9176 = vunpack.c.l.b16 %v9064
        %v9177 = vunpack.c.h.b16 %v9064
        %v9178 = vunpack.c.l.b16 %v9065
        %v9179 = vunpack.c.h.b16 %v9065
        %v9180 = vunpack.c.l.b16 %v9066
        %v9181 = vunpack.c.h.b16 %v9066
        %v9182 = vunpack.c.l.b16 %v9067
        %v9183 = vunpack.c.h.b16 %v9067
        %v9184 = vunpack.c.l.b16 %v9068
        %v9185 = vunpack.c.h.b16 %v9068
        %v9186 = vunpack.c.l.b16 %v9069
        %v9187 = vunpack.c.h.b16 %v9069
        %v9188 = vunpack.c.l.b16 %v9070
        %v9189 = vunpack.c.h.b16 %v9070
        %v9190 = vunpack.c.l.b16 %v9071
        %v9191 = vunpack.c.h.b16 %v9071
        %v9192 = vpack.c.b16 %v9114, %v9112
        %v9193 = vpack.c.b16 %v9115, %v9113
        %v9194 = vpack.c.b16 %v9118, %v9116
        %v9195 = vpack.c.b16 %v9119, %v9117
        %v9196 = vpack.c.b16 %v9122, %v9120
        %v9197 = vpack.c.b16 %v9123, %v9121
        %v9198 = vpack.c.b16 %v9126, %v9124
        %v9199 = vpack.c.b16 %v9127, %v9125
        %v9200 = vpack.c.b16 %v9130, %v9128
        %v9201 = vpack.c.b16 %v9131, %v9129
        %v9202 = vpack.c.b16 %v9134, %v9132
        %v9203 = vpack.c.b16 %v9135, %v9133
        %v9204 = vpack.c.b16 %v9138, %v9136
        %v9205 = vpack.c.b16 %v9139, %v9137
        %v9206 = vpack.c.b16 %v9142, %v9140
        %v9207 = vpack.c.b16 %v9143, %v9141
        %v9208 = vpack.c.b16 %v9146, %v9144
        %v9209 = vpack.c.b16 %v9147, %v9145
        %v9210 = vpack.c.b16 %v9150, %v9148
        %v9211 = vpack.c.b16 %v9151, %v9149
        %v9212 = vpack.c.b16 %v9154, %v9152
        %v9213 = vpack.c.b16 %v9155, %v9153
        %v9214 = vpack.c.b16 %v9158, %v9156
        %v9215 = vpack.c.b16 %v9159, %v9157
        %v9216 = vpack.c.b16 %v9162, %v9160
        %v9217 = vpack.c.b16 %v9163, %v9161
        %v9218 = vpack.c.b16 %v9166, %v9164
        %v9219 = vpack.c.b16 %v9167, %v9165
        %v9220 = vpack.c.b16 %v9170, %v9168
        %v9221 = vpack.c.b16 %v9171, %v9169
        %v9222 = vpack.c.b16 %v9174, %v9172
        %v9223 = vpack.c.b16 %v9175, %v9173
        %v9224 = vpack.c.b16 %v9178, %v9176
        %v9225 = vpack.c.b16 %v9179, %v9177
        %v9226 = vpack.c.b16 %v9182, %v9180
        %v9227 = vpack.c.b16 %v9183, %v9181
        %v9228 = vpack.c.b16 %v9186, %v9184
        %v9229 = vpack.c.b16 %v9187, %v9185
        %v9230 = vpack.c.b16 %v9190, %v9188
        %v9231 = vpack.c.b16 %v9191, %v9189
        %9272 = vmatprep.subr.bf16.mxu0 %v9193
        %9273 = vmatpush1.bf16.msra.mxu0 %v9192
        %9274 = vmatprep.subr.bf16.mxu0 %v9195
        %9275 = vmatpush1.bf16.msra.mxu0 %v9194
        %9276 = vmatprep.subr.bf16.mxu0 %v9197
        %9277 = vmatpush1.bf16.msra.mxu0 %v9196
        %9278 = vmatprep.subr.bf16.mxu0 %v9199
        %9279 = vmatpush1.bf16.msra.mxu0 %v9198
        %9280 = vmatprep.subr.bf16.mxu0 %v9201
        %9281 = vmatpush1.bf16.msra.mxu0 %v9200
        %9282 = vmatprep.subr.bf16.mxu0 %v9203
        %9283 = vmatpush1.bf16.msra.mxu0 %v9202
        %9284 = vmatprep.subr.bf16.mxu0 %v9205
        %9285 = vmatpush1.bf16.msra.mxu0 %v9204
        %9286 = vmatprep.subr.bf16.mxu0 %v9207
        %9287 = vmatpush1.bf16.msra.mxu0 %v9206
        %9288 = vmatprep.subr.bf16.mxu0 %v9209
        %9289 = vmatpush1.bf16.msra.mxu0 %v9208
        %9290 = vmatprep.subr.bf16.mxu0 %v9211
        %9291 = vmatpush1.bf16.msra.mxu0 %v9210
        %9292 = vmatprep.subr.bf16.mxu0 %v9213
        %9293 = vmatpush1.bf16.msra.mxu0 %v9212
        %9294 = vmatprep.subr.bf16.mxu0 %v9215
        %9295 = vmatpush1.bf16.msra.mxu0 %v9214
        %9296 = vmatprep.subr.bf16.mxu0 %v9217
        %9297 = vmatpush1.bf16.msra.mxu0 %v9216
        %9298 = vmatprep.subr.bf16.mxu0 %v9219
        %9299 = vmatpush1.bf16.msra.mxu0 %v9218
        %9300 = vmatprep.subr.bf16.mxu0 %v9221
        %9301 = vmatpush1.bf16.msra.mxu0 %v9220
        %9302 = vmatprep.subr.bf16.mxu0 %v9223
        %9303 = vmatpush1.bf16.msra.mxu0 %v9222
        %9304 = vmatprep.mubr.bf16.mxu0 %v8651
        %9305 = vmatmul.mubr.bf16.gmra.mrb[0].mxu0 %v8650
        %v9306 = vpop.f32.mrb[0].mxu0
        %v9307 = vadd.f32 0.0, %v9306
        %v9308 = vpop.f32.mrb[0].mxu0
        %v9309 = vadd.f32 0.0, %v9308
        %v9310 = vpop.f32.mrb[0].mxu0
        %v9311 = vadd.f32 0.0, %v9310
        %v9312 = vpop.f32.mrb[0].mxu0
        %v9313 = vadd.f32 0.0, %v9312
        %9314 = vmatprep.mubr.bf16.mxu0 %v8654
        %9315 = vmatmul.mubr.bf16.gmra.mrb[0].mxu0 %v8653
        %v9316 = vpop.f32.mrb[0].mxu0
        %v9317 = vadd.f32 0.0, %v9316
        %v9318 = vpop.f32.mrb[0].mxu0
        %v9319 = vadd.f32 0.0, %v9318
        %v9320 = vpop.f32.mrb[0].mxu0
        %v9321 = vadd.f32 0.0, %v9320
        %v9322 = vpop.f32.mrb[0].mxu0
        %v9323 = vadd.f32 0.0, %v9322
        %9324 = vmatprep.mubr.bf16.mxu0 %v8657
        %9325 = vmatmul.mubr.bf16.gmra.mrb[0].mxu0 %v8656
        %v9326 = vpop.f32.mrb[0].mxu0
        %v9327 = vadd.f32 0.0, %v9326
        %v9328 = vpop.f32.mrb[0].mxu0
        %v9329 = vadd.f32 0.0, %v9328
        %v9330 = vpop.f32.mrb[0].mxu0
        %v9331 = vpop.f32.mrb[0].mxu0
        %9332 = vdwg.mxu0
        %9333 = vmatprep.subr.bf16.mxu0 %v9225
        %9334 = vmatpush1.bf16.msra.mxu0 %v9224
        %9335 = vmatprep.subr.bf16.mxu0 %v9227
        %9336 = vmatpush1.bf16.msra.mxu0 %v9226
        %9337 = vmatprep.subr.bf16.mxu0 %v9229
        %9338 = vmatpush1.bf16.msra.mxu0 %v9228
        %9339 = vmatprep.subr.bf16.mxu0 %v9231
        %9340 = vmatpush1.bf16.msra.mxu0 %v9230
        %9341 = vmatprep.subr.bf16.mxu0 0
        %9342 = vmatpush1.bf16.msra.mxu0 0
        %9343 = vmatprep.subr.bf16.mxu0 0
        %9344 = vmatpush1.bf16.msra.mxu0 0
        %9345 = vmatprep.subr.bf16.mxu0 0
        %9346 = vmatpush1.bf16.msra.mxu0 0
        %9347 = vmatprep.subr.bf16.mxu0 0
        %9348 = vmatpush1.bf16.msra.mxu0 0
        %9349 = vmatprep.subr.bf16.mxu0 0
        %9350 = vmatpush1.bf16.msra.mxu0 0
        %9351 = vmatprep.subr.bf16.mxu0 0
        %9352 = vmatpush1.bf16.msra.mxu0 0
        %9353 = vmatprep.subr.bf16.mxu0 0
        %9354 = vmatpush1.bf16.msra.mxu0 0
        %9355 = vmatprep.subr.bf16.mxu0 0
        %9356 = vmatpush1.bf16.msra.mxu0 0
        %9357 = vmatprep.subr.bf16.mxu0 0
        %9358 = vmatpush1.bf16.msra.mxu0 0
        %9359 = vmatprep.subr.bf16.mxu0 0
        %9360 = vmatpush1.bf16.msra.mxu0 0
        %9361 = vmatprep.subr.bf16.mxu0 0
        %9362 = vmatpush1.bf16.msra.mxu0 0
        %9363 = vmatprep.subr.bf16.mxu0 0
        %9364 = vmatpush1.bf16.msra.mxu0 0
        %9365 = vmatprep.mubr.bf16.mxu0 0
        %9366 = vmatmul.mubr.bf16.gmra.mrb[0].mxu0 %v8901
        %v9367 = vpop.f32.mrb[0].mxu0
        %v9368 = vadd.f32 %v9307, %v9367
        %v9369 = vpop.f32.mrb[0].mxu0
        %v9370 = vadd.f32 %v9309, %v9369
        %v9371 = vpop.f32.mrb[0].mxu0
        %v9372 = vadd.f32 %v9311, %v9371
        %v9373 = vpop.f32.mrb[0].mxu0
        %v9374 = vadd.f32 %v9313, %v9373
        %9375 = vmatprep.mubr.bf16.mxu0 0
        %9376 = vmatmul.mubr.bf16.gmra.mrb[0].mxu0 %v8904
        %v9377 = vpop.f32.mrb[0].mxu0
        %v9378 = vadd.f32 %v9317, %v9377
        %v9379 = vpop.f32.mrb[0].mxu0
        %v9380 = vadd.f32 %v9319, %v9379
        %v9381 = vpop.f32.mrb[0].mxu0
        %v9382 = vadd.f32 %v9321, %v9381
        %v9383 = vpop.f32.mrb[0].mxu0
        %v9384 = vadd.f32 %v9323, %v9383
        %9385 = vmatprep.mubr.bf16.mxu0 0
        %9386 = vmatmul.mubr.bf16.gmra.mrb[0].mxu0 %v8907
        %v9387 = vpop.f32.mrb[0].mxu0
        %v9388 = vadd.f32 %v9327, %v9387
        %v9389 = vpop.f32.mrb[0].mxu0
        %v9390 = vadd.f32 %v9329, %v9389
        %v9391 = vpop.f32.mrb[0].mxu0
        %v9392 = vpop.f32.mrb[0].mxu0
        %9393 = vdwg.mxu0
        %v9394 = vmax.f32 %v9005, %v9368
        %v9395 = vmax.f32 %v9007, %v9370
        %v9396 = vmax.f32 %v9009, %v9372
        %v9397 = vmax.f32 %v9011, %v9374
        %v9398 = vmax.f32 %v9015, %v9378
        %v9399 = vmax.f32 %v9017, %v9380
        %v9400 = vmax.f32 %v9019, %v9382
        %v9401 = vmax.f32 %v9021, %v9384
        %v9402 = vmax.f32 %v9025, %v9388
        %v9403 = vmax.f32 %v9027, %v9390
        %v9404 = vpack.c.bf16 %v9396, %v9394
        %v9405 = vpack.c.bf16 %v9397, %v9395
        %v9406 = vpack.c.bf16 %v9400, %v9398
        %v9407 = vpack.c.bf16 %v9401, %v9399
        %v9408 = vpack.c.bf16 %v9402, %v9402
        %v9409 = vpack.c.bf16 %v9403, %v9403
        %v9410 = vld [vmem:[%s9] sm:$0xff]
        %v9411 = vld [vmem:[%s9 + $0x8] sm:$0xff]
        %v9412 = vld [vmem:[%s9 + $0x10] sm:$0xff]
        %v9413 = vld [vmem:[%s9 + $0x18] sm:$0xff]
        %v9414 = vld [vmem:[%s9 + $0x20] sm:$0xff]
        %v9415 = vld [vmem:[%s9 + $0x28] sm:$0xff]
        %v9416 = vld [vmem:[%s9 + $0x30] sm:$0xff]
        %v9417 = vld [vmem:[%s9 + $0x38] sm:$0xff]
        %v9418 = vld [vmem:[%s9 + $0x40] sm:$0xff]
        %v9419 = vld [vmem:[%s9 + $0x48] sm:$0xff]
        %v9420 = vld [vmem:[%s9 + $0x50] sm:$0xff]
        %v9421 = vld [vmem:[%s9 + $0x58] sm:$0xff]
        %v9422 = vld [vmem:[%s9 + $0x60] sm:$0xff]
        %v9423 = vld [vmem:[%s9 + $0x68] sm:$0xff]
        %v9424 = vld [vmem:[%s9 + $0x70] sm:$0xff]
        %v9425 = vld [vmem:[%s9 + $0x78] sm:$0xff]
        %v9426 = vld [vmem:[%s9 + $0x80] sm:$0xff]
        %v9427 = vld [vmem:[%s9 + $0x88] sm:$0xff]
        %v9428 = vld [vmem:[%s9 + $0x90] sm:$0xff]
        %v9429 = vld [vmem:[%s9 + $0x98] sm:$0xff]
        %s9430 = scalar_lea.vmem %s9, 160
        %v9431 = vld [vmem:[%s9430] sm:$0xff]
        %v9432 = vld [vmem:[%s9430 + $0x8] sm:$0xff]
        %v9433 = vld [vmem:[%s9430 + $0x10] sm:$0xff]
        %v9434 = vld [vmem:[%s9430 + $0x18] sm:$0xff]
        %v9435 = vld [vmem:[%s9430 + $0x20] sm:$0xff]
        %v9436 = vld [vmem:[%s9430 + $0x28] sm:$0xff]
        %v9437 = vld [vmem:[%s9430 + $0x30] sm:$0xff]
        %v9438 = vld [vmem:[%s9430 + $0x38] sm:$0xff]
        %v9439 = vld [vmem:[%s9430 + $0x40] sm:$0xff]
        %v9440 = vld [vmem:[%s9430 + $0x48] sm:$0xff]
        %v9441 = vld [vmem:[%s9430 + $0x50] sm:$0xff]
        %v9442 = vld [vmem:[%s9430 + $0x58] sm:$0xff]
        %v9443 = vld [vmem:[%s9430 + $0x60] sm:$0xff]
        %v9444 = vld [vmem:[%s9430 + $0x68] sm:$0xff]
        %v9445 = vld [vmem:[%s9430 + $0x70] sm:$0xff]
        %v9446 = vld [vmem:[%s9430 + $0x78] sm:$0xff]
        %v9447 = vld [vmem:[%s9430 + $0x80] sm:$0xff]
        %v9448 = vld [vmem:[%s9430 + $0x88] sm:$0xff]
        %v9449 = vld [vmem:[%s9430 + $0x90] sm:$0xff]
        %v9450 = vld [vmem:[%s9430 + $0x98] sm:$0xff]
        %v9452 = vshrl.u32 %v9404, 16
        %v9454 = vshll.u32 %v9404, 16
        %v9456 = vrot.slane %v9454, 1
        %v9457 = vor.u32 %v9452, %v9456
        %v9459 = vshll.u32 %v9406, 16
        %v9461 = vrot.slane %v9459, 1
        %v9462 = vsel %vm684, %v9457, %v9461
        %v9464 = vshrl.u32 %v9405, 16
        %v9466 = vshll.u32 %v9405, 16
        %v9468 = vrot.slane %v9466, 1
        %v9469 = vor.u32 %v9464, %v9468
        %v9471 = vshll.u32 %v9407, 16
        %v9473 = vrot.slane %v9471, 1
        %v9474 = vsel %vm684, %v9469, %v9473
        %v9475 = vshrl.u32 %v9406, 16
        %v9477 = vor.u32 %v9475, %v9461
        %v9479 = vshll.u32 %v9408, 16
        %v9481 = vrot.slane %v9479, 1
        %v9482 = vsel %vm684, %v9477, %v9481
        %v9483 = vshrl.u32 %v9407, 16
        %v9485 = vor.u32 %v9483, %v9473
        %v9487 = vshll.u32 %v9409, 16
        %v9489 = vrot.slane %v9487, 1
        %v9490 = vsel %vm684, %v9485, %v9489
        %v9491 = vshrl.u32 %v9408, 16
        %v9493 = vor.u32 %v9491, %v9481
        %v9494 = vshrl.u32 %v9409, 16
        %v9496 = vor.u32 %v9494, %v9489
        %v9520 = vunpack.c.l.b16 %v9431
        %v9521 = vunpack.c.h.b16 %v9431
        %v9522 = vunpack.c.l.b16 %v9432
        %v9523 = vunpack.c.h.b16 %v9432
        %v9524 = vunpack.c.l.b16 %v9433
        %v9525 = vunpack.c.h.b16 %v9433
        %v9526 = vunpack.c.l.b16 %v9434
        %v9527 = vunpack.c.h.b16 %v9434
        %v9528 = vunpack.c.l.b16 %v9435
        %v9529 = vunpack.c.h.b16 %v9435
        %v9530 = vunpack.c.l.b16 %v9436
        %v9531 = vunpack.c.h.b16 %v9436
        %v9532 = vunpack.c.l.b16 %v9437
        %v9533 = vunpack.c.h.b16 %v9437
        %v9534 = vunpack.c.l.b16 %v9438
        %v9535 = vunpack.c.h.b16 %v9438
        %v9536 = vunpack.c.l.b16 %v9439
        %v9537 = vunpack.c.h.b16 %v9439
        %v9538 = vunpack.c.l.b16 %v9440
        %v9539 = vunpack.c.h.b16 %v9440
        %v9540 = vunpack.c.l.b16 %v9441
        %v9541 = vunpack.c.h.b16 %v9441
        %v9542 = vunpack.c.l.b16 %v9442
        %v9543 = vunpack.c.h.b16 %v9442
        %v9544 = vunpack.c.l.b16 %v9443
        %v9545 = vunpack.c.h.b16 %v9443
        %v9546 = vunpack.c.l.b16 %v9444
        %v9547 = vunpack.c.h.b16 %v9444
        %v9548 = vunpack.c.l.b16 %v9445
        %v9549 = vunpack.c.h.b16 %v9445
        %v9550 = vunpack.c.l.b16 %v9446
        %v9551 = vunpack.c.h.b16 %v9446
        %v9552 = vunpack.c.l.b16 %v9447
        %v9553 = vunpack.c.h.b16 %v9447
        %v9554 = vunpack.c.l.b16 %v9448
        %v9555 = vunpack.c.h.b16 %v9448
        %v9556 = vunpack.c.l.b16 %v9449
        %v9557 = vunpack.c.h.b16 %v9449
        %v9558 = vunpack.c.l.b16 %v9450
        %v9559 = vunpack.c.h.b16 %v9450
        %v9560 = vpack.c.b16 %v9522, %v9520
        %v9561 = vpack.c.b16 %v9523, %v9521
        %v9562 = vpack.c.b16 %v9526, %v9524
        %v9563 = vpack.c.b16 %v9527, %v9525
        %v9564 = vpack.c.b16 %v9530, %v9528
        %v9565 = vpack.c.b16 %v9531, %v9529
        %v9566 = vpack.c.b16 %v9534, %v9532
        %v9567 = vpack.c.b16 %v9535, %v9533
        %v9568 = vpack.c.b16 %v9538, %v9536
        %v9569 = vpack.c.b16 %v9539, %v9537
        %v9570 = vpack.c.b16 %v9542, %v9540
        %v9571 = vpack.c.b16 %v9543, %v9541
        %v9572 = vpack.c.b16 %v9546, %v9544
        %v9573 = vpack.c.b16 %v9547, %v9545
        %v9574 = vpack.c.b16 %v9550, %v9548
        %v9575 = vpack.c.b16 %v9551, %v9549
        %v9576 = vpack.c.b16 %v9554, %v9552
        %v9577 = vpack.c.b16 %v9555, %v9553
        %v9578 = vpack.c.b16 %v9558, %v9556
        %v9579 = vpack.c.b16 %v9559, %v9557
        %vm9600 = vcmask 261120
        %v9602 = vsel %vm9600, %v9474, 0
        %v9605 = vsel %vm9600, %v9490, 0
        %v9608 = vsel %vm9600, %v9496, 0
        %9610 = vmatprep.subr.bf16.mxu0 %v9561
        %9611 = vmatpush1.bf16.msra.mxu0 %v9560
        %9612 = vmatprep.subr.bf16.mxu0 %v9563
        %9613 = vmatpush1.bf16.msra.mxu0 %v9562
        %9614 = vmatprep.subr.bf16.mxu0 %v9565
        %9615 = vmatpush1.bf16.msra.mxu0 %v9564
        %9616 = vmatprep.subr.bf16.mxu0 %v9567
        %9617 = vmatpush1.bf16.msra.mxu0 %v9566
        %9618 = vmatprep.subr.bf16.mxu0 %v9569
        %9619 = vmatpush1.bf16.msra.mxu0 %v9568
        %9620 = vmatprep.subr.bf16.mxu0 %v9571
        %9621 = vmatpush1.bf16.msra.mxu0 %v9570
        %9622 = vmatprep.subr.bf16.mxu0 %v9573
        %9623 = vmatpush1.bf16.msra.mxu0 %v9572
        %9624 = vmatprep.subr.bf16.mxu0 %v9575
        %9625 = vmatpush1.bf16.msra.mxu0 %v9574
        %9626 = vmatprep.subr.bf16.mxu0 %v9577
        %9627 = vmatpush1.bf16.msra.mxu0 %v9576
        %9628 = vmatprep.subr.bf16.mxu0 %v9579
        %9629 = vmatpush1.bf16.msra.mxu0 %v9578
        %9630 = vmatprep.subr.bf16.mxu0 0
        %9631 = vmatpush1.bf16.msra.mxu0 0
        %9632 = vmatprep.subr.bf16.mxu0 0
        %9633 = vmatpush1.bf16.msra.mxu0 0
        %9634 = vmatprep.subr.bf16.mxu0 0
        %9635 = vmatpush1.bf16.msra.mxu0 0
        %9636 = vmatprep.subr.bf16.mxu0 0
        %9637 = vmatpush1.bf16.msra.mxu0 0
        %9638 = vmatprep.subr.bf16.mxu0 0
        %9639 = vmatpush1.bf16.msra.mxu0 0
        %9640 = vmatprep.subr.bf16.mxu0 0
        %9641 = vmatpush1.bf16.msra.mxu0 0
        %9642 = vmatprep.mubr.bf16.mxu0 %v9602
        %9643 = vmatmul.mubr.bf16.gmra.mrb[0].mxu0 %v9462
        %v9644 = vpop.f32.mrb[0].mxu0
        %v9645 = vadd.f32 0.0, %v9644
        %v9646 = vpop.f32.mrb[0].mxu0
        %v9647 = vadd.f32 0.0, %v9646
        %v9648 = vpop.f32.mrb[0].mxu0
        %v9649 = vadd.f32 0.0, %v9648
        %v9650 = vpop.f32.mrb[0].mxu0
        %v9651 = vadd.f32 0.0, %v9650
        %9652 = vmatprep.mubr.bf16.mxu0 %v9605
        %9653 = vmatmul.mubr.bf16.gmra.mrb[0].mxu0 %v9482
        %v9654 = vpop.f32.mrb[0].mxu0
        %v9655 = vadd.f32 0.0, %v9654
        %v9656 = vpop.f32.mrb[0].mxu0
        %v9657 = vadd.f32 0.0, %v9656
        %v9658 = vpop.f32.mrb[0].mxu0
        %v9659 = vadd.f32 0.0, %v9658
        %v9660 = vpop.f32.mrb[0].mxu0
        %v9661 = vadd.f32 0.0, %v9660
        %9662 = vmatprep.mubr.bf16.mxu0 %v9608
        %9663 = vmatmul.mubr.bf16.gmra.mrb[0].mxu0 %v9493
        %v9664 = vpop.f32.mrb[0].mxu0
        %v9665 = vadd.f32 0.0, %v9664
        %v9666 = vpop.f32.mrb[0].mxu0
        %v9667 = vadd.f32 0.0, %v9666
        %v9668 = vpop.f32.mrb[0].mxu0
        %v9669 = vpop.f32.mrb[0].mxu0
        %9670 = vdwg.mxu0
        %v9691 = vunpack.c.l.b16 %v9410
        %v9692 = vunpack.c.h.b16 %v9410
        %v9693 = vunpack.c.l.b16 %v9411
        %v9694 = vunpack.c.h.b16 %v9411
        %v9695 = vunpack.c.l.b16 %v9412
        %v9696 = vunpack.c.h.b16 %v9412
        %v9697 = vunpack.c.l.b16 %v9413
        %v9698 = vunpack.c.h.b16 %v9413
        %v9699 = vunpack.c.l.b16 %v9414
        %v9700 = vunpack.c.h.b16 %v9414
        %v9701 = vunpack.c.l.b16 %v9415
        %v9702 = vunpack.c.h.b16 %v9415
        %v9703 = vunpack.c.l.b16 %v9416
        %v9704 = vunpack.c.h.b16 %v9416
        %v9705 = vunpack.c.l.b16 %v9417
        %v9706 = vunpack.c.h.b16 %v9417
        %v9707 = vunpack.c.l.b16 %v9418
        %v9708 = vunpack.c.h.b16 %v9418
        %v9709 = vunpack.c.l.b16 %v9419
        %v9710 = vunpack.c.h.b16 %v9419
        %v9711 = vunpack.c.l.b16 %v9420
        %v9712 = vunpack.c.h.b16 %v9420
        %v9713 = vunpack.c.l.b16 %v9421
        %v9714 = vunpack.c.h.b16 %v9421
        %v9715 = vunpack.c.l.b16 %v9422
        %v9716 = vunpack.c.h.b16 %v9422
        %v9717 = vunpack.c.l.b16 %v9423
        %v9718 = vunpack.c.h.b16 %v9423
        %v9719 = vunpack.c.l.b16 %v9424
        %v9720 = vunpack.c.h.b16 %v9424
        %v9721 = vunpack.c.l.b16 %v9425
        %v9722 = vunpack.c.h.b16 %v9425
        %v9723 = vunpack.c.l.b16 %v9426
        %v9724 = vunpack.c.h.b16 %v9426
        %v9725 = vunpack.c.l.b16 %v9427
        %v9726 = vunpack.c.h.b16 %v9427
        %v9727 = vunpack.c.l.b16 %v9428
        %v9728 = vunpack.c.h.b16 %v9428
        %v9729 = vunpack.c.l.b16 %v9429
        %v9730 = vunpack.c.h.b16 %v9429
        %v9731 = vpack.c.b16 %v9693, %v9691
        %v9732 = vpack.c.b16 %v9694, %v9692
        %v9733 = vpack.c.b16 %v9697, %v9695
        %v9734 = vpack.c.b16 %v9698, %v9696
        %v9735 = vpack.c.b16 %v9701, %v9699
        %v9736 = vpack.c.b16 %v9702, %v9700
        %v9737 = vpack.c.b16 %v9705, %v9703
        %v9738 = vpack.c.b16 %v9706, %v9704
        %v9739 = vpack.c.b16 %v9709, %v9707
        %v9740 = vpack.c.b16 %v9710, %v9708
        %v9741 = vpack.c.b16 %v9713, %v9711
        %v9742 = vpack.c.b16 %v9714, %v9712
        %v9743 = vpack.c.b16 %v9717, %v9715
        %v9744 = vpack.c.b16 %v9718, %v9716
        %v9745 = vpack.c.b16 %v9721, %v9719
        %v9746 = vpack.c.b16 %v9722, %v9720
        %v9747 = vpack.c.b16 %v9725, %v9723
        %v9748 = vpack.c.b16 %v9726, %v9724
        %v9749 = vpack.c.b16 %v9729, %v9727
        %v9750 = vpack.c.b16 %v9730, %v9728
        %v9771 = vsel %vm9600, %v9405, 0
        %v9773 = vsel %vm9600, %v9407, 0
        %v9775 = vsel %vm9600, %v9409, 0
        %9777 = vmatprep.subr.bf16.mxu0 %v9732
        %9778 = vmatpush1.bf16.msra.mxu0 %v9731
        %9779 = vmatprep.subr.bf16.mxu0 %v9734
        %9780 = vmatpush1.bf16.msra.mxu0 %v9733
        %9781 = vmatprep.subr.bf16.mxu0 %v9736
        %9782 = vmatpush1.bf16.msra.mxu0 %v9735
        %9783 = vmatprep.subr.bf16.mxu0 %v9738
        %9784 = vmatpush1.bf16.msra.mxu0 %v9737
        %9785 = vmatprep.subr.bf16.mxu0 %v9740
        %9786 = vmatpush1.bf16.msra.mxu0 %v9739
        %9787 = vmatprep.subr.bf16.mxu0 %v9742
        %9788 = vmatpush1.bf16.msra.mxu0 %v9741
        %9789 = vmatprep.subr.bf16.mxu0 %v9744
        %9790 = vmatpush1.bf16.msra.mxu0 %v9743
        %9791 = vmatprep.subr.bf16.mxu0 %v9746
        %9792 = vmatpush1.bf16.msra.mxu0 %v9745
        %9793 = vmatprep.subr.bf16.mxu0 %v9748
        %9794 = vmatpush1.bf16.msra.mxu0 %v9747
        %9795 = vmatprep.subr.bf16.mxu0 %v9750
        %9796 = vmatpush1.bf16.msra.mxu0 %v9749
        %9797 = vmatprep.subr.bf16.mxu0 0
        %9798 = vmatpush1.bf16.msra.mxu0 0
        %9799 = vmatprep.subr.bf16.mxu0 0
        %9800 = vmatpush1.bf16.msra.mxu0 0
        %9801 = vmatprep.subr.bf16.mxu0 0
        %9802 = vmatpush1.bf16.msra.mxu0 0
        %9803 = vmatprep.subr.bf16.mxu0 0
        %9804 = vmatpush1.bf16.msra.mxu0 0
        %9805 = vmatprep.subr.bf16.mxu0 0
        %9806 = vmatpush1.bf16.msra.mxu0 0
        %9807 = vmatprep.subr.bf16.mxu0 0
        %9808 = vmatpush1.bf16.msra.mxu0 0
        %9809 = vmatprep.mubr.bf16.mxu0 %v9771
        %9810 = vmatmul.mubr.bf16.gmra.mrb[0].mxu0 %v9404
        %v9811 = vpop.f32.mrb[0].mxu0
        %v9812 = vadd.f32 %v9645, %v9811
        %v9813 = vpop.f32.mrb[0].mxu0
        %v9814 = vadd.f32 %v9647, %v9813
        %v9815 = vpop.f32.mrb[0].mxu0
        %v9816 = vadd.f32 %v9649, %v9815
        %v9817 = vpop.f32.mrb[0].mxu0
        %v9818 = vadd.f32 %v9651, %v9817
        %9819 = vmatprep.mubr.bf16.mxu0 %v9773
        %9820 = vmatmul.mubr.bf16.gmra.mrb[0].mxu0 %v9406
        %v9821 = vpop.f32.mrb[0].mxu0
        %v9822 = vadd.f32 %v9655, %v9821
        %v9823 = vpop.f32.mrb[0].mxu0
        %v9824 = vadd.f32 %v9657, %v9823
        %v9825 = vpop.f32.mrb[0].mxu0
        %v9826 = vadd.f32 %v9659, %v9825
        %v9827 = vpop.f32.mrb[0].mxu0
        %v9828 = vadd.f32 %v9661, %v9827
        %9829 = vmatprep.mubr.bf16.mxu0 %v9775
        %9830 = vmatmul.mubr.bf16.gmra.mrb[0].mxu0 %v9408
        %v9831 = vpop.f32.mrb[0].mxu0
        %v9832 = vadd.f32 %v9665, %v9831
        %v9833 = vpop.f32.mrb[0].mxu0
        %v9834 = vadd.f32 %v9667, %v9833
        %v9835 = vpop.f32.mrb[0].mxu0
        %v9836 = vpop.f32.mrb[0].mxu0
        %9837 = vdwg.mxu0
        %s9838 = scalar_lea.vmem %s9, 320
        %v9839 = vld [vmem:[%s9838] sm:$0xff]
        %v9840 = vld [vmem:[%s9838 + $0x8] sm:$0xff]
        %v9841 = vld [vmem:[%s9838 + $0x10] sm:$0xff]
        %v9842 = vld [vmem:[%s9838 + $0x18] sm:$0xff]
        %v9843 = vld [vmem:[%s9838 + $0x20] sm:$0xff]
        %v9844 = vld [vmem:[%s9838 + $0x28] sm:$0xff]
        %v9845 = vld [vmem:[%s9838 + $0x30] sm:$0xff]
        %v9846 = vld [vmem:[%s9838 + $0x38] sm:$0xff]
        %v9847 = vld [vmem:[%s9838 + $0x40] sm:$0xff]
        %v9848 = vld [vmem:[%s9838 + $0x48] sm:$0xff]
        %v9849 = vld [vmem:[%s9838 + $0x50] sm:$0xff]
        %v9850 = vld [vmem:[%s9838 + $0x58] sm:$0xff]
        %v9851 = vld [vmem:[%s9838 + $0x60] sm:$0xff]
        %v9852 = vld [vmem:[%s9838 + $0x68] sm:$0xff]
        %v9853 = vld [vmem:[%s9838 + $0x70] sm:$0xff]
        %v9854 = vld [vmem:[%s9838 + $0x78] sm:$0xff]
        %v9855 = vld [vmem:[%s9838 + $0x80] sm:$0xff]
        %v9856 = vld [vmem:[%s9838 + $0x88] sm:$0xff]
        %v9857 = vld [vmem:[%s9838 + $0x90] sm:$0xff]
        %v9858 = vld [vmem:[%s9838 + $0x98] sm:$0xff]
        %v9865 = vrot.slane %v9404, 1
        %v9866 = vrot.slane %v9406, 1
        %v9867 = vsel %vm1818, %v9865, %v9866
        %v9868 = vrot.slane %v9405, 1
        %v9869 = vrot.slane %v9407, 1
        %v9870 = vsel %vm1818, %v9868, %v9869
        %v9871 = vrot.slane %v9408, 1
        %v9872 = vsel %vm1818, %v9866, %v9871
        %v9873 = vrot.slane %v9409, 1
        %v9874 = vsel %vm1818, %v9869, %v9873
        %v9898 = vunpack.c.l.b16 %v9839
        %v9899 = vunpack.c.h.b16 %v9839
        %v9900 = vunpack.c.l.b16 %v9840
        %v9901 = vunpack.c.h.b16 %v9840
        %v9902 = vunpack.c.l.b16 %v9841
        %v9903 = vunpack.c.h.b16 %v9841
        %v9904 = vunpack.c.l.b16 %v9842
        %v9905 = vunpack.c.h.b16 %v9842
        %v9906 = vunpack.c.l.b16 %v9843
        %v9907 = vunpack.c.h.b16 %v9843
        %v9908 = vunpack.c.l.b16 %v9844
        %v9909 = vunpack.c.h.b16 %v9844
        %v9910 = vunpack.c.l.b16 %v9845
        %v9911 = vunpack.c.h.b16 %v9845
        %v9912 = vunpack.c.l.b16 %v9846
        %v9913 = vunpack.c.h.b16 %v9846
        %v9914 = vunpack.c.l.b16 %v9847
        %v9915 = vunpack.c.h.b16 %v9847
        %v9916 = vunpack.c.l.b16 %v9848
        %v9917 = vunpack.c.h.b16 %v9848
        %v9918 = vunpack.c.l.b16 %v9849
        %v9919 = vunpack.c.h.b16 %v9849
        %v9920 = vunpack.c.l.b16 %v9850
        %v9921 = vunpack.c.h.b16 %v9850
        %v9922 = vunpack.c.l.b16 %v9851
        %v9923 = vunpack.c.h.b16 %v9851
        %v9924 = vunpack.c.l.b16 %v9852
        %v9925 = vunpack.c.h.b16 %v9852
        %v9926 = vunpack.c.l.b16 %v9853
        %v9927 = vunpack.c.h.b16 %v9853
        %v9928 = vunpack.c.l.b16 %v9854
        %v9929 = vunpack.c.h.b16 %v9854
        %v9930 = vunpack.c.l.b16 %v9855
        %v9931 = vunpack.c.h.b16 %v9855
        %v9932 = vunpack.c.l.b16 %v9856
        %v9933 = vunpack.c.h.b16 %v9856
        %v9934 = vunpack.c.l.b16 %v9857
        %v9935 = vunpack.c.h.b16 %v9857
        %v9936 = vunpack.c.l.b16 %v9858
        %v9937 = vunpack.c.h.b16 %v9858
        %v9938 = vpack.c.b16 %v9900, %v9898
        %v9939 = vpack.c.b16 %v9901, %v9899
        %v9940 = vpack.c.b16 %v9904, %v9902
        %v9941 = vpack.c.b16 %v9905, %v9903
        %v9942 = vpack.c.b16 %v9908, %v9906
        %v9943 = vpack.c.b16 %v9909, %v9907
        %v9944 = vpack.c.b16 %v9912, %v9910
        %v9945 = vpack.c.b16 %v9913, %v9911
        %v9946 = vpack.c.b16 %v9916, %v9914
        %v9947 = vpack.c.b16 %v9917, %v9915
        %v9948 = vpack.c.b16 %v9920, %v9918
        %v9949 = vpack.c.b16 %v9921, %v9919
        %v9950 = vpack.c.b16 %v9924, %v9922
        %v9951 = vpack.c.b16 %v9925, %v9923
        %v9952 = vpack.c.b16 %v9928, %v9926
        %v9953 = vpack.c.b16 %v9929, %v9927
        %v9954 = vpack.c.b16 %v9932, %v9930
        %v9955 = vpack.c.b16 %v9933, %v9931
        %v9956 = vpack.c.b16 %v9936, %v9934
        %v9957 = vpack.c.b16 %v9937, %v9935
        %v9979 = vsel %vm9600, %v9870, 0
        %v9982 = vsel %vm9600, %v9874, 0
        %v9985 = vsel %vm9600, %v9873, 0
        %9987 = vmatprep.subr.bf16.mxu0 %v9939
        %9988 = vmatpush1.bf16.msra.mxu0 %v9938
        %9989 = vmatprep.subr.bf16.mxu0 %v9941
        %9990 = vmatpush1.bf16.msra.mxu0 %v9940
        %9991 = vmatprep.subr.bf16.mxu0 %v9943
        %9992 = vmatpush1.bf16.msra.mxu0 %v9942
        %9993 = vmatprep.subr.bf16.mxu0 %v9945
        %9994 = vmatpush1.bf16.msra.mxu0 %v9944
        %9995 = vmatprep.subr.bf16.mxu0 %v9947
        %9996 = vmatpush1.bf16.msra.mxu0 %v9946
        %9997 = vmatprep.subr.bf16.mxu0 %v9949
        %9998 = vmatpush1.bf16.msra.mxu0 %v9948
        %9999 = vmatprep.subr.bf16.mxu0 %v9951
        %10000 = vmatpush1.bf16.msra.mxu0 %v9950
        %10001 = vmatprep.subr.bf16.mxu0 %v9953
        %10002 = vmatpush1.bf16.msra.mxu0 %v9952
        %10003 = vmatprep.subr.bf16.mxu0 %v9955
        %10004 = vmatpush1.bf16.msra.mxu0 %v9954
        %10005 = vmatprep.subr.bf16.mxu0 %v9957
        %10006 = vmatpush1.bf16.msra.mxu0 %v9956
        %10007 = vmatprep.subr.bf16.mxu0 0
        %10008 = vmatpush1.bf16.msra.mxu0 0
        %10009 = vmatprep.subr.bf16.mxu0 0
        %10010 = vmatpush1.bf16.msra.mxu0 0
        %10011 = vmatprep.subr.bf16.mxu0 0
        %10012 = vmatpush1.bf16.msra.mxu0 0
        %10013 = vmatprep.subr.bf16.mxu0 0
        %10014 = vmatpush1.bf16.msra.mxu0 0
        %10015 = vmatprep.subr.bf16.mxu0 0
        %10016 = vmatpush1.bf16.msra.mxu0 0
        %10017 = vmatprep.subr.bf16.mxu0 0
        %10018 = vmatpush1.bf16.msra.mxu0 0
        %10019 = vmatprep.mubr.bf16.mxu0 %v9979
        %10020 = vmatmul.mubr.bf16.gmra.mrb[0].mxu0 %v9867
        %v10021 = vpop.f32.mrb[0].mxu0
        %v10022 = vadd.f32 0.0, %v10021
        %v10023 = vpop.f32.mrb[0].mxu0
        %v10024 = vadd.f32 0.0, %v10023
        %v10025 = vpop.f32.mrb[0].mxu0
        %v10026 = vadd.f32 0.0, %v10025
        %v10027 = vpop.f32.mrb[0].mxu0
        %v10028 = vadd.f32 0.0, %v10027
        %10029 = vmatprep.mubr.bf16.mxu0 %v9982
        %10030 = vmatmul.mubr.bf16.gmra.mrb[0].mxu0 %v9872
        %v10031 = vpop.f32.mrb[0].mxu0
        %v10032 = vadd.f32 0.0, %v10031
        %v10033 = vpop.f32.mrb[0].mxu0
        %v10034 = vadd.f32 0.0, %v10033
        %v10035 = vpop.f32.mrb[0].mxu0
        %v10036 = vadd.f32 0.0, %v10035
        %v10037 = vpop.f32.mrb[0].mxu0
        %v10038 = vadd.f32 0.0, %v10037
        %10039 = vmatprep.mubr.bf16.mxu0 %v9985
        %10040 = vmatmul.mubr.bf16.gmra.mrb[0].mxu0 %v9871
        %v10041 = vpop.f32.mrb[0].mxu0
        %v10042 = vadd.f32 0.0, %v10041
        %v10043 = vpop.f32.mrb[0].mxu0
        %v10044 = vadd.f32 0.0, %v10043
        %v10045 = vpop.f32.mrb[0].mxu0
        %v10046 = vpop.f32.mrb[0].mxu0
        %10047 = vdwg.mxu0
        %v10048 = vadd.f32 %v9812, %v10022
        %v10049 = vadd.f32 %v9814, %v10024
        %v10050 = vadd.f32 %v9816, %v10026
        %v10051 = vadd.f32 %v9818, %v10028
        %v10052 = vadd.f32 %v9822, %v10032
        %v10053 = vadd.f32 %v9824, %v10034
        %v10054 = vadd.f32 %v9826, %v10036
        %v10055 = vadd.f32 %v9828, %v10038
        %v10056 = vadd.f32 %v9832, %v10042
        %v10057 = vadd.f32 %v9834, %v10044
        %s10058 = scalar_lea.vmem %s9, 480
        %v10059 = vld [vmem:[%s10058] sm:$0xff]
        %v10060 = vld [vmem:[%s10058 + $0x8] sm:$0xff]
        %v10061 = vld [vmem:[%s10058 + $0x10] sm:$0xff]
        %v10062 = vld [vmem:[%s10058 + $0x18] sm:$0xff]
        %v10063 = vld [vmem:[%s10058 + $0x20] sm:$0xff]
        %v10064 = vld [vmem:[%s10058 + $0x28] sm:$0xff]
        %v10065 = vld [vmem:[%s10058 + $0x30] sm:$0xff]
        %v10066 = vld [vmem:[%s10058 + $0x38] sm:$0xff]
        %v10067 = vld [vmem:[%s10058 + $0x40] sm:$0xff]
        %v10068 = vld [vmem:[%s10058 + $0x48] sm:$0xff]
        %v10069 = vld [vmem:[%s10058 + $0x50] sm:$0xff]
        %v10070 = vld [vmem:[%s10058 + $0x58] sm:$0xff]
        %v10071 = vld [vmem:[%s10058 + $0x60] sm:$0xff]
        %v10072 = vld [vmem:[%s10058 + $0x68] sm:$0xff]
        %v10073 = vld [vmem:[%s10058 + $0x70] sm:$0xff]
        %v10074 = vld [vmem:[%s10058 + $0x78] sm:$0xff]
        %v10075 = vld [vmem:[%s10058 + $0x80] sm:$0xff]
        %v10076 = vld [vmem:[%s10058 + $0x88] sm:$0xff]
        %v10077 = vld [vmem:[%s10058 + $0x90] sm:$0xff]
        %v10078 = vld [vmem:[%s10058 + $0x98] sm:$0xff]
        %v10079 = vrot.slane %v9452, 1
        %v10080 = vrot.slane %v9454, 2
        %v10081 = vor.u32 %v10079, %v10080
        %v10082 = vrot.slane %v9475, 1
        %v10083 = vrot.slane %v9459, 2
        %v10084 = vor.u32 %v10082, %v10083
        %v10085 = vsel %vm2469, %v10081, %v10084
        %v10086 = vrot.slane %v9464, 1
        %v10087 = vrot.slane %v9466, 2
        %v10088 = vor.u32 %v10086, %v10087
        %v10089 = vrot.slane %v9483, 1
        %v10090 = vrot.slane %v9471, 2
        %v10091 = vor.u32 %v10089, %v10090
        %v10092 = vsel %vm2469, %v10088, %v10091
        %v10093 = vrot.slane %v9491, 1
        %v10094 = vrot.slane %v9479, 2
        %v10095 = vor.u32 %v10093, %v10094
        %v10096 = vsel %vm2469, %v10084, %v10095
        %v10097 = vrot.slane %v9494, 1
        %v10098 = vrot.slane %v9487, 2
        %v10099 = vor.u32 %v10097, %v10098
        %v10100 = vsel %vm2469, %v10091, %v10099
        %v10124 = vunpack.c.l.b16 %v10059
        %v10125 = vunpack.c.h.b16 %v10059
        %v10126 = vunpack.c.l.b16 %v10060
        %v10127 = vunpack.c.h.b16 %v10060
        %v10128 = vunpack.c.l.b16 %v10061
        %v10129 = vunpack.c.h.b16 %v10061
        %v10130 = vunpack.c.l.b16 %v10062
        %v10131 = vunpack.c.h.b16 %v10062
        %v10132 = vunpack.c.l.b16 %v10063
        %v10133 = vunpack.c.h.b16 %v10063
        %v10134 = vunpack.c.l.b16 %v10064
        %v10135 = vunpack.c.h.b16 %v10064
        %v10136 = vunpack.c.l.b16 %v10065
        %v10137 = vunpack.c.h.b16 %v10065
        %v10138 = vunpack.c.l.b16 %v10066
        %v10139 = vunpack.c.h.b16 %v10066
        %v10140 = vunpack.c.l.b16 %v10067
        %v10141 = vunpack.c.h.b16 %v10067
        %v10142 = vunpack.c.l.b16 %v10068
        %v10143 = vunpack.c.h.b16 %v10068
        %v10144 = vunpack.c.l.b16 %v10069
        %v10145 = vunpack.c.h.b16 %v10069
        %v10146 = vunpack.c.l.b16 %v10070
        %v10147 = vunpack.c.h.b16 %v10070
        %v10148 = vunpack.c.l.b16 %v10071
        %v10149 = vunpack.c.h.b16 %v10071
        %v10150 = vunpack.c.l.b16 %v10072
        %v10151 = vunpack.c.h.b16 %v10072
        %v10152 = vunpack.c.l.b16 %v10073
        %v10153 = vunpack.c.h.b16 %v10073
        %v10154 = vunpack.c.l.b16 %v10074
        %v10155 = vunpack.c.h.b16 %v10074
        %v10156 = vunpack.c.l.b16 %v10075
        %v10157 = vunpack.c.h.b16 %v10075
        %v10158 = vunpack.c.l.b16 %v10076
        %v10159 = vunpack.c.h.b16 %v10076
        %v10160 = vunpack.c.l.b16 %v10077
        %v10161 = vunpack.c.h.b16 %v10077
        %v10162 = vunpack.c.l.b16 %v10078
        %v10163 = vunpack.c.h.b16 %v10078
        %v10164 = vpack.c.b16 %v10126, %v10124
        %v10165 = vpack.c.b16 %v10127, %v10125
        %v10166 = vpack.c.b16 %v10130, %v10128
        %v10167 = vpack.c.b16 %v10131, %v10129
        %v10168 = vpack.c.b16 %v10134, %v10132
        %v10169 = vpack.c.b16 %v10135, %v10133
        %v10170 = vpack.c.b16 %v10138, %v10136
        %v10171 = vpack.c.b16 %v10139, %v10137
        %v10172 = vpack.c.b16 %v10142, %v10140
        %v10173 = vpack.c.b16 %v10143, %v10141
        %v10174 = vpack.c.b16 %v10146, %v10144
        %v10175 = vpack.c.b16 %v10147, %v10145
        %v10176 = vpack.c.b16 %v10150, %v10148
        %v10177 = vpack.c.b16 %v10151, %v10149
        %v10178 = vpack.c.b16 %v10154, %v10152
        %v10179 = vpack.c.b16 %v10155, %v10153
        %v10180 = vpack.c.b16 %v10158, %v10156
        %v10181 = vpack.c.b16 %v10159, %v10157
        %v10182 = vpack.c.b16 %v10162, %v10160
        %v10183 = vpack.c.b16 %v10163, %v10161
        %v10205 = vsel %vm9600, %v10092, 0
        %v10208 = vsel %vm9600, %v10100, 0
        %v10211 = vsel %vm9600, %v10099, 0
        %10213 = vmatprep.subr.bf16.mxu0 %v10165
        %10214 = vmatpush1.bf16.msra.mxu0 %v10164
        %10215 = vmatprep.subr.bf16.mxu0 %v10167
        %10216 = vmatpush1.bf16.msra.mxu0 %v10166
        %10217 = vmatprep.subr.bf16.mxu0 %v10169
        %10218 = vmatpush1.bf16.msra.mxu0 %v10168
        %10219 = vmatprep.subr.bf16.mxu0 %v10171
        %10220 = vmatpush1.bf16.msra.mxu0 %v10170
        %10221 = vmatprep.subr.bf16.mxu0 %v10173
        %10222 = vmatpush1.bf16.msra.mxu0 %v10172
        %10223 = vmatprep.subr.bf16.mxu0 %v10175
        %10224 = vmatpush1.bf16.msra.mxu0 %v10174
        %10225 = vmatprep.subr.bf16.mxu0 %v10177
        %10226 = vmatpush1.bf16.msra.mxu0 %v10176
        %10227 = vmatprep.subr.bf16.mxu0 %v10179
        %10228 = vmatpush1.bf16.msra.mxu0 %v10178
        %10229 = vmatprep.subr.bf16.mxu0 %v10181
        %10230 = vmatpush1.bf16.msra.mxu0 %v10180
        %10231 = vmatprep.subr.bf16.mxu0 %v10183
        %10232 = vmatpush1.bf16.msra.mxu0 %v10182
        %10233 = vmatprep.subr.bf16.mxu0 0
        %10234 = vmatpush1.bf16.msra.mxu0 0
        %10235 = vmatprep.subr.bf16.mxu0 0
        %10236 = vmatpush1.bf16.msra.mxu0 0
        %10237 = vmatprep.subr.bf16.mxu0 0
        %10238 = vmatpush1.bf16.msra.mxu0 0
        %10239 = vmatprep.subr.bf16.mxu0 0
        %10240 = vmatpush1.bf16.msra.mxu0 0
        %10241 = vmatprep.subr.bf16.mxu0 0
        %10242 = vmatpush1.bf16.msra.mxu0 0
        %10243 = vmatprep.subr.bf16.mxu0 0
        %10244 = vmatpush1.bf16.msra.mxu0 0
        %10245 = vmatprep.mubr.bf16.mxu0 %v10205
        %10246 = vmatmul.mubr.bf16.gmra.mrb[0].mxu0 %v10085
        %v10247 = vpop.f32.mrb[0].mxu0
        %v10248 = vadd.f32 0.0, %v10247
        %v10249 = vpop.f32.mrb[0].mxu0
        %v10250 = vadd.f32 0.0, %v10249
        %v10251 = vpop.f32.mrb[0].mxu0
        %v10252 = vadd.f32 0.0, %v10251
        %v10253 = vpop.f32.mrb[0].mxu0
        %v10254 = vadd.f32 0.0, %v10253
        %10255 = vmatprep.mubr.bf16.mxu0 %v10208
        %10256 = vmatmul.mubr.bf16.gmra.mrb[0].mxu0 %v10096
        %v10257 = vpop.f32.mrb[0].mxu0
        %v10258 = vadd.f32 0.0, %v10257
        %v10259 = vpop.f32.mrb[0].mxu0
        %v10260 = vadd.f32 0.0, %v10259
        %v10261 = vpop.f32.mrb[0].mxu0
        %v10262 = vadd.f32 0.0, %v10261
        %v10263 = vpop.f32.mrb[0].mxu0
        %v10264 = vadd.f32 0.0, %v10263
        %10265 = vmatprep.mubr.bf16.mxu0 %v10211
        %10266 = vmatmul.mubr.bf16.gmra.mrb[0].mxu0 %v10095
        %v10267 = vpop.f32.mrb[0].mxu0
        %v10268 = vadd.f32 0.0, %v10267
        %v10269 = vpop.f32.mrb[0].mxu0
        %v10270 = vadd.f32 0.0, %v10269
        %v10271 = vpop.f32.mrb[0].mxu0
        %v10272 = vpop.f32.mrb[0].mxu0
        %10273 = vdwg.mxu0
        %v10274 = vadd.f32 %v10048, %v10248
        %v10275 = vadd.f32 %v10049, %v10250
        %v10276 = vadd.f32 %v10050, %v10252
        %v10277 = vadd.f32 %v10051, %v10254
        %v10278 = vadd.f32 %v10052, %v10258
        %v10279 = vadd.f32 %v10053, %v10260
        %v10280 = vadd.f32 %v10054, %v10262
        %v10281 = vadd.f32 %v10055, %v10264
        %v10282 = vadd.f32 %v10056, %v10268
        %v10283 = vadd.f32 %v10057, %v10270
        %s10284 = scalar_lea.vmem %s9, 640
        %v10285 = vld [vmem:[%s10284] sm:$0xff]
        %v10286 = vld [vmem:[%s10284 + $0x8] sm:$0xff]
        %v10287 = vld [vmem:[%s10284 + $0x10] sm:$0xff]
        %v10288 = vld [vmem:[%s10284 + $0x18] sm:$0xff]
        %v10289 = vld [vmem:[%s10284 + $0x20] sm:$0xff]
        %v10290 = vld [vmem:[%s10284 + $0x28] sm:$0xff]
        %v10291 = vld [vmem:[%s10284 + $0x30] sm:$0xff]
        %v10292 = vld [vmem:[%s10284 + $0x38] sm:$0xff]
        %v10293 = vld [vmem:[%s10284 + $0x40] sm:$0xff]
        %v10294 = vld [vmem:[%s10284 + $0x48] sm:$0xff]
        %v10295 = vld [vmem:[%s10284 + $0x50] sm:$0xff]
        %v10296 = vld [vmem:[%s10284 + $0x58] sm:$0xff]
        %v10297 = vld [vmem:[%s10284 + $0x60] sm:$0xff]
        %v10298 = vld [vmem:[%s10284 + $0x68] sm:$0xff]
        %v10299 = vld [vmem:[%s10284 + $0x70] sm:$0xff]
        %v10300 = vld [vmem:[%s10284 + $0x78] sm:$0xff]
        %v10301 = vld [vmem:[%s10284 + $0x80] sm:$0xff]
        %v10302 = vld [vmem:[%s10284 + $0x88] sm:$0xff]
        %v10303 = vld [vmem:[%s10284 + $0x90] sm:$0xff]
        %v10304 = vld [vmem:[%s10284 + $0x98] sm:$0xff]
        %v10305 = vrot.slane %v9404, 2
        %v10306 = vrot.slane %v9406, 2
        %v10307 = vsel %vm3152, %v10305, %v10306
        %v10308 = vrot.slane %v9405, 2
        %v10309 = vrot.slane %v9407, 2
        %v10310 = vsel %vm3152, %v10308, %v10309
        %v10311 = vrot.slane %v9408, 2
        %v10312 = vsel %vm3152, %v10306, %v10311
        %v10313 = vrot.slane %v9409, 2
        %v10314 = vsel %vm3152, %v10309, %v10313
        %v10338 = vunpack.c.l.b16 %v10285
        %v10339 = vunpack.c.h.b16 %v10285
        %v10340 = vunpack.c.l.b16 %v10286
        %v10341 = vunpack.c.h.b16 %v10286
        %v10342 = vunpack.c.l.b16 %v10287
        %v10343 = vunpack.c.h.b16 %v10287
        %v10344 = vunpack.c.l.b16 %v10288
        %v10345 = vunpack.c.h.b16 %v10288
        %v10346 = vunpack.c.l.b16 %v10289
        %v10347 = vunpack.c.h.b16 %v10289
        %v10348 = vunpack.c.l.b16 %v10290
        %v10349 = vunpack.c.h.b16 %v10290
        %v10350 = vunpack.c.l.b16 %v10291
        %v10351 = vunpack.c.h.b16 %v10291
        %v10352 = vunpack.c.l.b16 %v10292
        %v10353 = vunpack.c.h.b16 %v10292
        %v10354 = vunpack.c.l.b16 %v10293
        %v10355 = vunpack.c.h.b16 %v10293
        %v10356 = vunpack.c.l.b16 %v10294
        %v10357 = vunpack.c.h.b16 %v10294
        %v10358 = vunpack.c.l.b16 %v10295
        %v10359 = vunpack.c.h.b16 %v10295
        %v10360 = vunpack.c.l.b16 %v10296
        %v10361 = vunpack.c.h.b16 %v10296
        %v10362 = vunpack.c.l.b16 %v10297
        %v10363 = vunpack.c.h.b16 %v10297
        %v10364 = vunpack.c.l.b16 %v10298
        %v10365 = vunpack.c.h.b16 %v10298
        %v10366 = vunpack.c.l.b16 %v10299
        %v10367 = vunpack.c.h.b16 %v10299
        %v10368 = vunpack.c.l.b16 %v10300
        %v10369 = vunpack.c.h.b16 %v10300
        %v10370 = vunpack.c.l.b16 %v10301
        %v10371 = vunpack.c.h.b16 %v10301
        %v10372 = vunpack.c.l.b16 %v10302
        %v10373 = vunpack.c.h.b16 %v10302
        %v10374 = vunpack.c.l.b16 %v10303
        %v10375 = vunpack.c.h.b16 %v10303
        %v10376 = vunpack.c.l.b16 %v10304
        %v10377 = vunpack.c.h.b16 %v10304
        %v10378 = vpack.c.b16 %v10340, %v10338
        %v10379 = vpack.c.b16 %v10341, %v10339
        %v10380 = vpack.c.b16 %v10344, %v10342
        %v10381 = vpack.c.b16 %v10345, %v10343
        %v10382 = vpack.c.b16 %v10348, %v10346
        %v10383 = vpack.c.b16 %v10349, %v10347
        %v10384 = vpack.c.b16 %v10352, %v10350
        %v10385 = vpack.c.b16 %v10353, %v10351
        %v10386 = vpack.c.b16 %v10356, %v10354
        %v10387 = vpack.c.b16 %v10357, %v10355
        %v10388 = vpack.c.b16 %v10360, %v10358
        %v10389 = vpack.c.b16 %v10361, %v10359
        %v10390 = vpack.c.b16 %v10364, %v10362
        %v10391 = vpack.c.b16 %v10365, %v10363
        %v10392 = vpack.c.b16 %v10368, %v10366
        %v10393 = vpack.c.b16 %v10369, %v10367
        %v10394 = vpack.c.b16 %v10372, %v10370
        %v10395 = vpack.c.b16 %v10373, %v10371
        %v10396 = vpack.c.b16 %v10376, %v10374
        %v10397 = vpack.c.b16 %v10377, %v10375
        %v10419 = vsel %vm9600, %v10310, 0
        %v10422 = vsel %vm9600, %v10314, 0
        %v10425 = vsel %vm9600, %v10313, 0
        %10427 = vmatprep.subr.bf16.mxu0 %v10379
        %10428 = vmatpush1.bf16.msra.mxu0 %v10378
        %10429 = vmatprep.subr.bf16.mxu0 %v10381
        %10430 = vmatpush1.bf16.msra.mxu0 %v10380
        %10431 = vmatprep.subr.bf16.mxu0 %v10383
        %10432 = vmatpush1.bf16.msra.mxu0 %v10382
        %10433 = vmatprep.subr.bf16.mxu0 %v10385
        %10434 = vmatpush1.bf16.msra.mxu0 %v10384
        %10435 = vmatprep.subr.bf16.mxu0 %v10387
        %10436 = vmatpush1.bf16.msra.mxu0 %v10386
        %10437 = vmatprep.subr.bf16.mxu0 %v10389
        %10438 = vmatpush1.bf16.msra.mxu0 %v10388
        %10439 = vmatprep.subr.bf16.mxu0 %v10391
        %10440 = vmatpush1.bf16.msra.mxu0 %v10390
        %10441 = vmatprep.subr.bf16.mxu0 %v10393
        %10442 = vmatpush1.bf16.msra.mxu0 %v10392
        %10443 = vmatprep.subr.bf16.mxu0 %v10395
        %10444 = vmatpush1.bf16.msra.mxu0 %v10394
        %10445 = vmatprep.subr.bf16.mxu0 %v10397
        %10446 = vmatpush1.bf16.msra.mxu0 %v10396
        %10447 = vmatprep.subr.bf16.mxu0 0
        %10448 = vmatpush1.bf16.msra.mxu0 0
        %10449 = vmatprep.subr.bf16.mxu0 0
        %10450 = vmatpush1.bf16.msra.mxu0 0
        %10451 = vmatprep.subr.bf16.mxu0 0
        %10452 = vmatpush1.bf16.msra.mxu0 0
        %10453 = vmatprep.subr.bf16.mxu0 0
        %10454 = vmatpush1.bf16.msra.mxu0 0
        %10455 = vmatprep.subr.bf16.mxu0 0
        %10456 = vmatpush1.bf16.msra.mxu0 0
        %10457 = vmatprep.subr.bf16.mxu0 0
        %10458 = vmatpush1.bf16.msra.mxu0 0
        %10459 = vmatprep.mubr.bf16.mxu0 %v10419
        %10460 = vmatmul.mubr.bf16.gmra.mrb[0].mxu0 %v10307
        %v10461 = vpop.f32.mrb[0].mxu0
        %v10462 = vadd.f32 0.0, %v10461
        %v10463 = vpop.f32.mrb[0].mxu0
        %v10464 = vadd.f32 0.0, %v10463
        %v10465 = vpop.f32.mrb[0].mxu0
        %v10466 = vadd.f32 0.0, %v10465
        %v10467 = vpop.f32.mrb[0].mxu0
        %v10468 = vadd.f32 0.0, %v10467
        %10469 = vmatprep.mubr.bf16.mxu0 %v10422
        %10470 = vmatmul.mubr.bf16.gmra.mrb[0].mxu0 %v10312
        %v10471 = vpop.f32.mrb[0].mxu0
        %v10472 = vadd.f32 0.0, %v10471
        %v10473 = vpop.f32.mrb[0].mxu0
        %v10474 = vadd.f32 0.0, %v10473
        %v10475 = vpop.f32.mrb[0].mxu0
        %v10476 = vadd.f32 0.0, %v10475
        %v10477 = vpop.f32.mrb[0].mxu0
        %v10478 = vadd.f32 0.0, %v10477
        %10479 = vmatprep.mubr.bf16.mxu0 %v10425
        %10480 = vmatmul.mubr.bf16.gmra.mrb[0].mxu0 %v10311
        %v10481 = vpop.f32.mrb[0].mxu0
        %v10482 = vadd.f32 0.0, %v10481
        %v10483 = vpop.f32.mrb[0].mxu0
        %v10484 = vadd.f32 0.0, %v10483
        %v10485 = vpop.f32.mrb[0].mxu0
        %v10486 = vpop.f32.mrb[0].mxu0
        %10487 = vdwg.mxu0
        %v10488 = vadd.f32 %v10274, %v10462
        %v10489 = vadd.f32 %v10275, %v10464
        %v10490 = vadd.f32 %v10276, %v10466
        %v10491 = vadd.f32 %v10277, %v10468
        %v10492 = vadd.f32 %v10278, %v10472
        %v10493 = vadd.f32 %v10279, %v10474
        %v10494 = vadd.f32 %v10280, %v10476
        %v10495 = vadd.f32 %v10281, %v10478
        %v10496 = vadd.f32 %v10282, %v10482
        %v10497 = vadd.f32 %v10283, %v10484
        %v10498 = vld [vmem:[%s10] sm:$0x3]
        %v10500 = vlaneseq
        %v10501 = vshrl.u32 %v10500, 7
        %v10502 = vsub.s32 0, %v10501
        %v10503 = vrot.slane %v10498, %v10502
        %v10504 = vlaneseq
        %v10505 = vshrl.u32 %v10504, 7
        %v10506 = vsub.s32 1, %v10505
        %v10507 = vrot.slane %v10498, %v10506
        %v10510 = vadd.f32 %v10488, %v10503
        %v10511 = vadd.f32 %v10489, %v10507
        %v10512 = vadd.f32 %v10490, %v10503
        %v10513 = vadd.f32 %v10491, %v10507
        %v10514 = vadd.f32 %v10492, %v10503
        %v10515 = vadd.f32 %v10493, %v10507
        %v10516 = vadd.f32 %v10494, %v10503
        %v10517 = vadd.f32 %v10495, %v10507
        %v10518 = vadd.f32 %v10496, %v10503
        %v10519 = vadd.f32 %v10497, %v10507
        %v10520 = vtanh.pop %v10510
        %v10521 = vtanh.pop %v10511
        %v10522 = vtanh.pop %v10512
        %v10523 = vtanh.pop %v10513
        %v10524 = vtanh.pop %v10514
        %v10525 = vtanh.pop %v10515
        %v10526 = vtanh.pop %v10516
        %v10527 = vtanh.pop %v10517
        %v10528 = vtanh.pop %v10518
        %v10529 = vtanh.pop %v10519
        %v10530 = vld [vmem:[%s11] sm:$0xf]
        %v10531 = vpack.c.bf16 %v10522, %v10520
        %v10532 = vpack.c.bf16 %v10523, %v10521
        %v10533 = vpack.c.bf16 %v10526, %v10524
        %v10534 = vpack.c.bf16 %v10527, %v10525
        %v10535 = vpack.c.bf16 %v10528, %v10528
        %v10536 = vpack.c.bf16 %v10529, %v10529
        %vm10537 = vcmask 293888
        %v10539 = vsel %vm10537, %v10530, 0
        %vm10541 = vcmask 1041408
        %v10543 = vsel %vm10541, %v10535, 0
        %v10546 = vsel %vm10541, %v10536, 0
        %10548 = vmatprep.subr.bf16.mxu0 %v10532
        %10549 = vmatpush1.bf16.msra.mxu0 %v10531
        %10550 = vmatprep.subr.bf16.mxu0 %v10534
        %10551 = vmatpush1.bf16.msra.mxu0 %v10533
        %10552 = vmatprep.subr.bf16.mxu0 %v10546
        %10553 = vmatpush1.bf16.msra.mxu0 %v10543
        %10554 = vmatprep.subr.bf16.mxu0 0
        %10555 = vmatpush1.bf16.msra.mxu0 0
        %10556 = vmatprep.subr.bf16.mxu0 0
        %10557 = vmatpush1.bf16.msra.mxu0 0
        %10558 = vmatprep.subr.bf16.mxu0 0
        %10559 = vmatpush1.bf16.msra.mxu0 0
        %10560 = vmatprep.subr.bf16.mxu0 0
        %10561 = vmatpush1.bf16.msra.mxu0 0
        %10562 = vmatprep.subr.bf16.mxu0 0
        %10563 = vmatpush1.bf16.msra.mxu0 0
        %10564 = vmatprep.subr.bf16.mxu0 0
        %10565 = vmatpush1.bf16.msra.mxu0 0
        %10566 = vmatprep.subr.bf16.mxu0 0
        %10567 = vmatpush1.bf16.msra.mxu0 0
        %10568 = vmatprep.subr.bf16.mxu0 0
        %10569 = vmatpush1.bf16.msra.mxu0 0
        %10570 = vmatprep.subr.bf16.mxu0 0
        %10571 = vmatpush1.bf16.msra.mxu0 0
        %10572 = vmatprep.subr.bf16.mxu0 0
        %10573 = vmatpush1.bf16.msra.mxu0 0
        %10574 = vmatprep.subr.bf16.mxu0 0
        %10575 = vmatpush1.bf16.msra.mxu0 0
        %10576 = vmatprep.subr.bf16.mxu0 0
        %10577 = vmatpush1.bf16.msra.mxu0 0
        %10578 = vmatprep.subr.bf16.mxu0 0
        %10579 = vmatpush1.bf16.msra.mxu0 0
        %10580 = vmatprep.mubr.bf16.mxu0 0
        %10581 = vmatmul.mubr.bf16.gmra.mrb[0].mxu0 %v10539
        %v10582 = vpop.f32.mrb[0].mxu0
        %v10583 = vadd.f32 0.0, %v10582
        %v10584 = vpop.f32.mrb[0].mxu0
        %v10585 = vadd.f32 0.0, %v10584
        %v10586 = vpop.f32.mrb[0].mxu0
        %v10587 = vpop.f32.mrb[0].mxu0
        %10588 = vdwg.mxu0
        %v10589 = vpack.c.bf16 %v10583, %v10583
        %v10590 = vpack.c.bf16 %v10585, %v10585
        %v10591 = vld [vmem:[%s12] sm:$0xf]
        %v10592 = vld [vmem:[%s12 + $0x4] sm:$0xf]
        %v10593 = vld [vmem:[%s12 + $0x8] sm:$0xf]
        %v10594 = vld [vmem:[%s12 + $0xc] sm:$0xf]
        %v10595 = vld [vmem:[%s12 + $0x10] sm:$0xf]
        %v10596 = vld [vmem:[%s12 + $0x14] sm:$0xf]
        %v10597 = vld [vmem:[%s12 + $0x18] sm:$0xf]
        %v10598 = vld [vmem:[%s12 + $0x1c] sm:$0xf]
        %v10599 = vld [vmem:[%s12 + $0x20] sm:$0xf]
        %v10600 = vld [vmem:[%s12 + $0x24] sm:$0xf]
        %v10601 = vld [vmem:[%s12 + $0x28] sm:$0xf]
        %v10602 = vld [vmem:[%s12 + $0x2c] sm:$0xf]
        %v10603 = vld [vmem:[%s12 + $0x30] sm:$0xf]
        %v10604 = vld [vmem:[%s12 + $0x34] sm:$0xf]
        %v10605 = vld [vmem:[%s12 + $0x38] sm:$0xf]
        %v10606 = vld [vmem:[%s12 + $0x3c] sm:$0xf]
        %v10607 = vld [vmem:[%s12 + $0x40] sm:$0xf]
        %v10608 = vld [vmem:[%s12 + $0x44] sm:$0xf]
        %v10609 = vld [vmem:[%s12 + $0x48] sm:$0xf]
        %v10610 = vld [vmem:[%s12 + $0x4c] sm:$0xf]
        %v10611 = vld [vmem:[%s12 + $0x50] sm:$0xf]
        %v10612 = vld [vmem:[%s12 + $0x54] sm:$0xf]
        %v10613 = vld [vmem:[%s12 + $0x58] sm:$0xf]
        %v10614 = vld [vmem:[%s12 + $0x5c] sm:$0xf]
        %v10615 = vld [vmem:[%s12 + $0x60] sm:$0xf]
        %v10616 = vld [vmem:[%s12 + $0x64] sm:$0xf]
        %v10617 = vld [vmem:[%s12 + $0x68] sm:$0xf]
        %v10618 = vld [vmem:[%s12 + $0x6c] sm:$0xf]
        %v10619 = vld [vmem:[%s12 + $0x70] sm:$0xf]
        %v10620 = vld [vmem:[%s12 + $0x74] sm:$0xf]
        %v10621 = vld [vmem:[%s13] sm:$0x1]
        %v10623 = vlaneseq
        %v10624 = vshrl.u32 %v10623, 7
        %v10625 = vsub.s32 0, %v10624
        %v10626 = vrot.slane %v10621, %v10625
        %v10658 = vunpack.c.l.b16 %v10591
        %v10659 = vunpack.c.l.b16 %v10592
        %v10660 = vunpack.c.l.b16 %v10593
        %v10661 = vunpack.c.l.b16 %v10594
        %v10662 = vunpack.c.l.b16 %v10595
        %v10663 = vunpack.c.l.b16 %v10596
        %v10664 = vunpack.c.l.b16 %v10597
        %v10665 = vunpack.c.l.b16 %v10598
        %v10666 = vunpack.c.l.b16 %v10599
        %v10667 = vunpack.c.l.b16 %v10600
        %v10668 = vunpack.c.l.b16 %v10601
        %v10669 = vunpack.c.l.b16 %v10602
        %v10670 = vunpack.c.l.b16 %v10603
        %v10671 = vunpack.c.l.b16 %v10604
        %v10672 = vunpack.c.l.b16 %v10605
        %v10673 = vunpack.c.l.b16 %v10606
        %v10674 = vunpack.c.l.b16 %v10607
        %v10675 = vunpack.c.l.b16 %v10608
        %v10676 = vunpack.c.l.b16 %v10609
        %v10677 = vunpack.c.l.b16 %v10610
        %v10678 = vunpack.c.l.b16 %v10611
        %v10679 = vunpack.c.l.b16 %v10612
        %v10680 = vunpack.c.l.b16 %v10613
        %v10681 = vunpack.c.l.b16 %v10614
        %v10682 = vunpack.c.l.b16 %v10615
        %v10683 = vunpack.c.l.b16 %v10616
        %v10684 = vunpack.c.l.b16 %v10617
        %v10685 = vunpack.c.l.b16 %v10618
        %v10686 = vunpack.c.l.b16 %v10619
        %v10687 = vunpack.c.l.b16 %v10620
        %v10688 = vpack.c.b16 %v10659, %v10658
        %v10689 = vpack.c.b16 %v10661, %v10660
        %v10690 = vpack.c.b16 %v10663, %v10662
        %v10691 = vpack.c.b16 %v10665, %v10664
        %v10692 = vpack.c.b16 %v10667, %v10666
        %v10693 = vpack.c.b16 %v10669, %v10668
        %v10694 = vpack.c.b16 %v10671, %v10670
        %v10695 = vpack.c.b16 %v10673, %v10672
        %v10696 = vpack.c.b16 %v10675, %v10674
        %v10697 = vpack.c.b16 %v10677, %v10676
        %v10698 = vpack.c.b16 %v10679, %v10678
        %v10699 = vpack.c.b16 %v10681, %v10680
        %v10700 = vpack.c.b16 %v10683, %v10682
        %v10701 = vpack.c.b16 %v10685, %v10684
        %v10702 = vpack.c.b16 %v10687, %v10686
        %vm10718 = vcmask 916480
        %v10720 = vsel %vm10718, %v10590, 0
        %10722 = vmatprep.subr.bf16.mxu0 0
        %10723 = vmatpush1.bf16.msra.mxu0 %v10688
        %10724 = vmatprep.subr.bf16.mxu0 0
        %10725 = vmatpush1.bf16.msra.mxu0 %v10689
        %10726 = vmatprep.subr.bf16.mxu0 0
        %10727 = vmatpush1.bf16.msra.mxu0 %v10690
        %10728 = vmatprep.subr.bf16.mxu0 0
        %10729 = vmatpush1.bf16.msra.mxu0 %v10691
        %10730 = vmatprep.subr.bf16.mxu0 0
        %10731 = vmatpush1.bf16.msra.mxu0 %v10692
        %10732 = vmatprep.subr.bf16.mxu0 0
        %10733 = vmatpush1.bf16.msra.mxu0 %v10693
        %10734 = vmatprep.subr.bf16.mxu0 0
        %10735 = vmatpush1.bf16.msra.mxu0 %v10694
        %10736 = vmatprep.subr.bf16.mxu0 0
        %10737 = vmatpush1.bf16.msra.mxu0 %v10695
        %10738 = vmatprep.subr.bf16.mxu0 0
        %10739 = vmatpush1.bf16.msra.mxu0 %v10696
        %10740 = vmatprep.subr.bf16.mxu0 0
        %10741 = vmatpush1.bf16.msra.mxu0 %v10697
        %10742 = vmatprep.subr.bf16.mxu0 0
        %10743 = vmatpush1.bf16.msra.mxu0 %v10698
        %10744 = vmatprep.subr.bf16.mxu0 0
        %10745 = vmatpush1.bf16.msra.mxu0 %v10699
        %10746 = vmatprep.subr.bf16.mxu0 0
        %10747 = vmatpush1.bf16.msra.mxu0 %v10700
        %10748 = vmatprep.subr.bf16.mxu0 0
        %10749 = vmatpush1.bf16.msra.mxu0 %v10701
        %10750 = vmatprep.subr.bf16.mxu0 0
        %10751 = vmatpush1.bf16.msra.mxu0 %v10702
        %10752 = vmatprep.subr.bf16.mxu0 0
        %10753 = vmatpush1.bf16.msra.mxu0 0
        %10754 = vmatprep.mubr.bf16.mxu0 %v10720
        %10755 = vmatmul.mubr.bf16.gmra.mrb[0].mxu0 %v10589
        %v10756 = vpop.f32.mrb[0].mxu0
        %v10757 = vadd.f32 %v10626, %v10756
        %v10758 = vpop.f32.mrb[0].mxu0
        %v10759 = vpop.f32.mrb[0].mxu0
        %v10760 = vpop.f32.mrb[0].mxu0
        %10761 = vdwg.mxu0
        %v10762 = vtanh.pop %v10757
        %v10763 = vpack.c.bf16 %v10762, %v10762
        %v10764 = vld [vmem:[%s14] sm:$0xf]
        %v10765 = vld [vmem:[%s14 + $0x4] sm:$0xf]
        %v10766 = vld [vmem:[%s14 + $0x8] sm:$0xf]
        %v10767 = vld [vmem:[%s14 + $0xc] sm:$0xf]
        %v10768 = vld [vmem:[%s14 + $0x10] sm:$0xf]
        %v10769 = vld [vmem:[%s14 + $0x14] sm:$0xf]
        %v10770 = vld [vmem:[%s14 + $0x18] sm:$0xf]
        %v10771 = vld [vmem:[%s14 + $0x1c] sm:$0xf]
        %v10772 = vld [vmem:[%s14 + $0x20] sm:$0xf]
        %v10773 = vld [vmem:[%s14 + $0x24] sm:$0xf]
        %v10774 = vld [vmem:[%s14 + $0x28] sm:$0x3]
        %v10775 = vld [vmem:[%s15] sm:$0x1]
        %v10777 = vlaneseq
        %v10778 = vshrl.u32 %v10777, 7
        %v10779 = vsub.s32 0, %v10778
        %v10780 = vrot.slane %v10775, %v10779
        %v10793 = vunpack.c.l.b16 %v10764
        %v10794 = vunpack.c.l.b16 %v10765
        %v10795 = vunpack.c.l.b16 %v10766
        %v10796 = vunpack.c.l.b16 %v10767
        %v10797 = vunpack.c.l.b16 %v10768
        %v10798 = vunpack.c.l.b16 %v10769
        %v10799 = vunpack.c.l.b16 %v10770
        %v10800 = vunpack.c.l.b16 %v10771
        %v10801 = vunpack.c.l.b16 %v10772
        %v10802 = vunpack.c.l.b16 %v10773
        %v10803 = vunpack.c.l.b16 %v10774
        %v10804 = vpack.c.b16 %v10794, %v10793
        %v10805 = vpack.c.b16 %v10796, %v10795
        %v10806 = vpack.c.b16 %v10798, %v10797
        %v10807 = vpack.c.b16 %v10800, %v10799
        %v10808 = vpack.c.b16 %v10802, %v10801
        %v10809 = vpack.c.b16 %v10803, %v10803
        %vm10815 = vcmask 687104
        %v10817 = vsel %vm10815, %v10763, 0
        %v10820 = vsel %vm10541, %v10809, 0
        %10822 = vmatprep.subr.bf16.mxu0 0
        %10823 = vmatpush1.bf16.msra.mxu0 %v10804
        %10824 = vmatprep.subr.bf16.mxu0 0
        %10825 = vmatpush1.bf16.msra.mxu0 %v10805
        %10826 = vmatprep.subr.bf16.mxu0 0
        %10827 = vmatpush1.bf16.msra.mxu0 %v10806
        %10828 = vmatprep.subr.bf16.mxu0 0
        %10829 = vmatpush1.bf16.msra.mxu0 %v10807
        %10830 = vmatprep.subr.bf16.mxu0 0
        %10831 = vmatpush1.bf16.msra.mxu0 %v10808
        %10832 = vmatprep.subr.bf16.mxu0 0
        %10833 = vmatpush1.bf16.msra.mxu0 %v10820
        %10834 = vmatprep.subr.bf16.mxu0 0
        %10835 = vmatpush1.bf16.msra.mxu0 0
        %10836 = vmatprep.subr.bf16.mxu0 0
        %10837 = vmatpush1.bf16.msra.mxu0 0
        %10838 = vmatprep.subr.bf16.mxu0 0
        %10839 = vmatpush1.bf16.msra.mxu0 0
        %10840 = vmatprep.subr.bf16.mxu0 0
        %10841 = vmatpush1.bf16.msra.mxu0 0
        %10842 = vmatprep.subr.bf16.mxu0 0
        %10843 = vmatpush1.bf16.msra.mxu0 0
        %10844 = vmatprep.subr.bf16.mxu0 0
        %10845 = vmatpush1.bf16.msra.mxu0 0
        %10846 = vmatprep.subr.bf16.mxu0 0
        %10847 = vmatpush1.bf16.msra.mxu0 0
        %10848 = vmatprep.subr.bf16.mxu0 0
        %10849 = vmatpush1.bf16.msra.mxu0 0
        %10850 = vmatprep.subr.bf16.mxu0 0
        %10851 = vmatpush1.bf16.msra.mxu0 0
        %10852 = vmatprep.subr.bf16.mxu0 0
        %10853 = vmatpush1.bf16.msra.mxu0 0
        %10854 = vmatprep.mubr.bf16.mxu0 0
        %10855 = vmatmul.mubr.bf16.gmra.mrb[0].mxu0 %v10817
        %v10856 = vpop.f32.mrb[0].mxu0
        %v10857 = vadd.f32 %v10780, %v10856
        %v10858 = vpop.f32.mrb[0].mxu0
        %v10859 = vpop.f32.mrb[0].mxu0
        %v10860 = vpop.f32.mrb[0].mxu0
        %10861 = vdwg.mxu0
        %10862 = vmax.xlane.f32.xlu0 %v10857
        %v10863 = vpop.xlane.xlu0 %10862
        %v10864 = vsub.f32 %v10857, %v10863
        %v10865 = vmul.f32 %v10864, 1.442695
        %v10866 = vpow.pop %v10865
        %10867 = vadd.xlane.f32.xlu0 %v10866
        %v10868 = vpop.xlane.xlu0 %10867
        %v10869 = vrcp.pop %v10868
        %v10870 = vmul.f32 %v10866, %v10869
        %10871 = vst [vmem:[%s515] sm:$0xff] %v10870
        %s10872 = sand.u32 %s379, 1
        %s10873 = scalar_lea.sflag [#allocation3], %s10872
        %s10874 = sand.u32 %s379, 1
        %s10875 = smul.addr %s10874, 8
        %s10876 = scalar_lea.vmem [#allocation2], %s10875
        // Predicated region
        $region85: #{lenet5_like3_forward.1} parent=83 // pred_check
          %p10877 = pneg %p389
        $region86: #{lenet5_like3_forward.1} parent=83 // pred_check_branch
          %10879 = sbr.rel (%p10877) target = $region88
        $region87: #{lenet5_like3_forward.1} parent=83 // pred_region
          %s10881 = ssub.s32 128, 128
          %10882 = vsyncadd %s10873, %s10881
          %s10883 = smul.addr %s30, 128
          %s10884 = scalar_lea.hbm %s16, %s10883
          %s10886 = sshll.u32 %s10876, 4
          %s10887 = int_to_ptr.vmem [resolvable:$true] %s10886
          %10889 = dma.vmem_to_hbm [thread:$0]  %s10887, 128, %s10884, %s10873
        $region88: #{lenet5_like3_forward.1} parent=83 // pred_fallthru
          _
      $region84: #{lenet5_like3_forward.1} parent=5 // pred_fallthru
        _
      %p10890 = scmp.le.s32.totalorder 2, %s25
      // Predicated region
      $region89: #{lenet5_like3_forward.1} parent=5 // pred_check
        %p10891 = pneg %p10890
      $region90: #{lenet5_like3_forward.1} parent=5 // pred_check_branch
        %10893 = sbr.rel (%p10891) target = $region92
      $region91: #{lenet5_like3_forward.1} parent=5 // pred_region
        %s10894 = ssub.s32 %s25, 2
        // Predicated region
        $region93: #{lenet5_like3_forward.1} parent=91 // pred_check
          %p10895 = pneg %p395
        $region94: #{lenet5_like3_forward.1} parent=91 // pred_check_branch
          %10897 = sbr.rel (%p10895) target = $region96
        $region95: #{lenet5_like3_forward.1} parent=91 // pred_region
          %s10898 = sand.u32 %s380, 1
          %s10899 = scalar_lea.sflag [#allocation3], %s10898
          %s10900 = sand.u32 %s380, 1
          %s10901 = smul.addr %s10900, 8
          %s10902 = scalar_lea.vmem [#allocation2], %s10901
          %10903 = dma.done %s10899, 128
        $region96: #{lenet5_like3_forward.1} parent=91 // pred_fallthru
          _
      $region92: #{lenet5_like3_forward.1} parent=5 // pred_fallthru
        _
    $region6: #{lenet5_like3_forward.1} parent=1 // loop_footer
      %s29 = sadd.s32 1, %s25
    $region7: #{lenet5_like3_forward.1} parent=1 // loop_footer_branch
      %24 = sbr.rel target = $region3
    $region8: #{lenet5_like3_forward.1} parent=1 // loop_exit
      _
    %10904 = vsyncpa [#allocation3], 1
    %s10905 = scalar_lea.sflag [#allocation3], 1
    %10906 = vsyncpa %s10905, 1

</llo_original>
